<compile_context>
chip_gen: v7x
topology: tpu7x:2x2x1
jax: 0.10.0
libtpu: 0.0.40
codegen_flags: <defaults>
</compile_context>

<pallas_src>
import jax
import jax.numpy as jnp
import numpy as np
from jax import lax
from jax.experimental import pallas as pl
from jax.experimental.pallas import tpu as pltpu

NEG_SLOPE = 0.01   # nn.LeakyReLU() default
R_TIME = 1         # sensNet recursiveTime used by SensitivityModel
PAD = 3            # spatial halo = max dilation of the dilated conv block
CMID = 8           # sensNet midChannel
CIN = 2            # complex (real/imag) channels


def _lrelu(x):
    # max(x, 0.01*x): one mul + one max
    return jnp.maximum(x, NEG_SLOPE * x)


# ----------------------------------------------------------------------------
# Pallas kernel
# ----------------------------------------------------------------------------
def _make_sens_kernel(H, W):
    Hp, Wp = H + 2 * PAD, W + 2 * PAD
    Np = Hp * Wp                 # flattened padded image length (lane axis)
    MARG = 3 * Wp + 3            # max |flat tap offset| (dilation 3)

    def kernel(mask_ref, x_ref, w1, b1, wd1, bd1, wd2, bd2, wd3, bd3, w2, b2,
               y_ref, ssq_ref, pad_ref):
        """One (batch, coil) image through sensNet; accumulate sum-of-squares.

        mask_ref: (1, Np)        interior mask (1 inside H x W, 0 in border)
        x_ref:    (1, 1, 2, Np)  padded-flat coil image, channels first
        y_ref:    (1, 1, 2, Np)  unnormalised sensNet output (padded-flat)
        ssq_ref:  (1, 1, Np)     per-pixel sum of squares, accumulated over c
        pad_ref:  (CMID, Np + 2*MARG) channels-first margin scratch
        """
        # Zero ONLY the two margin strips (never written by the scatters);
        # the main window is fully overwritten by every conv.
        zeros_marg = jnp.zeros((CMID, MARG), jnp.float32)
        pad_ref[:, 0:MARG] = zeros_marg
        pad_ref[:, MARG + Np:MARG + Np + MARG] = zeros_marg

        mask = mask_ref[...]                               # (1, Np)

        def conv(x, w_ref_, b_ref_, dilation):
            """3x3 dilated conv = 9 MXU matmuls (cout,cin)@(cin,Np).

            x: (cin, Np) channels-first activations with zero border.
            w_ref_: (9, cout, cin) per-tap weights; b_ref_: (cout, 1).
            Returns (cout, Np) float32 (border positions contain garbage that
            the caller re-zeros with the interior mask).
            """
            cin = x.shape[0]
            # scatter the activation into the margin scratch (static window,
            # only rows 0:cin are written and read — channels cin..CMID stale)
            pad_ref[0:cin, MARG:MARG + Np] = x
            acc = None
            t = 0
            for ky in (-1, 0, 1):
                for kx in (-1, 0, 1):
                    off = (ky * Wp + kx) * dilation
                    # tap[p] = x_padded_flat[p + off]; static lane window
                    tap = pad_ref[0:cin, MARG + off:MARG + off + Np]
                    part = jnp.dot(w_ref_[t], tap,
                                   preferred_element_type=jnp.float32)
                    acc = part if acc is None else acc + part
                    t += 1
            return acc + b_ref_[...]                       # (cout,Np)+(cout,1)

        def layer(x, w_ref_, b_ref_, dilation):
            # conv -> LeakyReLU -> re-zero the 3-px border so the next conv
            # sees proper zero padding.
            return _lrelu(conv(x, w_ref_, b_ref_, dilation)) * mask

        x1 = x_ref[0, 0]                                   # (2, Np)

        # sensNet
        x2 = layer(x1, w1, b1, 1)                          # (8, Np)
        xt = x2
        for _ in range(R_TIME):
            h = layer(xt, wd1, bd1, 1)
            h = layer(h, wd2, bd2, 2)
            h = layer(h, wd3, bd3, 3)
            xt = h + x2
        x4 = layer(xt, w2, b2, 1)                          # (2, Np)
        y = x4 + x1
        y_ref[0, 0] = y

        # accumulate |y|^2 over coils (and complex) for the RSS second pass
        ssq = jnp.sum(y * y, axis=0, keepdims=True)        # (1, Np)
        c = pl.program_id(1)

        @pl.when(c == 0)
        def _():
            ssq_ref[0] = ssq

        @pl.when(c > 0)
        def _():
            ssq_ref[0] = ssq_ref[0] + ssq

    return kernel, Np, MARG


# ----------------------------------------------------------------------------
# Pallas wrapper
# ----------------------------------------------------------------------------
def run_sens_net_pallas(images, params):
    """images: (B, C, H, W, 2) coil images -> normalised sensitivity maps."""
    B, C, H, W, two = images.shape
    assert two == 2
    Hp, Wp = H + 2 * PAD, W + 2 * PAD

    kernel, Np, MARG = _make_sens_kernel(H, W)

    # channels-first, zero-padded, spatially flattened (lane-dense) input
    x = jnp.transpose(images.astype(jnp.float32), (0, 1, 4, 2, 3))  # (B,C,2,H,W)
    x = jnp.pad(x, ((0, 0), (0, 0), (0, 0), (PAD, PAD), (PAD, PAD)))
    x = x.reshape(B, C, 2, Np)

    # weights -> (9, cout, cin) per-tap matrices; biases -> (cout, 1) columns
    flat = []
    for name in ("conv1", "dil1", "dil2", "dil3", "conv2"):
        w, b = params[name]
        cout, cin, kh, kw = w.shape
        w9 = jnp.transpose(w.astype(jnp.float32),
                           (2, 3, 0, 1)).reshape(kh * kw, cout, cin)
        flat.append(w9)
        flat.append(b.astype(jnp.float32).reshape(cout, 1))

    # interior mask: 1 inside the original HxW image, 0 in the 3-px border
    m = np.zeros((Hp, Wp), np.float32)
    m[PAD:PAD + H, PAD:PAD + W] = 1.0
    mask = jnp.asarray(m.reshape(1, Np))

    # VMEM limit: generous on v5e/v6e (128 MiB physical), conservative on v7x
    try:
        vmem_cap = int(pltpu.get_tpu_info().vmem_capacity_bytes)
    except Exception:
        vmem_cap = 64 * 1024 * 1024
    vmem_limit = int(min(100 * 1024 * 1024, (vmem_cap * 3) // 4))

    x_spec = pl.BlockSpec((1, 1, 2, Np), lambda b, c: (b, c, 0, 0))
    mask_spec = pl.BlockSpec((1, Np), lambda b, c: (0, 0))
    w_specs = [pl.BlockSpec(a.shape, lambda b, c, n=a.ndim: (0,) * n)
               for a in flat]

    y, ssq = pl.pallas_call(
        kernel,
        out_shape=(jax.ShapeDtypeStruct((B, C, 2, Np), jnp.float32),
                   jax.ShapeDtypeStruct((B, 1, Np), jnp.float32)),
        grid=(B, C),
        in_specs=[mask_spec, x_spec] + w_specs,
        out_specs=(pl.BlockSpec((1, 1, 2, Np), lambda b, c: (b, c, 0, 0)),
                   pl.BlockSpec((1, 1, Np), lambda b, c: (b, 0, 0))),
        scratch_shapes=[pltpu.VMEM((CMID, Np + 2 * MARG), jnp.float32)],
        compiler_params=pltpu.CompilerParams(
            # coil axis MUST stay "arbitrary": ssq is accumulated across it.
            dimension_semantics=("parallel", "arbitrary"),
            vmem_limit_bytes=vmem_limit),
    )(mask, x, *flat)

    # divide_root_sum_of_squares: trivial second pass (crop padding, divide).
    y = y.reshape(B, C, 2, Hp, Wp)[..., PAD:PAD + H, PAD:PAD + W]   # (B,C,2,H,W)
    ssq = ssq.reshape(B, 1, Hp, Wp)[..., PAD:PAD + H, PAD:PAD + W]  # (B,1,H,W)
    rss = jnp.sqrt(ssq)[:, :, None]                                 # (B,1,1,H,W)
    return jnp.transpose(y / rss, (0, 1, 3, 4, 2))                  # (B,C,H,W,2)


# ----------------------------------------------------------------------------
# plain-JAX glue (fastMRI transform semantics)
# ----------------------------------------------------------------------------
def get_pad_and_num_low_freqs(mask, num_low_frequencies=None):
    if num_low_frequencies is None or num_low_frequencies == 0:
        squeezed_mask = mask[:, 0, 0, :, 0].astype(jnp.int32)
        cent = squeezed_mask.shape[1] // 2
        left = jnp.argmin(squeezed_mask[:, :cent][:, ::-1], axis=1)
        right = jnp.argmin(squeezed_mask[:, cent:], axis=1)
        num_low = jnp.maximum(2 * jnp.minimum(left, right), jnp.ones_like(left))
    else:
        num_low = num_low_frequencies * jnp.ones((mask.shape[0],), jnp.int32)
    pad = (mask.shape[-2] - num_low + 1) // 2
    return pad, num_low


def batched_mask_center(x, mask_from, mask_to):
    # x: (B, C, H, W, 2); keep only columns [from, to) per batch element.
    w = x.shape[-2]
    col = jnp.arange(w)
    keep = (col[None, :] >= mask_from[:, None]) & (col[None, :] < mask_to[:, None])
    return x * keep[:, None, None, :, None].astype(x.dtype)


def ifft2c(data, shift=True):
    # TODO(synk): iFFT has no Pallas primitive — orthonormal 2-D iFFT in JAX.
    cplx = data[..., 0] + 1j * data[..., 1]
    if shift:
        cplx = jnp.fft.ifftshift(cplx, axes=(-2, -1))
    img = jnp.fft.ifftn(cplx, axes=(-2, -1), norm="ortho")
    if shift:
        img = jnp.fft.fftshift(img, axes=(-2, -1))
    return jnp.stack([jnp.real(img), jnp.imag(img)], axis=-1).astype(jnp.float32)


def sensitivity_model_forward(masked_kspace, mask, params,
                              num_low_frequencies=None, mask_center=True,
                              shift=True):
    """masked_kspace: (B, C, H, W, 2); mask: (B, 1, 1, W, 1)."""
    if mask_center:
        pad, nlf = get_pad_and_num_low_freqs(mask, num_low_frequencies)
        masked_kspace = batched_mask_center(masked_kspace, pad, pad + nlf)
    images = ifft2c(masked_kspace, shift=shift)          # (B, C, H, W, 2)
    return run_sens_net_pallas(images, params)           # (B, C, H, W, 2)


# ----------------------------------------------------------------------------
# pure-JAX reference (for correctness check only)
# ----------------------------------------------------------------------------
def _conv_ref(x, w, b, dilation):
    out = lax.conv_general_dilated(
        x, w, window_strides=(1, 1),
        padding=[(dilation, dilation), (dilation, dilation)],
        rhs_dilation=(dilation, dilation),
        dimension_numbers=("NCHW", "OIHW", "NCHW"),
        precision=lax.Precision.HIGHEST)
    return out + b[None, :, None, None]


def _sensnet_ref(x, params):
    w1, b1 = params["conv1"]; wd1, bd1 = params["dil1"]
    wd2, bd2 = params["dil2"]; wd3, bd3 = params["dil3"]
    w2, b2 = params["conv2"]
    x2 = _lrelu(_conv_ref(x, w1, b1, 1))
    xt = x2
    for _ in range(R_TIME):
        h = _lrelu(_conv_ref(xt, wd1, bd1, 1))
        h = _lrelu(_conv_ref(h, wd2, bd2, 2))
        h = _lrelu(_conv_ref(h, wd3, bd3, 3))
        xt = h + x2
    x4 = _lrelu(_conv_ref(xt, w2, b2, 1))
    return x4 + x


def sensitivity_model_ref(masked_kspace, mask, params, num_low_frequencies=None):
    pad, nlf = get_pad_and_num_low_freqs(mask, num_low_frequencies)
    kspace = batched_mask_center(masked_kspace, pad, pad + nlf)
    images = ifft2c(kspace, shift=True)
    B, C, H, W, _ = images.shape
    x1 = jnp.transpose(images.reshape(B * C, H, W, 2), (0, 3, 1, 2))
    x5 = _sensnet_ref(x1, params)
    y = jnp.transpose(x5, (0, 2, 3, 1)).reshape(B, C, H, W, 2)
    rss = jnp.sqrt(jnp.sum(y * y, axis=(1, 4), keepdims=True))
    return y / rss


# ----------------------------------------------------------------------------
if __name__ == "__main__":
    key = jax.random.PRNGKey(0)
    B, C, H, W = 2, 4, 16, 16
    kdata, *wkeys = jax.random.split(key, 6)

    masked_kspace = jax.random.normal(kdata, (B, C, H, W, 2), jnp.float32)

    # undersampling mask over the width axis: fully sampled centre + lines
    cols = np.zeros((W,), np.float32)
    cols[[0, 3, 6, 7, 8, 9, 12, 15]] = 1.0
    mask = jnp.broadcast_to(jnp.asarray(cols)[None, None, None, :, None],
                            (B, 1, 1, W, 1))
    masked_kspace = masked_kspace * mask

    def init_conv(k, cout, cin):
        kw, kb = jax.random.split(k)
        return (0.1 * jax.random.normal(kw, (cout, cin, 3, 3), jnp.float32),
                0.1 * jax.random.normal(kb, (cout,), jnp.float32))

    params = {
        "conv1": init_conv(wkeys[0], 8, 2),   # sensNet conv1: 2 -> 8
        "dil1":  init_conv(wkeys[1], 8, 8),   # dilated conv d=1
        "dil2":  init_conv(wkeys[2], 8, 8),   # dilated conv d=2
        "dil3":  init_conv(wkeys[3], 8, 8),   # dilated conv d=3
        "conv2": init_conv(wkeys[4], 2, 8),   # sensNet conv2: 8 -> 2
    }

    fwd = jax.jit(lambda k, m, p: sensitivity_model_forward(k, m, p))
    out = jax.block_until_ready(fwd(masked_kspace, mask, params))
    ref = jax.block_until_ready(sensitivity_model_ref(masked_kspace, mask, params))

    assert out.shape == (B, C, H, W, 2), out.shape
    np.testing.assert_allclose(np.asarray(out), np.asarray(ref),
                               rtol=2e-4, atol=1e-4)
    print("KERNEL_OK")
</pallas_src>

<mosaic_0001>
module attributes {stable_mosaic.version = 11 : i64} {
  func.func @kernel(%arg0: i32, %arg1: i32, %arg2: memref<1x484xf32, #tpu.memory_space<vmem>>, %arg3: memref<1x1x2x484xf32, #tpu.memory_space<vmem>>, %arg4: memref<9x8x2xf32, #tpu.memory_space<vmem>>, %arg5: memref<8x1xf32, #tpu.memory_space<vmem>>, %arg6: memref<9x8x8xf32, #tpu.memory_space<vmem>>, %arg7: memref<8x1xf32, #tpu.memory_space<vmem>>, %arg8: memref<9x8x8xf32, #tpu.memory_space<vmem>>, %arg9: memref<8x1xf32, #tpu.memory_space<vmem>>, %arg10: memref<9x8x8xf32, #tpu.memory_space<vmem>>, %arg11: memref<8x1xf32, #tpu.memory_space<vmem>>, %arg12: memref<9x2x8xf32, #tpu.memory_space<vmem>>, %arg13: memref<2x1xf32, #tpu.memory_space<vmem>>, %arg14: memref<1x1x2x484xf32, #tpu.memory_space<vmem>>, %arg15: memref<1x1x484xf32, #tpu.memory_space<vmem>>, %arg16: memref<8x622xf32, #tpu.memory_space<vmem>>) attributes {dimension_semantics = [#tpu.dimension_semantics<parallel>, #tpu.dimension_semantics<arbitrary>], iteration_bounds = array<i64: 2, 4>, scalar_prefetch = 0 : i64, scratch_operands = 1 : i64, tpu.core_type = #tpu.core_type<tc>, window_params = [{pipeline_mode = #tpu.pipeline_mode<synchronous>, transform_indices = @transform_0, window_bounds = array<i64: 1, 484>}, {transform_indices = @transform_1, window_bounds = array<i64: 1, 1, 2, 484>}, {pipeline_mode = #tpu.pipeline_mode<synchronous>, transform_indices = @transform_2, window_bounds = array<i64: 9, 8, 2>}, {pipeline_mode = #tpu.pipeline_mode<synchronous>, transform_indices = @transform_3, window_bounds = array<i64: 8, 1>}, {pipeline_mode = #tpu.pipeline_mode<synchronous>, transform_indices = @transform_4, window_bounds = array<i64: 9, 8, 8>}, {pipeline_mode = #tpu.pipeline_mode<synchronous>, transform_indices = @transform_5, window_bounds = array<i64: 8, 1>}, {pipeline_mode = #tpu.pipeline_mode<synchronous>, transform_indices = @transform_6, window_bounds = array<i64: 9, 8, 8>}, {pipeline_mode = #tpu.pipeline_mode<synchronous>, transform_indices = @transform_7, window_bounds = array<i64: 8, 1>}, {pipeline_mode = #tpu.pipeline_mode<synchronous>, transform_indices = @transform_8, window_bounds = array<i64: 9, 8, 8>}, {pipeline_mode = #tpu.pipeline_mode<synchronous>, transform_indices = @transform_9, window_bounds = array<i64: 8, 1>}, {pipeline_mode = #tpu.pipeline_mode<synchronous>, transform_indices = @transform_10, window_bounds = array<i64: 9, 2, 8>}, {pipeline_mode = #tpu.pipeline_mode<synchronous>, transform_indices = @transform_11, window_bounds = array<i64: 2, 1>}, {transform_indices = @transform_12, window_bounds = array<i64: 1, 1, 2, 484>}, {transform_indices = @transform_13, window_bounds = array<i64: 1, 1, 484>}]} {
    %cst = arith.constant 0.000000e+00 : f32
    %0 = vector.broadcast %cst : f32 to vector<8x69xf32>
    %c0 = arith.constant 0 : index
    %c0_0 = arith.constant 0 : index
    %1 = vector.load %arg16[%c0, %c0_0] : memref<8x622xf32, #tpu.memory_space<vmem>>, vector<8x69xf32>
    tpu.vector_store %arg16[%c0, %c0_0], %0 {strides = array<i32>} : memref<8x622xf32, #tpu.memory_space<vmem>>, vector<8x69xf32>,
    %c0_1 = arith.constant 0 : index
    %c553 = arith.constant 553 : index
    %2 = vector.load %arg16[%c0_1, %c553] : memref<8x622xf32, #tpu.memory_space<vmem>>, vector<8x69xf32>
    tpu.vector_store %arg16[%c0_1, %c553], %0 {strides = array<i32>} : memref<8x622xf32, #tpu.memory_space<vmem>>, vector<8x69xf32>,
    %c0_2 = arith.constant 0 : index
    %c0_3 = arith.constant 0 : index
    %3 = vector.load %arg2[%c0_2, %c0_3] : memref<1x484xf32, #tpu.memory_space<vmem>>, vector<1x484xf32>
    %c0_4 = arith.constant 0 : index
    %c0_5 = arith.constant 0 : index
    %c0_6 = arith.constant 0 : index
    %c0_7 = arith.constant 0 : index
    %4 = vector.load %arg3[%c0_4, %c0_5, %c0_6, %c0_7] : memref<1x1x2x484xf32, #tpu.memory_space<vmem>>, vector<1x1x2x484xf32>
    %5 = vector.shape_cast %4 : vector<1x1x2x484xf32> to vector<2x484xf32>
    %c0_8 = arith.constant 0 : index
    %c69 = arith.constant 69 : index
    %6 = vector.load %arg16[%c0_8, %c69] : memref<8x622xf32, #tpu.memory_space<vmem>>, vector<2x484xf32>
    tpu.vector_store %arg16[%c0_8, %c69], %5 {strides = array<i32>} : memref<8x622xf32, #tpu.memory_space<vmem>>, vector<2x484xf32>,
    %c0_9 = arith.constant 0 : index
    %c46 = arith.constant 46 : index
    %7 = vector.load %arg16[%c0_9, %c46] : memref<8x622xf32, #tpu.memory_space<vmem>>, vector<2x484xf32>
    %c0_10 = arith.constant 0 : index
    %c0_11 = arith.constant 0 : index
    %c0_12 = arith.constant 0 : index
    %8 = vector.load %arg4[%c0_10, %c0_11, %c0_12] : memref<9x8x2xf32, #tpu.memory_space<vmem>>, vector<1x8x2xf32>
    %9 = vector.shape_cast %8 : vector<1x8x2xf32> to vector<8x2xf32>
    %cst_13 = arith.constant dense<0.000000e+00> : vector<8x484xf32>
    %10 = tpu.matmul %9, %7, %cst_13 {dimension_numbers = #tpu.dot_dimension_numbers<[1], [0], [0], [1], [0, 0, 1, 1], [], []>} : vector<8x2xf32>, vector<2x484xf32>, vector<8x484xf32> -> vector<8x484xf32>
    %c0_14 = arith.constant 0 : index
    %c47 = arith.constant 47 : index
    %11 = vector.load %arg16[%c0_14, %c47] : memref<8x622xf32, #tpu.memory_space<vmem>>, vector<2x484xf32>
    %c1 = arith.constant 1 : index
    %c0_15 = arith.constant 0 : index
    %c0_16 = arith.constant 0 : index
    %12 = vector.load %arg4[%c1, %c0_15, %c0_16] : memref<9x8x2xf32, #tpu.memory_space<vmem>>, vector<1x8x2xf32>
    %13 = vector.shape_cast %12 : vector<1x8x2xf32> to vector<8x2xf32>
    %cst_17 = arith.constant dense<0.000000e+00> : vector<8x484xf32>
    %14 = tpu.matmul %13, %11, %cst_17 {dimension_numbers = #tpu.dot_dimension_numbers<[1], [0], [0], [1], [0, 0, 1, 1], [], []>} : vector<8x2xf32>, vector<2x484xf32>, vector<8x484xf32> -> vector<8x484xf32>
    %15 = arith.addf %10, %14 : vector<8x484xf32>
    %c0_18 = arith.constant 0 : index
    %c48 = arith.constant 48 : index
    %16 = vector.load %arg16[%c0_18, %c48] : memref<8x622xf32, #tpu.memory_space<vmem>>, vector<2x484xf32>
    %c2 = arith.constant 2 : index
    %c0_19 = arith.constant 0 : index
    %c0_20 = arith.constant 0 : index
    %17 = vector.load %arg4[%c2, %c0_19, %c0_20] : memref<9x8x2xf32, #tpu.memory_space<vmem>>, vector<1x8x2xf32>
    %18 = vector.shape_cast %17 : vector<1x8x2xf32> to vector<8x2xf32>
    %cst_21 = arith.constant dense<0.000000e+00> : vector<8x484xf32>
    %19 = tpu.matmul %18, %16, %cst_21 {dimension_numbers = #tpu.dot_dimension_numbers<[1], [0], [0], [1], [0, 0, 1, 1], [], []>} : vector<8x2xf32>, vector<2x484xf32>, vector<8x484xf32> -> vector<8x484xf32>
    %20 = arith.addf %15, %19 : vector<8x484xf32>
    %c0_22 = arith.constant 0 : index
    %c68 = arith.constant 68 : index
    %21 = vector.load %arg16[%c0_22, %c68] : memref<8x622xf32, #tpu.memory_space<vmem>>, vector<2x484xf32>
    %c3 = arith.constant 3 : index
    %c0_23 = arith.constant 0 : index
    %c0_24 = arith.constant 0 : index
    %22 = vector.load %arg4[%c3, %c0_23, %c0_24] : memref<9x8x2xf32, #tpu.memory_space<vmem>>, vector<1x8x2xf32>
    %23 = vector.shape_cast %22 : vector<1x8x2xf32> to vector<8x2xf32>
    %cst_25 = arith.constant dense<0.000000e+00> : vector<8x484xf32>
    %24 = tpu.matmul %23, %21, %cst_25 {dimension_numbers = #tpu.dot_dimension_numbers<[1], [0], [0], [1], [0, 0, 1, 1], [], []>} : vector<8x2xf32>, vector<2x484xf32>, vector<8x484xf32> -> vector<8x484xf32>
    %25 = arith.addf %20, %24 : vector<8x484xf32>
    %c0_26 = arith.constant 0 : index
    %c69_27 = arith.constant 69 : index
    %26 = vector.load %arg16[%c0_26, %c69_27] : memref<8x622xf32, #tpu.memory_space<vmem>>, vector<2x484xf32>
    %c4 = arith.constant 4 : index
    %c0_28 = arith.constant 0 : index
    %c0_29 = arith.constant 0 : index
    %27 = vector.load %arg4[%c4, %c0_28, %c0_29] : memref<9x8x2xf32, #tpu.memory_space<vmem>>, vector<1x8x2xf32>
    %28 = vector.shape_cast %27 : vector<1x8x2xf32> to vector<8x2xf32>
    %cst_30 = arith.constant dense<0.000000e+00> : vector<8x484xf32>
    %29 = tpu.matmul %28, %26, %cst_30 {dimension_numbers = #tpu.dot_dimension_numbers<[1], [0], [0], [1], [0, 0, 1, 1], [], []>} : vector<8x2xf32>, vector<2x484xf32>, vector<8x484xf32> -> vector<8x484xf32>
    %30 = arith.addf %25, %29 : vector<8x484xf32>
    %c0_31 = arith.constant 0 : index
    %c70 = arith.constant 70 : index
    %31 = vector.load %arg16[%c0_31, %c70] : memref<8x622xf32, #tpu.memory_space<vmem>>, vector<2x484xf32>
    %c5 = arith.constant 5 : index
    %c0_32 = arith.constant 0 : index
    %c0_33 = arith.constant 0 : index
    %32 = vector.load %arg4[%c5, %c0_32, %c0_33] : memref<9x8x2xf32, #tpu.memory_space<vmem>>, vector<1x8x2xf32>
    %33 = vector.shape_cast %32 : vector<1x8x2xf32> to vector<8x2xf32>
    %cst_34 = arith.constant dense<0.000000e+00> : vector<8x484xf32>
    %34 = tpu.matmul %33, %31, %cst_34 {dimension_numbers = #tpu.dot_dimension_numbers<[1], [0], [0], [1], [0, 0, 1, 1], [], []>} : vector<8x2xf32>, vector<2x484xf32>, vector<8x484xf32> -> vector<8x484xf32>
    %35 = arith.addf %30, %34 : vector<8x484xf32>
    %c0_35 = arith.constant 0 : index
    %c90 = arith.constant 90 : index
    %36 = vector.load %arg16[%c0_35, %c90] : memref<8x622xf32, #tpu.memory_space<vmem>>, vector<2x484xf32>
    %c6 = arith.constant 6 : index
    %c0_36 = arith.constant 0 : index
    %c0_37 = arith.constant 0 : index
    %37 = vector.load %arg4[%c6, %c0_36, %c0_37] : memref<9x8x2xf32, #tpu.memory_space<vmem>>, vector<1x8x2xf32>
    %38 = vector.shape_cast %37 : vector<1x8x2xf32> to vector<8x2xf32>
    %cst_38 = arith.constant dense<0.000000e+00> : vector<8x484xf32>
    %39 = tpu.matmul %38, %36, %cst_38 {dimension_numbers = #tpu.dot_dimension_numbers<[1], [0], [0], [1], [0, 0, 1, 1], [], []>} : vector<8x2xf32>, vector<2x484xf32>, vector<8x484xf32> -> vector<8x484xf32>
    %40 = arith.addf %35, %39 : vector<8x484xf32>
    %c0_39 = arith.constant 0 : index
    %c91 = arith.constant 91 : index
    %41 = vector.load %arg16[%c0_39, %c91] : memref<8x622xf32, #tpu.memory_space<vmem>>, vector<2x484xf32>
    %c7 = arith.constant 7 : index
    %c0_40 = arith.constant 0 : index
    %c0_41 = arith.constant 0 : index
    %42 = vector.load %arg4[%c7, %c0_40, %c0_41] : memref<9x8x2xf32, #tpu.memory_space<vmem>>, vector<1x8x2xf32>
    %43 = vector.shape_cast %42 : vector<1x8x2xf32> to vector<8x2xf32>
    %cst_42 = arith.constant dense<0.000000e+00> : vector<8x484xf32>
    %44 = tpu.matmul %43, %41, %cst_42 {dimension_numbers = #tpu.dot_dimension_numbers<[1], [0], [0], [1], [0, 0, 1, 1], [], []>} : vector<8x2xf32>, vector<2x484xf32>, vector<8x484xf32> -> vector<8x484xf32>
    %45 = arith.addf %40, %44 : vector<8x484xf32>
    %c0_43 = arith.constant 0 : index
    %c92 = arith.constant 92 : index
    %46 = vector.load %arg16[%c0_43, %c92] : memref<8x622xf32, #tpu.memory_space<vmem>>, vector<2x484xf32>
    %c8 = arith.constant 8 : index
    %c0_44 = arith.constant 0 : index
    %c0_45 = arith.constant 0 : index
    %47 = vector.load %arg4[%c8, %c0_44, %c0_45] : memref<9x8x2xf32, #tpu.memory_space<vmem>>, vector<1x8x2xf32>
    %48 = vector.shape_cast %47 : vector<1x8x2xf32> to vector<8x2xf32>
    %cst_46 = arith.constant dense<0.000000e+00> : vector<8x484xf32>
    %49 = tpu.matmul %48, %46, %cst_46 {dimension_numbers = #tpu.dot_dimension_numbers<[1], [0], [0], [1], [0, 0, 1, 1], [], []>} : vector<8x2xf32>, vector<2x484xf32>, vector<8x484xf32> -> vector<8x484xf32>
    %50 = arith.addf %45, %49 : vector<8x484xf32>
    %c0_47 = arith.constant 0 : index
    %c0_48 = arith.constant 0 : index
    %51 = vector.load %arg5[%c0_47, %c0_48] : memref<8x1xf32, #tpu.memory_space<vmem>>, vector<8x1xf32>
    %52 = vector.broadcast %51 : vector<8x1xf32> to vector<8x484xf32>
    %53 = arith.addf %50, %52 : vector<8x484xf32>
    %cst_49 = arith.constant 0.00999999977 : f32
    %54 = vector.broadcast %cst_49 : f32 to vector<8x484xf32>
    %55 = arith.mulf %54, %53 : vector<8x484xf32>
    %56 = arith.maximumf %53, %55 : vector<8x484xf32>
    %57 = vector.broadcast %3 : vector<1x484xf32> to vector<8x484xf32>
    %58 = arith.mulf %56, %57 : vector<8x484xf32>
    %c0_50 = arith.constant 0 : index
    %c69_51 = arith.constant 69 : index
    %59 = vector.load %arg16[%c0_50, %c69_51] : memref<8x622xf32, #tpu.memory_space<vmem>>, vector<8x484xf32>
    tpu.vector_store %arg16[%c0_50, %c69_51], %58 {strides = array<i32>} : memref<8x622xf32, #tpu.memory_space<vmem>>, vector<8x484xf32>,
    %c0_52 = arith.constant 0 : index
    %c46_53 = arith.constant 46 : index
    %60 = vector.load %arg16[%c0_52, %c46_53] : memref<8x622xf32, #tpu.memory_space<vmem>>, vector<8x484xf32>
    %c0_54 = arith.constant 0 : index
    %c0_55 = arith.constant 0 : index
    %c0_56 = arith.constant 0 : index
    %61 = vector.load %arg6[%c0_54, %c0_55, %c0_56] : memref<9x8x8xf32, #tpu.memory_space<vmem>>, vector<1x8x8xf32>
    %62 = vector.shape_cast %61 : vector<1x8x8xf32> to vector<8x8xf32>
    %cst_57 = arith.constant dense<0.000000e+00> : vector<8x484xf32>
    %63 = tpu.matmul %62, %60, %cst_57 {dimension_numbers = #tpu.dot_dimension_numbers<[1], [0], [0], [1], [0, 0, 1, 1], [], []>} : vector<8x8xf32>, vector<8x484xf32>, vector<8x484xf32> -> vector<8x484xf32>
    %c0_58 = arith.constant 0 : index
    %c47_59 = arith.constant 47 : index
    %64 = vector.load %arg16[%c0_58, %c47_59] : memref<8x622xf32, #tpu.memory_space<vmem>>, vector<8x484xf32>
    %c1_60 = arith.constant 1 : index
    %c0_61 = arith.constant 0 : index
    %c0_62 = arith.constant 0 : index
    %65 = vector.load %arg6[%c1_60, %c0_61, %c0_62] : memref<9x8x8xf32, #tpu.memory_space<vmem>>, vector<1x8x8xf32>
    %66 = vector.shape_cast %65 : vector<1x8x8xf32> to vector<8x8xf32>
    %cst_63 = arith.constant dense<0.000000e+00> : vector<8x484xf32>
    %67 = tpu.matmul %66, %64, %cst_63 {dimension_numbers = #tpu.dot_dimension_numbers<[1], [0], [0], [1], [0, 0, 1, 1], [], []>} : vector<8x8xf32>, vector<8x484xf32>, vector<8x484xf32> -> vector<8x484xf32>
    %68 = arith.addf %63, %67 : vector<8x484xf32>
    %c0_64 = arith.constant 0 : index
    %c48_65 = arith.constant 48 : index
    %69 = vector.load %arg16[%c0_64, %c48_65] : memref<8x622xf32, #tpu.memory_space<vmem>>, vector<8x484xf32>
    %c2_66 = arith.constant 2 : index
    %c0_67 = arith.constant 0 : index
    %c0_68 = arith.constant 0 : index
    %70 = vector.load %arg6[%c2_66, %c0_67, %c0_68] : memref<9x8x8xf32, #tpu.memory_space<vmem>>, vector<1x8x8xf32>
    %71 = vector.shape_cast %70 : vector<1x8x8xf32> to vector<8x8xf32>
    %cst_69 = arith.constant dense<0.000000e+00> : vector<8x484xf32>
    %72 = tpu.matmul %71, %69, %cst_69 {dimension_numbers = #tpu.dot_dimension_numbers<[1], [0], [0], [1], [0, 0, 1, 1], [], []>} : vector<8x8xf32>, vector<8x484xf32>, vector<8x484xf32> -> vector<8x484xf32>
    %73 = arith.addf %68, %72 : vector<8x484xf32>
    %c0_70 = arith.constant 0 : index
    %c68_71 = arith.constant 68 : index
    %74 = vector.load %arg16[%c0_70, %c68_71] : memref<8x622xf32, #tpu.memory_space<vmem>>, vector<8x484xf32>
    %c3_72 = arith.constant 3 : index
    %c0_73 = arith.constant 0 : index
    %c0_74 = arith.constant 0 : index
    %75 = vector.load %arg6[%c3_72, %c0_73, %c0_74] : memref<9x8x8xf32, #tpu.memory_space<vmem>>, vector<1x8x8xf32>
    %76 = vector.shape_cast %75 : vector<1x8x8xf32> to vector<8x8xf32>
    %cst_75 = arith.constant dense<0.000000e+00> : vector<8x484xf32>
    %77 = tpu.matmul %76, %74, %cst_75 {dimension_numbers = #tpu.dot_dimension_numbers<[1], [0], [0], [1], [0, 0, 1, 1], [], []>} : vector<8x8xf32>, vector<8x484xf32>, vector<8x484xf32> -> vector<8x484xf32>
    %78 = arith.addf %73, %77 : vector<8x484xf32>
    %c0_76 = arith.constant 0 : index
    %c69_77 = arith.constant 69 : index
    %79 = vector.load %arg16[%c0_76, %c69_77] : memref<8x622xf32, #tpu.memory_space<vmem>>, vector<8x484xf32>
    %c4_78 = arith.constant 4 : index
    %c0_79 = arith.constant 0 : index
    %c0_80 = arith.constant 0 : index
    %80 = vector.load %arg6[%c4_78, %c0_79, %c0_80] : memref<9x8x8xf32, #tpu.memory_space<vmem>>, vector<1x8x8xf32>
    %81 = vector.shape_cast %80 : vector<1x8x8xf32> to vector<8x8xf32>
    %cst_81 = arith.constant dense<0.000000e+00> : vector<8x484xf32>
    %82 = tpu.matmul %81, %79, %cst_81 {dimension_numbers = #tpu.dot_dimension_numbers<[1], [0], [0], [1], [0, 0, 1, 1], [], []>} : vector<8x8xf32>, vector<8x484xf32>, vector<8x484xf32> -> vector<8x484xf32>
    %83 = arith.addf %78, %82 : vector<8x484xf32>
    %c0_82 = arith.constant 0 : index
    %c70_83 = arith.constant 70 : index
    %84 = vector.load %arg16[%c0_82, %c70_83] : memref<8x622xf32, #tpu.memory_space<vmem>>, vector<8x484xf32>
    %c5_84 = arith.constant 5 : index
    %c0_85 = arith.constant 0 : index
    %c0_86 = arith.constant 0 : index
    %85 = vector.load %arg6[%c5_84, %c0_85, %c0_86] : memref<9x8x8xf32, #tpu.memory_space<vmem>>, vector<1x8x8xf32>
    %86 = vector.shape_cast %85 : vector<1x8x8xf32> to vector<8x8xf32>
    %cst_87 = arith.constant dense<0.000000e+00> : vector<8x484xf32>
    %87 = tpu.matmul %86, %84, %cst_87 {dimension_numbers = #tpu.dot_dimension_numbers<[1], [0], [0], [1], [0, 0, 1, 1], [], []>} : vector<8x8xf32>, vector<8x484xf32>, vector<8x484xf32> -> vector<8x484xf32>
    %88 = arith.addf %83, %87 : vector<8x484xf32>
    %c0_88 = arith.constant 0 : index
    %c90_89 = arith.constant 90 : index
    %89 = vector.load %arg16[%c0_88, %c90_89] : memref<8x622xf32, #tpu.memory_space<vmem>>, vector<8x484xf32>
    %c6_90 = arith.constant 6 : index
    %c0_91 = arith.constant 0 : index
    %c0_92 = arith.constant 0 : index
    %90 = vector.load %arg6[%c6_90, %c0_91, %c0_92] : memref<9x8x8xf32, #tpu.memory_space<vmem>>, vector<1x8x8xf32>
    %91 = vector.shape_cast %90 : vector<1x8x8xf32> to vector<8x8xf32>
    %cst_93 = arith.constant dense<0.000000e+00> : vector<8x484xf32>
    %92 = tpu.matmul %91, %89, %cst_93 {dimension_numbers = #tpu.dot_dimension_numbers<[1], [0], [0], [1], [0, 0, 1, 1], [], []>} : vector<8x8xf32>, vector<8x484xf32>, vector<8x484xf32> -> vector<8x484xf32>
    %93 = arith.addf %88, %92 : vector<8x484xf32>
    %c0_94 = arith.constant 0 : index
    %c91_95 = arith.constant 91 : index
    %94 = vector.load %arg16[%c0_94, %c91_95] : memref<8x622xf32, #tpu.memory_space<vmem>>, vector<8x484xf32>
    %c7_96 = arith.constant 7 : index
    %c0_97 = arith.constant 0 : index
    %c0_98 = arith.constant 0 : index
    %95 = vector.load %arg6[%c7_96, %c0_97, %c0_98] : memref<9x8x8xf32, #tpu.memory_space<vmem>>, vector<1x8x8xf32>
    %96 = vector.shape_cast %95 : vector<1x8x8xf32> to vector<8x8xf32>
    %cst_99 = arith.constant dense<0.000000e+00> : vector<8x484xf32>
    %97 = tpu.matmul %96, %94, %cst_99 {dimension_numbers = #tpu.dot_dimension_numbers<[1], [0], [0], [1], [0, 0, 1, 1], [], []>} : vector<8x8xf32>, vector<8x484xf32>, vector<8x484xf32> -> vector<8x484xf32>
    %98 = arith.addf %93, %97 : vector<8x484xf32>
    %c0_100 = arith.constant 0 : index
    %c92_101 = arith.constant 92 : index
    %99 = vector.load %arg16[%c0_100, %c92_101] : memref<8x622xf32, #tpu.memory_space<vmem>>, vector<8x484xf32>
    %c8_102 = arith.constant 8 : index
    %c0_103 = arith.constant 0 : index
    %c0_104 = arith.constant 0 : index
    %100 = vector.load %arg6[%c8_102, %c0_103, %c0_104] : memref<9x8x8xf32, #tpu.memory_space<vmem>>, vector<1x8x8xf32>
    %101 = vector.shape_cast %100 : vector<1x8x8xf32> to vector<8x8xf32>
    %cst_105 = arith.constant dense<0.000000e+00> : vector<8x484xf32>
    %102 = tpu.matmul %101, %99, %cst_105 {dimension_numbers = #tpu.dot_dimension_numbers<[1], [0], [0], [1], [0, 0, 1, 1], [], []>} : vector<8x8xf32>, vector<8x484xf32>, vector<8x484xf32> -> vector<8x484xf32>
    %103 = arith.addf %98, %102 : vector<8x484xf32>
    %c0_106 = arith.constant 0 : index
    %c0_107 = arith.constant 0 : index
    %104 = vector.load %arg7[%c0_106, %c0_107] : memref<8x1xf32, #tpu.memory_space<vmem>>, vector<8x1xf32>
    %105 = vector.broadcast %104 : vector<8x1xf32> to vector<8x484xf32>
    %106 = arith.addf %103, %105 : vector<8x484xf32>
    %cst_108 = arith.constant 0.00999999977 : f32
    %107 = vector.broadcast %cst_108 : f32 to vector<8x484xf32>
    %108 = arith.mulf %107, %106 : vector<8x484xf32>
    %109 = arith.maximumf %106, %108 : vector<8x484xf32>
    %110 = vector.broadcast %3 : vector<1x484xf32> to vector<8x484xf32>
    %111 = arith.mulf %109, %110 : vector<8x484xf32>
    %c0_109 = arith.constant 0 : index
    %c69_110 = arith.constant 69 : index
    %112 = vector.load %arg16[%c0_109, %c69_110] : memref<8x622xf32, #tpu.memory_space<vmem>>, vector<8x484xf32>
    tpu.vector_store %arg16[%c0_109, %c69_110], %111 {strides = array<i32>} : memref<8x622xf32, #tpu.memory_space<vmem>>, vector<8x484xf32>,
    %c0_111 = arith.constant 0 : index
    %c23 = arith.constant 23 : index
    %113 = vector.load %arg16[%c0_111, %c23] : memref<8x622xf32, #tpu.memory_space<vmem>>, vector<8x484xf32>
    %c0_112 = arith.constant 0 : index
    %c0_113 = arith.constant 0 : index
    %c0_114 = arith.constant 0 : index
    %114 = vector.load %arg8[%c0_112, %c0_113, %c0_114] : memref<9x8x8xf32, #tpu.memory_space<vmem>>, vector<1x8x8xf32>
    %115 = vector.shape_cast %114 : vector<1x8x8xf32> to vector<8x8xf32>
    %cst_115 = arith.constant dense<0.000000e+00> : vector<8x484xf32>
    %116 = tpu.matmul %115, %113, %cst_115 {dimension_numbers = #tpu.dot_dimension_numbers<[1], [0], [0], [1], [0, 0, 1, 1], [], []>} : vector<8x8xf32>, vector<8x484xf32>, vector<8x484xf32> -> vector<8x484xf32>
    %c0_116 = arith.constant 0 : index
    %c25 = arith.constant 25 : index
    %117 = vector.load %arg16[%c0_116, %c25] : memref<8x622xf32, #tpu.memory_space<vmem>>, vector<8x484xf32>
    %c1_117 = arith.constant 1 : index
    %c0_118 = arith.constant 0 : index
    %c0_119 = arith.constant 0 : index
    %118 = vector.load %arg8[%c1_117, %c0_118, %c0_119] : memref<9x8x8xf32, #tpu.memory_space<vmem>>, vector<1x8x8xf32>
    %119 = vector.shape_cast %118 : vector<1x8x8xf32> to vector<8x8xf32>
    %cst_120 = arith.constant dense<0.000000e+00> : vector<8x484xf32>
    %120 = tpu.matmul %119, %117, %cst_120 {dimension_numbers = #tpu.dot_dimension_numbers<[1], [0], [0], [1], [0, 0, 1, 1], [], []>} : vector<8x8xf32>, vector<8x484xf32>, vector<8x484xf32> -> vector<8x484xf32>
    %121 = arith.addf %116, %120 : vector<8x484xf32>
    %c0_121 = arith.constant 0 : index
    %c27 = arith.constant 27 : index
    %122 = vector.load %arg16[%c0_121, %c27] : memref<8x622xf32, #tpu.memory_space<vmem>>, vector<8x484xf32>
    %c2_122 = arith.constant 2 : index
    %c0_123 = arith.constant 0 : index
    %c0_124 = arith.constant 0 : index
    %123 = vector.load %arg8[%c2_122, %c0_123, %c0_124] : memref<9x8x8xf32, #tpu.memory_space<vmem>>, vector<1x8x8xf32>
    %124 = vector.shape_cast %123 : vector<1x8x8xf32> to vector<8x8xf32>
    %cst_125 = arith.constant dense<0.000000e+00> : vector<8x484xf32>
    %125 = tpu.matmul %124, %122, %cst_125 {dimension_numbers = #tpu.dot_dimension_numbers<[1], [0], [0], [1], [0, 0, 1, 1], [], []>} : vector<8x8xf32>, vector<8x484xf32>, vector<8x484xf32> -> vector<8x484xf32>
    %126 = arith.addf %121, %125 : vector<8x484xf32>
    %c0_126 = arith.constant 0 : index
    %c67 = arith.constant 67 : index
    %127 = vector.load %arg16[%c0_126, %c67] : memref<8x622xf32, #tpu.memory_space<vmem>>, vector<8x484xf32>
    %c3_127 = arith.constant 3 : index
    %c0_128 = arith.constant 0 : index
    %c0_129 = arith.constant 0 : index
    %128 = vector.load %arg8[%c3_127, %c0_128, %c0_129] : memref<9x8x8xf32, #tpu.memory_space<vmem>>, vector<1x8x8xf32>
    %129 = vector.shape_cast %128 : vector<1x8x8xf32> to vector<8x8xf32>
    %cst_130 = arith.constant dense<0.000000e+00> : vector<8x484xf32>
    %130 = tpu.matmul %129, %127, %cst_130 {dimension_numbers = #tpu.dot_dimension_numbers<[1], [0], [0], [1], [0, 0, 1, 1], [], []>} : vector<8x8xf32>, vector<8x484xf32>, vector<8x484xf32> -> vector<8x484xf32>
    %131 = arith.addf %126, %130 : vector<8x484xf32>
    %c0_131 = arith.constant 0 : index
    %c69_132 = arith.constant 69 : index
    %132 = vector.load %arg16[%c0_131, %c69_132] : memref<8x622xf32, #tpu.memory_space<vmem>>, vector<8x484xf32>
    %c4_133 = arith.constant 4 : index
    %c0_134 = arith.constant 0 : index
    %c0_135 = arith.constant 0 : index
    %133 = vector.load %arg8[%c4_133, %c0_134, %c0_135] : memref<9x8x8xf32, #tpu.memory_space<vmem>>, vector<1x8x8xf32>
    %134 = vector.shape_cast %133 : vector<1x8x8xf32> to vector<8x8xf32>
    %cst_136 = arith.constant dense<0.000000e+00> : vector<8x484xf32>
    %135 = tpu.matmul %134, %132, %cst_136 {dimension_numbers = #tpu.dot_dimension_numbers<[1], [0], [0], [1], [0, 0, 1, 1], [], []>} : vector<8x8xf32>, vector<8x484xf32>, vector<8x484xf32> -> vector<8x484xf32>
    %136 = arith.addf %131, %135 : vector<8x484xf32>
    %c0_137 = arith.constant 0 : index
    %c71 = arith.constant 71 : index
    %137 = vector.load %arg16[%c0_137, %c71] : memref<8x622xf32, #tpu.memory_space<vmem>>, vector<8x484xf32>
    %c5_138 = arith.constant 5 : index
    %c0_139 = arith.constant 0 : index
    %c0_140 = arith.constant 0 : index
    %138 = vector.load %arg8[%c5_138, %c0_139, %c0_140] : memref<9x8x8xf32, #tpu.memory_space<vmem>>, vector<1x8x8xf32>
    %139 = vector.shape_cast %138 : vector<1x8x8xf32> to vector<8x8xf32>
    %cst_141 = arith.constant dense<0.000000e+00> : vector<8x484xf32>
    %140 = tpu.matmul %139, %137, %cst_141 {dimension_numbers = #tpu.dot_dimension_numbers<[1], [0], [0], [1], [0, 0, 1, 1], [], []>} : vector<8x8xf32>, vector<8x484xf32>, vector<8x484xf32> -> vector<8x484xf32>
    %141 = arith.addf %136, %140 : vector<8x484xf32>
    %c0_142 = arith.constant 0 : index
    %c111 = arith.constant 111 : index
    %142 = vector.load %arg16[%c0_142, %c111] : memref<8x622xf32, #tpu.memory_space<vmem>>, vector<8x484xf32>
    %c6_143 = arith.constant 6 : index
    %c0_144 = arith.constant 0 : index
    %c0_145 = arith.constant 0 : index
    %143 = vector.load %arg8[%c6_143, %c0_144, %c0_145] : memref<9x8x8xf32, #tpu.memory_space<vmem>>, vector<1x8x8xf32>
    %144 = vector.shape_cast %143 : vector<1x8x8xf32> to vector<8x8xf32>
    %cst_146 = arith.constant dense<0.000000e+00> : vector<8x484xf32>
    %145 = tpu.matmul %144, %142, %cst_146 {dimension_numbers = #tpu.dot_dimension_numbers<[1], [0], [0], [1], [0, 0, 1, 1], [], []>} : vector<8x8xf32>, vector<8x484xf32>, vector<8x484xf32> -> vector<8x484xf32>
    %146 = arith.addf %141, %145 : vector<8x484xf32>
    %c0_147 = arith.constant 0 : index
    %c113 = arith.constant 113 : index
    %147 = vector.load %arg16[%c0_147, %c113] : memref<8x622xf32, #tpu.memory_space<vmem>>, vector<8x484xf32>
    %c7_148 = arith.constant 7 : index
    %c0_149 = arith.constant 0 : index
    %c0_150 = arith.constant 0 : index
    %148 = vector.load %arg8[%c7_148, %c0_149, %c0_150] : memref<9x8x8xf32, #tpu.memory_space<vmem>>, vector<1x8x8xf32>
    %149 = vector.shape_cast %148 : vector<1x8x8xf32> to vector<8x8xf32>
    %cst_151 = arith.constant dense<0.000000e+00> : vector<8x484xf32>
    %150 = tpu.matmul %149, %147, %cst_151 {dimension_numbers = #tpu.dot_dimension_numbers<[1], [0], [0], [1], [0, 0, 1, 1], [], []>} : vector<8x8xf32>, vector<8x484xf32>, vector<8x484xf32> -> vector<8x484xf32>
    %151 = arith.addf %146, %150 : vector<8x484xf32>
    %c0_152 = arith.constant 0 : index
    %c115 = arith.constant 115 : index
    %152 = vector.load %arg16[%c0_152, %c115] : memref<8x622xf32, #tpu.memory_space<vmem>>, vector<8x484xf32>
    %c8_153 = arith.constant 8 : index
    %c0_154 = arith.constant 0 : index
    %c0_155 = arith.constant 0 : index
    %153 = vector.load %arg8[%c8_153, %c0_154, %c0_155] : memref<9x8x8xf32, #tpu.memory_space<vmem>>, vector<1x8x8xf32>
    %154 = vector.shape_cast %153 : vector<1x8x8xf32> to vector<8x8xf32>
    %cst_156 = arith.constant dense<0.000000e+00> : vector<8x484xf32>
    %155 = tpu.matmul %154, %152, %cst_156 {dimension_numbers = #tpu.dot_dimension_numbers<[1], [0], [0], [1], [0, 0, 1, 1], [], []>} : vector<8x8xf32>, vector<8x484xf32>, vector<8x484xf32> -> vector<8x484xf32>
    %156 = arith.addf %151, %155 : vector<8x484xf32>
    %c0_157 = arith.constant 0 : index
    %c0_158 = arith.constant 0 : index
    %157 = vector.load %arg9[%c0_157, %c0_158] : memref<8x1xf32, #tpu.memory_space<vmem>>, vector<8x1xf32>
    %158 = vector.broadcast %157 : vector<8x1xf32> to vector<8x484xf32>
    %159 = arith.addf %156, %158 : vector<8x484xf32>
    %cst_159 = arith.constant 0.00999999977 : f32
    %160 = vector.broadcast %cst_159 : f32 to vector<8x484xf32>
    %161 = arith.mulf %160, %159 : vector<8x484xf32>
    %162 = arith.maximumf %159, %161 : vector<8x484xf32>
    %163 = vector.broadcast %3 : vector<1x484xf32> to vector<8x484xf32>
    %164 = arith.mulf %162, %163 : vector<8x484xf32>
    %c0_160 = arith.constant 0 : index
    %c69_161 = arith.constant 69 : index
    %165 = vector.load %arg16[%c0_160, %c69_161] : memref<8x622xf32, #tpu.memory_space<vmem>>, vector<8x484xf32>
    tpu.vector_store %arg16[%c0_160, %c69_161], %164 {strides = array<i32>} : memref<8x622xf32, #tpu.memory_space<vmem>>, vector<8x484xf32>,
    %c0_162 = arith.constant 0 : index
    %c0_163 = arith.constant 0 : index
    %166 = vector.load %arg16[%c0_162, %c0_163] : memref<8x622xf32, #tpu.memory_space<vmem>>, vector<8x484xf32>
    %c0_164 = arith.constant 0 : index
    %c0_165 = arith.constant 0 : index
    %c0_166 = arith.constant 0 : index
    %167 = vector.load %arg10[%c0_164, %c0_165, %c0_166] : memref<9x8x8xf32, #tpu.memory_space<vmem>>, vector<1x8x8xf32>
    %168 = vector.shape_cast %167 : vector<1x8x8xf32> to vector<8x8xf32>
    %cst_167 = arith.constant dense<0.000000e+00> : vector<8x484xf32>
    %169 = tpu.matmul %168, %166, %cst_167 {dimension_numbers = #tpu.dot_dimension_numbers<[1], [0], [0], [1], [0, 0, 1, 1], [], []>} : vector<8x8xf32>, vector<8x484xf32>, vector<8x484xf32> -> vector<8x484xf32>
    %c0_168 = arith.constant 0 : index
    %c3_169 = arith.constant 3 : index
    %170 = vector.load %arg16[%c0_168, %c3_169] : memref<8x622xf32, #tpu.memory_space<vmem>>, vector<8x484xf32>
    %c1_170 = arith.constant 1 : index
    %c0_171 = arith.constant 0 : index
    %c0_172 = arith.constant 0 : index
    %171 = vector.load %arg10[%c1_170, %c0_171, %c0_172] : memref<9x8x8xf32, #tpu.memory_space<vmem>>, vector<1x8x8xf32>
    %172 = vector.shape_cast %171 : vector<1x8x8xf32> to vector<8x8xf32>
    %cst_173 = arith.constant dense<0.000000e+00> : vector<8x484xf32>
    %173 = tpu.matmul %172, %170, %cst_173 {dimension_numbers = #tpu.dot_dimension_numbers<[1], [0], [0], [1], [0, 0, 1, 1], [], []>} : vector<8x8xf32>, vector<8x484xf32>, vector<8x484xf32> -> vector<8x484xf32>
    %174 = arith.addf %169, %173 : vector<8x484xf32>
    %c0_174 = arith.constant 0 : index
    %c6_175 = arith.constant 6 : index
    %175 = vector.load %arg16[%c0_174, %c6_175] : memref<8x622xf32, #tpu.memory_space<vmem>>, vector<8x484xf32>
    %c2_176 = arith.constant 2 : index
    %c0_177 = arith.constant 0 : index
    %c0_178 = arith.constant 0 : index
    %176 = vector.load %arg10[%c2_176, %c0_177, %c0_178] : memref<9x8x8xf32, #tpu.memory_space<vmem>>, vector<1x8x8xf32>
    %177 = vector.shape_cast %176 : vector<1x8x8xf32> to vector<8x8xf32>
    %cst_179 = arith.constant dense<0.000000e+00> : vector<8x484xf32>
    %178 = tpu.matmul %177, %175, %cst_179 {dimension_numbers = #tpu.dot_dimension_numbers<[1], [0], [0], [1], [0, 0, 1, 1], [], []>} : vector<8x8xf32>, vector<8x484xf32>, vector<8x484xf32> -> vector<8x484xf32>
    %179 = arith.addf %174, %178 : vector<8x484xf32>
    %c0_180 = arith.constant 0 : index
    %c66 = arith.constant 66 : index
    %180 = vector.load %arg16[%c0_180, %c66] : memref<8x622xf32, #tpu.memory_space<vmem>>, vector<8x484xf32>
    %c3_181 = arith.constant 3 : index
    %c0_182 = arith.constant 0 : index
    %c0_183 = arith.constant 0 : index
    %181 = vector.load %arg10[%c3_181, %c0_182, %c0_183] : memref<9x8x8xf32, #tpu.memory_space<vmem>>, vector<1x8x8xf32>
    %182 = vector.shape_cast %181 : vector<1x8x8xf32> to vector<8x8xf32>
    %cst_184 = arith.constant dense<0.000000e+00> : vector<8x484xf32>
    %183 = tpu.matmul %182, %180, %cst_184 {dimension_numbers = #tpu.dot_dimension_numbers<[1], [0], [0], [1], [0, 0, 1, 1], [], []>} : vector<8x8xf32>, vector<8x484xf32>, vector<8x484xf32> -> vector<8x484xf32>
    %184 = arith.addf %179, %183 : vector<8x484xf32>
    %c0_185 = arith.constant 0 : index
    %c69_186 = arith.constant 69 : index
    %185 = vector.load %arg16[%c0_185, %c69_186] : memref<8x622xf32, #tpu.memory_space<vmem>>, vector<8x484xf32>
    %c4_187 = arith.constant 4 : index
    %c0_188 = arith.constant 0 : index
    %c0_189 = arith.constant 0 : index
    %186 = vector.load %arg10[%c4_187, %c0_188, %c0_189] : memref<9x8x8xf32, #tpu.memory_space<vmem>>, vector<1x8x8xf32>
    %187 = vector.shape_cast %186 : vector<1x8x8xf32> to vector<8x8xf32>
    %cst_190 = arith.constant dense<0.000000e+00> : vector<8x484xf32>
    %188 = tpu.matmul %187, %185, %cst_190 {dimension_numbers = #tpu.dot_dimension_numbers<[1], [0], [0], [1], [0, 0, 1, 1], [], []>} : vector<8x8xf32>, vector<8x484xf32>, vector<8x484xf32> -> vector<8x484xf32>
    %189 = arith.addf %184, %188 : vector<8x484xf32>
    %c0_191 = arith.constant 0 : index
    %c72 = arith.constant 72 : index
    %190 = vector.load %arg16[%c0_191, %c72] : memref<8x622xf32, #tpu.memory_space<vmem>>, vector<8x484xf32>
    %c5_192 = arith.constant 5 : index
    %c0_193 = arith.constant 0 : index
    %c0_194 = arith.constant 0 : index
    %191 = vector.load %arg10[%c5_192, %c0_193, %c0_194] : memref<9x8x8xf32, #tpu.memory_space<vmem>>, vector<1x8x8xf32>
    %192 = vector.shape_cast %191 : vector<1x8x8xf32> to vector<8x8xf32>
    %cst_195 = arith.constant dense<0.000000e+00> : vector<8x484xf32>
    %193 = tpu.matmul %192, %190, %cst_195 {dimension_numbers = #tpu.dot_dimension_numbers<[1], [0], [0], [1], [0, 0, 1, 1], [], []>} : vector<8x8xf32>, vector<8x484xf32>, vector<8x484xf32> -> vector<8x484xf32>
    %194 = arith.addf %189, %193 : vector<8x484xf32>
    %c0_196 = arith.constant 0 : index
    %c132 = arith.constant 132 : index
    %195 = vector.load %arg16[%c0_196, %c132] : memref<8x622xf32, #tpu.memory_space<vmem>>, vector<8x484xf32>
    %c6_197 = arith.constant 6 : index
    %c0_198 = arith.constant 0 : index
    %c0_199 = arith.constant 0 : index
    %196 = vector.load %arg10[%c6_197, %c0_198, %c0_199] : memref<9x8x8xf32, #tpu.memory_space<vmem>>, vector<1x8x8xf32>
    %197 = vector.shape_cast %196 : vector<1x8x8xf32> to vector<8x8xf32>
    %cst_200 = arith.constant dense<0.000000e+00> : vector<8x484xf32>
    %198 = tpu.matmul %197, %195, %cst_200 {dimension_numbers = #tpu.dot_dimension_numbers<[1], [0], [0], [1], [0, 0, 1, 1], [], []>} : vector<8x8xf32>, vector<8x484xf32>, vector<8x484xf32> -> vector<8x484xf32>
    %199 = arith.addf %194, %198 : vector<8x484xf32>
    %c0_201 = arith.constant 0 : index
    %c135 = arith.constant 135 : index
    %200 = vector.load %arg16[%c0_201, %c135] : memref<8x622xf32, #tpu.memory_space<vmem>>, vector<8x484xf32>
    %c7_202 = arith.constant 7 : index
    %c0_203 = arith.constant 0 : index
    %c0_204 = arith.constant 0 : index
    %201 = vector.load %arg10[%c7_202, %c0_203, %c0_204] : memref<9x8x8xf32, #tpu.memory_space<vmem>>, vector<1x8x8xf32>
    %202 = vector.shape_cast %201 : vector<1x8x8xf32> to vector<8x8xf32>
    %cst_205 = arith.constant dense<0.000000e+00> : vector<8x484xf32>
    %203 = tpu.matmul %202, %200, %cst_205 {dimension_numbers = #tpu.dot_dimension_numbers<[1], [0], [0], [1], [0, 0, 1, 1], [], []>} : vector<8x8xf32>, vector<8x484xf32>, vector<8x484xf32> -> vector<8x484xf32>
    %204 = arith.addf %199, %203 : vector<8x484xf32>
    %c0_206 = arith.constant 0 : index
    %c138 = arith.constant 138 : index
    %205 = vector.load %arg16[%c0_206, %c138] : memref<8x622xf32, #tpu.memory_space<vmem>>, vector<8x484xf32>
    %c8_207 = arith.constant 8 : index
    %c0_208 = arith.constant 0 : index
    %c0_209 = arith.constant 0 : index
    %206 = vector.load %arg10[%c8_207, %c0_208, %c0_209] : memref<9x8x8xf32, #tpu.memory_space<vmem>>, vector<1x8x8xf32>
    %207 = vector.shape_cast %206 : vector<1x8x8xf32> to vector<8x8xf32>
    %cst_210 = arith.constant dense<0.000000e+00> : vector<8x484xf32>
    %208 = tpu.matmul %207, %205, %cst_210 {dimension_numbers = #tpu.dot_dimension_numbers<[1], [0], [0], [1], [0, 0, 1, 1], [], []>} : vector<8x8xf32>, vector<8x484xf32>, vector<8x484xf32> -> vector<8x484xf32>
    %209 = arith.addf %204, %208 : vector<8x484xf32>
    %c0_211 = arith.constant 0 : index
    %c0_212 = arith.constant 0 : index
    %210 = vector.load %arg11[%c0_211, %c0_212] : memref<8x1xf32, #tpu.memory_space<vmem>>, vector<8x1xf32>
    %211 = vector.broadcast %210 : vector<8x1xf32> to vector<8x484xf32>
    %212 = arith.addf %209, %211 : vector<8x484xf32>
    %cst_213 = arith.constant 0.00999999977 : f32
    %213 = vector.broadcast %cst_213 : f32 to vector<8x484xf32>
    %214 = arith.mulf %213, %212 : vector<8x484xf32>
    %215 = arith.maximumf %212, %214 : vector<8x484xf32>
    %216 = vector.broadcast %3 : vector<1x484xf32> to vector<8x484xf32>
    %217 = arith.mulf %215, %216 : vector<8x484xf32>
    %218 = arith.addf %217, %58 : vector<8x484xf32>
    %c0_214 = arith.constant 0 : index
    %c69_215 = arith.constant 69 : index
    %219 = vector.load %arg16[%c0_214, %c69_215] : memref<8x622xf32, #tpu.memory_space<vmem>>, vector<8x484xf32>
    tpu.vector_store %arg16[%c0_214, %c69_215], %218 {strides = array<i32>} : memref<8x622xf32, #tpu.memory_space<vmem>>, vector<8x484xf32>,
    %c0_216 = arith.constant 0 : index
    %c46_217 = arith.constant 46 : index
    %220 = vector.load %arg16[%c0_216, %c46_217] : memref<8x622xf32, #tpu.memory_space<vmem>>, vector<8x484xf32>
    %c0_218 = arith.constant 0 : index
    %c0_219 = arith.constant 0 : index
    %c0_220 = arith.constant 0 : index
    %221 = vector.load %arg12[%c0_218, %c0_219, %c0_220] : memref<9x2x8xf32, #tpu.memory_space<vmem>>, vector<1x2x8xf32>
    %222 = vector.shape_cast %221 : vector<1x2x8xf32> to vector<2x8xf32>
    %cst_221 = arith.constant dense<0.000000e+00> : vector<2x484xf32>
    %223 = tpu.matmul %222, %220, %cst_221 {dimension_numbers = #tpu.dot_dimension_numbers<[1], [0], [0], [1], [0, 0, 1, 1], [], []>} : vector<2x8xf32>, vector<8x484xf32>, vector<2x484xf32> -> vector<2x484xf32>
    %c0_222 = arith.constant 0 : index
    %c47_223 = arith.constant 47 : index
    %224 = vector.load %arg16[%c0_222, %c47_223] : memref<8x622xf32, #tpu.memory_space<vmem>>, vector<8x484xf32>
    %c1_224 = arith.constant 1 : index
    %c0_225 = arith.constant 0 : index
    %c0_226 = arith.constant 0 : index
    %225 = vector.load %arg12[%c1_224, %c0_225, %c0_226] : memref<9x2x8xf32, #tpu.memory_space<vmem>>, vector<1x2x8xf32>
    %226 = vector.shape_cast %225 : vector<1x2x8xf32> to vector<2x8xf32>
    %cst_227 = arith.constant dense<0.000000e+00> : vector<2x484xf32>
    %227 = tpu.matmul %226, %224, %cst_227 {dimension_numbers = #tpu.dot_dimension_numbers<[1], [0], [0], [1], [0, 0, 1, 1], [], []>} : vector<2x8xf32>, vector<8x484xf32>, vector<2x484xf32> -> vector<2x484xf32>
    %228 = arith.addf %223, %227 : vector<2x484xf32>
    %c0_228 = arith.constant 0 : index
    %c48_229 = arith.constant 48 : index
    %229 = vector.load %arg16[%c0_228, %c48_229] : memref<8x622xf32, #tpu.memory_space<vmem>>, vector<8x484xf32>
    %c2_230 = arith.constant 2 : index
    %c0_231 = arith.constant 0 : index
    %c0_232 = arith.constant 0 : index
    %230 = vector.load %arg12[%c2_230, %c0_231, %c0_232] : memref<9x2x8xf32, #tpu.memory_space<vmem>>, vector<1x2x8xf32>
    %231 = vector.shape_cast %230 : vector<1x2x8xf32> to vector<2x8xf32>
    %cst_233 = arith.constant dense<0.000000e+00> : vector<2x484xf32>
    %232 = tpu.matmul %231, %229, %cst_233 {dimension_numbers = #tpu.dot_dimension_numbers<[1], [0], [0], [1], [0, 0, 1, 1], [], []>} : vector<2x8xf32>, vector<8x484xf32>, vector<2x484xf32> -> vector<2x484xf32>
    %233 = arith.addf %228, %232 : vector<2x484xf32>
    %c0_234 = arith.constant 0 : index
    %c68_235 = arith.constant 68 : index
    %234 = vector.load %arg16[%c0_234, %c68_235] : memref<8x622xf32, #tpu.memory_space<vmem>>, vector<8x484xf32>
    %c3_236 = arith.constant 3 : index
    %c0_237 = arith.constant 0 : index
    %c0_238 = arith.constant 0 : index
    %235 = vector.load %arg12[%c3_236, %c0_237, %c0_238] : memref<9x2x8xf32, #tpu.memory_space<vmem>>, vector<1x2x8xf32>
    %236 = vector.shape_cast %235 : vector<1x2x8xf32> to vector<2x8xf32>
    %cst_239 = arith.constant dense<0.000000e+00> : vector<2x484xf32>
    %237 = tpu.matmul %236, %234, %cst_239 {dimension_numbers = #tpu.dot_dimension_numbers<[1], [0], [0], [1], [0, 0, 1, 1], [], []>} : vector<2x8xf32>, vector<8x484xf32>, vector<2x484xf32> -> vector<2x484xf32>
    %238 = arith.addf %233, %237 : vector<2x484xf32>
    %c0_240 = arith.constant 0 : index
    %c69_241 = arith.constant 69 : index
    %239 = vector.load %arg16[%c0_240, %c69_241] : memref<8x622xf32, #tpu.memory_space<vmem>>, vector<8x484xf32>
    %c4_242 = arith.constant 4 : index
    %c0_243 = arith.constant 0 : index
    %c0_244 = arith.constant 0 : index
    %240 = vector.load %arg12[%c4_242, %c0_243, %c0_244] : memref<9x2x8xf32, #tpu.memory_space<vmem>>, vector<1x2x8xf32>
    %241 = vector.shape_cast %240 : vector<1x2x8xf32> to vector<2x8xf32>
    %cst_245 = arith.constant dense<0.000000e+00> : vector<2x484xf32>
    %242 = tpu.matmul %241, %239, %cst_245 {dimension_numbers = #tpu.dot_dimension_numbers<[1], [0], [0], [1], [0, 0, 1, 1], [], []>} : vector<2x8xf32>, vector<8x484xf32>, vector<2x484xf32> -> vector<2x484xf32>
    %243 = arith.addf %238, %242 : vector<2x484xf32>
    %c0_246 = arith.constant 0 : index
    %c70_247 = arith.constant 70 : index
    %244 = vector.load %arg16[%c0_246, %c70_247] : memref<8x622xf32, #tpu.memory_space<vmem>>, vector<8x484xf32>
    %c5_248 = arith.constant 5 : index
    %c0_249 = arith.constant 0 : index
    %c0_250 = arith.constant 0 : index
    %245 = vector.load %arg12[%c5_248, %c0_249, %c0_250] : memref<9x2x8xf32, #tpu.memory_space<vmem>>, vector<1x2x8xf32>
    %246 = vector.shape_cast %245 : vector<1x2x8xf32> to vector<2x8xf32>
    %cst_251 = arith.constant dense<0.000000e+00> : vector<2x484xf32>
    %247 = tpu.matmul %246, %244, %cst_251 {dimension_numbers = #tpu.dot_dimension_numbers<[1], [0], [0], [1], [0, 0, 1, 1], [], []>} : vector<2x8xf32>, vector<8x484xf32>, vector<2x484xf32> -> vector<2x484xf32>
    %248 = arith.addf %243, %247 : vector<2x484xf32>
    %c0_252 = arith.constant 0 : index
    %c90_253 = arith.constant 90 : index
    %249 = vector.load %arg16[%c0_252, %c90_253] : memref<8x622xf32, #tpu.memory_space<vmem>>, vector<8x484xf32>
    %c6_254 = arith.constant 6 : index
    %c0_255 = arith.constant 0 : index
    %c0_256 = arith.constant 0 : index
    %250 = vector.load %arg12[%c6_254, %c0_255, %c0_256] : memref<9x2x8xf32, #tpu.memory_space<vmem>>, vector<1x2x8xf32>
    %251 = vector.shape_cast %250 : vector<1x2x8xf32> to vector<2x8xf32>
    %cst_257 = arith.constant dense<0.000000e+00> : vector<2x484xf32>
    %252 = tpu.matmul %251, %249, %cst_257 {dimension_numbers = #tpu.dot_dimension_numbers<[1], [0], [0], [1], [0, 0, 1, 1], [], []>} : vector<2x8xf32>, vector<8x484xf32>, vector<2x484xf32> -> vector<2x484xf32>
    %253 = arith.addf %248, %252 : vector<2x484xf32>
    %c0_258 = arith.constant 0 : index
    %c91_259 = arith.constant 91 : index
    %254 = vector.load %arg16[%c0_258, %c91_259] : memref<8x622xf32, #tpu.memory_space<vmem>>, vector<8x484xf32>
    %c7_260 = arith.constant 7 : index
    %c0_261 = arith.constant 0 : index
    %c0_262 = arith.constant 0 : index
    %255 = vector.load %arg12[%c7_260, %c0_261, %c0_262] : memref<9x2x8xf32, #tpu.memory_space<vmem>>, vector<1x2x8xf32>
    %256 = vector.shape_cast %255 : vector<1x2x8xf32> to vector<2x8xf32>
    %cst_263 = arith.constant dense<0.000000e+00> : vector<2x484xf32>
    %257 = tpu.matmul %256, %254, %cst_263 {dimension_numbers = #tpu.dot_dimension_numbers<[1], [0], [0], [1], [0, 0, 1, 1], [], []>} : vector<2x8xf32>, vector<8x484xf32>, vector<2x484xf32> -> vector<2x484xf32>
    %258 = arith.addf %253, %257 : vector<2x484xf32>
    %c0_264 = arith.constant 0 : index
    %c92_265 = arith.constant 92 : index
    %259 = vector.load %arg16[%c0_264, %c92_265] : memref<8x622xf32, #tpu.memory_space<vmem>>, vector<8x484xf32>
    %c8_266 = arith.constant 8 : index
    %c0_267 = arith.constant 0 : index
    %c0_268 = arith.constant 0 : index
    %260 = vector.load %arg12[%c8_266, %c0_267, %c0_268] : memref<9x2x8xf32, #tpu.memory_space<vmem>>, vector<1x2x8xf32>
    %261 = vector.shape_cast %260 : vector<1x2x8xf32> to vector<2x8xf32>
    %cst_269 = arith.constant dense<0.000000e+00> : vector<2x484xf32>
    %262 = tpu.matmul %261, %259, %cst_269 {dimension_numbers = #tpu.dot_dimension_numbers<[1], [0], [0], [1], [0, 0, 1, 1], [], []>} : vector<2x8xf32>, vector<8x484xf32>, vector<2x484xf32> -> vector<2x484xf32>
    %263 = arith.addf %258, %262 : vector<2x484xf32>
    %c0_270 = arith.constant 0 : index
    %c0_271 = arith.constant 0 : index
    %264 = vector.load %arg13[%c0_270, %c0_271] : memref<2x1xf32, #tpu.memory_space<vmem>>, vector<2x1xf32>
    %265 = vector.broadcast %264 : vector<2x1xf32> to vector<2x484xf32>
    %266 = arith.addf %263, %265 : vector<2x484xf32>
    %cst_272 = arith.constant 0.00999999977 : f32
    %267 = vector.broadcast %cst_272 : f32 to vector<2x484xf32>
    %268 = arith.mulf %267, %266 : vector<2x484xf32>
    %269 = arith.maximumf %266, %268 : vector<2x484xf32>
    %270 = vector.broadcast %3 : vector<1x484xf32> to vector<2x484xf32>
    %271 = arith.mulf %269, %270 : vector<2x484xf32>
    %272 = arith.addf %271, %5 : vector<2x484xf32>
    %c0_273 = arith.constant 0 : index
    %c0_274 = arith.constant 0 : index
    %c0_275 = arith.constant 0 : index
    %c0_276 = arith.constant 0 : index
    %273 = vector.load %arg14[%c0_273, %c0_274, %c0_275, %c0_276] : memref<1x1x2x484xf32, #tpu.memory_space<vmem>>, vector<1x1x2x484xf32>
    %274 = vector.shape_cast %273 : vector<1x1x2x484xf32> to vector<2x484xf32>
    %275 = vector.shape_cast %272 : vector<2x484xf32> to vector<1x1x2x484xf32>
    tpu.vector_store %arg14[%c0_273, %c0_274, %c0_275, %c0_276], %275 {strides = array<i32>} : memref<1x1x2x484xf32, #tpu.memory_space<vmem>>, vector<1x1x2x484xf32>,
    %276 = arith.mulf %272, %272 : vector<2x484xf32>
    %cst_277 = arith.constant dense<0.000000e+00> : vector<484xf32>
    %277 = vector.multi_reduction <add>, %276, %cst_277 [0] : vector<2x484xf32> to vector<484xf32>
    %278 = vector.shape_cast %277 : vector<484xf32> to vector<1x484xf32>
    %c0_i32 = arith.constant 0 : i32
    %279 = arith.cmpi eq, %arg1, %c0_i32 : i32
    %280 = arith.extui %279 : i1 to i32
    %c0_i32_278 = arith.constant 0 : i32
    %281 = arith.cmpi ne, %280, %c0_i32_278 : i32
    scf.if %281 {
      %c0_281 = arith.constant 0 : index
      %c0_282 = arith.constant 0 : index
      %c0_283 = arith.constant 0 : index
      %285 = vector.load %arg15[%c0_281, %c0_282, %c0_283] : memref<1x1x484xf32, #tpu.memory_space<vmem>>, vector<1x1x484xf32>
      %286 = vector.shape_cast %285 : vector<1x1x484xf32> to vector<1x484xf32>
      %287 = vector.shape_cast %278 : vector<1x484xf32> to vector<1x1x484xf32>
      tpu.vector_store %arg15[%c0_281, %c0_282, %c0_283], %287 {strides = array<i32>} : memref<1x1x484xf32, #tpu.memory_space<vmem>>, vector<1x1x484xf32>,
    } else {
    }
    %c0_i32_279 = arith.constant 0 : i32
    %282 = arith.cmpi sgt, %arg1, %c0_i32_279 : i32
    %283 = arith.extui %282 : i1 to i32
    %c0_i32_280 = arith.constant 0 : i32
    %284 = arith.cmpi ne, %283, %c0_i32_280 : i32
    scf.if %284 {
      %c0_281 = arith.constant 0 : index
      %c0_282 = arith.constant 0 : index
      %c0_283 = arith.constant 0 : index
      %285 = vector.load %arg15[%c0_281, %c0_282, %c0_283] : memref<1x1x484xf32, #tpu.memory_space<vmem>>, vector<1x1x484xf32>
      %286 = vector.shape_cast %285 : vector<1x1x484xf32> to vector<1x484xf32>
      %287 = arith.addf %286, %278 : vector<1x484xf32>
      %c0_284 = arith.constant 0 : index
      %c0_285 = arith.constant 0 : index
      %c0_286 = arith.constant 0 : index
      %288 = vector.load %arg15[%c0_284, %c0_285, %c0_286] : memref<1x1x484xf32, #tpu.memory_space<vmem>>, vector<1x1x484xf32>
      %289 = vector.shape_cast %288 : vector<1x1x484xf32> to vector<1x484xf32>
      %290 = vector.shape_cast %287 : vector<1x484xf32> to vector<1x1x484xf32>
      tpu.vector_store %arg15[%c0_284, %c0_285, %c0_286], %290 {strides = array<i32>} : memref<1x1x484xf32, #tpu.memory_space<vmem>>, vector<1x1x484xf32>,
    } else {
    }
    return
  }
  func.func @transform_0(%arg0: i32, %arg1: i32) -> (i32, i32) {
    %c0_i32 = arith.constant 0 : i32
    %c0_i32_0 = arith.constant 0 : i32
    %c0_i32_1 = arith.constant 0 : i32
    return %c0_i32, %c0_i32_0 : i32, i32
  }
  func.func @transform_1(%arg0: i32, %arg1: i32) -> (i32, i32, i32, i32) {
    %c0_i32 = arith.constant 0 : i32
    %c0_i32_0 = arith.constant 0 : i32
    %c0_i32_1 = arith.constant 0 : i32
    return %arg0, %arg1, %c0_i32, %c0_i32_0 : i32, i32, i32, i32
  }
  func.func @transform_2(%arg0: i32, %arg1: i32) -> (i32, i32, i32) {
    %c0_i32 = arith.constant 0 : i32
    %c0_i32_0 = arith.constant 0 : i32
    %c0_i32_1 = arith.constant 0 : i32
    %c0_i32_2 = arith.constant 0 : i32
    return %c0_i32, %c0_i32_0, %c0_i32_1 : i32, i32, i32
  }
  func.func @transform_3(%arg0: i32, %arg1: i32) -> (i32, i32) {
    %c0_i32 = arith.constant 0 : i32
    %c0_i32_0 = arith.constant 0 : i32
    %c0_i32_1 = arith.constant 0 : i32
    return %c0_i32, %c0_i32_0 : i32, i32
  }
  func.func @transform_4(%arg0: i32, %arg1: i32) -> (i32, i32, i32) {
    %c0_i32 = arith.constant 0 : i32
    %c0_i32_0 = arith.constant 0 : i32
    %c0_i32_1 = arith.constant 0 : i32
    %c0_i32_2 = arith.constant 0 : i32
    return %c0_i32, %c0_i32_0, %c0_i32_1 : i32, i32, i32
  }
  func.func @transform_5(%arg0: i32, %arg1: i32) -> (i32, i32) {
    %c0_i32 = arith.constant 0 : i32
    %c0_i32_0 = arith.constant 0 : i32
    %c0_i32_1 = arith.constant 0 : i32
    return %c0_i32, %c0_i32_0 : i32, i32
  }
  func.func @transform_6(%arg0: i32, %arg1: i32) -> (i32, i32, i32) {
    %c0_i32 = arith.constant 0 : i32
    %c0_i32_0 = arith.constant 0 : i32
    %c0_i32_1 = arith.constant 0 : i32
    %c0_i32_2 = arith.constant 0 : i32
    return %c0_i32, %c0_i32_0, %c0_i32_1 : i32, i32, i32
  }
  func.func @transform_7(%arg0: i32, %arg1: i32) -> (i32, i32) {
    %c0_i32 = arith.constant 0 : i32
    %c0_i32_0 = arith.constant 0 : i32
    %c0_i32_1 = arith.constant 0 : i32
    return %c0_i32, %c0_i32_0 : i32, i32
  }
  func.func @transform_8(%arg0: i32, %arg1: i32) -> (i32, i32, i32) {
    %c0_i32 = arith.constant 0 : i32
    %c0_i32_0 = arith.constant 0 : i32
    %c0_i32_1 = arith.constant 0 : i32
    %c0_i32_2 = arith.constant 0 : i32
    return %c0_i32, %c0_i32_0, %c0_i32_1 : i32, i32, i32
  }
  func.func @transform_9(%arg0: i32, %arg1: i32) -> (i32, i32) {
    %c0_i32 = arith.constant 0 : i32
    %c0_i32_0 = arith.constant 0 : i32
    %c0_i32_1 = arith.constant 0 : i32
    return %c0_i32, %c0_i32_0 : i32, i32
  }
  func.func @transform_10(%arg0: i32, %arg1: i32) -> (i32, i32, i32) {
    %c0_i32 = arith.constant 0 : i32
    %c0_i32_0 = arith.constant 0 : i32
    %c0_i32_1 = arith.constant 0 : i32
    %c0_i32_2 = arith.constant 0 : i32
    return %c0_i32, %c0_i32_0, %c0_i32_1 : i32, i32, i32
  }
  func.func @transform_11(%arg0: i32, %arg1: i32) -> (i32, i32) {
    %c0_i32 = arith.constant 0 : i32
    %c0_i32_0 = arith.constant 0 : i32
    %c0_i32_1 = arith.constant 0 : i32
    return %c0_i32, %c0_i32_0 : i32, i32
  }
  func.func @transform_12(%arg0: i32, %arg1: i32) -> (i32, i32, i32, i32) {
    %c0_i32 = arith.constant 0 : i32
    %c0_i32_0 = arith.constant 0 : i32
    %c0_i32_1 = arith.constant 0 : i32
    return %arg0, %arg1, %c0_i32, %c0_i32_0 : i32, i32, i32, i32
  }
  func.func @transform_13(%arg0: i32, %arg1: i32) -> (i32, i32, i32) {
    %c0_i32 = arith.constant 0 : i32
    %c0_i32_0 = arith.constant 0 : i32
    %c0_i32_1 = arith.constant 0 : i32
    return %arg0, %c0_i32, %c0_i32_0 : i32, i32, i32
  }
}

</mosaic_0001>

<llo_original>
// kernel: _lambda_.1
$region0: #{_lambda_.1}
  #allocation0 [shape = 'u32[]', space=smem, size = 0x4, offset = 0x4, fixed_abs, tag = 'smem constant byte address 0x4 - core index']
  #allocation1 [shape = 'u32[144,128]{1,0:T(1,128)}', space=vmem, size = 0x12000, scoped, tag = 'internal scratch']
  #allocation2 [shape = 'f32[8,622]{1,0:T(8,128)}', space=vmem, size = 0x5000, scoped, tag = 'scratch operand']
  %s0 = inlined_call_operand.vmem [shape: f32[1,484], index: 0, kind: input, shape index: {}]
  %s1 = inlined_call_operand.vmem [shape: f32[2,4,2,484], index: 1, kind: input, shape index: {}]
  %s2 = inlined_call_operand.vmem [shape: f32[9,8,2], index: 2, kind: input, shape index: {}]
  %s3 = inlined_call_operand.vmem [shape: f32[8,1], index: 3, kind: input, shape index: {}]
  %s4 = inlined_call_operand.vmem [shape: f32[9,8,8], index: 4, kind: input, shape index: {}]
  %s5 = inlined_call_operand.vmem [shape: f32[8,1], index: 5, kind: input, shape index: {}]
  %s6 = inlined_call_operand.vmem [shape: f32[9,8,8], index: 6, kind: input, shape index: {}]
  %s7 = inlined_call_operand.vmem [shape: f32[8,1], index: 7, kind: input, shape index: {}]
  %s8 = inlined_call_operand.vmem [shape: f32[9,8,8], index: 8, kind: input, shape index: {}]
  %s9 = inlined_call_operand.vmem [shape: f32[8,1], index: 9, kind: input, shape index: {}]
  %s10 = inlined_call_operand.vmem [shape: f32[9,2,8], index: 10, kind: input, shape index: {}]
  %s11 = inlined_call_operand.vmem [shape: f32[2,1], index: 11, kind: input, shape index: {}]
  %s12 = inlined_call_operand.vmem [shape: f32[2,4,2,484], index: 12, kind: output, shape index: {0}]
  %s13 = inlined_call_operand.vmem [shape: f32[2,1,484], index: 13, kind: output, shape index: {1}]
  %14 = xla_tuple %s12, %s13
  %s15 = sld [smem:[#allocation0]]
  $region97: #{_lambda_.1} parent=0
    _
  %s17 = ssub.s32 1, %s15
  %s18 = scalar_select 0, %s17, %s15
  loop: start=0, step=1, limit=10
  $region2: #{_lambda_.1} parent=0 // loop_pre_header
    _
  $region3: #{_lambda_.1} parent=0 // loop_header
    %s20 = sphi 0, %s24
    %p21 = scmp.ge.s32.totalorder %s20, 10
    %s27 = sphi 0, %s39
    %s28 = sphi 0, %s35
    %s29 = sphi 0, %s27
    %s30 = sphi 0, %s28
    %s31 = sphi 0, %s29
    %s32 = sphi 0, %s30
    %s40 = sphi 0, %s40
    %s42 = sphi 0, %s40
    %s43 = sphi 0, %s42
    %s57 = sphi 0, %s43
    %s65 = sphi 0, %s67
    %s68 = sphi 0, %s65
    %s69 = sphi 0, %s68
    %s85 = sphi 0, %s69
    %s89 = sphi 0, %s89
    %s91 = sphi 0, %s89
    %s92 = sphi 0, %s91
    %s106 = sphi 0, %s92
    %s110 = sphi 0, %s110
    %s112 = sphi 0, %s110
    %s113 = sphi 0, %s112
    %s127 = sphi 0, %s113
    %s131 = sphi 0, %s131
    %s133 = sphi 0, %s131
    %s134 = sphi 0, %s133
    %s148 = sphi 0, %s134
    %s152 = sphi 0, %s152
    %s154 = sphi 0, %s152
    %s155 = sphi 0, %s154
    %s169 = sphi 0, %s155
    %s173 = sphi 0, %s173
    %s175 = sphi 0, %s173
    %s176 = sphi 0, %s175
    %s190 = sphi 0, %s176
    %s194 = sphi 0, %s194
    %s196 = sphi 0, %s194
    %s197 = sphi 0, %s196
    %s211 = sphi 0, %s197
    %s215 = sphi 0, %s215
    %s217 = sphi 0, %s215
    %s218 = sphi 0, %s217
    %s232 = sphi 0, %s218
    %s236 = sphi 0, %s236
    %s238 = sphi 0, %s236
    %s239 = sphi 0, %s238
    %s253 = sphi 0, %s239
    %s257 = sphi 0, %s257
    %s259 = sphi 0, %s257
    %s260 = sphi 0, %s259
    %s274 = sphi 0, %s260
    %s278 = sphi 0, %s278
    %s280 = sphi 0, %s278
    %s281 = sphi 0, %s280
    %s295 = sphi 0, %s281
    %s303 = sphi 0, %s305
    %s306 = sphi 0, %s303
    %s307 = sphi 0, %s306
    %s323 = sphi 0, %s307
    %s329 = sphi 0, %s331
    %s332 = sphi 0, %s329
    %s333 = sphi 0, %s332
    %s349 = sphi 0, %s333
  $region4: #{_lambda_.1} parent=0 // loop_header_branch
    %23 = sbr.rel (%p21) target = $region8
  $region5: #{_lambda_.1} parent=0 // loop_body
    %s25 = ssub.s32 %s20, 1
    %s26 = ssub.s32 %s20, 2
    %s33 = sadd.s32 1, %s28
    %p34 = scmp.ge.s32.totalorder %s33, 4
    %s35 = scalar_select %p34, 0, %s33
    %s36 = sadd.s32 1, %s27
    %s37 = scalar_select %p34, %s36, %s27
    %p38 = scmp.ge.s32.totalorder %s37, 2
    %s39 = scalar_select %p38, 0, %s37
    %s41 = sadd.s32 %s40, 1
    %p44 = scmp.eq.s32.totalorder %s20, 7
    %p45 = scmp.ne.s32.totalorder %s40, %s42
    %p46 = scmp.eq.s32.totalorder %s20, 0
    %p47 = por %p45, %p46
    %p48 = scmp.ne.s32.totalorder %s40, %s42
    %p49 = scmp.eq.s32.totalorder %s25, 7
    %p50 = por %p48, %p49
    %p51 = scmp.ne.s32.totalorder %s42, %s43
    %p52 = scmp.eq.s32.totalorder %s25, 0
    %p53 = por %p51, %p52
    %p54 = scmp.ne.s32.totalorder %s42, %s43
    %p55 = scmp.eq.s32.totalorder %s26, 7
    %p56 = por %p54, %p55
    %p58 = scmp.ne.s32.totalorder %s43, %s57
    %p59 = scmp.eq.s32.totalorder %s26, 0
    %p60 = por %p58, %p59
    %s61 = ssub.s32 %s27, %s39
    %s62 = ssub.s32 %s28, %s35
    %s63 = sor.u32 %s61, %s62
    %p64 = scmp.eq.s32.totalorder %s63, 0
    %s66 = sadd.s32 %s65, 1
    %s67 = scalar_select %p64, %s65, %s66
    %p70 = pneg %p64
    %p71 = scmp.eq.s32.totalorder %s20, 7
    %p72 = por %p70, %p71
    %p73 = scmp.ne.s32.totalorder %s65, %s68
    %p74 = scmp.eq.s32.totalorder %s20, 0
    %p75 = por %p73, %p74
    %p76 = scmp.ne.s32.totalorder %s65, %s68
    %p77 = scmp.eq.s32.totalorder %s25, 7
    %p78 = por %p76, %p77
    %p79 = scmp.ne.s32.totalorder %s68, %s69
    %p80 = scmp.eq.s32.totalorder %s25, 0
    %p81 = por %p79, %p80
    %p82 = scmp.ne.s32.totalorder %s68, %s69
    %p83 = scmp.eq.s32.totalorder %s26, 7
    %p84 = por %p82, %p83
    %p86 = scmp.ne.s32.totalorder %s69, %s85
    %p87 = scmp.eq.s32.totalorder %s26, 0
    %p88 = por %p86, %p87
    %s90 = sadd.s32 %s89, 1
    %p93 = scmp.eq.s32.totalorder %s20, 7
    %p94 = scmp.ne.s32.totalorder %s89, %s91
    %p95 = scmp.eq.s32.totalorder %s20, 0
    %p96 = por %p94, %p95
    %p97 = scmp.ne.s32.totalorder %s89, %s91
    %p98 = scmp.eq.s32.totalorder %s25, 7
    %p99 = por %p97, %p98
    %p100 = scmp.ne.s32.totalorder %s91, %s92
    %p101 = scmp.eq.s32.totalorder %s25, 0
    %p102 = por %p100, %p101
    %p103 = scmp.ne.s32.totalorder %s91, %s92
    %p104 = scmp.eq.s32.totalorder %s26, 7
    %p105 = por %p103, %p104
    %p107 = scmp.ne.s32.totalorder %s92, %s106
    %p108 = scmp.eq.s32.totalorder %s26, 0
    %p109 = por %p107, %p108
    %s111 = sadd.s32 %s110, 1
    %p114 = scmp.eq.s32.totalorder %s20, 7
    %p115 = scmp.ne.s32.totalorder %s110, %s112
    %p116 = scmp.eq.s32.totalorder %s20, 0
    %p117 = por %p115, %p116
    %p118 = scmp.ne.s32.totalorder %s110, %s112
    %p119 = scmp.eq.s32.totalorder %s25, 7
    %p120 = por %p118, %p119
    %p121 = scmp.ne.s32.totalorder %s112, %s113
    %p122 = scmp.eq.s32.totalorder %s25, 0
    %p123 = por %p121, %p122
    %p124 = scmp.ne.s32.totalorder %s112, %s113
    %p125 = scmp.eq.s32.totalorder %s26, 7
    %p126 = por %p124, %p125
    %p128 = scmp.ne.s32.totalorder %s113, %s127
    %p129 = scmp.eq.s32.totalorder %s26, 0
    %p130 = por %p128, %p129
    %s132 = sadd.s32 %s131, 1
    %p135 = scmp.eq.s32.totalorder %s20, 7
    %p136 = scmp.ne.s32.totalorder %s131, %s133
    %p137 = scmp.eq.s32.totalorder %s20, 0
    %p138 = por %p136, %p137
    %p139 = scmp.ne.s32.totalorder %s131, %s133
    %p140 = scmp.eq.s32.totalorder %s25, 7
    %p141 = por %p139, %p140
    %p142 = scmp.ne.s32.totalorder %s133, %s134
    %p143 = scmp.eq.s32.totalorder %s25, 0
    %p144 = por %p142, %p143
    %p145 = scmp.ne.s32.totalorder %s133, %s134
    %p146 = scmp.eq.s32.totalorder %s26, 7
    %p147 = por %p145, %p146
    %p149 = scmp.ne.s32.totalorder %s134, %s148
    %p150 = scmp.eq.s32.totalorder %s26, 0
    %p151 = por %p149, %p150
    %s153 = sadd.s32 %s152, 1
    %p156 = scmp.eq.s32.totalorder %s20, 7
    %p157 = scmp.ne.s32.totalorder %s152, %s154
    %p158 = scmp.eq.s32.totalorder %s20, 0
    %p159 = por %p157, %p158
    %p160 = scmp.ne.s32.totalorder %s152, %s154
    %p161 = scmp.eq.s32.totalorder %s25, 7
    %p162 = por %p160, %p161
    %p163 = scmp.ne.s32.totalorder %s154, %s155
    %p164 = scmp.eq.s32.totalorder %s25, 0
    %p165 = por %p163, %p164
    %p166 = scmp.ne.s32.totalorder %s154, %s155
    %p167 = scmp.eq.s32.totalorder %s26, 7
    %p168 = por %p166, %p167
    %p170 = scmp.ne.s32.totalorder %s155, %s169
    %p171 = scmp.eq.s32.totalorder %s26, 0
    %p172 = por %p170, %p171
    %s174 = sadd.s32 %s173, 1
    %p177 = scmp.eq.s32.totalorder %s20, 7
    %p178 = scmp.ne.s32.totalorder %s173, %s175
    %p179 = scmp.eq.s32.totalorder %s20, 0
    %p180 = por %p178, %p179
    %p181 = scmp.ne.s32.totalorder %s173, %s175
    %p182 = scmp.eq.s32.totalorder %s25, 7
    %p183 = por %p181, %p182
    %p184 = scmp.ne.s32.totalorder %s175, %s176
    %p185 = scmp.eq.s32.totalorder %s25, 0
    %p186 = por %p184, %p185
    %p187 = scmp.ne.s32.totalorder %s175, %s176
    %p188 = scmp.eq.s32.totalorder %s26, 7
    %p189 = por %p187, %p188
    %p191 = scmp.ne.s32.totalorder %s176, %s190
    %p192 = scmp.eq.s32.totalorder %s26, 0
    %p193 = por %p191, %p192
    %s195 = sadd.s32 %s194, 1
    %p198 = scmp.eq.s32.totalorder %s20, 7
    %p199 = scmp.ne.s32.totalorder %s194, %s196
    %p200 = scmp.eq.s32.totalorder %s20, 0
    %p201 = por %p199, %p200
    %p202 = scmp.ne.s32.totalorder %s194, %s196
    %p203 = scmp.eq.s32.totalorder %s25, 7
    %p204 = por %p202, %p203
    %p205 = scmp.ne.s32.totalorder %s196, %s197
    %p206 = scmp.eq.s32.totalorder %s25, 0
    %p207 = por %p205, %p206
    %p208 = scmp.ne.s32.totalorder %s196, %s197
    %p209 = scmp.eq.s32.totalorder %s26, 7
    %p210 = por %p208, %p209
    %p212 = scmp.ne.s32.totalorder %s197, %s211
    %p213 = scmp.eq.s32.totalorder %s26, 0
    %p214 = por %p212, %p213
    %s216 = sadd.s32 %s215, 1
    %p219 = scmp.eq.s32.totalorder %s20, 7
    %p220 = scmp.ne.s32.totalorder %s215, %s217
    %p221 = scmp.eq.s32.totalorder %s20, 0
    %p222 = por %p220, %p221
    %p223 = scmp.ne.s32.totalorder %s215, %s217
    %p224 = scmp.eq.s32.totalorder %s25, 7
    %p225 = por %p223, %p224
    %p226 = scmp.ne.s32.totalorder %s217, %s218
    %p227 = scmp.eq.s32.totalorder %s25, 0
    %p228 = por %p226, %p227
    %p229 = scmp.ne.s32.totalorder %s217, %s218
    %p230 = scmp.eq.s32.totalorder %s26, 7
    %p231 = por %p229, %p230
    %p233 = scmp.ne.s32.totalorder %s218, %s232
    %p234 = scmp.eq.s32.totalorder %s26, 0
    %p235 = por %p233, %p234
    %s237 = sadd.s32 %s236, 1
    %p240 = scmp.eq.s32.totalorder %s20, 7
    %p241 = scmp.ne.s32.totalorder %s236, %s238
    %p242 = scmp.eq.s32.totalorder %s20, 0
    %p243 = por %p241, %p242
    %p244 = scmp.ne.s32.totalorder %s236, %s238
    %p245 = scmp.eq.s32.totalorder %s25, 7
    %p246 = por %p244, %p245
    %p247 = scmp.ne.s32.totalorder %s238, %s239
    %p248 = scmp.eq.s32.totalorder %s25, 0
    %p249 = por %p247, %p248
    %p250 = scmp.ne.s32.totalorder %s238, %s239
    %p251 = scmp.eq.s32.totalorder %s26, 7
    %p252 = por %p250, %p251
    %p254 = scmp.ne.s32.totalorder %s239, %s253
    %p255 = scmp.eq.s32.totalorder %s26, 0
    %p256 = por %p254, %p255
    %s258 = sadd.s32 %s257, 1
    %p261 = scmp.eq.s32.totalorder %s20, 7
    %p262 = scmp.ne.s32.totalorder %s257, %s259
    %p263 = scmp.eq.s32.totalorder %s20, 0
    %p264 = por %p262, %p263
    %p265 = scmp.ne.s32.totalorder %s257, %s259
    %p266 = scmp.eq.s32.totalorder %s25, 7
    %p267 = por %p265, %p266
    %p268 = scmp.ne.s32.totalorder %s259, %s260
    %p269 = scmp.eq.s32.totalorder %s25, 0
    %p270 = por %p268, %p269
    %p271 = scmp.ne.s32.totalorder %s259, %s260
    %p272 = scmp.eq.s32.totalorder %s26, 7
    %p273 = por %p271, %p272
    %p275 = scmp.ne.s32.totalorder %s260, %s274
    %p276 = scmp.eq.s32.totalorder %s26, 0
    %p277 = por %p275, %p276
    %s279 = sadd.s32 %s278, 1
    %p282 = scmp.eq.s32.totalorder %s20, 7
    %p283 = scmp.ne.s32.totalorder %s278, %s280
    %p284 = scmp.eq.s32.totalorder %s20, 0
    %p285 = por %p283, %p284
    %p286 = scmp.ne.s32.totalorder %s278, %s280
    %p287 = scmp.eq.s32.totalorder %s25, 7
    %p288 = por %p286, %p287
    %p289 = scmp.ne.s32.totalorder %s280, %s281
    %p290 = scmp.eq.s32.totalorder %s25, 0
    %p291 = por %p289, %p290
    %p292 = scmp.ne.s32.totalorder %s280, %s281
    %p293 = scmp.eq.s32.totalorder %s26, 7
    %p294 = por %p292, %p293
    %p296 = scmp.ne.s32.totalorder %s281, %s295
    %p297 = scmp.eq.s32.totalorder %s26, 0
    %p298 = por %p296, %p297
    %s299 = ssub.s32 %s27, %s39
    %s300 = ssub.s32 %s28, %s35
    %s301 = sor.u32 %s299, %s300
    %p302 = scmp.eq.s32.totalorder %s301, 0
    %s304 = sadd.s32 %s303, 1
    %s305 = scalar_select %p302, %s303, %s304
    %p308 = pneg %p302
    %p309 = scmp.eq.s32.totalorder %s20, 7
    %p310 = por %p308, %p309
    %p311 = scmp.ne.s32.totalorder %s303, %s306
    %p312 = scmp.eq.s32.totalorder %s20, 0
    %p313 = por %p311, %p312
    %p314 = scmp.ne.s32.totalorder %s303, %s306
    %p315 = scmp.eq.s32.totalorder %s25, 7
    %p316 = por %p314, %p315
    %p317 = scmp.ne.s32.totalorder %s306, %s307
    %p318 = scmp.eq.s32.totalorder %s25, 0
    %p319 = por %p317, %p318
    %p320 = scmp.ne.s32.totalorder %s306, %s307
    %p321 = scmp.eq.s32.totalorder %s26, 7
    %p322 = por %p320, %p321
    %p324 = scmp.ne.s32.totalorder %s307, %s323
    %p325 = scmp.eq.s32.totalorder %s26, 0
    %p326 = por %p324, %p325
    %s327 = ssub.s32 %s27, %s39
    %p328 = scmp.eq.s32.totalorder %s327, 0
    %s330 = sadd.s32 %s329, 1
    %s331 = scalar_select %p328, %s329, %s330
    %p334 = pneg %p328
    %p335 = scmp.eq.s32.totalorder %s20, 7
    %p336 = por %p334, %p335
    %p337 = scmp.ne.s32.totalorder %s329, %s332
    %p338 = scmp.eq.s32.totalorder %s20, 0
    %p339 = por %p337, %p338
    %p340 = scmp.ne.s32.totalorder %s329, %s332
    %p341 = scmp.eq.s32.totalorder %s25, 7
    %p342 = por %p340, %p341
    %p343 = scmp.ne.s32.totalorder %s332, %s333
    %p344 = scmp.eq.s32.totalorder %s25, 0
    %p345 = por %p343, %p344
    %p346 = scmp.ne.s32.totalorder %s332, %s333
    %p347 = scmp.eq.s32.totalorder %s26, 7
    %p348 = por %p346, %p347
    %p350 = scmp.ne.s32.totalorder %s333, %s349
    %p351 = scmp.eq.s32.totalorder %s26, 0
    %p352 = por %p350, %p351
    %p353 = scmp.le.s32.totalorder 1, %s20
    %p354 = scmp.lt.s32.totalorder %s20, 9
    %p355 = pnand %p353, %p354
    %p356 = pneg %p355
    // Predicated region
    $region9: #{_lambda_.1} parent=5 // pred_check
      _
    $region10: #{_lambda_.1} parent=5 // pred_check_branch
      %358 = sbr.rel (%p355) target = $region12
    $region11: #{_lambda_.1} parent=5 // pred_region
      %s359 = ssub.s32 %s20, 1
      // Predicated region
      $region13: #{_lambda_.1} parent=11 // pred_check
        %p360 = pneg %p53
      $region14: #{_lambda_.1} parent=11 // pred_check_branch
        %362 = sbr.rel (%p360) target = $region16
      $region15: #{_lambda_.1} parent=11 // pred_region
        _
      $region16: #{_lambda_.1} parent=11 // pred_fallthru
        _
      // Predicated region
      $region17: #{_lambda_.1} parent=11 // pred_check
        %p363 = pneg %p102
      $region18: #{_lambda_.1} parent=11 // pred_check_branch
        %365 = sbr.rel (%p363) target = $region20
      $region19: #{_lambda_.1} parent=11 // pred_region
        _
      $region20: #{_lambda_.1} parent=11 // pred_fallthru
        _
      // Predicated region
      $region21: #{_lambda_.1} parent=11 // pred_check
        %p366 = pneg %p123
      $region22: #{_lambda_.1} parent=11 // pred_check_branch
        %368 = sbr.rel (%p366) target = $region24
      $region23: #{_lambda_.1} parent=11 // pred_region
        _
      $region24: #{_lambda_.1} parent=11 // pred_fallthru
        _
      // Predicated region
      $region25: #{_lambda_.1} parent=11 // pred_check
        %p369 = pneg %p144
      $region26: #{_lambda_.1} parent=11 // pred_check_branch
        %371 = sbr.rel (%p369) target = $region28
      $region27: #{_lambda_.1} parent=11 // pred_region
        _
      $region28: #{_lambda_.1} parent=11 // pred_fallthru
        _
      // Predicated region
      $region29: #{_lambda_.1} parent=11 // pred_check
        %p372 = pneg %p165
      $region30: #{_lambda_.1} parent=11 // pred_check_branch
        %374 = sbr.rel (%p372) target = $region32
      $region31: #{_lambda_.1} parent=11 // pred_region
        _
      $region32: #{_lambda_.1} parent=11 // pred_fallthru
        _
      // Predicated region
      $region33: #{_lambda_.1} parent=11 // pred_check
        %p375 = pneg %p186
      $region34: #{_lambda_.1} parent=11 // pred_check_branch
        %377 = sbr.rel (%p375) target = $region36
      $region35: #{_lambda_.1} parent=11 // pred_region
        _
      $region36: #{_lambda_.1} parent=11 // pred_fallthru
        _
      // Predicated region
      $region37: #{_lambda_.1} parent=11 // pred_check
        %p378 = pneg %p207
      $region38: #{_lambda_.1} parent=11 // pred_check_branch
        %380 = sbr.rel (%p378) target = $region40
      $region39: #{_lambda_.1} parent=11 // pred_region
        _
      $region40: #{_lambda_.1} parent=11 // pred_fallthru
        _
      // Predicated region
      $region41: #{_lambda_.1} parent=11 // pred_check
        %p381 = pneg %p228
      $region42: #{_lambda_.1} parent=11 // pred_check_branch
        %383 = sbr.rel (%p381) target = $region44
      $region43: #{_lambda_.1} parent=11 // pred_region
        _
      $region44: #{_lambda_.1} parent=11 // pred_fallthru
        _
      // Predicated region
      $region45: #{_lambda_.1} parent=11 // pred_check
        %p384 = pneg %p249
      $region46: #{_lambda_.1} parent=11 // pred_check_branch
        %386 = sbr.rel (%p384) target = $region48
      $region47: #{_lambda_.1} parent=11 // pred_region
        _
      $region48: #{_lambda_.1} parent=11 // pred_fallthru
        _
      // Predicated region
      $region49: #{_lambda_.1} parent=11 // pred_check
        %p387 = pneg %p270
      $region50: #{_lambda_.1} parent=11 // pred_check_branch
        %389 = sbr.rel (%p387) target = $region52
      $region51: #{_lambda_.1} parent=11 // pred_region
        _
      $region52: #{_lambda_.1} parent=11 // pred_fallthru
        _
      // Predicated region
      $region53: #{_lambda_.1} parent=11 // pred_check
        %p390 = pneg %p291
      $region54: #{_lambda_.1} parent=11 // pred_check_branch
        %392 = sbr.rel (%p390) target = $region56
      $region55: #{_lambda_.1} parent=11 // pred_region
        _
      $region56: #{_lambda_.1} parent=11 // pred_fallthru
        _
    $region12: #{_lambda_.1} parent=5 // pred_fallthru
      _
    %p393 = scmp.lt.s32.totalorder %s20, 8
    // Predicated region
    $region57: #{_lambda_.1} parent=5 // pred_check
      %p394 = pneg %p393
    $region58: #{_lambda_.1} parent=5 // pred_check_branch
      %396 = sbr.rel (%p394) target = $region60
    $region59: #{_lambda_.1} parent=5 // pred_region
      // Predicated region
      $region61: #{_lambda_.1} parent=59 // pred_check
        %p397 = pneg %p75
      $region62: #{_lambda_.1} parent=59 // pred_check_branch
        %399 = sbr.rel (%p397) target = $region64
      $region63: #{_lambda_.1} parent=59 // pred_region
        %p400 = scmp.lt.s32.totalorder %s27, 1
        %s401 = scalar_select %p400, %s27, 1
        %p402 = scmp.lt.s32.totalorder %s28, 3
        %s403 = scalar_select %p402, %s28, 3
        %s404 = smul.addr %s403, 4
        %s405 = smul.addr %s401, 16
        %s406 = sadd.s32 %s404, %s405
        %s407 = smul.addr %s406, 2
        %s408 = scalar_lea.vmem %s1, %s407
      $region64: #{_lambda_.1} parent=59 // pred_fallthru
        _
    $region60: #{_lambda_.1} parent=5 // pred_fallthru
      _
    %p409 = scmp.le.s32.totalorder 1, %s20
    %p410 = scmp.lt.s32.totalorder %s20, 9
    %p411 = pnand %p409, %p410
    %p412 = pneg %p411
    // Predicated region
    $region65: #{_lambda_.1} parent=5 // pred_check
      _
    $region66: #{_lambda_.1} parent=5 // pred_check_branch
      %414 = sbr.rel (%p411) target = $region68
    $region67: #{_lambda_.1} parent=5 // pred_region
      %s415 = ssub.s32 %s20, 1
      %p416 = pneg %p53
      %p417 = pneg %p50
      %p418 = scmp.lt.s32.totalorder %s29, 1
      %s419 = scalar_select %p418, %s29, 1
      %p420 = scmp.lt.s32.totalorder %s30, 3
      %s421 = scalar_select %p420, %s30, 3
      %s422 = smul.addr %s421, 4
      %s423 = smul.addr %s419, 16
      %s424 = sadd.s32 %s422, %s423
      %s425 = smul.addr %s424, 2
      %s426 = scalar_lea.vmem %s1, %s425
      %p427 = pneg %p81
      %p428 = pneg %p78
      %p429 = pneg %p102
      %p430 = pneg %p99
      %p431 = pneg %p123
      %p432 = pneg %p120
      %p433 = pneg %p144
      %p434 = pneg %p141
      %p435 = pneg %p165
      %p436 = pneg %p162
      %p437 = pneg %p186
      %p438 = pneg %p183
      %p439 = pneg %p207
      %p440 = pneg %p204
      %p441 = pneg %p228
      %p442 = pneg %p225
      %p443 = pneg %p249
      %p444 = pneg %p246
      %p445 = pneg %p270
      %p446 = pneg %p267
      %p447 = pneg %p291
      %p448 = pneg %p288
      %p449 = pneg %p319
      %p450 = pneg %p316
      %p451 = scmp.lt.s32.totalorder %s29, 1
      %s452 = scalar_select %p451, %s29, 1
      %p453 = scmp.lt.s32.totalorder %s30, 3
      %s454 = scalar_select %p453, %s30, 3
      %s455 = smul.addr %s454, 4
      %s456 = smul.addr %s452, 16
      %s457 = sadd.s32 %s455, %s456
      %s458 = smul.addr %s457, 2
      %s459 = scalar_lea.vmem %s12, %s458
      %p460 = pneg %p345
      %p461 = pneg %p342
      %p462 = scmp.lt.s32.totalorder %s29, 1
      %s463 = scalar_select %p462, %s29, 1
      %s464 = smul.addr %s463, 4
      %s465 = scalar_lea.vmem %s13, %s464
      %p466 = scmp.lt.s32.totalorder %s29, 1
      %s467 = scalar_select %p466, %s29, 1
      %p468 = scmp.lt.s32.totalorder %s30, 3
      %s469 = scalar_select %p468, %s30, 3
      %s470 = smul.addr %s469, 4
      %s471 = smul.addr %s467, 16
      %s472 = sadd.s32 %s470, %s471
      %s473 = smul.addr %s472, 2
      %s474 = scalar_lea.vmem %s1, %s473
      %p475 = scmp.lt.s32.totalorder %s29, 1
      %s476 = scalar_select %p475, %s29, 1
      %p477 = scmp.lt.s32.totalorder %s30, 3
      %s478 = scalar_select %p477, %s30, 3
      %s479 = smul.addr %s478, 4
      %s480 = smul.addr %s476, 16
      %s481 = sadd.s32 %s479, %s480
      %s482 = smul.addr %s481, 2
      %s483 = scalar_lea.vmem %s12, %s482
      %p484 = scmp.lt.s32.totalorder %s29, 1
      %s485 = scalar_select %p484, %s29, 1
      %s486 = smul.addr %s485, 4
      %s487 = scalar_lea.vmem %s13, %s486
      %vm488 = vcmask 564224
      %489 = vst.msk [vmem:[#allocation2] sm:$0xff] %vm488, 0.0
      %vm490 = vcmask 900424
      %491 = vst.msk [vmem:[#allocation2 + $0x20] sm:$0xff] %vm490, 0.0
      %v492 = vld [vmem:[%s0] sm:$0xf]
      %v493 = vld [vmem:[%s474] sm:$0xff]
      %v495 = vcombine.high %v493, %v493
      %v497 = vunpack.c.l.s4 1983009808
      %v498 = vunpack.c.0.s8 %v497
      %v499 = vlaneseq
      %v500 = vshrl.u32 %v499, 7
      %v501 = vsub.s32 %v498, %v500
      %v502 = vrot.slane %v493, %v501
      %v504 = vunpack.c.l.s4 1983009808
      %v505 = vunpack.c.0.s8 %v504
      %v506 = vlaneseq
      %v507 = vshrl.u32 %v506, 7
      %v508 = vsub.s32 %v505, %v507
      %v509 = vrot.slane %v495, %v508
      %v510 = vcombine.high %v502, %v502
      %v511 = vcombine.high %v509, %v509
      %512 = vrot.lane.b32.xlu0 %v502, 69
      %v513 = vpop.permute.xlu0 %512
      %514 = vrot.lane.b32.xlu0 %v510, 69
      %v515 = vpop.permute.xlu0 %514
      %516 = vrot.lane.b32.xlu0 %v509, 69
      %v517 = vpop.permute.xlu0 %516
      %518 = vrot.lane.b32.xlu0 %v511, 69
      %v519 = vpop.permute.xlu0 %518
      %v520 = vsel %vm488, %v513, %v515
      %v521 = vsel %vm488, %v515, %v517
      %v522 = vsel %vm488, %v517, %v519
      %vm528 = vcmask 1041960
      %529 = vst.msk [vmem:[#allocation2] sm:$0x3] %vm528, %v513
      %530 = vst [vmem:[#allocation2 + $0x8] sm:$0x3] %v520
      %531 = vst [vmem:[#allocation2 + $0x10] sm:$0x3] %v521
      %532 = vst [vmem:[#allocation2 + $0x18] sm:$0x3] %v522
      %vm533 = vcmask 328704
      %534 = vst.msk [vmem:[#allocation2 + $0x20] sm:$0x3] %vm533, %v519
      %v535 = vld [vmem:[#allocation2] sm:$0x3]
      %v536 = vld [vmem:[#allocation2 + $0x8] sm:$0x3]
      %v537 = vld [vmem:[#allocation2 + $0x10] sm:$0x3]
      %v538 = vld [vmem:[#allocation2 + $0x18] sm:$0x3]
      %v539 = vld [vmem:[#allocation2 + $0x20] sm:$0x3]
      %v540 = vld [vmem:[%s2] sm:$0xff]
      %s541 = scalar_lea.vmem %s2, 8
      %v542 = vld [vmem:[%s541] sm:$0xff]
      %548 = vrot.lane.b32.xlu0 %v535, 81
      %v549 = vpop.permute.xlu0 %548
      %550 = vrot.lane.b32.xlu0 %v536, 81
      %v551 = vpop.permute.xlu0 %550
      %552 = vrot.lane.b32.xlu0 %v537, 81
      %v553 = vpop.permute.xlu0 %552
      %554 = vrot.lane.b32.xlu0 %v538, 81
      %v555 = vpop.permute.xlu0 %554
      %556 = vrot.lane.b32.xlu0 %v539, 81
      %v557 = vpop.permute.xlu0 %556
      %vm558 = vcmask 662528
      %v559 = vsel %vm558, %v549, %v551
      %v560 = vsel %vm558, %v551, %v553
      %v561 = vsel %vm558, %v553, %v555
      %v562 = vsel %vm558, %v555, %v557
      %vm563 = vcmask 15360
      %v565 = vsel %vm563, %v542, 0
      %vm567 = vcmask 1041408
      %v568 = vsel %vm567, %v559, 0
      %v570 = vsel %vm567, %v560, 0
      %v572 = vsel %vm567, %v561, 0
      %v574 = vsel %vm567, %v562, 0
      %576 = vmatprep.subr.mxu0 %v570
      %577 = vmatpush1.msra.mxu0 %v568
      %578 = vmatprep.subr.mxu0 0.0
      %579 = vmatpush1.msra.mxu0 0.0
      %580 = vmatprep.subr.mxu0 0.0
      %581 = vmatpush1.msra.mxu0 0.0
      %582 = vmatprep.subr.mxu0 0.0
      %583 = vmatpush1.msra.mxu0 0.0
      %584 = vmatprep.subr.mxu0 0.0
      %585 = vmatpush1.msra.mxu0 0.0
      %586 = vmatprep.subr.mxu0 0.0
      %587 = vmatpush1.msra.mxu0 0.0
      %588 = vmatprep.subr.mxu0 0.0
      %589 = vmatpush1.msra.mxu0 0.0
      %590 = vmatprep.subr.mxu0 0.0
      %591 = vmatpush1.msra.mxu0 0.0
      %592 = vmatprep.subr.mxu0 0.0
      %593 = vmatpush1.msra.mxu0 0.0
      %594 = vmatprep.subr.mxu0 0.0
      %595 = vmatpush1.msra.mxu0 0.0
      %596 = vmatprep.subr.mxu0 0.0
      %597 = vmatpush1.msra.mxu0 0.0
      %598 = vmatprep.subr.mxu0 0.0
      %599 = vmatpush1.msra.mxu0 0.0
      %600 = vmatprep.subr.mxu0 0.0
      %601 = vmatpush1.msra.mxu0 0.0
      %602 = vmatprep.subr.mxu0 0.0
      %603 = vmatpush1.msra.mxu0 0.0
      %604 = vmatprep.subr.mxu0 0.0
      %605 = vmatpush1.msra.mxu0 0.0
      %606 = vmatprep.subr.mxu0 0.0
      %607 = vmatpush1.msra.mxu0 0.0
      %608 = vmatprep.subr.mxu0 0.0
      %609 = vmatpush1.msra.mxu0 0.0
      %610 = vmatprep.subr.mxu0 0.0
      %611 = vmatpush1.msra.mxu0 0.0
      %612 = vmatprep.subr.mxu0 0.0
      %613 = vmatpush1.msra.mxu0 0.0
      %614 = vmatprep.subr.mxu0 0.0
      %615 = vmatpush1.msra.mxu0 0.0
      %616 = vmatprep.subr.mxu0 0.0
      %617 = vmatpush1.msra.mxu0 0.0
      %618 = vmatprep.subr.mxu0 0.0
      %619 = vmatpush1.msra.mxu0 0.0
      %620 = vmatprep.subr.mxu0 0.0
      %621 = vmatpush1.msra.mxu0 0.0
      %622 = vmatprep.subr.mxu0 0.0
      %623 = vmatpush1.msra.mxu0 0.0
      %624 = vmatprep.subr.mxu0 0.0
      %625 = vmatpush1.msra.mxu0 0.0
      %626 = vmatprep.subr.mxu0 0.0
      %627 = vmatpush1.msra.mxu0 0.0
      %628 = vmatprep.subr.mxu0 0.0
      %629 = vmatpush1.msra.mxu0 0.0
      %630 = vmatprep.subr.mxu0 0.0
      %631 = vmatpush1.msra.mxu0 0.0
      %632 = vmatprep.subr.mxu0 0.0
      %633 = vmatpush1.msra.mxu0 0.0
      %634 = vmatprep.subr.mxu0 0.0
      %635 = vmatpush1.msra.mxu0 0.0
      %636 = vmatprep.subr.mxu0 0.0
      %637 = vmatpush1.msra.mxu0 0.0
      %638 = vmatprep.subr.mxu0 0.0
      %639 = vmatpush1.msra.mxu0 0.0
      %640 = vmatprep.mubr.f32.mxu0 0.0
      %641 = vmatmul.mubr.f32.gmra.mrb[0].mxu0 %v565
      %v642 = vpop.f32.mrb[0].mxu0
      %v643 = vadd.f32 0.0, %v642
      %v644 = vpop.f32.mrb[0].mxu0
      %v645 = vadd.f32 0.0, %v644
      %646 = vdwg.mxu0
      %647 = vmatprep.subr.mxu0 %v574
      %648 = vmatpush1.msra.mxu0 %v572
      %649 = vmatprep.subr.mxu0 0.0
      %650 = vmatpush1.msra.mxu0 0.0
      %651 = vmatprep.subr.mxu0 0.0
      %652 = vmatpush1.msra.mxu0 0.0
      %653 = vmatprep.subr.mxu0 0.0
      %654 = vmatpush1.msra.mxu0 0.0
      %655 = vmatprep.subr.mxu0 0.0
      %656 = vmatpush1.msra.mxu0 0.0
      %657 = vmatprep.subr.mxu0 0.0
      %658 = vmatpush1.msra.mxu0 0.0
      %659 = vmatprep.subr.mxu0 0.0
      %660 = vmatpush1.msra.mxu0 0.0
      %661 = vmatprep.subr.mxu0 0.0
      %662 = vmatpush1.msra.mxu0 0.0
      %663 = vmatprep.subr.mxu0 0.0
      %664 = vmatpush1.msra.mxu0 0.0
      %665 = vmatprep.subr.mxu0 0.0
      %666 = vmatpush1.msra.mxu0 0.0
      %667 = vmatprep.subr.mxu0 0.0
      %668 = vmatpush1.msra.mxu0 0.0
      %669 = vmatprep.subr.mxu0 0.0
      %670 = vmatpush1.msra.mxu0 0.0
      %671 = vmatprep.subr.mxu0 0.0
      %672 = vmatpush1.msra.mxu0 0.0
      %673 = vmatprep.subr.mxu0 0.0
      %674 = vmatpush1.msra.mxu0 0.0
      %675 = vmatprep.subr.mxu0 0.0
      %676 = vmatpush1.msra.mxu0 0.0
      %677 = vmatprep.subr.mxu0 0.0
      %678 = vmatpush1.msra.mxu0 0.0
      %679 = vmatprep.subr.mxu0 0.0
      %680 = vmatpush1.msra.mxu0 0.0
      %681 = vmatprep.subr.mxu0 0.0
      %682 = vmatpush1.msra.mxu0 0.0
      %683 = vmatprep.subr.mxu0 0.0
      %684 = vmatpush1.msra.mxu0 0.0
      %685 = vmatprep.subr.mxu0 0.0
      %686 = vmatpush1.msra.mxu0 0.0
      %687 = vmatprep.subr.mxu0 0.0
      %688 = vmatpush1.msra.mxu0 0.0
      %689 = vmatprep.subr.mxu0 0.0
      %690 = vmatpush1.msra.mxu0 0.0
      %691 = vmatprep.subr.mxu0 0.0
      %692 = vmatpush1.msra.mxu0 0.0
      %693 = vmatprep.subr.mxu0 0.0
      %694 = vmatpush1.msra.mxu0 0.0
      %695 = vmatprep.subr.mxu0 0.0
      %696 = vmatpush1.msra.mxu0 0.0
      %697 = vmatprep.subr.mxu0 0.0
      %698 = vmatpush1.msra.mxu0 0.0
      %699 = vmatprep.subr.mxu0 0.0
      %700 = vmatpush1.msra.mxu0 0.0
      %701 = vmatprep.subr.mxu0 0.0
      %702 = vmatpush1.msra.mxu0 0.0
      %703 = vmatprep.subr.mxu0 0.0
      %704 = vmatpush1.msra.mxu0 0.0
      %705 = vmatprep.subr.mxu0 0.0
      %706 = vmatpush1.msra.mxu0 0.0
      %707 = vmatprep.subr.mxu0 0.0
      %708 = vmatpush1.msra.mxu0 0.0
      %709 = vmatprep.subr.mxu0 0.0
      %710 = vmatpush1.msra.mxu0 0.0
      %711 = vmatprep.mubr.f32.mxu0 0.0
      %712 = vmatmul.mubr.f32.gmra.mrb[0].mxu0 %v565
      %v713 = vpop.f32.mrb[0].mxu0
      %v714 = vadd.f32 0.0, %v713
      %v715 = vpop.f32.mrb[0].mxu0
      %v716 = vadd.f32 0.0, %v715
      %717 = vdwg.mxu0
      %718 = vrot.lane.b32.xlu0 %v535, 82
      %v719 = vpop.permute.xlu0 %718
      %720 = vrot.lane.b32.xlu0 %v536, 82
      %v721 = vpop.permute.xlu0 %720
      %722 = vrot.lane.b32.xlu0 %v537, 82
      %v723 = vpop.permute.xlu0 %722
      %724 = vrot.lane.b32.xlu0 %v538, 82
      %v725 = vpop.permute.xlu0 %724
      %726 = vrot.lane.b32.xlu0 %v539, 82
      %v727 = vpop.permute.xlu0 %726
      %vm728 = vcmask 670720
      %v729 = vsel %vm728, %v719, %v721
      %v730 = vsel %vm728, %v721, %v723
      %v731 = vsel %vm728, %v723, %v725
      %v732 = vsel %vm728, %v725, %v727
      %v734 = vsel %vm563, %v540, 0
      %v736 = vsel %vm567, %v729, 0
      %v738 = vsel %vm567, %v730, 0
      %v740 = vsel %vm567, %v731, 0
      %v742 = vsel %vm567, %v732, 0
      %744 = vmatprep.subr.mxu0 %v738
      %745 = vmatpush1.msra.mxu0 %v736
      %746 = vmatprep.subr.mxu0 0.0
      %747 = vmatpush1.msra.mxu0 0.0
      %748 = vmatprep.subr.mxu0 0.0
      %749 = vmatpush1.msra.mxu0 0.0
      %750 = vmatprep.subr.mxu0 0.0
      %751 = vmatpush1.msra.mxu0 0.0
      %752 = vmatprep.subr.mxu0 0.0
      %753 = vmatpush1.msra.mxu0 0.0
      %754 = vmatprep.subr.mxu0 0.0
      %755 = vmatpush1.msra.mxu0 0.0
      %756 = vmatprep.subr.mxu0 0.0
      %757 = vmatpush1.msra.mxu0 0.0
      %758 = vmatprep.subr.mxu0 0.0
      %759 = vmatpush1.msra.mxu0 0.0
      %760 = vmatprep.subr.mxu0 0.0
      %761 = vmatpush1.msra.mxu0 0.0
      %762 = vmatprep.subr.mxu0 0.0
      %763 = vmatpush1.msra.mxu0 0.0
      %764 = vmatprep.subr.mxu0 0.0
      %765 = vmatpush1.msra.mxu0 0.0
      %766 = vmatprep.subr.mxu0 0.0
      %767 = vmatpush1.msra.mxu0 0.0
      %768 = vmatprep.subr.mxu0 0.0
      %769 = vmatpush1.msra.mxu0 0.0
      %770 = vmatprep.subr.mxu0 0.0
      %771 = vmatpush1.msra.mxu0 0.0
      %772 = vmatprep.subr.mxu0 0.0
      %773 = vmatpush1.msra.mxu0 0.0
      %774 = vmatprep.subr.mxu0 0.0
      %775 = vmatpush1.msra.mxu0 0.0
      %776 = vmatprep.subr.mxu0 0.0
      %777 = vmatpush1.msra.mxu0 0.0
      %778 = vmatprep.subr.mxu0 0.0
      %779 = vmatpush1.msra.mxu0 0.0
      %780 = vmatprep.subr.mxu0 0.0
      %781 = vmatpush1.msra.mxu0 0.0
      %782 = vmatprep.subr.mxu0 0.0
      %783 = vmatpush1.msra.mxu0 0.0
      %784 = vmatprep.subr.mxu0 0.0
      %785 = vmatpush1.msra.mxu0 0.0
      %786 = vmatprep.subr.mxu0 0.0
      %787 = vmatpush1.msra.mxu0 0.0
      %788 = vmatprep.subr.mxu0 0.0
      %789 = vmatpush1.msra.mxu0 0.0
      %790 = vmatprep.subr.mxu0 0.0
      %791 = vmatpush1.msra.mxu0 0.0
      %792 = vmatprep.subr.mxu0 0.0
      %793 = vmatpush1.msra.mxu0 0.0
      %794 = vmatprep.subr.mxu0 0.0
      %795 = vmatpush1.msra.mxu0 0.0
      %796 = vmatprep.subr.mxu0 0.0
      %797 = vmatpush1.msra.mxu0 0.0
      %798 = vmatprep.subr.mxu0 0.0
      %799 = vmatpush1.msra.mxu0 0.0
      %800 = vmatprep.subr.mxu0 0.0
      %801 = vmatpush1.msra.mxu0 0.0
      %802 = vmatprep.subr.mxu0 0.0
      %803 = vmatpush1.msra.mxu0 0.0
      %804 = vmatprep.subr.mxu0 0.0
      %805 = vmatpush1.msra.mxu0 0.0
      %806 = vmatprep.subr.mxu0 0.0
      %807 = vmatpush1.msra.mxu0 0.0
      %808 = vmatprep.mubr.f32.mxu0 0.0
      %809 = vmatmul.mubr.f32.gmra.mrb[0].mxu0 %v734
      %v810 = vpop.f32.mrb[0].mxu0
      %v811 = vadd.f32 %v643, %v810
      %v812 = vpop.f32.mrb[0].mxu0
      %v813 = vadd.f32 %v645, %v812
      %814 = vdwg.mxu0
      %815 = vmatprep.subr.mxu0 %v742
      %816 = vmatpush1.msra.mxu0 %v740
      %817 = vmatprep.subr.mxu0 0.0
      %818 = vmatpush1.msra.mxu0 0.0
      %819 = vmatprep.subr.mxu0 0.0
      %820 = vmatpush1.msra.mxu0 0.0
      %821 = vmatprep.subr.mxu0 0.0
      %822 = vmatpush1.msra.mxu0 0.0
      %823 = vmatprep.subr.mxu0 0.0
      %824 = vmatpush1.msra.mxu0 0.0
      %825 = vmatprep.subr.mxu0 0.0
      %826 = vmatpush1.msra.mxu0 0.0
      %827 = vmatprep.subr.mxu0 0.0
      %828 = vmatpush1.msra.mxu0 0.0
      %829 = vmatprep.subr.mxu0 0.0
      %830 = vmatpush1.msra.mxu0 0.0
      %831 = vmatprep.subr.mxu0 0.0
      %832 = vmatpush1.msra.mxu0 0.0
      %833 = vmatprep.subr.mxu0 0.0
      %834 = vmatpush1.msra.mxu0 0.0
      %835 = vmatprep.subr.mxu0 0.0
      %836 = vmatpush1.msra.mxu0 0.0
      %837 = vmatprep.subr.mxu0 0.0
      %838 = vmatpush1.msra.mxu0 0.0
      %839 = vmatprep.subr.mxu0 0.0
      %840 = vmatpush1.msra.mxu0 0.0
      %841 = vmatprep.subr.mxu0 0.0
      %842 = vmatpush1.msra.mxu0 0.0
      %843 = vmatprep.subr.mxu0 0.0
      %844 = vmatpush1.msra.mxu0 0.0
      %845 = vmatprep.subr.mxu0 0.0
      %846 = vmatpush1.msra.mxu0 0.0
      %847 = vmatprep.subr.mxu0 0.0
      %848 = vmatpush1.msra.mxu0 0.0
      %849 = vmatprep.subr.mxu0 0.0
      %850 = vmatpush1.msra.mxu0 0.0
      %851 = vmatprep.subr.mxu0 0.0
      %852 = vmatpush1.msra.mxu0 0.0
      %853 = vmatprep.subr.mxu0 0.0
      %854 = vmatpush1.msra.mxu0 0.0
      %855 = vmatprep.subr.mxu0 0.0
      %856 = vmatpush1.msra.mxu0 0.0
      %857 = vmatprep.subr.mxu0 0.0
      %858 = vmatpush1.msra.mxu0 0.0
      %859 = vmatprep.subr.mxu0 0.0
      %860 = vmatpush1.msra.mxu0 0.0
      %861 = vmatprep.subr.mxu0 0.0
      %862 = vmatpush1.msra.mxu0 0.0
      %863 = vmatprep.subr.mxu0 0.0
      %864 = vmatpush1.msra.mxu0 0.0
      %865 = vmatprep.subr.mxu0 0.0
      %866 = vmatpush1.msra.mxu0 0.0
      %867 = vmatprep.subr.mxu0 0.0
      %868 = vmatpush1.msra.mxu0 0.0
      %869 = vmatprep.subr.mxu0 0.0
      %870 = vmatpush1.msra.mxu0 0.0
      %871 = vmatprep.subr.mxu0 0.0
      %872 = vmatpush1.msra.mxu0 0.0
      %873 = vmatprep.subr.mxu0 0.0
      %874 = vmatpush1.msra.mxu0 0.0
      %875 = vmatprep.subr.mxu0 0.0
      %876 = vmatpush1.msra.mxu0 0.0
      %877 = vmatprep.subr.mxu0 0.0
      %878 = vmatpush1.msra.mxu0 0.0
      %879 = vmatprep.mubr.f32.mxu0 0.0
      %880 = vmatmul.mubr.f32.gmra.mrb[0].mxu0 %v734
      %v881 = vpop.f32.mrb[0].mxu0
      %v882 = vadd.f32 %v714, %v881
      %v883 = vpop.f32.mrb[0].mxu0
      %v884 = vadd.f32 %v716, %v883
      %885 = vdwg.mxu0
      %s886 = scalar_lea.vmem %s2, 16
      %v887 = vld [vmem:[%s886] sm:$0xff]
      %888 = vrot.lane.b32.xlu0 %v535, 80
      %v889 = vpop.permute.xlu0 %888
      %890 = vrot.lane.b32.xlu0 %v536, 80
      %v891 = vpop.permute.xlu0 %890
      %892 = vrot.lane.b32.xlu0 %v537, 80
      %v893 = vpop.permute.xlu0 %892
      %894 = vrot.lane.b32.xlu0 %v538, 80
      %v895 = vpop.permute.xlu0 %894
      %896 = vrot.lane.b32.xlu0 %v539, 80
      %v897 = vpop.permute.xlu0 %896
      %vm898 = vcmask 654336
      %v899 = vsel %vm898, %v889, %v891
      %v900 = vsel %vm898, %v891, %v893
      %v901 = vsel %vm898, %v893, %v895
      %v902 = vsel %vm898, %v895, %v897
      %v904 = vsel %vm563, %v887, 0
      %v906 = vsel %vm567, %v899, 0
      %v908 = vsel %vm567, %v900, 0
      %v910 = vsel %vm567, %v901, 0
      %v912 = vsel %vm567, %v902, 0
      %914 = vmatprep.subr.mxu0 %v908
      %915 = vmatpush1.msra.mxu0 %v906
      %916 = vmatprep.subr.mxu0 0.0
      %917 = vmatpush1.msra.mxu0 0.0
      %918 = vmatprep.subr.mxu0 0.0
      %919 = vmatpush1.msra.mxu0 0.0
      %920 = vmatprep.subr.mxu0 0.0
      %921 = vmatpush1.msra.mxu0 0.0
      %922 = vmatprep.subr.mxu0 0.0
      %923 = vmatpush1.msra.mxu0 0.0
      %924 = vmatprep.subr.mxu0 0.0
      %925 = vmatpush1.msra.mxu0 0.0
      %926 = vmatprep.subr.mxu0 0.0
      %927 = vmatpush1.msra.mxu0 0.0
      %928 = vmatprep.subr.mxu0 0.0
      %929 = vmatpush1.msra.mxu0 0.0
      %930 = vmatprep.subr.mxu0 0.0
      %931 = vmatpush1.msra.mxu0 0.0
      %932 = vmatprep.subr.mxu0 0.0
      %933 = vmatpush1.msra.mxu0 0.0
      %934 = vmatprep.subr.mxu0 0.0
      %935 = vmatpush1.msra.mxu0 0.0
      %936 = vmatprep.subr.mxu0 0.0
      %937 = vmatpush1.msra.mxu0 0.0
      %938 = vmatprep.subr.mxu0 0.0
      %939 = vmatpush1.msra.mxu0 0.0
      %940 = vmatprep.subr.mxu0 0.0
      %941 = vmatpush1.msra.mxu0 0.0
      %942 = vmatprep.subr.mxu0 0.0
      %943 = vmatpush1.msra.mxu0 0.0
      %944 = vmatprep.subr.mxu0 0.0
      %945 = vmatpush1.msra.mxu0 0.0
      %946 = vmatprep.subr.mxu0 0.0
      %947 = vmatpush1.msra.mxu0 0.0
      %948 = vmatprep.subr.mxu0 0.0
      %949 = vmatpush1.msra.mxu0 0.0
      %950 = vmatprep.subr.mxu0 0.0
      %951 = vmatpush1.msra.mxu0 0.0
      %952 = vmatprep.subr.mxu0 0.0
      %953 = vmatpush1.msra.mxu0 0.0
      %954 = vmatprep.subr.mxu0 0.0
      %955 = vmatpush1.msra.mxu0 0.0
      %956 = vmatprep.subr.mxu0 0.0
      %957 = vmatpush1.msra.mxu0 0.0
      %958 = vmatprep.subr.mxu0 0.0
      %959 = vmatpush1.msra.mxu0 0.0
      %960 = vmatprep.subr.mxu0 0.0
      %961 = vmatpush1.msra.mxu0 0.0
      %962 = vmatprep.subr.mxu0 0.0
      %963 = vmatpush1.msra.mxu0 0.0
      %964 = vmatprep.subr.mxu0 0.0
      %965 = vmatpush1.msra.mxu0 0.0
      %966 = vmatprep.subr.mxu0 0.0
      %967 = vmatpush1.msra.mxu0 0.0
      %968 = vmatprep.subr.mxu0 0.0
      %969 = vmatpush1.msra.mxu0 0.0
      %970 = vmatprep.subr.mxu0 0.0
      %971 = vmatpush1.msra.mxu0 0.0
      %972 = vmatprep.subr.mxu0 0.0
      %973 = vmatpush1.msra.mxu0 0.0
      %974 = vmatprep.subr.mxu0 0.0
      %975 = vmatpush1.msra.mxu0 0.0
      %976 = vmatprep.subr.mxu0 0.0
      %977 = vmatpush1.msra.mxu0 0.0
      %978 = vmatprep.mubr.f32.mxu0 0.0
      %979 = vmatmul.mubr.f32.gmra.mrb[0].mxu0 %v904
      %v980 = vpop.f32.mrb[0].mxu0
      %v981 = vadd.f32 0.0, %v980
      %v982 = vpop.f32.mrb[0].mxu0
      %v983 = vadd.f32 0.0, %v982
      %984 = vdwg.mxu0
      %985 = vmatprep.subr.mxu0 %v912
      %986 = vmatpush1.msra.mxu0 %v910
      %987 = vmatprep.subr.mxu0 0.0
      %988 = vmatpush1.msra.mxu0 0.0
      %989 = vmatprep.subr.mxu0 0.0
      %990 = vmatpush1.msra.mxu0 0.0
      %991 = vmatprep.subr.mxu0 0.0
      %992 = vmatpush1.msra.mxu0 0.0
      %993 = vmatprep.subr.mxu0 0.0
      %994 = vmatpush1.msra.mxu0 0.0
      %995 = vmatprep.subr.mxu0 0.0
      %996 = vmatpush1.msra.mxu0 0.0
      %997 = vmatprep.subr.mxu0 0.0
      %998 = vmatpush1.msra.mxu0 0.0
      %999 = vmatprep.subr.mxu0 0.0
      %1000 = vmatpush1.msra.mxu0 0.0
      %1001 = vmatprep.subr.mxu0 0.0
      %1002 = vmatpush1.msra.mxu0 0.0
      %1003 = vmatprep.subr.mxu0 0.0
      %1004 = vmatpush1.msra.mxu0 0.0
      %1005 = vmatprep.subr.mxu0 0.0
      %1006 = vmatpush1.msra.mxu0 0.0
      %1007 = vmatprep.subr.mxu0 0.0
      %1008 = vmatpush1.msra.mxu0 0.0
      %1009 = vmatprep.subr.mxu0 0.0
      %1010 = vmatpush1.msra.mxu0 0.0
      %1011 = vmatprep.subr.mxu0 0.0
      %1012 = vmatpush1.msra.mxu0 0.0
      %1013 = vmatprep.subr.mxu0 0.0
      %1014 = vmatpush1.msra.mxu0 0.0
      %1015 = vmatprep.subr.mxu0 0.0
      %1016 = vmatpush1.msra.mxu0 0.0
      %1017 = vmatprep.subr.mxu0 0.0
      %1018 = vmatpush1.msra.mxu0 0.0
      %1019 = vmatprep.subr.mxu0 0.0
      %1020 = vmatpush1.msra.mxu0 0.0
      %1021 = vmatprep.subr.mxu0 0.0
      %1022 = vmatpush1.msra.mxu0 0.0
      %1023 = vmatprep.subr.mxu0 0.0
      %1024 = vmatpush1.msra.mxu0 0.0
      %1025 = vmatprep.subr.mxu0 0.0
      %1026 = vmatpush1.msra.mxu0 0.0
      %1027 = vmatprep.subr.mxu0 0.0
      %1028 = vmatpush1.msra.mxu0 0.0
      %1029 = vmatprep.subr.mxu0 0.0
      %1030 = vmatpush1.msra.mxu0 0.0
      %1031 = vmatprep.subr.mxu0 0.0
      %1032 = vmatpush1.msra.mxu0 0.0
      %1033 = vmatprep.subr.mxu0 0.0
      %1034 = vmatpush1.msra.mxu0 0.0
      %1035 = vmatprep.subr.mxu0 0.0
      %1036 = vmatpush1.msra.mxu0 0.0
      %1037 = vmatprep.subr.mxu0 0.0
      %1038 = vmatpush1.msra.mxu0 0.0
      %1039 = vmatprep.subr.mxu0 0.0
      %1040 = vmatpush1.msra.mxu0 0.0
      %1041 = vmatprep.subr.mxu0 0.0
      %1042 = vmatpush1.msra.mxu0 0.0
      %1043 = vmatprep.subr.mxu0 0.0
      %1044 = vmatpush1.msra.mxu0 0.0
      %1045 = vmatprep.subr.mxu0 0.0
      %1046 = vmatpush1.msra.mxu0 0.0
      %1047 = vmatprep.subr.mxu0 0.0
      %1048 = vmatpush1.msra.mxu0 0.0
      %1049 = vmatprep.mubr.f32.mxu0 0.0
      %1050 = vmatmul.mubr.f32.gmra.mrb[0].mxu0 %v904
      %v1051 = vpop.f32.mrb[0].mxu0
      %v1052 = vadd.f32 0.0, %v1051
      %v1053 = vpop.f32.mrb[0].mxu0
      %v1054 = vadd.f32 0.0, %v1053
      %1055 = vdwg.mxu0
      %v1056 = vadd.f32 %v811, %v981
      %v1057 = vadd.f32 %v813, %v983
      %v1058 = vadd.f32 %v882, %v1052
      %v1059 = vadd.f32 %v884, %v1054
      %s1060 = scalar_lea.vmem %s2, 24
      %v1061 = vld [vmem:[%s1060] sm:$0xff]
      %1062 = vrot.lane.b32.xlu0 %v535, 60
      %v1063 = vpop.permute.xlu0 %1062
      %1064 = vrot.lane.b32.xlu0 %v536, 60
      %v1065 = vpop.permute.xlu0 %1064
      %1066 = vrot.lane.b32.xlu0 %v537, 60
      %v1067 = vpop.permute.xlu0 %1066
      %1068 = vrot.lane.b32.xlu0 %v538, 60
      %v1069 = vpop.permute.xlu0 %1068
      %1070 = vrot.lane.b32.xlu0 %v539, 60
      %v1071 = vpop.permute.xlu0 %1070
      %vm1072 = vcmask 490496
      %v1073 = vsel %vm1072, %v1063, %v1065
      %v1074 = vsel %vm1072, %v1065, %v1067
      %v1075 = vsel %vm1072, %v1067, %v1069
      %v1076 = vsel %vm1072, %v1069, %v1071
      %v1078 = vsel %vm563, %v1061, 0
      %v1080 = vsel %vm567, %v1073, 0
      %v1082 = vsel %vm567, %v1074, 0
      %v1084 = vsel %vm567, %v1075, 0
      %v1086 = vsel %vm567, %v1076, 0
      %1088 = vmatprep.subr.mxu0 %v1082
      %1089 = vmatpush1.msra.mxu0 %v1080
      %1090 = vmatprep.subr.mxu0 0.0
      %1091 = vmatpush1.msra.mxu0 0.0
      %1092 = vmatprep.subr.mxu0 0.0
      %1093 = vmatpush1.msra.mxu0 0.0
      %1094 = vmatprep.subr.mxu0 0.0
      %1095 = vmatpush1.msra.mxu0 0.0
      %1096 = vmatprep.subr.mxu0 0.0
      %1097 = vmatpush1.msra.mxu0 0.0
      %1098 = vmatprep.subr.mxu0 0.0
      %1099 = vmatpush1.msra.mxu0 0.0
      %1100 = vmatprep.subr.mxu0 0.0
      %1101 = vmatpush1.msra.mxu0 0.0
      %1102 = vmatprep.subr.mxu0 0.0
      %1103 = vmatpush1.msra.mxu0 0.0
      %1104 = vmatprep.subr.mxu0 0.0
      %1105 = vmatpush1.msra.mxu0 0.0
      %1106 = vmatprep.subr.mxu0 0.0
      %1107 = vmatpush1.msra.mxu0 0.0
      %1108 = vmatprep.subr.mxu0 0.0
      %1109 = vmatpush1.msra.mxu0 0.0
      %1110 = vmatprep.subr.mxu0 0.0
      %1111 = vmatpush1.msra.mxu0 0.0
      %1112 = vmatprep.subr.mxu0 0.0
      %1113 = vmatpush1.msra.mxu0 0.0
      %1114 = vmatprep.subr.mxu0 0.0
      %1115 = vmatpush1.msra.mxu0 0.0
      %1116 = vmatprep.subr.mxu0 0.0
      %1117 = vmatpush1.msra.mxu0 0.0
      %1118 = vmatprep.subr.mxu0 0.0
      %1119 = vmatpush1.msra.mxu0 0.0
      %1120 = vmatprep.subr.mxu0 0.0
      %1121 = vmatpush1.msra.mxu0 0.0
      %1122 = vmatprep.subr.mxu0 0.0
      %1123 = vmatpush1.msra.mxu0 0.0
      %1124 = vmatprep.subr.mxu0 0.0
      %1125 = vmatpush1.msra.mxu0 0.0
      %1126 = vmatprep.subr.mxu0 0.0
      %1127 = vmatpush1.msra.mxu0 0.0
      %1128 = vmatprep.subr.mxu0 0.0
      %1129 = vmatpush1.msra.mxu0 0.0
      %1130 = vmatprep.subr.mxu0 0.0
      %1131 = vmatpush1.msra.mxu0 0.0
      %1132 = vmatprep.subr.mxu0 0.0
      %1133 = vmatpush1.msra.mxu0 0.0
      %1134 = vmatprep.subr.mxu0 0.0
      %1135 = vmatpush1.msra.mxu0 0.0
      %1136 = vmatprep.subr.mxu0 0.0
      %1137 = vmatpush1.msra.mxu0 0.0
      %1138 = vmatprep.subr.mxu0 0.0
      %1139 = vmatpush1.msra.mxu0 0.0
      %1140 = vmatprep.subr.mxu0 0.0
      %1141 = vmatpush1.msra.mxu0 0.0
      %1142 = vmatprep.subr.mxu0 0.0
      %1143 = vmatpush1.msra.mxu0 0.0
      %1144 = vmatprep.subr.mxu0 0.0
      %1145 = vmatpush1.msra.mxu0 0.0
      %1146 = vmatprep.subr.mxu0 0.0
      %1147 = vmatpush1.msra.mxu0 0.0
      %1148 = vmatprep.subr.mxu0 0.0
      %1149 = vmatpush1.msra.mxu0 0.0
      %1150 = vmatprep.subr.mxu0 0.0
      %1151 = vmatpush1.msra.mxu0 0.0
      %1152 = vmatprep.mubr.f32.mxu0 0.0
      %1153 = vmatmul.mubr.f32.gmra.mrb[0].mxu0 %v1078
      %v1154 = vpop.f32.mrb[0].mxu0
      %v1155 = vadd.f32 0.0, %v1154
      %v1156 = vpop.f32.mrb[0].mxu0
      %v1157 = vadd.f32 0.0, %v1156
      %1158 = vdwg.mxu0
      %1159 = vmatprep.subr.mxu0 %v1086
      %1160 = vmatpush1.msra.mxu0 %v1084
      %1161 = vmatprep.subr.mxu0 0.0
      %1162 = vmatpush1.msra.mxu0 0.0
      %1163 = vmatprep.subr.mxu0 0.0
      %1164 = vmatpush1.msra.mxu0 0.0
      %1165 = vmatprep.subr.mxu0 0.0
      %1166 = vmatpush1.msra.mxu0 0.0
      %1167 = vmatprep.subr.mxu0 0.0
      %1168 = vmatpush1.msra.mxu0 0.0
      %1169 = vmatprep.subr.mxu0 0.0
      %1170 = vmatpush1.msra.mxu0 0.0
      %1171 = vmatprep.subr.mxu0 0.0
      %1172 = vmatpush1.msra.mxu0 0.0
      %1173 = vmatprep.subr.mxu0 0.0
      %1174 = vmatpush1.msra.mxu0 0.0
      %1175 = vmatprep.subr.mxu0 0.0
      %1176 = vmatpush1.msra.mxu0 0.0
      %1177 = vmatprep.subr.mxu0 0.0
      %1178 = vmatpush1.msra.mxu0 0.0
      %1179 = vmatprep.subr.mxu0 0.0
      %1180 = vmatpush1.msra.mxu0 0.0
      %1181 = vmatprep.subr.mxu0 0.0
      %1182 = vmatpush1.msra.mxu0 0.0
      %1183 = vmatprep.subr.mxu0 0.0
      %1184 = vmatpush1.msra.mxu0 0.0
      %1185 = vmatprep.subr.mxu0 0.0
      %1186 = vmatpush1.msra.mxu0 0.0
      %1187 = vmatprep.subr.mxu0 0.0
      %1188 = vmatpush1.msra.mxu0 0.0
      %1189 = vmatprep.subr.mxu0 0.0
      %1190 = vmatpush1.msra.mxu0 0.0
      %1191 = vmatprep.subr.mxu0 0.0
      %1192 = vmatpush1.msra.mxu0 0.0
      %1193 = vmatprep.subr.mxu0 0.0
      %1194 = vmatpush1.msra.mxu0 0.0
      %1195 = vmatprep.subr.mxu0 0.0
      %1196 = vmatpush1.msra.mxu0 0.0
      %1197 = vmatprep.subr.mxu0 0.0
      %1198 = vmatpush1.msra.mxu0 0.0
      %1199 = vmatprep.subr.mxu0 0.0
      %1200 = vmatpush1.msra.mxu0 0.0
      %1201 = vmatprep.subr.mxu0 0.0
      %1202 = vmatpush1.msra.mxu0 0.0
      %1203 = vmatprep.subr.mxu0 0.0
      %1204 = vmatpush1.msra.mxu0 0.0
      %1205 = vmatprep.subr.mxu0 0.0
      %1206 = vmatpush1.msra.mxu0 0.0
      %1207 = vmatprep.subr.mxu0 0.0
      %1208 = vmatpush1.msra.mxu0 0.0
      %1209 = vmatprep.subr.mxu0 0.0
      %1210 = vmatpush1.msra.mxu0 0.0
      %1211 = vmatprep.subr.mxu0 0.0
      %1212 = vmatpush1.msra.mxu0 0.0
      %1213 = vmatprep.subr.mxu0 0.0
      %1214 = vmatpush1.msra.mxu0 0.0
      %1215 = vmatprep.subr.mxu0 0.0
      %1216 = vmatpush1.msra.mxu0 0.0
      %1217 = vmatprep.subr.mxu0 0.0
      %1218 = vmatpush1.msra.mxu0 0.0
      %1219 = vmatprep.subr.mxu0 0.0
      %1220 = vmatpush1.msra.mxu0 0.0
      %1221 = vmatprep.subr.mxu0 0.0
      %1222 = vmatpush1.msra.mxu0 0.0
      %1223 = vmatprep.mubr.f32.mxu0 0.0
      %1224 = vmatmul.mubr.f32.gmra.mrb[0].mxu0 %v1078
      %v1225 = vpop.f32.mrb[0].mxu0
      %v1226 = vadd.f32 0.0, %v1225
      %v1227 = vpop.f32.mrb[0].mxu0
      %v1228 = vadd.f32 0.0, %v1227
      %1229 = vdwg.mxu0
      %v1230 = vadd.f32 %v1056, %v1155
      %v1231 = vadd.f32 %v1057, %v1157
      %v1232 = vadd.f32 %v1058, %v1226
      %v1233 = vadd.f32 %v1059, %v1228
      %s1234 = scalar_lea.vmem %s2, 32
      %v1235 = vld [vmem:[%s1234] sm:$0xff]
      %1236 = vrot.lane.b32.xlu0 %v535, 59
      %v1237 = vpop.permute.xlu0 %1236
      %1238 = vrot.lane.b32.xlu0 %v536, 59
      %v1239 = vpop.permute.xlu0 %1238
      %1240 = vrot.lane.b32.xlu0 %v537, 59
      %v1241 = vpop.permute.xlu0 %1240
      %1242 = vrot.lane.b32.xlu0 %v538, 59
      %v1243 = vpop.permute.xlu0 %1242
      %1244 = vrot.lane.b32.xlu0 %v539, 59
      %v1245 = vpop.permute.xlu0 %1244
      %vm1246 = vcmask 482304
      %v1247 = vsel %vm1246, %v1237, %v1239
      %v1248 = vsel %vm1246, %v1239, %v1241
      %v1249 = vsel %vm1246, %v1241, %v1243
      %v1250 = vsel %vm1246, %v1243, %v1245
      %v1252 = vsel %vm563, %v1235, 0
      %v1254 = vsel %vm567, %v1247, 0
      %v1256 = vsel %vm567, %v1248, 0
      %v1258 = vsel %vm567, %v1249, 0
      %v1260 = vsel %vm567, %v1250, 0
      %1262 = vmatprep.subr.mxu0 %v1256
      %1263 = vmatpush1.msra.mxu0 %v1254
      %1264 = vmatprep.subr.mxu0 0.0
      %1265 = vmatpush1.msra.mxu0 0.0
      %1266 = vmatprep.subr.mxu0 0.0
      %1267 = vmatpush1.msra.mxu0 0.0
      %1268 = vmatprep.subr.mxu0 0.0
      %1269 = vmatpush1.msra.mxu0 0.0
      %1270 = vmatprep.subr.mxu0 0.0
      %1271 = vmatpush1.msra.mxu0 0.0
      %1272 = vmatprep.subr.mxu0 0.0
      %1273 = vmatpush1.msra.mxu0 0.0
      %1274 = vmatprep.subr.mxu0 0.0
      %1275 = vmatpush1.msra.mxu0 0.0
      %1276 = vmatprep.subr.mxu0 0.0
      %1277 = vmatpush1.msra.mxu0 0.0
      %1278 = vmatprep.subr.mxu0 0.0
      %1279 = vmatpush1.msra.mxu0 0.0
      %1280 = vmatprep.subr.mxu0 0.0
      %1281 = vmatpush1.msra.mxu0 0.0
      %1282 = vmatprep.subr.mxu0 0.0
      %1283 = vmatpush1.msra.mxu0 0.0
      %1284 = vmatprep.subr.mxu0 0.0
      %1285 = vmatpush1.msra.mxu0 0.0
      %1286 = vmatprep.subr.mxu0 0.0
      %1287 = vmatpush1.msra.mxu0 0.0
      %1288 = vmatprep.subr.mxu0 0.0
      %1289 = vmatpush1.msra.mxu0 0.0
      %1290 = vmatprep.subr.mxu0 0.0
      %1291 = vmatpush1.msra.mxu0 0.0
      %1292 = vmatprep.subr.mxu0 0.0
      %1293 = vmatpush1.msra.mxu0 0.0
      %1294 = vmatprep.subr.mxu0 0.0
      %1295 = vmatpush1.msra.mxu0 0.0
      %1296 = vmatprep.subr.mxu0 0.0
      %1297 = vmatpush1.msra.mxu0 0.0
      %1298 = vmatprep.subr.mxu0 0.0
      %1299 = vmatpush1.msra.mxu0 0.0
      %1300 = vmatprep.subr.mxu0 0.0
      %1301 = vmatpush1.msra.mxu0 0.0
      %1302 = vmatprep.subr.mxu0 0.0
      %1303 = vmatpush1.msra.mxu0 0.0
      %1304 = vmatprep.subr.mxu0 0.0
      %1305 = vmatpush1.msra.mxu0 0.0
      %1306 = vmatprep.subr.mxu0 0.0
      %1307 = vmatpush1.msra.mxu0 0.0
      %1308 = vmatprep.subr.mxu0 0.0
      %1309 = vmatpush1.msra.mxu0 0.0
      %1310 = vmatprep.subr.mxu0 0.0
      %1311 = vmatpush1.msra.mxu0 0.0
      %1312 = vmatprep.subr.mxu0 0.0
      %1313 = vmatpush1.msra.mxu0 0.0
      %1314 = vmatprep.subr.mxu0 0.0
      %1315 = vmatpush1.msra.mxu0 0.0
      %1316 = vmatprep.subr.mxu0 0.0
      %1317 = vmatpush1.msra.mxu0 0.0
      %1318 = vmatprep.subr.mxu0 0.0
      %1319 = vmatpush1.msra.mxu0 0.0
      %1320 = vmatprep.subr.mxu0 0.0
      %1321 = vmatpush1.msra.mxu0 0.0
      %1322 = vmatprep.subr.mxu0 0.0
      %1323 = vmatpush1.msra.mxu0 0.0
      %1324 = vmatprep.subr.mxu0 0.0
      %1325 = vmatpush1.msra.mxu0 0.0
      %1326 = vmatprep.mubr.f32.mxu0 0.0
      %1327 = vmatmul.mubr.f32.gmra.mrb[0].mxu0 %v1252
      %v1328 = vpop.f32.mrb[0].mxu0
      %v1329 = vadd.f32 0.0, %v1328
      %v1330 = vpop.f32.mrb[0].mxu0
      %v1331 = vadd.f32 0.0, %v1330
      %1332 = vdwg.mxu0
      %1333 = vmatprep.subr.mxu0 %v1260
      %1334 = vmatpush1.msra.mxu0 %v1258
      %1335 = vmatprep.subr.mxu0 0.0
      %1336 = vmatpush1.msra.mxu0 0.0
      %1337 = vmatprep.subr.mxu0 0.0
      %1338 = vmatpush1.msra.mxu0 0.0
      %1339 = vmatprep.subr.mxu0 0.0
      %1340 = vmatpush1.msra.mxu0 0.0
      %1341 = vmatprep.subr.mxu0 0.0
      %1342 = vmatpush1.msra.mxu0 0.0
      %1343 = vmatprep.subr.mxu0 0.0
      %1344 = vmatpush1.msra.mxu0 0.0
      %1345 = vmatprep.subr.mxu0 0.0
      %1346 = vmatpush1.msra.mxu0 0.0
      %1347 = vmatprep.subr.mxu0 0.0
      %1348 = vmatpush1.msra.mxu0 0.0
      %1349 = vmatprep.subr.mxu0 0.0
      %1350 = vmatpush1.msra.mxu0 0.0
      %1351 = vmatprep.subr.mxu0 0.0
      %1352 = vmatpush1.msra.mxu0 0.0
      %1353 = vmatprep.subr.mxu0 0.0
      %1354 = vmatpush1.msra.mxu0 0.0
      %1355 = vmatprep.subr.mxu0 0.0
      %1356 = vmatpush1.msra.mxu0 0.0
      %1357 = vmatprep.subr.mxu0 0.0
      %1358 = vmatpush1.msra.mxu0 0.0
      %1359 = vmatprep.subr.mxu0 0.0
      %1360 = vmatpush1.msra.mxu0 0.0
      %1361 = vmatprep.subr.mxu0 0.0
      %1362 = vmatpush1.msra.mxu0 0.0
      %1363 = vmatprep.subr.mxu0 0.0
      %1364 = vmatpush1.msra.mxu0 0.0
      %1365 = vmatprep.subr.mxu0 0.0
      %1366 = vmatpush1.msra.mxu0 0.0
      %1367 = vmatprep.subr.mxu0 0.0
      %1368 = vmatpush1.msra.mxu0 0.0
      %1369 = vmatprep.subr.mxu0 0.0
      %1370 = vmatpush1.msra.mxu0 0.0
      %1371 = vmatprep.subr.mxu0 0.0
      %1372 = vmatpush1.msra.mxu0 0.0
      %1373 = vmatprep.subr.mxu0 0.0
      %1374 = vmatpush1.msra.mxu0 0.0
      %1375 = vmatprep.subr.mxu0 0.0
      %1376 = vmatpush1.msra.mxu0 0.0
      %1377 = vmatprep.subr.mxu0 0.0
      %1378 = vmatpush1.msra.mxu0 0.0
      %1379 = vmatprep.subr.mxu0 0.0
      %1380 = vmatpush1.msra.mxu0 0.0
      %1381 = vmatprep.subr.mxu0 0.0
      %1382 = vmatpush1.msra.mxu0 0.0
      %1383 = vmatprep.subr.mxu0 0.0
      %1384 = vmatpush1.msra.mxu0 0.0
      %1385 = vmatprep.subr.mxu0 0.0
      %1386 = vmatpush1.msra.mxu0 0.0
      %1387 = vmatprep.subr.mxu0 0.0
      %1388 = vmatpush1.msra.mxu0 0.0
      %1389 = vmatprep.subr.mxu0 0.0
      %1390 = vmatpush1.msra.mxu0 0.0
      %1391 = vmatprep.subr.mxu0 0.0
      %1392 = vmatpush1.msra.mxu0 0.0
      %1393 = vmatprep.subr.mxu0 0.0
      %1394 = vmatpush1.msra.mxu0 0.0
      %1395 = vmatprep.subr.mxu0 0.0
      %1396 = vmatpush1.msra.mxu0 0.0
      %1397 = vmatprep.mubr.f32.mxu0 0.0
      %1398 = vmatmul.mubr.f32.gmra.mrb[0].mxu0 %v1252
      %v1399 = vpop.f32.mrb[0].mxu0
      %v1400 = vadd.f32 0.0, %v1399
      %v1401 = vpop.f32.mrb[0].mxu0
      %v1402 = vadd.f32 0.0, %v1401
      %1403 = vdwg.mxu0
      %v1404 = vadd.f32 %v1230, %v1329
      %v1405 = vadd.f32 %v1231, %v1331
      %v1406 = vadd.f32 %v1232, %v1400
      %v1407 = vadd.f32 %v1233, %v1402
      %s1408 = scalar_lea.vmem %s2, 40
      %v1409 = vld [vmem:[%s1408] sm:$0xff]
      %1410 = vrot.lane.b32.xlu0 %v535, 58
      %v1411 = vpop.permute.xlu0 %1410
      %1412 = vrot.lane.b32.xlu0 %v536, 58
      %v1413 = vpop.permute.xlu0 %1412
      %1414 = vrot.lane.b32.xlu0 %v537, 58
      %v1415 = vpop.permute.xlu0 %1414
      %1416 = vrot.lane.b32.xlu0 %v538, 58
      %v1417 = vpop.permute.xlu0 %1416
      %1418 = vrot.lane.b32.xlu0 %v539, 58
      %v1419 = vpop.permute.xlu0 %1418
      %vm1420 = vcmask 474112
      %v1421 = vsel %vm1420, %v1411, %v1413
      %v1422 = vsel %vm1420, %v1413, %v1415
      %v1423 = vsel %vm1420, %v1415, %v1417
      %v1424 = vsel %vm1420, %v1417, %v1419
      %v1426 = vsel %vm563, %v1409, 0
      %v1428 = vsel %vm567, %v1421, 0
      %v1430 = vsel %vm567, %v1422, 0
      %v1432 = vsel %vm567, %v1423, 0
      %v1434 = vsel %vm567, %v1424, 0
      %1436 = vmatprep.subr.mxu0 %v1430
      %1437 = vmatpush1.msra.mxu0 %v1428
      %1438 = vmatprep.subr.mxu0 0.0
      %1439 = vmatpush1.msra.mxu0 0.0
      %1440 = vmatprep.subr.mxu0 0.0
      %1441 = vmatpush1.msra.mxu0 0.0
      %1442 = vmatprep.subr.mxu0 0.0
      %1443 = vmatpush1.msra.mxu0 0.0
      %1444 = vmatprep.subr.mxu0 0.0
      %1445 = vmatpush1.msra.mxu0 0.0
      %1446 = vmatprep.subr.mxu0 0.0
      %1447 = vmatpush1.msra.mxu0 0.0
      %1448 = vmatprep.subr.mxu0 0.0
      %1449 = vmatpush1.msra.mxu0 0.0
      %1450 = vmatprep.subr.mxu0 0.0
      %1451 = vmatpush1.msra.mxu0 0.0
      %1452 = vmatprep.subr.mxu0 0.0
      %1453 = vmatpush1.msra.mxu0 0.0
      %1454 = vmatprep.subr.mxu0 0.0
      %1455 = vmatpush1.msra.mxu0 0.0
      %1456 = vmatprep.subr.mxu0 0.0
      %1457 = vmatpush1.msra.mxu0 0.0
      %1458 = vmatprep.subr.mxu0 0.0
      %1459 = vmatpush1.msra.mxu0 0.0
      %1460 = vmatprep.subr.mxu0 0.0
      %1461 = vmatpush1.msra.mxu0 0.0
      %1462 = vmatprep.subr.mxu0 0.0
      %1463 = vmatpush1.msra.mxu0 0.0
      %1464 = vmatprep.subr.mxu0 0.0
      %1465 = vmatpush1.msra.mxu0 0.0
      %1466 = vmatprep.subr.mxu0 0.0
      %1467 = vmatpush1.msra.mxu0 0.0
      %1468 = vmatprep.subr.mxu0 0.0
      %1469 = vmatpush1.msra.mxu0 0.0
      %1470 = vmatprep.subr.mxu0 0.0
      %1471 = vmatpush1.msra.mxu0 0.0
      %1472 = vmatprep.subr.mxu0 0.0
      %1473 = vmatpush1.msra.mxu0 0.0
      %1474 = vmatprep.subr.mxu0 0.0
      %1475 = vmatpush1.msra.mxu0 0.0
      %1476 = vmatprep.subr.mxu0 0.0
      %1477 = vmatpush1.msra.mxu0 0.0
      %1478 = vmatprep.subr.mxu0 0.0
      %1479 = vmatpush1.msra.mxu0 0.0
      %1480 = vmatprep.subr.mxu0 0.0
      %1481 = vmatpush1.msra.mxu0 0.0
      %1482 = vmatprep.subr.mxu0 0.0
      %1483 = vmatpush1.msra.mxu0 0.0
      %1484 = vmatprep.subr.mxu0 0.0
      %1485 = vmatpush1.msra.mxu0 0.0
      %1486 = vmatprep.subr.mxu0 0.0
      %1487 = vmatpush1.msra.mxu0 0.0
      %1488 = vmatprep.subr.mxu0 0.0
      %1489 = vmatpush1.msra.mxu0 0.0
      %1490 = vmatprep.subr.mxu0 0.0
      %1491 = vmatpush1.msra.mxu0 0.0
      %1492 = vmatprep.subr.mxu0 0.0
      %1493 = vmatpush1.msra.mxu0 0.0
      %1494 = vmatprep.subr.mxu0 0.0
      %1495 = vmatpush1.msra.mxu0 0.0
      %1496 = vmatprep.subr.mxu0 0.0
      %1497 = vmatpush1.msra.mxu0 0.0
      %1498 = vmatprep.subr.mxu0 0.0
      %1499 = vmatpush1.msra.mxu0 0.0
      %1500 = vmatprep.mubr.f32.mxu0 0.0
      %1501 = vmatmul.mubr.f32.gmra.mrb[0].mxu0 %v1426
      %v1502 = vpop.f32.mrb[0].mxu0
      %v1503 = vadd.f32 0.0, %v1502
      %v1504 = vpop.f32.mrb[0].mxu0
      %v1505 = vadd.f32 0.0, %v1504
      %1506 = vdwg.mxu0
      %1507 = vmatprep.subr.mxu0 %v1434
      %1508 = vmatpush1.msra.mxu0 %v1432
      %1509 = vmatprep.subr.mxu0 0.0
      %1510 = vmatpush1.msra.mxu0 0.0
      %1511 = vmatprep.subr.mxu0 0.0
      %1512 = vmatpush1.msra.mxu0 0.0
      %1513 = vmatprep.subr.mxu0 0.0
      %1514 = vmatpush1.msra.mxu0 0.0
      %1515 = vmatprep.subr.mxu0 0.0
      %1516 = vmatpush1.msra.mxu0 0.0
      %1517 = vmatprep.subr.mxu0 0.0
      %1518 = vmatpush1.msra.mxu0 0.0
      %1519 = vmatprep.subr.mxu0 0.0
      %1520 = vmatpush1.msra.mxu0 0.0
      %1521 = vmatprep.subr.mxu0 0.0
      %1522 = vmatpush1.msra.mxu0 0.0
      %1523 = vmatprep.subr.mxu0 0.0
      %1524 = vmatpush1.msra.mxu0 0.0
      %1525 = vmatprep.subr.mxu0 0.0
      %1526 = vmatpush1.msra.mxu0 0.0
      %1527 = vmatprep.subr.mxu0 0.0
      %1528 = vmatpush1.msra.mxu0 0.0
      %1529 = vmatprep.subr.mxu0 0.0
      %1530 = vmatpush1.msra.mxu0 0.0
      %1531 = vmatprep.subr.mxu0 0.0
      %1532 = vmatpush1.msra.mxu0 0.0
      %1533 = vmatprep.subr.mxu0 0.0
      %1534 = vmatpush1.msra.mxu0 0.0
      %1535 = vmatprep.subr.mxu0 0.0
      %1536 = vmatpush1.msra.mxu0 0.0
      %1537 = vmatprep.subr.mxu0 0.0
      %1538 = vmatpush1.msra.mxu0 0.0
      %1539 = vmatprep.subr.mxu0 0.0
      %1540 = vmatpush1.msra.mxu0 0.0
      %1541 = vmatprep.subr.mxu0 0.0
      %1542 = vmatpush1.msra.mxu0 0.0
      %1543 = vmatprep.subr.mxu0 0.0
      %1544 = vmatpush1.msra.mxu0 0.0
      %1545 = vmatprep.subr.mxu0 0.0
      %1546 = vmatpush1.msra.mxu0 0.0
      %1547 = vmatprep.subr.mxu0 0.0
      %1548 = vmatpush1.msra.mxu0 0.0
      %1549 = vmatprep.subr.mxu0 0.0
      %1550 = vmatpush1.msra.mxu0 0.0
      %1551 = vmatprep.subr.mxu0 0.0
      %1552 = vmatpush1.msra.mxu0 0.0
      %1553 = vmatprep.subr.mxu0 0.0
      %1554 = vmatpush1.msra.mxu0 0.0
      %1555 = vmatprep.subr.mxu0 0.0
      %1556 = vmatpush1.msra.mxu0 0.0
      %1557 = vmatprep.subr.mxu0 0.0
      %1558 = vmatpush1.msra.mxu0 0.0
      %1559 = vmatprep.subr.mxu0 0.0
      %1560 = vmatpush1.msra.mxu0 0.0
      %1561 = vmatprep.subr.mxu0 0.0
      %1562 = vmatpush1.msra.mxu0 0.0
      %1563 = vmatprep.subr.mxu0 0.0
      %1564 = vmatpush1.msra.mxu0 0.0
      %1565 = vmatprep.subr.mxu0 0.0
      %1566 = vmatpush1.msra.mxu0 0.0
      %1567 = vmatprep.subr.mxu0 0.0
      %1568 = vmatpush1.msra.mxu0 0.0
      %1569 = vmatprep.subr.mxu0 0.0
      %1570 = vmatpush1.msra.mxu0 0.0
      %1571 = vmatprep.mubr.f32.mxu0 0.0
      %1572 = vmatmul.mubr.f32.gmra.mrb[0].mxu0 %v1426
      %v1573 = vpop.f32.mrb[0].mxu0
      %v1574 = vadd.f32 0.0, %v1573
      %v1575 = vpop.f32.mrb[0].mxu0
      %v1576 = vadd.f32 0.0, %v1575
      %1577 = vdwg.mxu0
      %v1578 = vadd.f32 %v1404, %v1503
      %v1579 = vadd.f32 %v1405, %v1505
      %v1580 = vadd.f32 %v1406, %v1574
      %v1581 = vadd.f32 %v1407, %v1576
      %s1582 = scalar_lea.vmem %s2, 48
      %v1583 = vld [vmem:[%s1582] sm:$0xff]
      %1584 = vrot.lane.b32.xlu0 %v535, 38
      %v1585 = vpop.permute.xlu0 %1584
      %1586 = vrot.lane.b32.xlu0 %v536, 38
      %v1587 = vpop.permute.xlu0 %1586
      %1588 = vrot.lane.b32.xlu0 %v537, 38
      %v1589 = vpop.permute.xlu0 %1588
      %1590 = vrot.lane.b32.xlu0 %v538, 38
      %v1591 = vpop.permute.xlu0 %1590
      %1592 = vrot.lane.b32.xlu0 %v539, 38
      %v1593 = vpop.permute.xlu0 %1592
      %vm1594 = vcmask 310272
      %v1595 = vsel %vm1594, %v1585, %v1587
      %v1596 = vsel %vm1594, %v1587, %v1589
      %v1597 = vsel %vm1594, %v1589, %v1591
      %v1598 = vsel %vm1594, %v1591, %v1593
      %v1600 = vsel %vm563, %v1583, 0
      %v1602 = vsel %vm567, %v1595, 0
      %v1604 = vsel %vm567, %v1596, 0
      %v1606 = vsel %vm567, %v1597, 0
      %v1608 = vsel %vm567, %v1598, 0
      %1610 = vmatprep.subr.mxu0 %v1604
      %1611 = vmatpush1.msra.mxu0 %v1602
      %1612 = vmatprep.subr.mxu0 0.0
      %1613 = vmatpush1.msra.mxu0 0.0
      %1614 = vmatprep.subr.mxu0 0.0
      %1615 = vmatpush1.msra.mxu0 0.0
      %1616 = vmatprep.subr.mxu0 0.0
      %1617 = vmatpush1.msra.mxu0 0.0
      %1618 = vmatprep.subr.mxu0 0.0
      %1619 = vmatpush1.msra.mxu0 0.0
      %1620 = vmatprep.subr.mxu0 0.0
      %1621 = vmatpush1.msra.mxu0 0.0
      %1622 = vmatprep.subr.mxu0 0.0
      %1623 = vmatpush1.msra.mxu0 0.0
      %1624 = vmatprep.subr.mxu0 0.0
      %1625 = vmatpush1.msra.mxu0 0.0
      %1626 = vmatprep.subr.mxu0 0.0
      %1627 = vmatpush1.msra.mxu0 0.0
      %1628 = vmatprep.subr.mxu0 0.0
      %1629 = vmatpush1.msra.mxu0 0.0
      %1630 = vmatprep.subr.mxu0 0.0
      %1631 = vmatpush1.msra.mxu0 0.0
      %1632 = vmatprep.subr.mxu0 0.0
      %1633 = vmatpush1.msra.mxu0 0.0
      %1634 = vmatprep.subr.mxu0 0.0
      %1635 = vmatpush1.msra.mxu0 0.0
      %1636 = vmatprep.subr.mxu0 0.0
      %1637 = vmatpush1.msra.mxu0 0.0
      %1638 = vmatprep.subr.mxu0 0.0
      %1639 = vmatpush1.msra.mxu0 0.0
      %1640 = vmatprep.subr.mxu0 0.0
      %1641 = vmatpush1.msra.mxu0 0.0
      %1642 = vmatprep.subr.mxu0 0.0
      %1643 = vmatpush1.msra.mxu0 0.0
      %1644 = vmatprep.subr.mxu0 0.0
      %1645 = vmatpush1.msra.mxu0 0.0
      %1646 = vmatprep.subr.mxu0 0.0
      %1647 = vmatpush1.msra.mxu0 0.0
      %1648 = vmatprep.subr.mxu0 0.0
      %1649 = vmatpush1.msra.mxu0 0.0
      %1650 = vmatprep.subr.mxu0 0.0
      %1651 = vmatpush1.msra.mxu0 0.0
      %1652 = vmatprep.subr.mxu0 0.0
      %1653 = vmatpush1.msra.mxu0 0.0
      %1654 = vmatprep.subr.mxu0 0.0
      %1655 = vmatpush1.msra.mxu0 0.0
      %1656 = vmatprep.subr.mxu0 0.0
      %1657 = vmatpush1.msra.mxu0 0.0
      %1658 = vmatprep.subr.mxu0 0.0
      %1659 = vmatpush1.msra.mxu0 0.0
      %1660 = vmatprep.subr.mxu0 0.0
      %1661 = vmatpush1.msra.mxu0 0.0
      %1662 = vmatprep.subr.mxu0 0.0
      %1663 = vmatpush1.msra.mxu0 0.0
      %1664 = vmatprep.subr.mxu0 0.0
      %1665 = vmatpush1.msra.mxu0 0.0
      %1666 = vmatprep.subr.mxu0 0.0
      %1667 = vmatpush1.msra.mxu0 0.0
      %1668 = vmatprep.subr.mxu0 0.0
      %1669 = vmatpush1.msra.mxu0 0.0
      %1670 = vmatprep.subr.mxu0 0.0
      %1671 = vmatpush1.msra.mxu0 0.0
      %1672 = vmatprep.subr.mxu0 0.0
      %1673 = vmatpush1.msra.mxu0 0.0
      %1674 = vmatprep.mubr.f32.mxu0 0.0
      %1675 = vmatmul.mubr.f32.gmra.mrb[0].mxu0 %v1600
      %v1676 = vpop.f32.mrb[0].mxu0
      %v1677 = vadd.f32 0.0, %v1676
      %v1678 = vpop.f32.mrb[0].mxu0
      %v1679 = vadd.f32 0.0, %v1678
      %1680 = vdwg.mxu0
      %1681 = vmatprep.subr.mxu0 %v1608
      %1682 = vmatpush1.msra.mxu0 %v1606
      %1683 = vmatprep.subr.mxu0 0.0
      %1684 = vmatpush1.msra.mxu0 0.0
      %1685 = vmatprep.subr.mxu0 0.0
      %1686 = vmatpush1.msra.mxu0 0.0
      %1687 = vmatprep.subr.mxu0 0.0
      %1688 = vmatpush1.msra.mxu0 0.0
      %1689 = vmatprep.subr.mxu0 0.0
      %1690 = vmatpush1.msra.mxu0 0.0
      %1691 = vmatprep.subr.mxu0 0.0
      %1692 = vmatpush1.msra.mxu0 0.0
      %1693 = vmatprep.subr.mxu0 0.0
      %1694 = vmatpush1.msra.mxu0 0.0
      %1695 = vmatprep.subr.mxu0 0.0
      %1696 = vmatpush1.msra.mxu0 0.0
      %1697 = vmatprep.subr.mxu0 0.0
      %1698 = vmatpush1.msra.mxu0 0.0
      %1699 = vmatprep.subr.mxu0 0.0
      %1700 = vmatpush1.msra.mxu0 0.0
      %1701 = vmatprep.subr.mxu0 0.0
      %1702 = vmatpush1.msra.mxu0 0.0
      %1703 = vmatprep.subr.mxu0 0.0
      %1704 = vmatpush1.msra.mxu0 0.0
      %1705 = vmatprep.subr.mxu0 0.0
      %1706 = vmatpush1.msra.mxu0 0.0
      %1707 = vmatprep.subr.mxu0 0.0
      %1708 = vmatpush1.msra.mxu0 0.0
      %1709 = vmatprep.subr.mxu0 0.0
      %1710 = vmatpush1.msra.mxu0 0.0
      %1711 = vmatprep.subr.mxu0 0.0
      %1712 = vmatpush1.msra.mxu0 0.0
      %1713 = vmatprep.subr.mxu0 0.0
      %1714 = vmatpush1.msra.mxu0 0.0
      %1715 = vmatprep.subr.mxu0 0.0
      %1716 = vmatpush1.msra.mxu0 0.0
      %1717 = vmatprep.subr.mxu0 0.0
      %1718 = vmatpush1.msra.mxu0 0.0
      %1719 = vmatprep.subr.mxu0 0.0
      %1720 = vmatpush1.msra.mxu0 0.0
      %1721 = vmatprep.subr.mxu0 0.0
      %1722 = vmatpush1.msra.mxu0 0.0
      %1723 = vmatprep.subr.mxu0 0.0
      %1724 = vmatpush1.msra.mxu0 0.0
      %1725 = vmatprep.subr.mxu0 0.0
      %1726 = vmatpush1.msra.mxu0 0.0
      %1727 = vmatprep.subr.mxu0 0.0
      %1728 = vmatpush1.msra.mxu0 0.0
      %1729 = vmatprep.subr.mxu0 0.0
      %1730 = vmatpush1.msra.mxu0 0.0
      %1731 = vmatprep.subr.mxu0 0.0
      %1732 = vmatpush1.msra.mxu0 0.0
      %1733 = vmatprep.subr.mxu0 0.0
      %1734 = vmatpush1.msra.mxu0 0.0
      %1735 = vmatprep.subr.mxu0 0.0
      %1736 = vmatpush1.msra.mxu0 0.0
      %1737 = vmatprep.subr.mxu0 0.0
      %1738 = vmatpush1.msra.mxu0 0.0
      %1739 = vmatprep.subr.mxu0 0.0
      %1740 = vmatpush1.msra.mxu0 0.0
      %1741 = vmatprep.subr.mxu0 0.0
      %1742 = vmatpush1.msra.mxu0 0.0
      %1743 = vmatprep.subr.mxu0 0.0
      %1744 = vmatpush1.msra.mxu0 0.0
      %1745 = vmatprep.mubr.f32.mxu0 0.0
      %1746 = vmatmul.mubr.f32.gmra.mrb[0].mxu0 %v1600
      %v1747 = vpop.f32.mrb[0].mxu0
      %v1748 = vadd.f32 0.0, %v1747
      %v1749 = vpop.f32.mrb[0].mxu0
      %v1750 = vadd.f32 0.0, %v1749
      %1751 = vdwg.mxu0
      %v1752 = vadd.f32 %v1578, %v1677
      %v1753 = vadd.f32 %v1579, %v1679
      %v1754 = vadd.f32 %v1580, %v1748
      %v1755 = vadd.f32 %v1581, %v1750
      %s1756 = scalar_lea.vmem %s2, 56
      %v1757 = vld [vmem:[%s1756] sm:$0xff]
      %1758 = vrot.lane.b32.xlu0 %v535, 37
      %v1759 = vpop.permute.xlu0 %1758
      %1760 = vrot.lane.b32.xlu0 %v536, 37
      %v1761 = vpop.permute.xlu0 %1760
      %1762 = vrot.lane.b32.xlu0 %v537, 37
      %v1763 = vpop.permute.xlu0 %1762
      %1764 = vrot.lane.b32.xlu0 %v538, 37
      %v1765 = vpop.permute.xlu0 %1764
      %1766 = vrot.lane.b32.xlu0 %v539, 37
      %v1767 = vpop.permute.xlu0 %1766
      %vm1768 = vcmask 302080
      %v1769 = vsel %vm1768, %v1759, %v1761
      %v1770 = vsel %vm1768, %v1761, %v1763
      %v1771 = vsel %vm1768, %v1763, %v1765
      %v1772 = vsel %vm1768, %v1765, %v1767
      %v1774 = vsel %vm563, %v1757, 0
      %v1776 = vsel %vm567, %v1769, 0
      %v1778 = vsel %vm567, %v1770, 0
      %v1780 = vsel %vm567, %v1771, 0
      %v1782 = vsel %vm567, %v1772, 0
      %1784 = vmatprep.subr.mxu0 %v1778
      %1785 = vmatpush1.msra.mxu0 %v1776
      %1786 = vmatprep.subr.mxu0 0.0
      %1787 = vmatpush1.msra.mxu0 0.0
      %1788 = vmatprep.subr.mxu0 0.0
      %1789 = vmatpush1.msra.mxu0 0.0
      %1790 = vmatprep.subr.mxu0 0.0
      %1791 = vmatpush1.msra.mxu0 0.0
      %1792 = vmatprep.subr.mxu0 0.0
      %1793 = vmatpush1.msra.mxu0 0.0
      %1794 = vmatprep.subr.mxu0 0.0
      %1795 = vmatpush1.msra.mxu0 0.0
      %1796 = vmatprep.subr.mxu0 0.0
      %1797 = vmatpush1.msra.mxu0 0.0
      %1798 = vmatprep.subr.mxu0 0.0
      %1799 = vmatpush1.msra.mxu0 0.0
      %1800 = vmatprep.subr.mxu0 0.0
      %1801 = vmatpush1.msra.mxu0 0.0
      %1802 = vmatprep.subr.mxu0 0.0
      %1803 = vmatpush1.msra.mxu0 0.0
      %1804 = vmatprep.subr.mxu0 0.0
      %1805 = vmatpush1.msra.mxu0 0.0
      %1806 = vmatprep.subr.mxu0 0.0
      %1807 = vmatpush1.msra.mxu0 0.0
      %1808 = vmatprep.subr.mxu0 0.0
      %1809 = vmatpush1.msra.mxu0 0.0
      %1810 = vmatprep.subr.mxu0 0.0
      %1811 = vmatpush1.msra.mxu0 0.0
      %1812 = vmatprep.subr.mxu0 0.0
      %1813 = vmatpush1.msra.mxu0 0.0
      %1814 = vmatprep.subr.mxu0 0.0
      %1815 = vmatpush1.msra.mxu0 0.0
      %1816 = vmatprep.subr.mxu0 0.0
      %1817 = vmatpush1.msra.mxu0 0.0
      %1818 = vmatprep.subr.mxu0 0.0
      %1819 = vmatpush1.msra.mxu0 0.0
      %1820 = vmatprep.subr.mxu0 0.0
      %1821 = vmatpush1.msra.mxu0 0.0
      %1822 = vmatprep.subr.mxu0 0.0
      %1823 = vmatpush1.msra.mxu0 0.0
      %1824 = vmatprep.subr.mxu0 0.0
      %1825 = vmatpush1.msra.mxu0 0.0
      %1826 = vmatprep.subr.mxu0 0.0
      %1827 = vmatpush1.msra.mxu0 0.0
      %1828 = vmatprep.subr.mxu0 0.0
      %1829 = vmatpush1.msra.mxu0 0.0
      %1830 = vmatprep.subr.mxu0 0.0
      %1831 = vmatpush1.msra.mxu0 0.0
      %1832 = vmatprep.subr.mxu0 0.0
      %1833 = vmatpush1.msra.mxu0 0.0
      %1834 = vmatprep.subr.mxu0 0.0
      %1835 = vmatpush1.msra.mxu0 0.0
      %1836 = vmatprep.subr.mxu0 0.0
      %1837 = vmatpush1.msra.mxu0 0.0
      %1838 = vmatprep.subr.mxu0 0.0
      %1839 = vmatpush1.msra.mxu0 0.0
      %1840 = vmatprep.subr.mxu0 0.0
      %1841 = vmatpush1.msra.mxu0 0.0
      %1842 = vmatprep.subr.mxu0 0.0
      %1843 = vmatpush1.msra.mxu0 0.0
      %1844 = vmatprep.subr.mxu0 0.0
      %1845 = vmatpush1.msra.mxu0 0.0
      %1846 = vmatprep.subr.mxu0 0.0
      %1847 = vmatpush1.msra.mxu0 0.0
      %1848 = vmatprep.mubr.f32.mxu0 0.0
      %1849 = vmatmul.mubr.f32.gmra.mrb[0].mxu0 %v1774
      %v1850 = vpop.f32.mrb[0].mxu0
      %v1851 = vadd.f32 0.0, %v1850
      %v1852 = vpop.f32.mrb[0].mxu0
      %v1853 = vadd.f32 0.0, %v1852
      %1854 = vdwg.mxu0
      %1855 = vmatprep.subr.mxu0 %v1782
      %1856 = vmatpush1.msra.mxu0 %v1780
      %1857 = vmatprep.subr.mxu0 0.0
      %1858 = vmatpush1.msra.mxu0 0.0
      %1859 = vmatprep.subr.mxu0 0.0
      %1860 = vmatpush1.msra.mxu0 0.0
      %1861 = vmatprep.subr.mxu0 0.0
      %1862 = vmatpush1.msra.mxu0 0.0
      %1863 = vmatprep.subr.mxu0 0.0
      %1864 = vmatpush1.msra.mxu0 0.0
      %1865 = vmatprep.subr.mxu0 0.0
      %1866 = vmatpush1.msra.mxu0 0.0
      %1867 = vmatprep.subr.mxu0 0.0
      %1868 = vmatpush1.msra.mxu0 0.0
      %1869 = vmatprep.subr.mxu0 0.0
      %1870 = vmatpush1.msra.mxu0 0.0
      %1871 = vmatprep.subr.mxu0 0.0
      %1872 = vmatpush1.msra.mxu0 0.0
      %1873 = vmatprep.subr.mxu0 0.0
      %1874 = vmatpush1.msra.mxu0 0.0
      %1875 = vmatprep.subr.mxu0 0.0
      %1876 = vmatpush1.msra.mxu0 0.0
      %1877 = vmatprep.subr.mxu0 0.0
      %1878 = vmatpush1.msra.mxu0 0.0
      %1879 = vmatprep.subr.mxu0 0.0
      %1880 = vmatpush1.msra.mxu0 0.0
      %1881 = vmatprep.subr.mxu0 0.0
      %1882 = vmatpush1.msra.mxu0 0.0
      %1883 = vmatprep.subr.mxu0 0.0
      %1884 = vmatpush1.msra.mxu0 0.0
      %1885 = vmatprep.subr.mxu0 0.0
      %1886 = vmatpush1.msra.mxu0 0.0
      %1887 = vmatprep.subr.mxu0 0.0
      %1888 = vmatpush1.msra.mxu0 0.0
      %1889 = vmatprep.subr.mxu0 0.0
      %1890 = vmatpush1.msra.mxu0 0.0
      %1891 = vmatprep.subr.mxu0 0.0
      %1892 = vmatpush1.msra.mxu0 0.0
      %1893 = vmatprep.subr.mxu0 0.0
      %1894 = vmatpush1.msra.mxu0 0.0
      %1895 = vmatprep.subr.mxu0 0.0
      %1896 = vmatpush1.msra.mxu0 0.0
      %1897 = vmatprep.subr.mxu0 0.0
      %1898 = vmatpush1.msra.mxu0 0.0
      %1899 = vmatprep.subr.mxu0 0.0
      %1900 = vmatpush1.msra.mxu0 0.0
      %1901 = vmatprep.subr.mxu0 0.0
      %1902 = vmatpush1.msra.mxu0 0.0
      %1903 = vmatprep.subr.mxu0 0.0
      %1904 = vmatpush1.msra.mxu0 0.0
      %1905 = vmatprep.subr.mxu0 0.0
      %1906 = vmatpush1.msra.mxu0 0.0
      %1907 = vmatprep.subr.mxu0 0.0
      %1908 = vmatpush1.msra.mxu0 0.0
      %1909 = vmatprep.subr.mxu0 0.0
      %1910 = vmatpush1.msra.mxu0 0.0
      %1911 = vmatprep.subr.mxu0 0.0
      %1912 = vmatpush1.msra.mxu0 0.0
      %1913 = vmatprep.subr.mxu0 0.0
      %1914 = vmatpush1.msra.mxu0 0.0
      %1915 = vmatprep.subr.mxu0 0.0
      %1916 = vmatpush1.msra.mxu0 0.0
      %1917 = vmatprep.subr.mxu0 0.0
      %1918 = vmatpush1.msra.mxu0 0.0
      %1919 = vmatprep.mubr.f32.mxu0 0.0
      %1920 = vmatmul.mubr.f32.gmra.mrb[0].mxu0 %v1774
      %v1921 = vpop.f32.mrb[0].mxu0
      %v1922 = vadd.f32 0.0, %v1921
      %v1923 = vpop.f32.mrb[0].mxu0
      %v1924 = vadd.f32 0.0, %v1923
      %1925 = vdwg.mxu0
      %v1926 = vadd.f32 %v1752, %v1851
      %v1927 = vadd.f32 %v1753, %v1853
      %v1928 = vadd.f32 %v1754, %v1922
      %v1929 = vadd.f32 %v1755, %v1924
      %s1930 = scalar_lea.vmem %s2, 64
      %v1931 = vld [vmem:[%s1930] sm:$0xff]
      %1932 = vrot.lane.b32.xlu0 %v535, 36
      %v1933 = vpop.permute.xlu0 %1932
      %1934 = vrot.lane.b32.xlu0 %v536, 36
      %v1935 = vpop.permute.xlu0 %1934
      %1936 = vrot.lane.b32.xlu0 %v537, 36
      %v1937 = vpop.permute.xlu0 %1936
      %1938 = vrot.lane.b32.xlu0 %v538, 36
      %v1939 = vpop.permute.xlu0 %1938
      %1940 = vrot.lane.b32.xlu0 %v539, 36
      %v1941 = vpop.permute.xlu0 %1940
      %vm1942 = vcmask 293888
      %v1943 = vsel %vm1942, %v1933, %v1935
      %v1944 = vsel %vm1942, %v1935, %v1937
      %v1945 = vsel %vm1942, %v1937, %v1939
      %v1946 = vsel %vm1942, %v1939, %v1941
      %v1948 = vsel %vm563, %v1931, 0
      %v1950 = vsel %vm567, %v1943, 0
      %v1952 = vsel %vm567, %v1944, 0
      %v1954 = vsel %vm567, %v1945, 0
      %v1956 = vsel %vm567, %v1946, 0
      %1958 = vmatprep.subr.mxu0 %v1952
      %1959 = vmatpush1.msra.mxu0 %v1950
      %1960 = vmatprep.subr.mxu0 0.0
      %1961 = vmatpush1.msra.mxu0 0.0
      %1962 = vmatprep.subr.mxu0 0.0
      %1963 = vmatpush1.msra.mxu0 0.0
      %1964 = vmatprep.subr.mxu0 0.0
      %1965 = vmatpush1.msra.mxu0 0.0
      %1966 = vmatprep.subr.mxu0 0.0
      %1967 = vmatpush1.msra.mxu0 0.0
      %1968 = vmatprep.subr.mxu0 0.0
      %1969 = vmatpush1.msra.mxu0 0.0
      %1970 = vmatprep.subr.mxu0 0.0
      %1971 = vmatpush1.msra.mxu0 0.0
      %1972 = vmatprep.subr.mxu0 0.0
      %1973 = vmatpush1.msra.mxu0 0.0
      %1974 = vmatprep.subr.mxu0 0.0
      %1975 = vmatpush1.msra.mxu0 0.0
      %1976 = vmatprep.subr.mxu0 0.0
      %1977 = vmatpush1.msra.mxu0 0.0
      %1978 = vmatprep.subr.mxu0 0.0
      %1979 = vmatpush1.msra.mxu0 0.0
      %1980 = vmatprep.subr.mxu0 0.0
      %1981 = vmatpush1.msra.mxu0 0.0
      %1982 = vmatprep.subr.mxu0 0.0
      %1983 = vmatpush1.msra.mxu0 0.0
      %1984 = vmatprep.subr.mxu0 0.0
      %1985 = vmatpush1.msra.mxu0 0.0
      %1986 = vmatprep.subr.mxu0 0.0
      %1987 = vmatpush1.msra.mxu0 0.0
      %1988 = vmatprep.subr.mxu0 0.0
      %1989 = vmatpush1.msra.mxu0 0.0
      %1990 = vmatprep.subr.mxu0 0.0
      %1991 = vmatpush1.msra.mxu0 0.0
      %1992 = vmatprep.subr.mxu0 0.0
      %1993 = vmatpush1.msra.mxu0 0.0
      %1994 = vmatprep.subr.mxu0 0.0
      %1995 = vmatpush1.msra.mxu0 0.0
      %1996 = vmatprep.subr.mxu0 0.0
      %1997 = vmatpush1.msra.mxu0 0.0
      %1998 = vmatprep.subr.mxu0 0.0
      %1999 = vmatpush1.msra.mxu0 0.0
      %2000 = vmatprep.subr.mxu0 0.0
      %2001 = vmatpush1.msra.mxu0 0.0
      %2002 = vmatprep.subr.mxu0 0.0
      %2003 = vmatpush1.msra.mxu0 0.0
      %2004 = vmatprep.subr.mxu0 0.0
      %2005 = vmatpush1.msra.mxu0 0.0
      %2006 = vmatprep.subr.mxu0 0.0
      %2007 = vmatpush1.msra.mxu0 0.0
      %2008 = vmatprep.subr.mxu0 0.0
      %2009 = vmatpush1.msra.mxu0 0.0
      %2010 = vmatprep.subr.mxu0 0.0
      %2011 = vmatpush1.msra.mxu0 0.0
      %2012 = vmatprep.subr.mxu0 0.0
      %2013 = vmatpush1.msra.mxu0 0.0
      %2014 = vmatprep.subr.mxu0 0.0
      %2015 = vmatpush1.msra.mxu0 0.0
      %2016 = vmatprep.subr.mxu0 0.0
      %2017 = vmatpush1.msra.mxu0 0.0
      %2018 = vmatprep.subr.mxu0 0.0
      %2019 = vmatpush1.msra.mxu0 0.0
      %2020 = vmatprep.subr.mxu0 0.0
      %2021 = vmatpush1.msra.mxu0 0.0
      %2022 = vmatprep.mubr.f32.mxu0 0.0
      %2023 = vmatmul.mubr.f32.gmra.mrb[0].mxu0 %v1948
      %v2024 = vpop.f32.mrb[0].mxu0
      %v2025 = vadd.f32 0.0, %v2024
      %v2026 = vpop.f32.mrb[0].mxu0
      %v2027 = vadd.f32 0.0, %v2026
      %2028 = vdwg.mxu0
      %2029 = vmatprep.subr.mxu0 %v1956
      %2030 = vmatpush1.msra.mxu0 %v1954
      %2031 = vmatprep.subr.mxu0 0.0
      %2032 = vmatpush1.msra.mxu0 0.0
      %2033 = vmatprep.subr.mxu0 0.0
      %2034 = vmatpush1.msra.mxu0 0.0
      %2035 = vmatprep.subr.mxu0 0.0
      %2036 = vmatpush1.msra.mxu0 0.0
      %2037 = vmatprep.subr.mxu0 0.0
      %2038 = vmatpush1.msra.mxu0 0.0
      %2039 = vmatprep.subr.mxu0 0.0
      %2040 = vmatpush1.msra.mxu0 0.0
      %2041 = vmatprep.subr.mxu0 0.0
      %2042 = vmatpush1.msra.mxu0 0.0
      %2043 = vmatprep.subr.mxu0 0.0
      %2044 = vmatpush1.msra.mxu0 0.0
      %2045 = vmatprep.subr.mxu0 0.0
      %2046 = vmatpush1.msra.mxu0 0.0
      %2047 = vmatprep.subr.mxu0 0.0
      %2048 = vmatpush1.msra.mxu0 0.0
      %2049 = vmatprep.subr.mxu0 0.0
      %2050 = vmatpush1.msra.mxu0 0.0
      %2051 = vmatprep.subr.mxu0 0.0
      %2052 = vmatpush1.msra.mxu0 0.0
      %2053 = vmatprep.subr.mxu0 0.0
      %2054 = vmatpush1.msra.mxu0 0.0
      %2055 = vmatprep.subr.mxu0 0.0
      %2056 = vmatpush1.msra.mxu0 0.0
      %2057 = vmatprep.subr.mxu0 0.0
      %2058 = vmatpush1.msra.mxu0 0.0
      %2059 = vmatprep.subr.mxu0 0.0
      %2060 = vmatpush1.msra.mxu0 0.0
      %2061 = vmatprep.subr.mxu0 0.0
      %2062 = vmatpush1.msra.mxu0 0.0
      %2063 = vmatprep.subr.mxu0 0.0
      %2064 = vmatpush1.msra.mxu0 0.0
      %2065 = vmatprep.subr.mxu0 0.0
      %2066 = vmatpush1.msra.mxu0 0.0
      %2067 = vmatprep.subr.mxu0 0.0
      %2068 = vmatpush1.msra.mxu0 0.0
      %2069 = vmatprep.subr.mxu0 0.0
      %2070 = vmatpush1.msra.mxu0 0.0
      %2071 = vmatprep.subr.mxu0 0.0
      %2072 = vmatpush1.msra.mxu0 0.0
      %2073 = vmatprep.subr.mxu0 0.0
      %2074 = vmatpush1.msra.mxu0 0.0
      %2075 = vmatprep.subr.mxu0 0.0
      %2076 = vmatpush1.msra.mxu0 0.0
      %2077 = vmatprep.subr.mxu0 0.0
      %2078 = vmatpush1.msra.mxu0 0.0
      %2079 = vmatprep.subr.mxu0 0.0
      %2080 = vmatpush1.msra.mxu0 0.0
      %2081 = vmatprep.subr.mxu0 0.0
      %2082 = vmatpush1.msra.mxu0 0.0
      %2083 = vmatprep.subr.mxu0 0.0
      %2084 = vmatpush1.msra.mxu0 0.0
      %2085 = vmatprep.subr.mxu0 0.0
      %2086 = vmatpush1.msra.mxu0 0.0
      %2087 = vmatprep.subr.mxu0 0.0
      %2088 = vmatpush1.msra.mxu0 0.0
      %2089 = vmatprep.subr.mxu0 0.0
      %2090 = vmatpush1.msra.mxu0 0.0
      %2091 = vmatprep.subr.mxu0 0.0
      %2092 = vmatpush1.msra.mxu0 0.0
      %2093 = vmatprep.mubr.f32.mxu0 0.0
      %2094 = vmatmul.mubr.f32.gmra.mrb[0].mxu0 %v1948
      %v2095 = vpop.f32.mrb[0].mxu0
      %v2096 = vadd.f32 0.0, %v2095
      %v2097 = vpop.f32.mrb[0].mxu0
      %v2098 = vadd.f32 0.0, %v2097
      %2099 = vdwg.mxu0
      %v2100 = vadd.f32 %v1926, %v2025
      %v2101 = vadd.f32 %v1927, %v2027
      %v2102 = vadd.f32 %v1928, %v2096
      %v2103 = vadd.f32 %v1929, %v2098
      %v2104 = vld [vmem:[%s3] sm:$0xff]
      %2106 = vset.pattern.permute.xlu0 0
      %2107 = vperm.xlu0 %2106, %v2104
      %v2108 = vpop.permute.xlu0 %2107
      %v2110 = vadd.f32 %v2100, %v2108
      %v2111 = vadd.f32 %v2101, %v2108
      %v2112 = vadd.f32 %v2102, %v2108
      %v2113 = vadd.f32 %v2103, %v2108
      %v2114 = vmul.f32 %v2110, 0.01
      %v2115 = vmul.f32 %v2111, 0.01
      %v2116 = vmul.f32 %v2112, 0.01
      %v2117 = vmul.f32 %v2113, 0.01
      %v2118 = vmax.f32 %v2110, %v2114
      %v2119 = vmax.f32 %v2111, %v2115
      %v2120 = vmax.f32 %v2112, %v2116
      %v2121 = vmax.f32 %v2113, %v2117
      %v2123 = vlaneseq
      %v2124 = vshrl.u32 %v2123, 7
      %v2125 = vsub.s32 0, %v2124
      %v2126 = vrot.slane %v492, %v2125
      %v2127 = vlaneseq
      %v2128 = vshrl.u32 %v2127, 7
      %v2129 = vsub.s32 1, %v2128
      %v2130 = vrot.slane %v492, %v2129
      %v2131 = vlaneseq
      %v2132 = vshrl.u32 %v2131, 7
      %v2133 = vsub.s32 2, %v2132
      %v2134 = vrot.slane %v492, %v2133
      %v2135 = vlaneseq
      %v2136 = vshrl.u32 %v2135, 7
      %v2137 = vsub.s32 3, %v2136
      %v2138 = vrot.slane %v492, %v2137
      %v2143 = vmul.f32 %v2118, %v2126
      %v2144 = vmul.f32 %v2119, %v2130
      %v2145 = vmul.f32 %v2120, %v2134
      %v2146 = vmul.f32 %v2121, %v2138
      %2151 = vrot.lane.b32.xlu0 %v2143, 69
      %v2152 = vpop.permute.xlu0 %2151
      %2153 = vrot.lane.b32.xlu0 %v2144, 69
      %v2154 = vpop.permute.xlu0 %2153
      %2155 = vrot.lane.b32.xlu0 %v2145, 69
      %v2156 = vpop.permute.xlu0 %2155
      %2157 = vrot.lane.b32.xlu0 %v2146, 69
      %v2158 = vpop.permute.xlu0 %2157
      %v2159 = vsel %vm488, %v2152, %v2154
      %v2160 = vsel %vm488, %v2154, %v2156
      %v2161 = vsel %vm488, %v2156, %v2158
      %vm2167 = vcmask 1048104
      %2168 = vst.msk [vmem:[#allocation2] sm:$0xff] %vm2167, %v2152
      %2169 = vst [vmem:[#allocation2 + $0x8] sm:$0xff] %v2159
      %2170 = vst [vmem:[#allocation2 + $0x10] sm:$0xff] %v2160
      %2171 = vst [vmem:[#allocation2 + $0x18] sm:$0xff] %v2161
      %vm2172 = vcmask 334848
      %2173 = vst.msk [vmem:[#allocation2 + $0x20] sm:$0xff] %vm2172, %v2158
      %v2174 = vld [vmem:[#allocation2] sm:$0xff]
      %v2175 = vld [vmem:[#allocation2 + $0x8] sm:$0xff]
      %v2176 = vld [vmem:[#allocation2 + $0x10] sm:$0xff]
      %v2177 = vld [vmem:[#allocation2 + $0x18] sm:$0xff]
      %v2178 = vld [vmem:[#allocation2 + $0x20] sm:$0xff]
      %v2179 = vld [vmem:[%s4] sm:$0xff]
      %s2180 = scalar_lea.vmem %s4, 8
      %v2181 = vld [vmem:[%s2180] sm:$0xff]
      %2187 = vrot.lane.b32.xlu0 %v2174, 81
      %v2188 = vpop.permute.xlu0 %2187
      %2189 = vrot.lane.b32.xlu0 %v2175, 81
      %v2190 = vpop.permute.xlu0 %2189
      %2191 = vrot.lane.b32.xlu0 %v2176, 81
      %v2192 = vpop.permute.xlu0 %2191
      %2193 = vrot.lane.b32.xlu0 %v2177, 81
      %v2194 = vpop.permute.xlu0 %2193
      %2195 = vrot.lane.b32.xlu0 %v2178, 81
      %v2196 = vpop.permute.xlu0 %2195
      %v2197 = vsel %vm558, %v2188, %v2190
      %v2198 = vsel %vm558, %v2190, %v2192
      %v2199 = vsel %vm558, %v2192, %v2194
      %v2200 = vsel %vm558, %v2194, %v2196
      %vm2205 = vcmask 64512
      %v2207 = vsel %vm2205, %v2181, 0
      %2209 = vmatprep.subr.mxu0 %v2198
      %2210 = vmatpush1.msra.mxu0 %v2197
      %2211 = vmatprep.subr.mxu0 0.0
      %2212 = vmatpush1.msra.mxu0 0.0
      %2213 = vmatprep.subr.mxu0 0.0
      %2214 = vmatpush1.msra.mxu0 0.0
      %2215 = vmatprep.subr.mxu0 0.0
      %2216 = vmatpush1.msra.mxu0 0.0
      %2217 = vmatprep.subr.mxu0 0.0
      %2218 = vmatpush1.msra.mxu0 0.0
      %2219 = vmatprep.subr.mxu0 0.0
      %2220 = vmatpush1.msra.mxu0 0.0
      %2221 = vmatprep.subr.mxu0 0.0
      %2222 = vmatpush1.msra.mxu0 0.0
      %2223 = vmatprep.subr.mxu0 0.0
      %2224 = vmatpush1.msra.mxu0 0.0
      %2225 = vmatprep.subr.mxu0 0.0
      %2226 = vmatpush1.msra.mxu0 0.0
      %2227 = vmatprep.subr.mxu0 0.0
      %2228 = vmatpush1.msra.mxu0 0.0
      %2229 = vmatprep.subr.mxu0 0.0
      %2230 = vmatpush1.msra.mxu0 0.0
      %2231 = vmatprep.subr.mxu0 0.0
      %2232 = vmatpush1.msra.mxu0 0.0
      %2233 = vmatprep.subr.mxu0 0.0
      %2234 = vmatpush1.msra.mxu0 0.0
      %2235 = vmatprep.subr.mxu0 0.0
      %2236 = vmatpush1.msra.mxu0 0.0
      %2237 = vmatprep.subr.mxu0 0.0
      %2238 = vmatpush1.msra.mxu0 0.0
      %2239 = vmatprep.subr.mxu0 0.0
      %2240 = vmatpush1.msra.mxu0 0.0
      %2241 = vmatprep.subr.mxu0 0.0
      %2242 = vmatpush1.msra.mxu0 0.0
      %2243 = vmatprep.subr.mxu0 0.0
      %2244 = vmatpush1.msra.mxu0 0.0
      %2245 = vmatprep.subr.mxu0 0.0
      %2246 = vmatpush1.msra.mxu0 0.0
      %2247 = vmatprep.subr.mxu0 0.0
      %2248 = vmatpush1.msra.mxu0 0.0
      %2249 = vmatprep.subr.mxu0 0.0
      %2250 = vmatpush1.msra.mxu0 0.0
      %2251 = vmatprep.subr.mxu0 0.0
      %2252 = vmatpush1.msra.mxu0 0.0
      %2253 = vmatprep.subr.mxu0 0.0
      %2254 = vmatpush1.msra.mxu0 0.0
      %2255 = vmatprep.subr.mxu0 0.0
      %2256 = vmatpush1.msra.mxu0 0.0
      %2257 = vmatprep.subr.mxu0 0.0
      %2258 = vmatpush1.msra.mxu0 0.0
      %2259 = vmatprep.subr.mxu0 0.0
      %2260 = vmatpush1.msra.mxu0 0.0
      %2261 = vmatprep.subr.mxu0 0.0
      %2262 = vmatpush1.msra.mxu0 0.0
      %2263 = vmatprep.subr.mxu0 0.0
      %2264 = vmatpush1.msra.mxu0 0.0
      %2265 = vmatprep.subr.mxu0 0.0
      %2266 = vmatpush1.msra.mxu0 0.0
      %2267 = vmatprep.subr.mxu0 0.0
      %2268 = vmatpush1.msra.mxu0 0.0
      %2269 = vmatprep.subr.mxu0 0.0
      %2270 = vmatpush1.msra.mxu0 0.0
      %2271 = vmatprep.subr.mxu0 0.0
      %2272 = vmatpush1.msra.mxu0 0.0
      %2273 = vmatprep.mubr.f32.mxu0 0.0
      %2274 = vmatmul.mubr.f32.gmra.mrb[0].mxu0 %v2207
      %v2275 = vpop.f32.mrb[0].mxu0
      %v2276 = vadd.f32 0.0, %v2275
      %v2277 = vpop.f32.mrb[0].mxu0
      %v2278 = vadd.f32 0.0, %v2277
      %2279 = vdwg.mxu0
      %2280 = vmatprep.subr.mxu0 %v2200
      %2281 = vmatpush1.msra.mxu0 %v2199
      %2282 = vmatprep.subr.mxu0 0.0
      %2283 = vmatpush1.msra.mxu0 0.0
      %2284 = vmatprep.subr.mxu0 0.0
      %2285 = vmatpush1.msra.mxu0 0.0
      %2286 = vmatprep.subr.mxu0 0.0
      %2287 = vmatpush1.msra.mxu0 0.0
      %2288 = vmatprep.subr.mxu0 0.0
      %2289 = vmatpush1.msra.mxu0 0.0
      %2290 = vmatprep.subr.mxu0 0.0
      %2291 = vmatpush1.msra.mxu0 0.0
      %2292 = vmatprep.subr.mxu0 0.0
      %2293 = vmatpush1.msra.mxu0 0.0
      %2294 = vmatprep.subr.mxu0 0.0
      %2295 = vmatpush1.msra.mxu0 0.0
      %2296 = vmatprep.subr.mxu0 0.0
      %2297 = vmatpush1.msra.mxu0 0.0
      %2298 = vmatprep.subr.mxu0 0.0
      %2299 = vmatpush1.msra.mxu0 0.0
      %2300 = vmatprep.subr.mxu0 0.0
      %2301 = vmatpush1.msra.mxu0 0.0
      %2302 = vmatprep.subr.mxu0 0.0
      %2303 = vmatpush1.msra.mxu0 0.0
      %2304 = vmatprep.subr.mxu0 0.0
      %2305 = vmatpush1.msra.mxu0 0.0
      %2306 = vmatprep.subr.mxu0 0.0
      %2307 = vmatpush1.msra.mxu0 0.0
      %2308 = vmatprep.subr.mxu0 0.0
      %2309 = vmatpush1.msra.mxu0 0.0
      %2310 = vmatprep.subr.mxu0 0.0
      %2311 = vmatpush1.msra.mxu0 0.0
      %2312 = vmatprep.subr.mxu0 0.0
      %2313 = vmatpush1.msra.mxu0 0.0
      %2314 = vmatprep.subr.mxu0 0.0
      %2315 = vmatpush1.msra.mxu0 0.0
      %2316 = vmatprep.subr.mxu0 0.0
      %2317 = vmatpush1.msra.mxu0 0.0
      %2318 = vmatprep.subr.mxu0 0.0
      %2319 = vmatpush1.msra.mxu0 0.0
      %2320 = vmatprep.subr.mxu0 0.0
      %2321 = vmatpush1.msra.mxu0 0.0
      %2322 = vmatprep.subr.mxu0 0.0
      %2323 = vmatpush1.msra.mxu0 0.0
      %2324 = vmatprep.subr.mxu0 0.0
      %2325 = vmatpush1.msra.mxu0 0.0
      %2326 = vmatprep.subr.mxu0 0.0
      %2327 = vmatpush1.msra.mxu0 0.0
      %2328 = vmatprep.subr.mxu0 0.0
      %2329 = vmatpush1.msra.mxu0 0.0
      %2330 = vmatprep.subr.mxu0 0.0
      %2331 = vmatpush1.msra.mxu0 0.0
      %2332 = vmatprep.subr.mxu0 0.0
      %2333 = vmatpush1.msra.mxu0 0.0
      %2334 = vmatprep.subr.mxu0 0.0
      %2335 = vmatpush1.msra.mxu0 0.0
      %2336 = vmatprep.subr.mxu0 0.0
      %2337 = vmatpush1.msra.mxu0 0.0
      %2338 = vmatprep.subr.mxu0 0.0
      %2339 = vmatpush1.msra.mxu0 0.0
      %2340 = vmatprep.subr.mxu0 0.0
      %2341 = vmatpush1.msra.mxu0 0.0
      %2342 = vmatprep.subr.mxu0 0.0
      %2343 = vmatpush1.msra.mxu0 0.0
      %2344 = vmatprep.mubr.f32.mxu0 0.0
      %2345 = vmatmul.mubr.f32.gmra.mrb[0].mxu0 %v2207
      %v2346 = vpop.f32.mrb[0].mxu0
      %v2347 = vadd.f32 0.0, %v2346
      %v2348 = vpop.f32.mrb[0].mxu0
      %v2349 = vadd.f32 0.0, %v2348
      %2350 = vdwg.mxu0
      %2351 = vrot.lane.b32.xlu0 %v2174, 82
      %v2352 = vpop.permute.xlu0 %2351
      %2353 = vrot.lane.b32.xlu0 %v2175, 82
      %v2354 = vpop.permute.xlu0 %2353
      %2355 = vrot.lane.b32.xlu0 %v2176, 82
      %v2356 = vpop.permute.xlu0 %2355
      %2357 = vrot.lane.b32.xlu0 %v2177, 82
      %v2358 = vpop.permute.xlu0 %2357
      %2359 = vrot.lane.b32.xlu0 %v2178, 82
      %v2360 = vpop.permute.xlu0 %2359
      %v2361 = vsel %vm728, %v2352, %v2354
      %v2362 = vsel %vm728, %v2354, %v2356
      %v2363 = vsel %vm728, %v2356, %v2358
      %v2364 = vsel %vm728, %v2358, %v2360
      %v2370 = vsel %vm2205, %v2179, 0
      %2372 = vmatprep.subr.mxu0 %v2362
      %2373 = vmatpush1.msra.mxu0 %v2361
      %2374 = vmatprep.subr.mxu0 0.0
      %2375 = vmatpush1.msra.mxu0 0.0
      %2376 = vmatprep.subr.mxu0 0.0
      %2377 = vmatpush1.msra.mxu0 0.0
      %2378 = vmatprep.subr.mxu0 0.0
      %2379 = vmatpush1.msra.mxu0 0.0
      %2380 = vmatprep.subr.mxu0 0.0
      %2381 = vmatpush1.msra.mxu0 0.0
      %2382 = vmatprep.subr.mxu0 0.0
      %2383 = vmatpush1.msra.mxu0 0.0
      %2384 = vmatprep.subr.mxu0 0.0
      %2385 = vmatpush1.msra.mxu0 0.0
      %2386 = vmatprep.subr.mxu0 0.0
      %2387 = vmatpush1.msra.mxu0 0.0
      %2388 = vmatprep.subr.mxu0 0.0
      %2389 = vmatpush1.msra.mxu0 0.0
      %2390 = vmatprep.subr.mxu0 0.0
      %2391 = vmatpush1.msra.mxu0 0.0
      %2392 = vmatprep.subr.mxu0 0.0
      %2393 = vmatpush1.msra.mxu0 0.0
      %2394 = vmatprep.subr.mxu0 0.0
      %2395 = vmatpush1.msra.mxu0 0.0
      %2396 = vmatprep.subr.mxu0 0.0
      %2397 = vmatpush1.msra.mxu0 0.0
      %2398 = vmatprep.subr.mxu0 0.0
      %2399 = vmatpush1.msra.mxu0 0.0
      %2400 = vmatprep.subr.mxu0 0.0
      %2401 = vmatpush1.msra.mxu0 0.0
      %2402 = vmatprep.subr.mxu0 0.0
      %2403 = vmatpush1.msra.mxu0 0.0
      %2404 = vmatprep.subr.mxu0 0.0
      %2405 = vmatpush1.msra.mxu0 0.0
      %2406 = vmatprep.subr.mxu0 0.0
      %2407 = vmatpush1.msra.mxu0 0.0
      %2408 = vmatprep.subr.mxu0 0.0
      %2409 = vmatpush1.msra.mxu0 0.0
      %2410 = vmatprep.subr.mxu0 0.0
      %2411 = vmatpush1.msra.mxu0 0.0
      %2412 = vmatprep.subr.mxu0 0.0
      %2413 = vmatpush1.msra.mxu0 0.0
      %2414 = vmatprep.subr.mxu0 0.0
      %2415 = vmatpush1.msra.mxu0 0.0
      %2416 = vmatprep.subr.mxu0 0.0
      %2417 = vmatpush1.msra.mxu0 0.0
      %2418 = vmatprep.subr.mxu0 0.0
      %2419 = vmatpush1.msra.mxu0 0.0
      %2420 = vmatprep.subr.mxu0 0.0
      %2421 = vmatpush1.msra.mxu0 0.0
      %2422 = vmatprep.subr.mxu0 0.0
      %2423 = vmatpush1.msra.mxu0 0.0
      %2424 = vmatprep.subr.mxu0 0.0
      %2425 = vmatpush1.msra.mxu0 0.0
      %2426 = vmatprep.subr.mxu0 0.0
      %2427 = vmatpush1.msra.mxu0 0.0
      %2428 = vmatprep.subr.mxu0 0.0
      %2429 = vmatpush1.msra.mxu0 0.0
      %2430 = vmatprep.subr.mxu0 0.0
      %2431 = vmatpush1.msra.mxu0 0.0
      %2432 = vmatprep.subr.mxu0 0.0
      %2433 = vmatpush1.msra.mxu0 0.0
      %2434 = vmatprep.subr.mxu0 0.0
      %2435 = vmatpush1.msra.mxu0 0.0
      %2436 = vmatprep.mubr.f32.mxu0 0.0
      %2437 = vmatmul.mubr.f32.gmra.mrb[0].mxu0 %v2370
      %v2438 = vpop.f32.mrb[0].mxu0
      %v2439 = vadd.f32 %v2276, %v2438
      %v2440 = vpop.f32.mrb[0].mxu0
      %v2441 = vadd.f32 %v2278, %v2440
      %2442 = vdwg.mxu0
      %2443 = vmatprep.subr.mxu0 %v2364
      %2444 = vmatpush1.msra.mxu0 %v2363
      %2445 = vmatprep.subr.mxu0 0.0
      %2446 = vmatpush1.msra.mxu0 0.0
      %2447 = vmatprep.subr.mxu0 0.0
      %2448 = vmatpush1.msra.mxu0 0.0
      %2449 = vmatprep.subr.mxu0 0.0
      %2450 = vmatpush1.msra.mxu0 0.0
      %2451 = vmatprep.subr.mxu0 0.0
      %2452 = vmatpush1.msra.mxu0 0.0
      %2453 = vmatprep.subr.mxu0 0.0
      %2454 = vmatpush1.msra.mxu0 0.0
      %2455 = vmatprep.subr.mxu0 0.0
      %2456 = vmatpush1.msra.mxu0 0.0
      %2457 = vmatprep.subr.mxu0 0.0
      %2458 = vmatpush1.msra.mxu0 0.0
      %2459 = vmatprep.subr.mxu0 0.0
      %2460 = vmatpush1.msra.mxu0 0.0
      %2461 = vmatprep.subr.mxu0 0.0
      %2462 = vmatpush1.msra.mxu0 0.0
      %2463 = vmatprep.subr.mxu0 0.0
      %2464 = vmatpush1.msra.mxu0 0.0
      %2465 = vmatprep.subr.mxu0 0.0
      %2466 = vmatpush1.msra.mxu0 0.0
      %2467 = vmatprep.subr.mxu0 0.0
      %2468 = vmatpush1.msra.mxu0 0.0
      %2469 = vmatprep.subr.mxu0 0.0
      %2470 = vmatpush1.msra.mxu0 0.0
      %2471 = vmatprep.subr.mxu0 0.0
      %2472 = vmatpush1.msra.mxu0 0.0
      %2473 = vmatprep.subr.mxu0 0.0
      %2474 = vmatpush1.msra.mxu0 0.0
      %2475 = vmatprep.subr.mxu0 0.0
      %2476 = vmatpush1.msra.mxu0 0.0
      %2477 = vmatprep.subr.mxu0 0.0
      %2478 = vmatpush1.msra.mxu0 0.0
      %2479 = vmatprep.subr.mxu0 0.0
      %2480 = vmatpush1.msra.mxu0 0.0
      %2481 = vmatprep.subr.mxu0 0.0
      %2482 = vmatpush1.msra.mxu0 0.0
      %2483 = vmatprep.subr.mxu0 0.0
      %2484 = vmatpush1.msra.mxu0 0.0
      %2485 = vmatprep.subr.mxu0 0.0
      %2486 = vmatpush1.msra.mxu0 0.0
      %2487 = vmatprep.subr.mxu0 0.0
      %2488 = vmatpush1.msra.mxu0 0.0
      %2489 = vmatprep.subr.mxu0 0.0
      %2490 = vmatpush1.msra.mxu0 0.0
      %2491 = vmatprep.subr.mxu0 0.0
      %2492 = vmatpush1.msra.mxu0 0.0
      %2493 = vmatprep.subr.mxu0 0.0
      %2494 = vmatpush1.msra.mxu0 0.0
      %2495 = vmatprep.subr.mxu0 0.0
      %2496 = vmatpush1.msra.mxu0 0.0
      %2497 = vmatprep.subr.mxu0 0.0
      %2498 = vmatpush1.msra.mxu0 0.0
      %2499 = vmatprep.subr.mxu0 0.0
      %2500 = vmatpush1.msra.mxu0 0.0
      %2501 = vmatprep.subr.mxu0 0.0
      %2502 = vmatpush1.msra.mxu0 0.0
      %2503 = vmatprep.subr.mxu0 0.0
      %2504 = vmatpush1.msra.mxu0 0.0
      %2505 = vmatprep.subr.mxu0 0.0
      %2506 = vmatpush1.msra.mxu0 0.0
      %2507 = vmatprep.mubr.f32.mxu0 0.0
      %2508 = vmatmul.mubr.f32.gmra.mrb[0].mxu0 %v2370
      %v2509 = vpop.f32.mrb[0].mxu0
      %v2510 = vadd.f32 %v2347, %v2509
      %v2511 = vpop.f32.mrb[0].mxu0
      %v2512 = vadd.f32 %v2349, %v2511
      %2513 = vdwg.mxu0
      %s2514 = scalar_lea.vmem %s4, 16
      %v2515 = vld [vmem:[%s2514] sm:$0xff]
      %2516 = vrot.lane.b32.xlu0 %v2174, 80
      %v2517 = vpop.permute.xlu0 %2516
      %2518 = vrot.lane.b32.xlu0 %v2175, 80
      %v2519 = vpop.permute.xlu0 %2518
      %2520 = vrot.lane.b32.xlu0 %v2176, 80
      %v2521 = vpop.permute.xlu0 %2520
      %2522 = vrot.lane.b32.xlu0 %v2177, 80
      %v2523 = vpop.permute.xlu0 %2522
      %2524 = vrot.lane.b32.xlu0 %v2178, 80
      %v2525 = vpop.permute.xlu0 %2524
      %v2526 = vsel %vm898, %v2517, %v2519
      %v2527 = vsel %vm898, %v2519, %v2521
      %v2528 = vsel %vm898, %v2521, %v2523
      %v2529 = vsel %vm898, %v2523, %v2525
      %v2535 = vsel %vm2205, %v2515, 0
      %2537 = vmatprep.subr.mxu0 %v2527
      %2538 = vmatpush1.msra.mxu0 %v2526
      %2539 = vmatprep.subr.mxu0 0.0
      %2540 = vmatpush1.msra.mxu0 0.0
      %2541 = vmatprep.subr.mxu0 0.0
      %2542 = vmatpush1.msra.mxu0 0.0
      %2543 = vmatprep.subr.mxu0 0.0
      %2544 = vmatpush1.msra.mxu0 0.0
      %2545 = vmatprep.subr.mxu0 0.0
      %2546 = vmatpush1.msra.mxu0 0.0
      %2547 = vmatprep.subr.mxu0 0.0
      %2548 = vmatpush1.msra.mxu0 0.0
      %2549 = vmatprep.subr.mxu0 0.0
      %2550 = vmatpush1.msra.mxu0 0.0
      %2551 = vmatprep.subr.mxu0 0.0
      %2552 = vmatpush1.msra.mxu0 0.0
      %2553 = vmatprep.subr.mxu0 0.0
      %2554 = vmatpush1.msra.mxu0 0.0
      %2555 = vmatprep.subr.mxu0 0.0
      %2556 = vmatpush1.msra.mxu0 0.0
      %2557 = vmatprep.subr.mxu0 0.0
      %2558 = vmatpush1.msra.mxu0 0.0
      %2559 = vmatprep.subr.mxu0 0.0
      %2560 = vmatpush1.msra.mxu0 0.0
      %2561 = vmatprep.subr.mxu0 0.0
      %2562 = vmatpush1.msra.mxu0 0.0
      %2563 = vmatprep.subr.mxu0 0.0
      %2564 = vmatpush1.msra.mxu0 0.0
      %2565 = vmatprep.subr.mxu0 0.0
      %2566 = vmatpush1.msra.mxu0 0.0
      %2567 = vmatprep.subr.mxu0 0.0
      %2568 = vmatpush1.msra.mxu0 0.0
      %2569 = vmatprep.subr.mxu0 0.0
      %2570 = vmatpush1.msra.mxu0 0.0
      %2571 = vmatprep.subr.mxu0 0.0
      %2572 = vmatpush1.msra.mxu0 0.0
      %2573 = vmatprep.subr.mxu0 0.0
      %2574 = vmatpush1.msra.mxu0 0.0
      %2575 = vmatprep.subr.mxu0 0.0
      %2576 = vmatpush1.msra.mxu0 0.0
      %2577 = vmatprep.subr.mxu0 0.0
      %2578 = vmatpush1.msra.mxu0 0.0
      %2579 = vmatprep.subr.mxu0 0.0
      %2580 = vmatpush1.msra.mxu0 0.0
      %2581 = vmatprep.subr.mxu0 0.0
      %2582 = vmatpush1.msra.mxu0 0.0
      %2583 = vmatprep.subr.mxu0 0.0
      %2584 = vmatpush1.msra.mxu0 0.0
      %2585 = vmatprep.subr.mxu0 0.0
      %2586 = vmatpush1.msra.mxu0 0.0
      %2587 = vmatprep.subr.mxu0 0.0
      %2588 = vmatpush1.msra.mxu0 0.0
      %2589 = vmatprep.subr.mxu0 0.0
      %2590 = vmatpush1.msra.mxu0 0.0
      %2591 = vmatprep.subr.mxu0 0.0
      %2592 = vmatpush1.msra.mxu0 0.0
      %2593 = vmatprep.subr.mxu0 0.0
      %2594 = vmatpush1.msra.mxu0 0.0
      %2595 = vmatprep.subr.mxu0 0.0
      %2596 = vmatpush1.msra.mxu0 0.0
      %2597 = vmatprep.subr.mxu0 0.0
      %2598 = vmatpush1.msra.mxu0 0.0
      %2599 = vmatprep.subr.mxu0 0.0
      %2600 = vmatpush1.msra.mxu0 0.0
      %2601 = vmatprep.mubr.f32.mxu0 0.0
      %2602 = vmatmul.mubr.f32.gmra.mrb[0].mxu0 %v2535
      %v2603 = vpop.f32.mrb[0].mxu0
      %v2604 = vadd.f32 0.0, %v2603
      %v2605 = vpop.f32.mrb[0].mxu0
      %v2606 = vadd.f32 0.0, %v2605
      %2607 = vdwg.mxu0
      %2608 = vmatprep.subr.mxu0 %v2529
      %2609 = vmatpush1.msra.mxu0 %v2528
      %2610 = vmatprep.subr.mxu0 0.0
      %2611 = vmatpush1.msra.mxu0 0.0
      %2612 = vmatprep.subr.mxu0 0.0
      %2613 = vmatpush1.msra.mxu0 0.0
      %2614 = vmatprep.subr.mxu0 0.0
      %2615 = vmatpush1.msra.mxu0 0.0
      %2616 = vmatprep.subr.mxu0 0.0
      %2617 = vmatpush1.msra.mxu0 0.0
      %2618 = vmatprep.subr.mxu0 0.0
      %2619 = vmatpush1.msra.mxu0 0.0
      %2620 = vmatprep.subr.mxu0 0.0
      %2621 = vmatpush1.msra.mxu0 0.0
      %2622 = vmatprep.subr.mxu0 0.0
      %2623 = vmatpush1.msra.mxu0 0.0
      %2624 = vmatprep.subr.mxu0 0.0
      %2625 = vmatpush1.msra.mxu0 0.0
      %2626 = vmatprep.subr.mxu0 0.0
      %2627 = vmatpush1.msra.mxu0 0.0
      %2628 = vmatprep.subr.mxu0 0.0
      %2629 = vmatpush1.msra.mxu0 0.0
      %2630 = vmatprep.subr.mxu0 0.0
      %2631 = vmatpush1.msra.mxu0 0.0
      %2632 = vmatprep.subr.mxu0 0.0
      %2633 = vmatpush1.msra.mxu0 0.0
      %2634 = vmatprep.subr.mxu0 0.0
      %2635 = vmatpush1.msra.mxu0 0.0
      %2636 = vmatprep.subr.mxu0 0.0
      %2637 = vmatpush1.msra.mxu0 0.0
      %2638 = vmatprep.subr.mxu0 0.0
      %2639 = vmatpush1.msra.mxu0 0.0
      %2640 = vmatprep.subr.mxu0 0.0
      %2641 = vmatpush1.msra.mxu0 0.0
      %2642 = vmatprep.subr.mxu0 0.0
      %2643 = vmatpush1.msra.mxu0 0.0
      %2644 = vmatprep.subr.mxu0 0.0
      %2645 = vmatpush1.msra.mxu0 0.0
      %2646 = vmatprep.subr.mxu0 0.0
      %2647 = vmatpush1.msra.mxu0 0.0
      %2648 = vmatprep.subr.mxu0 0.0
      %2649 = vmatpush1.msra.mxu0 0.0
      %2650 = vmatprep.subr.mxu0 0.0
      %2651 = vmatpush1.msra.mxu0 0.0
      %2652 = vmatprep.subr.mxu0 0.0
      %2653 = vmatpush1.msra.mxu0 0.0
      %2654 = vmatprep.subr.mxu0 0.0
      %2655 = vmatpush1.msra.mxu0 0.0
      %2656 = vmatprep.subr.mxu0 0.0
      %2657 = vmatpush1.msra.mxu0 0.0
      %2658 = vmatprep.subr.mxu0 0.0
      %2659 = vmatpush1.msra.mxu0 0.0
      %2660 = vmatprep.subr.mxu0 0.0
      %2661 = vmatpush1.msra.mxu0 0.0
      %2662 = vmatprep.subr.mxu0 0.0
      %2663 = vmatpush1.msra.mxu0 0.0
      %2664 = vmatprep.subr.mxu0 0.0
      %2665 = vmatpush1.msra.mxu0 0.0
      %2666 = vmatprep.subr.mxu0 0.0
      %2667 = vmatpush1.msra.mxu0 0.0
      %2668 = vmatprep.subr.mxu0 0.0
      %2669 = vmatpush1.msra.mxu0 0.0
      %2670 = vmatprep.subr.mxu0 0.0
      %2671 = vmatpush1.msra.mxu0 0.0
      %2672 = vmatprep.mubr.f32.mxu0 0.0
      %2673 = vmatmul.mubr.f32.gmra.mrb[0].mxu0 %v2535
      %v2674 = vpop.f32.mrb[0].mxu0
      %v2675 = vadd.f32 0.0, %v2674
      %v2676 = vpop.f32.mrb[0].mxu0
      %v2677 = vadd.f32 0.0, %v2676
      %2678 = vdwg.mxu0
      %v2679 = vadd.f32 %v2439, %v2604
      %v2680 = vadd.f32 %v2441, %v2606
      %v2681 = vadd.f32 %v2510, %v2675
      %v2682 = vadd.f32 %v2512, %v2677
      %s2683 = scalar_lea.vmem %s4, 24
      %v2684 = vld [vmem:[%s2683] sm:$0xff]
      %2685 = vrot.lane.b32.xlu0 %v2174, 60
      %v2686 = vpop.permute.xlu0 %2685
      %2687 = vrot.lane.b32.xlu0 %v2175, 60
      %v2688 = vpop.permute.xlu0 %2687
      %2689 = vrot.lane.b32.xlu0 %v2176, 60
      %v2690 = vpop.permute.xlu0 %2689
      %2691 = vrot.lane.b32.xlu0 %v2177, 60
      %v2692 = vpop.permute.xlu0 %2691
      %2693 = vrot.lane.b32.xlu0 %v2178, 60
      %v2694 = vpop.permute.xlu0 %2693
      %v2695 = vsel %vm1072, %v2686, %v2688
      %v2696 = vsel %vm1072, %v2688, %v2690
      %v2697 = vsel %vm1072, %v2690, %v2692
      %v2698 = vsel %vm1072, %v2692, %v2694
      %v2704 = vsel %vm2205, %v2684, 0
      %2706 = vmatprep.subr.mxu0 %v2696
      %2707 = vmatpush1.msra.mxu0 %v2695
      %2708 = vmatprep.subr.mxu0 0.0
      %2709 = vmatpush1.msra.mxu0 0.0
      %2710 = vmatprep.subr.mxu0 0.0
      %2711 = vmatpush1.msra.mxu0 0.0
      %2712 = vmatprep.subr.mxu0 0.0
      %2713 = vmatpush1.msra.mxu0 0.0
      %2714 = vmatprep.subr.mxu0 0.0
      %2715 = vmatpush1.msra.mxu0 0.0
      %2716 = vmatprep.subr.mxu0 0.0
      %2717 = vmatpush1.msra.mxu0 0.0
      %2718 = vmatprep.subr.mxu0 0.0
      %2719 = vmatpush1.msra.mxu0 0.0
      %2720 = vmatprep.subr.mxu0 0.0
      %2721 = vmatpush1.msra.mxu0 0.0
      %2722 = vmatprep.subr.mxu0 0.0
      %2723 = vmatpush1.msra.mxu0 0.0
      %2724 = vmatprep.subr.mxu0 0.0
      %2725 = vmatpush1.msra.mxu0 0.0
      %2726 = vmatprep.subr.mxu0 0.0
      %2727 = vmatpush1.msra.mxu0 0.0
      %2728 = vmatprep.subr.mxu0 0.0
      %2729 = vmatpush1.msra.mxu0 0.0
      %2730 = vmatprep.subr.mxu0 0.0
      %2731 = vmatpush1.msra.mxu0 0.0
      %2732 = vmatprep.subr.mxu0 0.0
      %2733 = vmatpush1.msra.mxu0 0.0
      %2734 = vmatprep.subr.mxu0 0.0
      %2735 = vmatpush1.msra.mxu0 0.0
      %2736 = vmatprep.subr.mxu0 0.0
      %2737 = vmatpush1.msra.mxu0 0.0
      %2738 = vmatprep.subr.mxu0 0.0
      %2739 = vmatpush1.msra.mxu0 0.0
      %2740 = vmatprep.subr.mxu0 0.0
      %2741 = vmatpush1.msra.mxu0 0.0
      %2742 = vmatprep.subr.mxu0 0.0
      %2743 = vmatpush1.msra.mxu0 0.0
      %2744 = vmatprep.subr.mxu0 0.0
      %2745 = vmatpush1.msra.mxu0 0.0
      %2746 = vmatprep.subr.mxu0 0.0
      %2747 = vmatpush1.msra.mxu0 0.0
      %2748 = vmatprep.subr.mxu0 0.0
      %2749 = vmatpush1.msra.mxu0 0.0
      %2750 = vmatprep.subr.mxu0 0.0
      %2751 = vmatpush1.msra.mxu0 0.0
      %2752 = vmatprep.subr.mxu0 0.0
      %2753 = vmatpush1.msra.mxu0 0.0
      %2754 = vmatprep.subr.mxu0 0.0
      %2755 = vmatpush1.msra.mxu0 0.0
      %2756 = vmatprep.subr.mxu0 0.0
      %2757 = vmatpush1.msra.mxu0 0.0
      %2758 = vmatprep.subr.mxu0 0.0
      %2759 = vmatpush1.msra.mxu0 0.0
      %2760 = vmatprep.subr.mxu0 0.0
      %2761 = vmatpush1.msra.mxu0 0.0
      %2762 = vmatprep.subr.mxu0 0.0
      %2763 = vmatpush1.msra.mxu0 0.0
      %2764 = vmatprep.subr.mxu0 0.0
      %2765 = vmatpush1.msra.mxu0 0.0
      %2766 = vmatprep.subr.mxu0 0.0
      %2767 = vmatpush1.msra.mxu0 0.0
      %2768 = vmatprep.subr.mxu0 0.0
      %2769 = vmatpush1.msra.mxu0 0.0
      %2770 = vmatprep.mubr.f32.mxu0 0.0
      %2771 = vmatmul.mubr.f32.gmra.mrb[0].mxu0 %v2704
      %v2772 = vpop.f32.mrb[0].mxu0
      %v2773 = vadd.f32 0.0, %v2772
      %v2774 = vpop.f32.mrb[0].mxu0
      %v2775 = vadd.f32 0.0, %v2774
      %2776 = vdwg.mxu0
      %2777 = vmatprep.subr.mxu0 %v2698
      %2778 = vmatpush1.msra.mxu0 %v2697
      %2779 = vmatprep.subr.mxu0 0.0
      %2780 = vmatpush1.msra.mxu0 0.0
      %2781 = vmatprep.subr.mxu0 0.0
      %2782 = vmatpush1.msra.mxu0 0.0
      %2783 = vmatprep.subr.mxu0 0.0
      %2784 = vmatpush1.msra.mxu0 0.0
      %2785 = vmatprep.subr.mxu0 0.0
      %2786 = vmatpush1.msra.mxu0 0.0
      %2787 = vmatprep.subr.mxu0 0.0
      %2788 = vmatpush1.msra.mxu0 0.0
      %2789 = vmatprep.subr.mxu0 0.0
      %2790 = vmatpush1.msra.mxu0 0.0
      %2791 = vmatprep.subr.mxu0 0.0
      %2792 = vmatpush1.msra.mxu0 0.0
      %2793 = vmatprep.subr.mxu0 0.0
      %2794 = vmatpush1.msra.mxu0 0.0
      %2795 = vmatprep.subr.mxu0 0.0
      %2796 = vmatpush1.msra.mxu0 0.0
      %2797 = vmatprep.subr.mxu0 0.0
      %2798 = vmatpush1.msra.mxu0 0.0
      %2799 = vmatprep.subr.mxu0 0.0
      %2800 = vmatpush1.msra.mxu0 0.0
      %2801 = vmatprep.subr.mxu0 0.0
      %2802 = vmatpush1.msra.mxu0 0.0
      %2803 = vmatprep.subr.mxu0 0.0
      %2804 = vmatpush1.msra.mxu0 0.0
      %2805 = vmatprep.subr.mxu0 0.0
      %2806 = vmatpush1.msra.mxu0 0.0
      %2807 = vmatprep.subr.mxu0 0.0
      %2808 = vmatpush1.msra.mxu0 0.0
      %2809 = vmatprep.subr.mxu0 0.0
      %2810 = vmatpush1.msra.mxu0 0.0
      %2811 = vmatprep.subr.mxu0 0.0
      %2812 = vmatpush1.msra.mxu0 0.0
      %2813 = vmatprep.subr.mxu0 0.0
      %2814 = vmatpush1.msra.mxu0 0.0
      %2815 = vmatprep.subr.mxu0 0.0
      %2816 = vmatpush1.msra.mxu0 0.0
      %2817 = vmatprep.subr.mxu0 0.0
      %2818 = vmatpush1.msra.mxu0 0.0
      %2819 = vmatprep.subr.mxu0 0.0
      %2820 = vmatpush1.msra.mxu0 0.0
      %2821 = vmatprep.subr.mxu0 0.0
      %2822 = vmatpush1.msra.mxu0 0.0
      %2823 = vmatprep.subr.mxu0 0.0
      %2824 = vmatpush1.msra.mxu0 0.0
      %2825 = vmatprep.subr.mxu0 0.0
      %2826 = vmatpush1.msra.mxu0 0.0
      %2827 = vmatprep.subr.mxu0 0.0
      %2828 = vmatpush1.msra.mxu0 0.0
      %2829 = vmatprep.subr.mxu0 0.0
      %2830 = vmatpush1.msra.mxu0 0.0
      %2831 = vmatprep.subr.mxu0 0.0
      %2832 = vmatpush1.msra.mxu0 0.0
      %2833 = vmatprep.subr.mxu0 0.0
      %2834 = vmatpush1.msra.mxu0 0.0
      %2835 = vmatprep.subr.mxu0 0.0
      %2836 = vmatpush1.msra.mxu0 0.0
      %2837 = vmatprep.subr.mxu0 0.0
      %2838 = vmatpush1.msra.mxu0 0.0
      %2839 = vmatprep.subr.mxu0 0.0
      %2840 = vmatpush1.msra.mxu0 0.0
      %2841 = vmatprep.mubr.f32.mxu0 0.0
      %2842 = vmatmul.mubr.f32.gmra.mrb[0].mxu0 %v2704
      %v2843 = vpop.f32.mrb[0].mxu0
      %v2844 = vadd.f32 0.0, %v2843
      %v2845 = vpop.f32.mrb[0].mxu0
      %v2846 = vadd.f32 0.0, %v2845
      %2847 = vdwg.mxu0
      %v2848 = vadd.f32 %v2679, %v2773
      %v2849 = vadd.f32 %v2680, %v2775
      %v2850 = vadd.f32 %v2681, %v2844
      %v2851 = vadd.f32 %v2682, %v2846
      %s2852 = scalar_lea.vmem %s4, 32
      %v2853 = vld [vmem:[%s2852] sm:$0xff]
      %2854 = vrot.lane.b32.xlu0 %v2174, 59
      %v2855 = vpop.permute.xlu0 %2854
      %2856 = vrot.lane.b32.xlu0 %v2175, 59
      %v2857 = vpop.permute.xlu0 %2856
      %2858 = vrot.lane.b32.xlu0 %v2176, 59
      %v2859 = vpop.permute.xlu0 %2858
      %2860 = vrot.lane.b32.xlu0 %v2177, 59
      %v2861 = vpop.permute.xlu0 %2860
      %2862 = vrot.lane.b32.xlu0 %v2178, 59
      %v2863 = vpop.permute.xlu0 %2862
      %v2864 = vsel %vm1246, %v2855, %v2857
      %v2865 = vsel %vm1246, %v2857, %v2859
      %v2866 = vsel %vm1246, %v2859, %v2861
      %v2867 = vsel %vm1246, %v2861, %v2863
      %v2873 = vsel %vm2205, %v2853, 0
      %2875 = vmatprep.subr.mxu0 %v2865
      %2876 = vmatpush1.msra.mxu0 %v2864
      %2877 = vmatprep.subr.mxu0 0.0
      %2878 = vmatpush1.msra.mxu0 0.0
      %2879 = vmatprep.subr.mxu0 0.0
      %2880 = vmatpush1.msra.mxu0 0.0
      %2881 = vmatprep.subr.mxu0 0.0
      %2882 = vmatpush1.msra.mxu0 0.0
      %2883 = vmatprep.subr.mxu0 0.0
      %2884 = vmatpush1.msra.mxu0 0.0
      %2885 = vmatprep.subr.mxu0 0.0
      %2886 = vmatpush1.msra.mxu0 0.0
      %2887 = vmatprep.subr.mxu0 0.0
      %2888 = vmatpush1.msra.mxu0 0.0
      %2889 = vmatprep.subr.mxu0 0.0
      %2890 = vmatpush1.msra.mxu0 0.0
      %2891 = vmatprep.subr.mxu0 0.0
      %2892 = vmatpush1.msra.mxu0 0.0
      %2893 = vmatprep.subr.mxu0 0.0
      %2894 = vmatpush1.msra.mxu0 0.0
      %2895 = vmatprep.subr.mxu0 0.0
      %2896 = vmatpush1.msra.mxu0 0.0
      %2897 = vmatprep.subr.mxu0 0.0
      %2898 = vmatpush1.msra.mxu0 0.0
      %2899 = vmatprep.subr.mxu0 0.0
      %2900 = vmatpush1.msra.mxu0 0.0
      %2901 = vmatprep.subr.mxu0 0.0
      %2902 = vmatpush1.msra.mxu0 0.0
      %2903 = vmatprep.subr.mxu0 0.0
      %2904 = vmatpush1.msra.mxu0 0.0
      %2905 = vmatprep.subr.mxu0 0.0
      %2906 = vmatpush1.msra.mxu0 0.0
      %2907 = vmatprep.subr.mxu0 0.0
      %2908 = vmatpush1.msra.mxu0 0.0
      %2909 = vmatprep.subr.mxu0 0.0
      %2910 = vmatpush1.msra.mxu0 0.0
      %2911 = vmatprep.subr.mxu0 0.0
      %2912 = vmatpush1.msra.mxu0 0.0
      %2913 = vmatprep.subr.mxu0 0.0
      %2914 = vmatpush1.msra.mxu0 0.0
      %2915 = vmatprep.subr.mxu0 0.0
      %2916 = vmatpush1.msra.mxu0 0.0
      %2917 = vmatprep.subr.mxu0 0.0
      %2918 = vmatpush1.msra.mxu0 0.0
      %2919 = vmatprep.subr.mxu0 0.0
      %2920 = vmatpush1.msra.mxu0 0.0
      %2921 = vmatprep.subr.mxu0 0.0
      %2922 = vmatpush1.msra.mxu0 0.0
      %2923 = vmatprep.subr.mxu0 0.0
      %2924 = vmatpush1.msra.mxu0 0.0
      %2925 = vmatprep.subr.mxu0 0.0
      %2926 = vmatpush1.msra.mxu0 0.0
      %2927 = vmatprep.subr.mxu0 0.0
      %2928 = vmatpush1.msra.mxu0 0.0
      %2929 = vmatprep.subr.mxu0 0.0
      %2930 = vmatpush1.msra.mxu0 0.0
      %2931 = vmatprep.subr.mxu0 0.0
      %2932 = vmatpush1.msra.mxu0 0.0
      %2933 = vmatprep.subr.mxu0 0.0
      %2934 = vmatpush1.msra.mxu0 0.0
      %2935 = vmatprep.subr.mxu0 0.0
      %2936 = vmatpush1.msra.mxu0 0.0
      %2937 = vmatprep.subr.mxu0 0.0
      %2938 = vmatpush1.msra.mxu0 0.0
      %2939 = vmatprep.mubr.f32.mxu0 0.0
      %2940 = vmatmul.mubr.f32.gmra.mrb[0].mxu0 %v2873
      %v2941 = vpop.f32.mrb[0].mxu0
      %v2942 = vadd.f32 0.0, %v2941
      %v2943 = vpop.f32.mrb[0].mxu0
      %v2944 = vadd.f32 0.0, %v2943
      %2945 = vdwg.mxu0
      %2946 = vmatprep.subr.mxu0 %v2867
      %2947 = vmatpush1.msra.mxu0 %v2866
      %2948 = vmatprep.subr.mxu0 0.0
      %2949 = vmatpush1.msra.mxu0 0.0
      %2950 = vmatprep.subr.mxu0 0.0
      %2951 = vmatpush1.msra.mxu0 0.0
      %2952 = vmatprep.subr.mxu0 0.0
      %2953 = vmatpush1.msra.mxu0 0.0
      %2954 = vmatprep.subr.mxu0 0.0
      %2955 = vmatpush1.msra.mxu0 0.0
      %2956 = vmatprep.subr.mxu0 0.0
      %2957 = vmatpush1.msra.mxu0 0.0
      %2958 = vmatprep.subr.mxu0 0.0
      %2959 = vmatpush1.msra.mxu0 0.0
      %2960 = vmatprep.subr.mxu0 0.0
      %2961 = vmatpush1.msra.mxu0 0.0
      %2962 = vmatprep.subr.mxu0 0.0
      %2963 = vmatpush1.msra.mxu0 0.0
      %2964 = vmatprep.subr.mxu0 0.0
      %2965 = vmatpush1.msra.mxu0 0.0
      %2966 = vmatprep.subr.mxu0 0.0
      %2967 = vmatpush1.msra.mxu0 0.0
      %2968 = vmatprep.subr.mxu0 0.0
      %2969 = vmatpush1.msra.mxu0 0.0
      %2970 = vmatprep.subr.mxu0 0.0
      %2971 = vmatpush1.msra.mxu0 0.0
      %2972 = vmatprep.subr.mxu0 0.0
      %2973 = vmatpush1.msra.mxu0 0.0
      %2974 = vmatprep.subr.mxu0 0.0
      %2975 = vmatpush1.msra.mxu0 0.0
      %2976 = vmatprep.subr.mxu0 0.0
      %2977 = vmatpush1.msra.mxu0 0.0
      %2978 = vmatprep.subr.mxu0 0.0
      %2979 = vmatpush1.msra.mxu0 0.0
      %2980 = vmatprep.subr.mxu0 0.0
      %2981 = vmatpush1.msra.mxu0 0.0
      %2982 = vmatprep.subr.mxu0 0.0
      %2983 = vmatpush1.msra.mxu0 0.0
      %2984 = vmatprep.subr.mxu0 0.0
      %2985 = vmatpush1.msra.mxu0 0.0
      %2986 = vmatprep.subr.mxu0 0.0
      %2987 = vmatpush1.msra.mxu0 0.0
      %2988 = vmatprep.subr.mxu0 0.0
      %2989 = vmatpush1.msra.mxu0 0.0
      %2990 = vmatprep.subr.mxu0 0.0
      %2991 = vmatpush1.msra.mxu0 0.0
      %2992 = vmatprep.subr.mxu0 0.0
      %2993 = vmatpush1.msra.mxu0 0.0
      %2994 = vmatprep.subr.mxu0 0.0
      %2995 = vmatpush1.msra.mxu0 0.0
      %2996 = vmatprep.subr.mxu0 0.0
      %2997 = vmatpush1.msra.mxu0 0.0
      %2998 = vmatprep.subr.mxu0 0.0
      %2999 = vmatpush1.msra.mxu0 0.0
      %3000 = vmatprep.subr.mxu0 0.0
      %3001 = vmatpush1.msra.mxu0 0.0
      %3002 = vmatprep.subr.mxu0 0.0
      %3003 = vmatpush1.msra.mxu0 0.0
      %3004 = vmatprep.subr.mxu0 0.0
      %3005 = vmatpush1.msra.mxu0 0.0
      %3006 = vmatprep.subr.mxu0 0.0
      %3007 = vmatpush1.msra.mxu0 0.0
      %3008 = vmatprep.subr.mxu0 0.0
      %3009 = vmatpush1.msra.mxu0 0.0
      %3010 = vmatprep.mubr.f32.mxu0 0.0
      %3011 = vmatmul.mubr.f32.gmra.mrb[0].mxu0 %v2873
      %v3012 = vpop.f32.mrb[0].mxu0
      %v3013 = vadd.f32 0.0, %v3012
      %v3014 = vpop.f32.mrb[0].mxu0
      %v3015 = vadd.f32 0.0, %v3014
      %3016 = vdwg.mxu0
      %v3017 = vadd.f32 %v2848, %v2942
      %v3018 = vadd.f32 %v2849, %v2944
      %v3019 = vadd.f32 %v2850, %v3013
      %v3020 = vadd.f32 %v2851, %v3015
      %s3021 = scalar_lea.vmem %s4, 40
      %v3022 = vld [vmem:[%s3021] sm:$0xff]
      %3023 = vrot.lane.b32.xlu0 %v2174, 58
      %v3024 = vpop.permute.xlu0 %3023
      %3025 = vrot.lane.b32.xlu0 %v2175, 58
      %v3026 = vpop.permute.xlu0 %3025
      %3027 = vrot.lane.b32.xlu0 %v2176, 58
      %v3028 = vpop.permute.xlu0 %3027
      %3029 = vrot.lane.b32.xlu0 %v2177, 58
      %v3030 = vpop.permute.xlu0 %3029
      %3031 = vrot.lane.b32.xlu0 %v2178, 58
      %v3032 = vpop.permute.xlu0 %3031
      %v3033 = vsel %vm1420, %v3024, %v3026
      %v3034 = vsel %vm1420, %v3026, %v3028
      %v3035 = vsel %vm1420, %v3028, %v3030
      %v3036 = vsel %vm1420, %v3030, %v3032
      %v3042 = vsel %vm2205, %v3022, 0
      %3044 = vmatprep.subr.mxu0 %v3034
      %3045 = vmatpush1.msra.mxu0 %v3033
      %3046 = vmatprep.subr.mxu0 0.0
      %3047 = vmatpush1.msra.mxu0 0.0
      %3048 = vmatprep.subr.mxu0 0.0
      %3049 = vmatpush1.msra.mxu0 0.0
      %3050 = vmatprep.subr.mxu0 0.0
      %3051 = vmatpush1.msra.mxu0 0.0
      %3052 = vmatprep.subr.mxu0 0.0
      %3053 = vmatpush1.msra.mxu0 0.0
      %3054 = vmatprep.subr.mxu0 0.0
      %3055 = vmatpush1.msra.mxu0 0.0
      %3056 = vmatprep.subr.mxu0 0.0
      %3057 = vmatpush1.msra.mxu0 0.0
      %3058 = vmatprep.subr.mxu0 0.0
      %3059 = vmatpush1.msra.mxu0 0.0
      %3060 = vmatprep.subr.mxu0 0.0
      %3061 = vmatpush1.msra.mxu0 0.0
      %3062 = vmatprep.subr.mxu0 0.0
      %3063 = vmatpush1.msra.mxu0 0.0
      %3064 = vmatprep.subr.mxu0 0.0
      %3065 = vmatpush1.msra.mxu0 0.0
      %3066 = vmatprep.subr.mxu0 0.0
      %3067 = vmatpush1.msra.mxu0 0.0
      %3068 = vmatprep.subr.mxu0 0.0
      %3069 = vmatpush1.msra.mxu0 0.0
      %3070 = vmatprep.subr.mxu0 0.0
      %3071 = vmatpush1.msra.mxu0 0.0
      %3072 = vmatprep.subr.mxu0 0.0
      %3073 = vmatpush1.msra.mxu0 0.0
      %3074 = vmatprep.subr.mxu0 0.0
      %3075 = vmatpush1.msra.mxu0 0.0
      %3076 = vmatprep.subr.mxu0 0.0
      %3077 = vmatpush1.msra.mxu0 0.0
      %3078 = vmatprep.subr.mxu0 0.0
      %3079 = vmatpush1.msra.mxu0 0.0
      %3080 = vmatprep.subr.mxu0 0.0
      %3081 = vmatpush1.msra.mxu0 0.0
      %3082 = vmatprep.subr.mxu0 0.0
      %3083 = vmatpush1.msra.mxu0 0.0
      %3084 = vmatprep.subr.mxu0 0.0
      %3085 = vmatpush1.msra.mxu0 0.0
      %3086 = vmatprep.subr.mxu0 0.0
      %3087 = vmatpush1.msra.mxu0 0.0
      %3088 = vmatprep.subr.mxu0 0.0
      %3089 = vmatpush1.msra.mxu0 0.0
      %3090 = vmatprep.subr.mxu0 0.0
      %3091 = vmatpush1.msra.mxu0 0.0
      %3092 = vmatprep.subr.mxu0 0.0
      %3093 = vmatpush1.msra.mxu0 0.0
      %3094 = vmatprep.subr.mxu0 0.0
      %3095 = vmatpush1.msra.mxu0 0.0
      %3096 = vmatprep.subr.mxu0 0.0
      %3097 = vmatpush1.msra.mxu0 0.0
      %3098 = vmatprep.subr.mxu0 0.0
      %3099 = vmatpush1.msra.mxu0 0.0
      %3100 = vmatprep.subr.mxu0 0.0
      %3101 = vmatpush1.msra.mxu0 0.0
      %3102 = vmatprep.subr.mxu0 0.0
      %3103 = vmatpush1.msra.mxu0 0.0
      %3104 = vmatprep.subr.mxu0 0.0
      %3105 = vmatpush1.msra.mxu0 0.0
      %3106 = vmatprep.subr.mxu0 0.0
      %3107 = vmatpush1.msra.mxu0 0.0
      %3108 = vmatprep.mubr.f32.mxu0 0.0
      %3109 = vmatmul.mubr.f32.gmra.mrb[0].mxu0 %v3042
      %v3110 = vpop.f32.mrb[0].mxu0
      %v3111 = vadd.f32 0.0, %v3110
      %v3112 = vpop.f32.mrb[0].mxu0
      %v3113 = vadd.f32 0.0, %v3112
      %3114 = vdwg.mxu0
      %3115 = vmatprep.subr.mxu0 %v3036
      %3116 = vmatpush1.msra.mxu0 %v3035
      %3117 = vmatprep.subr.mxu0 0.0
      %3118 = vmatpush1.msra.mxu0 0.0
      %3119 = vmatprep.subr.mxu0 0.0
      %3120 = vmatpush1.msra.mxu0 0.0
      %3121 = vmatprep.subr.mxu0 0.0
      %3122 = vmatpush1.msra.mxu0 0.0
      %3123 = vmatprep.subr.mxu0 0.0
      %3124 = vmatpush1.msra.mxu0 0.0
      %3125 = vmatprep.subr.mxu0 0.0
      %3126 = vmatpush1.msra.mxu0 0.0
      %3127 = vmatprep.subr.mxu0 0.0
      %3128 = vmatpush1.msra.mxu0 0.0
      %3129 = vmatprep.subr.mxu0 0.0
      %3130 = vmatpush1.msra.mxu0 0.0
      %3131 = vmatprep.subr.mxu0 0.0
      %3132 = vmatpush1.msra.mxu0 0.0
      %3133 = vmatprep.subr.mxu0 0.0
      %3134 = vmatpush1.msra.mxu0 0.0
      %3135 = vmatprep.subr.mxu0 0.0
      %3136 = vmatpush1.msra.mxu0 0.0
      %3137 = vmatprep.subr.mxu0 0.0
      %3138 = vmatpush1.msra.mxu0 0.0
      %3139 = vmatprep.subr.mxu0 0.0
      %3140 = vmatpush1.msra.mxu0 0.0
      %3141 = vmatprep.subr.mxu0 0.0
      %3142 = vmatpush1.msra.mxu0 0.0
      %3143 = vmatprep.subr.mxu0 0.0
      %3144 = vmatpush1.msra.mxu0 0.0
      %3145 = vmatprep.subr.mxu0 0.0
      %3146 = vmatpush1.msra.mxu0 0.0
      %3147 = vmatprep.subr.mxu0 0.0
      %3148 = vmatpush1.msra.mxu0 0.0
      %3149 = vmatprep.subr.mxu0 0.0
      %3150 = vmatpush1.msra.mxu0 0.0
      %3151 = vmatprep.subr.mxu0 0.0
      %3152 = vmatpush1.msra.mxu0 0.0
      %3153 = vmatprep.subr.mxu0 0.0
      %3154 = vmatpush1.msra.mxu0 0.0
      %3155 = vmatprep.subr.mxu0 0.0
      %3156 = vmatpush1.msra.mxu0 0.0
      %3157 = vmatprep.subr.mxu0 0.0
      %3158 = vmatpush1.msra.mxu0 0.0
      %3159 = vmatprep.subr.mxu0 0.0
      %3160 = vmatpush1.msra.mxu0 0.0
      %3161 = vmatprep.subr.mxu0 0.0
      %3162 = vmatpush1.msra.mxu0 0.0
      %3163 = vmatprep.subr.mxu0 0.0
      %3164 = vmatpush1.msra.mxu0 0.0
      %3165 = vmatprep.subr.mxu0 0.0
      %3166 = vmatpush1.msra.mxu0 0.0
      %3167 = vmatprep.subr.mxu0 0.0
      %3168 = vmatpush1.msra.mxu0 0.0
      %3169 = vmatprep.subr.mxu0 0.0
      %3170 = vmatpush1.msra.mxu0 0.0
      %3171 = vmatprep.subr.mxu0 0.0
      %3172 = vmatpush1.msra.mxu0 0.0
      %3173 = vmatprep.subr.mxu0 0.0
      %3174 = vmatpush1.msra.mxu0 0.0
      %3175 = vmatprep.subr.mxu0 0.0
      %3176 = vmatpush1.msra.mxu0 0.0
      %3177 = vmatprep.subr.mxu0 0.0
      %3178 = vmatpush1.msra.mxu0 0.0
      %3179 = vmatprep.mubr.f32.mxu0 0.0
      %3180 = vmatmul.mubr.f32.gmra.mrb[0].mxu0 %v3042
      %v3181 = vpop.f32.mrb[0].mxu0
      %v3182 = vadd.f32 0.0, %v3181
      %v3183 = vpop.f32.mrb[0].mxu0
      %v3184 = vadd.f32 0.0, %v3183
      %3185 = vdwg.mxu0
      %v3186 = vadd.f32 %v3017, %v3111
      %v3187 = vadd.f32 %v3018, %v3113
      %v3188 = vadd.f32 %v3019, %v3182
      %v3189 = vadd.f32 %v3020, %v3184
      %s3190 = scalar_lea.vmem %s4, 48
      %v3191 = vld [vmem:[%s3190] sm:$0xff]
      %3192 = vrot.lane.b32.xlu0 %v2174, 38
      %v3193 = vpop.permute.xlu0 %3192
      %3194 = vrot.lane.b32.xlu0 %v2175, 38
      %v3195 = vpop.permute.xlu0 %3194
      %3196 = vrot.lane.b32.xlu0 %v2176, 38
      %v3197 = vpop.permute.xlu0 %3196
      %3198 = vrot.lane.b32.xlu0 %v2177, 38
      %v3199 = vpop.permute.xlu0 %3198
      %3200 = vrot.lane.b32.xlu0 %v2178, 38
      %v3201 = vpop.permute.xlu0 %3200
      %v3202 = vsel %vm1594, %v3193, %v3195
      %v3203 = vsel %vm1594, %v3195, %v3197
      %v3204 = vsel %vm1594, %v3197, %v3199
      %v3205 = vsel %vm1594, %v3199, %v3201
      %v3211 = vsel %vm2205, %v3191, 0
      %3213 = vmatprep.subr.mxu0 %v3203
      %3214 = vmatpush1.msra.mxu0 %v3202
      %3215 = vmatprep.subr.mxu0 0.0
      %3216 = vmatpush1.msra.mxu0 0.0
      %3217 = vmatprep.subr.mxu0 0.0
      %3218 = vmatpush1.msra.mxu0 0.0
      %3219 = vmatprep.subr.mxu0 0.0
      %3220 = vmatpush1.msra.mxu0 0.0
      %3221 = vmatprep.subr.mxu0 0.0
      %3222 = vmatpush1.msra.mxu0 0.0
      %3223 = vmatprep.subr.mxu0 0.0
      %3224 = vmatpush1.msra.mxu0 0.0
      %3225 = vmatprep.subr.mxu0 0.0
      %3226 = vmatpush1.msra.mxu0 0.0
      %3227 = vmatprep.subr.mxu0 0.0
      %3228 = vmatpush1.msra.mxu0 0.0
      %3229 = vmatprep.subr.mxu0 0.0
      %3230 = vmatpush1.msra.mxu0 0.0
      %3231 = vmatprep.subr.mxu0 0.0
      %3232 = vmatpush1.msra.mxu0 0.0
      %3233 = vmatprep.subr.mxu0 0.0
      %3234 = vmatpush1.msra.mxu0 0.0
      %3235 = vmatprep.subr.mxu0 0.0
      %3236 = vmatpush1.msra.mxu0 0.0
      %3237 = vmatprep.subr.mxu0 0.0
      %3238 = vmatpush1.msra.mxu0 0.0
      %3239 = vmatprep.subr.mxu0 0.0
      %3240 = vmatpush1.msra.mxu0 0.0
      %3241 = vmatprep.subr.mxu0 0.0
      %3242 = vmatpush1.msra.mxu0 0.0
      %3243 = vmatprep.subr.mxu0 0.0
      %3244 = vmatpush1.msra.mxu0 0.0
      %3245 = vmatprep.subr.mxu0 0.0
      %3246 = vmatpush1.msra.mxu0 0.0
      %3247 = vmatprep.subr.mxu0 0.0
      %3248 = vmatpush1.msra.mxu0 0.0
      %3249 = vmatprep.subr.mxu0 0.0
      %3250 = vmatpush1.msra.mxu0 0.0
      %3251 = vmatprep.subr.mxu0 0.0
      %3252 = vmatpush1.msra.mxu0 0.0
      %3253 = vmatprep.subr.mxu0 0.0
      %3254 = vmatpush1.msra.mxu0 0.0
      %3255 = vmatprep.subr.mxu0 0.0
      %3256 = vmatpush1.msra.mxu0 0.0
      %3257 = vmatprep.subr.mxu0 0.0
      %3258 = vmatpush1.msra.mxu0 0.0
      %3259 = vmatprep.subr.mxu0 0.0
      %3260 = vmatpush1.msra.mxu0 0.0
      %3261 = vmatprep.subr.mxu0 0.0
      %3262 = vmatpush1.msra.mxu0 0.0
      %3263 = vmatprep.subr.mxu0 0.0
      %3264 = vmatpush1.msra.mxu0 0.0
      %3265 = vmatprep.subr.mxu0 0.0
      %3266 = vmatpush1.msra.mxu0 0.0
      %3267 = vmatprep.subr.mxu0 0.0
      %3268 = vmatpush1.msra.mxu0 0.0
      %3269 = vmatprep.subr.mxu0 0.0
      %3270 = vmatpush1.msra.mxu0 0.0
      %3271 = vmatprep.subr.mxu0 0.0
      %3272 = vmatpush1.msra.mxu0 0.0
      %3273 = vmatprep.subr.mxu0 0.0
      %3274 = vmatpush1.msra.mxu0 0.0
      %3275 = vmatprep.subr.mxu0 0.0
      %3276 = vmatpush1.msra.mxu0 0.0
      %3277 = vmatprep.mubr.f32.mxu0 0.0
      %3278 = vmatmul.mubr.f32.gmra.mrb[0].mxu0 %v3211
      %v3279 = vpop.f32.mrb[0].mxu0
      %v3280 = vadd.f32 0.0, %v3279
      %v3281 = vpop.f32.mrb[0].mxu0
      %v3282 = vadd.f32 0.0, %v3281
      %3283 = vdwg.mxu0
      %3284 = vmatprep.subr.mxu0 %v3205
      %3285 = vmatpush1.msra.mxu0 %v3204
      %3286 = vmatprep.subr.mxu0 0.0
      %3287 = vmatpush1.msra.mxu0 0.0
      %3288 = vmatprep.subr.mxu0 0.0
      %3289 = vmatpush1.msra.mxu0 0.0
      %3290 = vmatprep.subr.mxu0 0.0
      %3291 = vmatpush1.msra.mxu0 0.0
      %3292 = vmatprep.subr.mxu0 0.0
      %3293 = vmatpush1.msra.mxu0 0.0
      %3294 = vmatprep.subr.mxu0 0.0
      %3295 = vmatpush1.msra.mxu0 0.0
      %3296 = vmatprep.subr.mxu0 0.0
      %3297 = vmatpush1.msra.mxu0 0.0
      %3298 = vmatprep.subr.mxu0 0.0
      %3299 = vmatpush1.msra.mxu0 0.0
      %3300 = vmatprep.subr.mxu0 0.0
      %3301 = vmatpush1.msra.mxu0 0.0
      %3302 = vmatprep.subr.mxu0 0.0
      %3303 = vmatpush1.msra.mxu0 0.0
      %3304 = vmatprep.subr.mxu0 0.0
      %3305 = vmatpush1.msra.mxu0 0.0
      %3306 = vmatprep.subr.mxu0 0.0
      %3307 = vmatpush1.msra.mxu0 0.0
      %3308 = vmatprep.subr.mxu0 0.0
      %3309 = vmatpush1.msra.mxu0 0.0
      %3310 = vmatprep.subr.mxu0 0.0
      %3311 = vmatpush1.msra.mxu0 0.0
      %3312 = vmatprep.subr.mxu0 0.0
      %3313 = vmatpush1.msra.mxu0 0.0
      %3314 = vmatprep.subr.mxu0 0.0
      %3315 = vmatpush1.msra.mxu0 0.0
      %3316 = vmatprep.subr.mxu0 0.0
      %3317 = vmatpush1.msra.mxu0 0.0
      %3318 = vmatprep.subr.mxu0 0.0
      %3319 = vmatpush1.msra.mxu0 0.0
      %3320 = vmatprep.subr.mxu0 0.0
      %3321 = vmatpush1.msra.mxu0 0.0
      %3322 = vmatprep.subr.mxu0 0.0
      %3323 = vmatpush1.msra.mxu0 0.0
      %3324 = vmatprep.subr.mxu0 0.0
      %3325 = vmatpush1.msra.mxu0 0.0
      %3326 = vmatprep.subr.mxu0 0.0
      %3327 = vmatpush1.msra.mxu0 0.0
      %3328 = vmatprep.subr.mxu0 0.0
      %3329 = vmatpush1.msra.mxu0 0.0
      %3330 = vmatprep.subr.mxu0 0.0
      %3331 = vmatpush1.msra.mxu0 0.0
      %3332 = vmatprep.subr.mxu0 0.0
      %3333 = vmatpush1.msra.mxu0 0.0
      %3334 = vmatprep.subr.mxu0 0.0
      %3335 = vmatpush1.msra.mxu0 0.0
      %3336 = vmatprep.subr.mxu0 0.0
      %3337 = vmatpush1.msra.mxu0 0.0
      %3338 = vmatprep.subr.mxu0 0.0
      %3339 = vmatpush1.msra.mxu0 0.0
      %3340 = vmatprep.subr.mxu0 0.0
      %3341 = vmatpush1.msra.mxu0 0.0
      %3342 = vmatprep.subr.mxu0 0.0
      %3343 = vmatpush1.msra.mxu0 0.0
      %3344 = vmatprep.subr.mxu0 0.0
      %3345 = vmatpush1.msra.mxu0 0.0
      %3346 = vmatprep.subr.mxu0 0.0
      %3347 = vmatpush1.msra.mxu0 0.0
      %3348 = vmatprep.mubr.f32.mxu0 0.0
      %3349 = vmatmul.mubr.f32.gmra.mrb[0].mxu0 %v3211
      %v3350 = vpop.f32.mrb[0].mxu0
      %v3351 = vadd.f32 0.0, %v3350
      %v3352 = vpop.f32.mrb[0].mxu0
      %v3353 = vadd.f32 0.0, %v3352
      %3354 = vdwg.mxu0
      %v3355 = vadd.f32 %v3186, %v3280
      %v3356 = vadd.f32 %v3187, %v3282
      %v3357 = vadd.f32 %v3188, %v3351
      %v3358 = vadd.f32 %v3189, %v3353
      %s3359 = scalar_lea.vmem %s4, 56
      %v3360 = vld [vmem:[%s3359] sm:$0xff]
      %3361 = vrot.lane.b32.xlu0 %v2174, 37
      %v3362 = vpop.permute.xlu0 %3361
      %3363 = vrot.lane.b32.xlu0 %v2175, 37
      %v3364 = vpop.permute.xlu0 %3363
      %3365 = vrot.lane.b32.xlu0 %v2176, 37
      %v3366 = vpop.permute.xlu0 %3365
      %3367 = vrot.lane.b32.xlu0 %v2177, 37
      %v3368 = vpop.permute.xlu0 %3367
      %3369 = vrot.lane.b32.xlu0 %v2178, 37
      %v3370 = vpop.permute.xlu0 %3369
      %v3371 = vsel %vm1768, %v3362, %v3364
      %v3372 = vsel %vm1768, %v3364, %v3366
      %v3373 = vsel %vm1768, %v3366, %v3368
      %v3374 = vsel %vm1768, %v3368, %v3370
      %v3380 = vsel %vm2205, %v3360, 0
      %3382 = vmatprep.subr.mxu0 %v3372
      %3383 = vmatpush1.msra.mxu0 %v3371
      %3384 = vmatprep.subr.mxu0 0.0
      %3385 = vmatpush1.msra.mxu0 0.0
      %3386 = vmatprep.subr.mxu0 0.0
      %3387 = vmatpush1.msra.mxu0 0.0
      %3388 = vmatprep.subr.mxu0 0.0
      %3389 = vmatpush1.msra.mxu0 0.0
      %3390 = vmatprep.subr.mxu0 0.0
      %3391 = vmatpush1.msra.mxu0 0.0
      %3392 = vmatprep.subr.mxu0 0.0
      %3393 = vmatpush1.msra.mxu0 0.0
      %3394 = vmatprep.subr.mxu0 0.0
      %3395 = vmatpush1.msra.mxu0 0.0
      %3396 = vmatprep.subr.mxu0 0.0
      %3397 = vmatpush1.msra.mxu0 0.0
      %3398 = vmatprep.subr.mxu0 0.0
      %3399 = vmatpush1.msra.mxu0 0.0
      %3400 = vmatprep.subr.mxu0 0.0
      %3401 = vmatpush1.msra.mxu0 0.0
      %3402 = vmatprep.subr.mxu0 0.0
      %3403 = vmatpush1.msra.mxu0 0.0
      %3404 = vmatprep.subr.mxu0 0.0
      %3405 = vmatpush1.msra.mxu0 0.0
      %3406 = vmatprep.subr.mxu0 0.0
      %3407 = vmatpush1.msra.mxu0 0.0
      %3408 = vmatprep.subr.mxu0 0.0
      %3409 = vmatpush1.msra.mxu0 0.0
      %3410 = vmatprep.subr.mxu0 0.0
      %3411 = vmatpush1.msra.mxu0 0.0
      %3412 = vmatprep.subr.mxu0 0.0
      %3413 = vmatpush1.msra.mxu0 0.0
      %3414 = vmatprep.subr.mxu0 0.0
      %3415 = vmatpush1.msra.mxu0 0.0
      %3416 = vmatprep.subr.mxu0 0.0
      %3417 = vmatpush1.msra.mxu0 0.0
      %3418 = vmatprep.subr.mxu0 0.0
      %3419 = vmatpush1.msra.mxu0 0.0
      %3420 = vmatprep.subr.mxu0 0.0
      %3421 = vmatpush1.msra.mxu0 0.0
      %3422 = vmatprep.subr.mxu0 0.0
      %3423 = vmatpush1.msra.mxu0 0.0
      %3424 = vmatprep.subr.mxu0 0.0
      %3425 = vmatpush1.msra.mxu0 0.0
      %3426 = vmatprep.subr.mxu0 0.0
      %3427 = vmatpush1.msra.mxu0 0.0
      %3428 = vmatprep.subr.mxu0 0.0
      %3429 = vmatpush1.msra.mxu0 0.0
      %3430 = vmatprep.subr.mxu0 0.0
      %3431 = vmatpush1.msra.mxu0 0.0
      %3432 = vmatprep.subr.mxu0 0.0
      %3433 = vmatpush1.msra.mxu0 0.0
      %3434 = vmatprep.subr.mxu0 0.0
      %3435 = vmatpush1.msra.mxu0 0.0
      %3436 = vmatprep.subr.mxu0 0.0
      %3437 = vmatpush1.msra.mxu0 0.0
      %3438 = vmatprep.subr.mxu0 0.0
      %3439 = vmatpush1.msra.mxu0 0.0
      %3440 = vmatprep.subr.mxu0 0.0
      %3441 = vmatpush1.msra.mxu0 0.0
      %3442 = vmatprep.subr.mxu0 0.0
      %3443 = vmatpush1.msra.mxu0 0.0
      %3444 = vmatprep.subr.mxu0 0.0
      %3445 = vmatpush1.msra.mxu0 0.0
      %3446 = vmatprep.mubr.f32.mxu0 0.0
      %3447 = vmatmul.mubr.f32.gmra.mrb[0].mxu0 %v3380
      %v3448 = vpop.f32.mrb[0].mxu0
      %v3449 = vadd.f32 0.0, %v3448
      %v3450 = vpop.f32.mrb[0].mxu0
      %v3451 = vadd.f32 0.0, %v3450
      %3452 = vdwg.mxu0
      %3453 = vmatprep.subr.mxu0 %v3374
      %3454 = vmatpush1.msra.mxu0 %v3373
      %3455 = vmatprep.subr.mxu0 0.0
      %3456 = vmatpush1.msra.mxu0 0.0
      %3457 = vmatprep.subr.mxu0 0.0
      %3458 = vmatpush1.msra.mxu0 0.0
      %3459 = vmatprep.subr.mxu0 0.0
      %3460 = vmatpush1.msra.mxu0 0.0
      %3461 = vmatprep.subr.mxu0 0.0
      %3462 = vmatpush1.msra.mxu0 0.0
      %3463 = vmatprep.subr.mxu0 0.0
      %3464 = vmatpush1.msra.mxu0 0.0
      %3465 = vmatprep.subr.mxu0 0.0
      %3466 = vmatpush1.msra.mxu0 0.0
      %3467 = vmatprep.subr.mxu0 0.0
      %3468 = vmatpush1.msra.mxu0 0.0
      %3469 = vmatprep.subr.mxu0 0.0
      %3470 = vmatpush1.msra.mxu0 0.0
      %3471 = vmatprep.subr.mxu0 0.0
      %3472 = vmatpush1.msra.mxu0 0.0
      %3473 = vmatprep.subr.mxu0 0.0
      %3474 = vmatpush1.msra.mxu0 0.0
      %3475 = vmatprep.subr.mxu0 0.0
      %3476 = vmatpush1.msra.mxu0 0.0
      %3477 = vmatprep.subr.mxu0 0.0
      %3478 = vmatpush1.msra.mxu0 0.0
      %3479 = vmatprep.subr.mxu0 0.0
      %3480 = vmatpush1.msra.mxu0 0.0
      %3481 = vmatprep.subr.mxu0 0.0
      %3482 = vmatpush1.msra.mxu0 0.0
      %3483 = vmatprep.subr.mxu0 0.0
      %3484 = vmatpush1.msra.mxu0 0.0
      %3485 = vmatprep.subr.mxu0 0.0
      %3486 = vmatpush1.msra.mxu0 0.0
      %3487 = vmatprep.subr.mxu0 0.0
      %3488 = vmatpush1.msra.mxu0 0.0
      %3489 = vmatprep.subr.mxu0 0.0
      %3490 = vmatpush1.msra.mxu0 0.0
      %3491 = vmatprep.subr.mxu0 0.0
      %3492 = vmatpush1.msra.mxu0 0.0
      %3493 = vmatprep.subr.mxu0 0.0
      %3494 = vmatpush1.msra.mxu0 0.0
      %3495 = vmatprep.subr.mxu0 0.0
      %3496 = vmatpush1.msra.mxu0 0.0
      %3497 = vmatprep.subr.mxu0 0.0
      %3498 = vmatpush1.msra.mxu0 0.0
      %3499 = vmatprep.subr.mxu0 0.0
      %3500 = vmatpush1.msra.mxu0 0.0
      %3501 = vmatprep.subr.mxu0 0.0
      %3502 = vmatpush1.msra.mxu0 0.0
      %3503 = vmatprep.subr.mxu0 0.0
      %3504 = vmatpush1.msra.mxu0 0.0
      %3505 = vmatprep.subr.mxu0 0.0
      %3506 = vmatpush1.msra.mxu0 0.0
      %3507 = vmatprep.subr.mxu0 0.0
      %3508 = vmatpush1.msra.mxu0 0.0
      %3509 = vmatprep.subr.mxu0 0.0
      %3510 = vmatpush1.msra.mxu0 0.0
      %3511 = vmatprep.subr.mxu0 0.0
      %3512 = vmatpush1.msra.mxu0 0.0
      %3513 = vmatprep.subr.mxu0 0.0
      %3514 = vmatpush1.msra.mxu0 0.0
      %3515 = vmatprep.subr.mxu0 0.0
      %3516 = vmatpush1.msra.mxu0 0.0
      %3517 = vmatprep.mubr.f32.mxu0 0.0
      %3518 = vmatmul.mubr.f32.gmra.mrb[0].mxu0 %v3380
      %v3519 = vpop.f32.mrb[0].mxu0
      %v3520 = vadd.f32 0.0, %v3519
      %v3521 = vpop.f32.mrb[0].mxu0
      %v3522 = vadd.f32 0.0, %v3521
      %3523 = vdwg.mxu0
      %v3524 = vadd.f32 %v3355, %v3449
      %v3525 = vadd.f32 %v3356, %v3451
      %v3526 = vadd.f32 %v3357, %v3520
      %v3527 = vadd.f32 %v3358, %v3522
      %s3528 = scalar_lea.vmem %s4, 64
      %v3529 = vld [vmem:[%s3528] sm:$0xff]
      %3530 = vrot.lane.b32.xlu0 %v2174, 36
      %v3531 = vpop.permute.xlu0 %3530
      %3532 = vrot.lane.b32.xlu0 %v2175, 36
      %v3533 = vpop.permute.xlu0 %3532
      %3534 = vrot.lane.b32.xlu0 %v2176, 36
      %v3535 = vpop.permute.xlu0 %3534
      %3536 = vrot.lane.b32.xlu0 %v2177, 36
      %v3537 = vpop.permute.xlu0 %3536
      %3538 = vrot.lane.b32.xlu0 %v2178, 36
      %v3539 = vpop.permute.xlu0 %3538
      %v3540 = vsel %vm1942, %v3531, %v3533
      %v3541 = vsel %vm1942, %v3533, %v3535
      %v3542 = vsel %vm1942, %v3535, %v3537
      %v3543 = vsel %vm1942, %v3537, %v3539
      %v3549 = vsel %vm2205, %v3529, 0
      %3551 = vmatprep.subr.mxu0 %v3541
      %3552 = vmatpush1.msra.mxu0 %v3540
      %3553 = vmatprep.subr.mxu0 0.0
      %3554 = vmatpush1.msra.mxu0 0.0
      %3555 = vmatprep.subr.mxu0 0.0
      %3556 = vmatpush1.msra.mxu0 0.0
      %3557 = vmatprep.subr.mxu0 0.0
      %3558 = vmatpush1.msra.mxu0 0.0
      %3559 = vmatprep.subr.mxu0 0.0
      %3560 = vmatpush1.msra.mxu0 0.0
      %3561 = vmatprep.subr.mxu0 0.0
      %3562 = vmatpush1.msra.mxu0 0.0
      %3563 = vmatprep.subr.mxu0 0.0
      %3564 = vmatpush1.msra.mxu0 0.0
      %3565 = vmatprep.subr.mxu0 0.0
      %3566 = vmatpush1.msra.mxu0 0.0
      %3567 = vmatprep.subr.mxu0 0.0
      %3568 = vmatpush1.msra.mxu0 0.0
      %3569 = vmatprep.subr.mxu0 0.0
      %3570 = vmatpush1.msra.mxu0 0.0
      %3571 = vmatprep.subr.mxu0 0.0
      %3572 = vmatpush1.msra.mxu0 0.0
      %3573 = vmatprep.subr.mxu0 0.0
      %3574 = vmatpush1.msra.mxu0 0.0
      %3575 = vmatprep.subr.mxu0 0.0
      %3576 = vmatpush1.msra.mxu0 0.0
      %3577 = vmatprep.subr.mxu0 0.0
      %3578 = vmatpush1.msra.mxu0 0.0
      %3579 = vmatprep.subr.mxu0 0.0
      %3580 = vmatpush1.msra.mxu0 0.0
      %3581 = vmatprep.subr.mxu0 0.0
      %3582 = vmatpush1.msra.mxu0 0.0
      %3583 = vmatprep.subr.mxu0 0.0
      %3584 = vmatpush1.msra.mxu0 0.0
      %3585 = vmatprep.subr.mxu0 0.0
      %3586 = vmatpush1.msra.mxu0 0.0
      %3587 = vmatprep.subr.mxu0 0.0
      %3588 = vmatpush1.msra.mxu0 0.0
      %3589 = vmatprep.subr.mxu0 0.0
      %3590 = vmatpush1.msra.mxu0 0.0
      %3591 = vmatprep.subr.mxu0 0.0
      %3592 = vmatpush1.msra.mxu0 0.0
      %3593 = vmatprep.subr.mxu0 0.0
      %3594 = vmatpush1.msra.mxu0 0.0
      %3595 = vmatprep.subr.mxu0 0.0
      %3596 = vmatpush1.msra.mxu0 0.0
      %3597 = vmatprep.subr.mxu0 0.0
      %3598 = vmatpush1.msra.mxu0 0.0
      %3599 = vmatprep.subr.mxu0 0.0
      %3600 = vmatpush1.msra.mxu0 0.0
      %3601 = vmatprep.subr.mxu0 0.0
      %3602 = vmatpush1.msra.mxu0 0.0
      %3603 = vmatprep.subr.mxu0 0.0
      %3604 = vmatpush1.msra.mxu0 0.0
      %3605 = vmatprep.subr.mxu0 0.0
      %3606 = vmatpush1.msra.mxu0 0.0
      %3607 = vmatprep.subr.mxu0 0.0
      %3608 = vmatpush1.msra.mxu0 0.0
      %3609 = vmatprep.subr.mxu0 0.0
      %3610 = vmatpush1.msra.mxu0 0.0
      %3611 = vmatprep.subr.mxu0 0.0
      %3612 = vmatpush1.msra.mxu0 0.0
      %3613 = vmatprep.subr.mxu0 0.0
      %3614 = vmatpush1.msra.mxu0 0.0
      %3615 = vmatprep.mubr.f32.mxu0 0.0
      %3616 = vmatmul.mubr.f32.gmra.mrb[0].mxu0 %v3549
      %v3617 = vpop.f32.mrb[0].mxu0
      %v3618 = vadd.f32 0.0, %v3617
      %v3619 = vpop.f32.mrb[0].mxu0
      %v3620 = vadd.f32 0.0, %v3619
      %3621 = vdwg.mxu0
      %3622 = vmatprep.subr.mxu0 %v3543
      %3623 = vmatpush1.msra.mxu0 %v3542
      %3624 = vmatprep.subr.mxu0 0.0
      %3625 = vmatpush1.msra.mxu0 0.0
      %3626 = vmatprep.subr.mxu0 0.0
      %3627 = vmatpush1.msra.mxu0 0.0
      %3628 = vmatprep.subr.mxu0 0.0
      %3629 = vmatpush1.msra.mxu0 0.0
      %3630 = vmatprep.subr.mxu0 0.0
      %3631 = vmatpush1.msra.mxu0 0.0
      %3632 = vmatprep.subr.mxu0 0.0
      %3633 = vmatpush1.msra.mxu0 0.0
      %3634 = vmatprep.subr.mxu0 0.0
      %3635 = vmatpush1.msra.mxu0 0.0
      %3636 = vmatprep.subr.mxu0 0.0
      %3637 = vmatpush1.msra.mxu0 0.0
      %3638 = vmatprep.subr.mxu0 0.0
      %3639 = vmatpush1.msra.mxu0 0.0
      %3640 = vmatprep.subr.mxu0 0.0
      %3641 = vmatpush1.msra.mxu0 0.0
      %3642 = vmatprep.subr.mxu0 0.0
      %3643 = vmatpush1.msra.mxu0 0.0
      %3644 = vmatprep.subr.mxu0 0.0
      %3645 = vmatpush1.msra.mxu0 0.0
      %3646 = vmatprep.subr.mxu0 0.0
      %3647 = vmatpush1.msra.mxu0 0.0
      %3648 = vmatprep.subr.mxu0 0.0
      %3649 = vmatpush1.msra.mxu0 0.0
      %3650 = vmatprep.subr.mxu0 0.0
      %3651 = vmatpush1.msra.mxu0 0.0
      %3652 = vmatprep.subr.mxu0 0.0
      %3653 = vmatpush1.msra.mxu0 0.0
      %3654 = vmatprep.subr.mxu0 0.0
      %3655 = vmatpush1.msra.mxu0 0.0
      %3656 = vmatprep.subr.mxu0 0.0
      %3657 = vmatpush1.msra.mxu0 0.0
      %3658 = vmatprep.subr.mxu0 0.0
      %3659 = vmatpush1.msra.mxu0 0.0
      %3660 = vmatprep.subr.mxu0 0.0
      %3661 = vmatpush1.msra.mxu0 0.0
      %3662 = vmatprep.subr.mxu0 0.0
      %3663 = vmatpush1.msra.mxu0 0.0
      %3664 = vmatprep.subr.mxu0 0.0
      %3665 = vmatpush1.msra.mxu0 0.0
      %3666 = vmatprep.subr.mxu0 0.0
      %3667 = vmatpush1.msra.mxu0 0.0
      %3668 = vmatprep.subr.mxu0 0.0
      %3669 = vmatpush1.msra.mxu0 0.0
      %3670 = vmatprep.subr.mxu0 0.0
      %3671 = vmatpush1.msra.mxu0 0.0
      %3672 = vmatprep.subr.mxu0 0.0
      %3673 = vmatpush1.msra.mxu0 0.0
      %3674 = vmatprep.subr.mxu0 0.0
      %3675 = vmatpush1.msra.mxu0 0.0
      %3676 = vmatprep.subr.mxu0 0.0
      %3677 = vmatpush1.msra.mxu0 0.0
      %3678 = vmatprep.subr.mxu0 0.0
      %3679 = vmatpush1.msra.mxu0 0.0
      %3680 = vmatprep.subr.mxu0 0.0
      %3681 = vmatpush1.msra.mxu0 0.0
      %3682 = vmatprep.subr.mxu0 0.0
      %3683 = vmatpush1.msra.mxu0 0.0
      %3684 = vmatprep.subr.mxu0 0.0
      %3685 = vmatpush1.msra.mxu0 0.0
      %3686 = vmatprep.mubr.f32.mxu0 0.0
      %3687 = vmatmul.mubr.f32.gmra.mrb[0].mxu0 %v3549
      %v3688 = vpop.f32.mrb[0].mxu0
      %v3689 = vadd.f32 0.0, %v3688
      %v3690 = vpop.f32.mrb[0].mxu0
      %v3691 = vadd.f32 0.0, %v3690
      %3692 = vdwg.mxu0
      %v3693 = vadd.f32 %v3524, %v3618
      %v3694 = vadd.f32 %v3525, %v3620
      %v3695 = vadd.f32 %v3526, %v3689
      %v3696 = vadd.f32 %v3527, %v3691
      %v3697 = vld [vmem:[%s5] sm:$0xff]
      %3699 = vset.pattern.permute.xlu0 0
      %3700 = vperm.xlu0 %3699, %v3697
      %v3701 = vpop.permute.xlu0 %3700
      %v3703 = vadd.f32 %v3693, %v3701
      %v3704 = vadd.f32 %v3694, %v3701
      %v3705 = vadd.f32 %v3695, %v3701
      %v3706 = vadd.f32 %v3696, %v3701
      %v3707 = vmul.f32 %v3703, 0.01
      %v3708 = vmul.f32 %v3704, 0.01
      %v3709 = vmul.f32 %v3705, 0.01
      %v3710 = vmul.f32 %v3706, 0.01
      %v3711 = vmax.f32 %v3703, %v3707
      %v3712 = vmax.f32 %v3704, %v3708
      %v3713 = vmax.f32 %v3705, %v3709
      %v3714 = vmax.f32 %v3706, %v3710
      %v3715 = vmul.f32 %v3711, %v2126
      %v3716 = vmul.f32 %v3712, %v2130
      %v3717 = vmul.f32 %v3713, %v2134
      %v3718 = vmul.f32 %v3714, %v2138
      %3723 = vrot.lane.b32.xlu0 %v3715, 69
      %v3724 = vpop.permute.xlu0 %3723
      %3725 = vrot.lane.b32.xlu0 %v3716, 69
      %v3726 = vpop.permute.xlu0 %3725
      %3727 = vrot.lane.b32.xlu0 %v3717, 69
      %v3728 = vpop.permute.xlu0 %3727
      %3729 = vrot.lane.b32.xlu0 %v3718, 69
      %v3730 = vpop.permute.xlu0 %3729
      %v3731 = vsel %vm488, %v3724, %v3726
      %v3732 = vsel %vm488, %v3726, %v3728
      %v3733 = vsel %vm488, %v3728, %v3730
      %3739 = vst.msk [vmem:[#allocation2] sm:$0xff] %vm2167, %v3724
      %3740 = vst [vmem:[#allocation2 + $0x8] sm:$0xff] %v3731
      %3741 = vst [vmem:[#allocation2 + $0x10] sm:$0xff] %v3732
      %3742 = vst [vmem:[#allocation2 + $0x18] sm:$0xff] %v3733
      %3743 = vst.msk [vmem:[#allocation2 + $0x20] sm:$0xff] %vm2172, %v3730
      %v3744 = vld [vmem:[#allocation2] sm:$0xff]
      %v3745 = vld [vmem:[#allocation2 + $0x8] sm:$0xff]
      %v3746 = vld [vmem:[#allocation2 + $0x10] sm:$0xff]
      %v3747 = vld [vmem:[#allocation2 + $0x18] sm:$0xff]
      %v3748 = vld [vmem:[%s6] sm:$0xff]
      %s3749 = scalar_lea.vmem %s6, 8
      %v3750 = vld [vmem:[%s3749] sm:$0xff]
      %3755 = vrot.lane.b32.xlu0 %v3744, 103
      %v3756 = vpop.permute.xlu0 %3755
      %3757 = vrot.lane.b32.xlu0 %v3745, 103
      %v3758 = vpop.permute.xlu0 %3757
      %3759 = vrot.lane.b32.xlu0 %v3746, 103
      %v3760 = vpop.permute.xlu0 %3759
      %3761 = vrot.lane.b32.xlu0 %v3747, 103
      %v3762 = vpop.permute.xlu0 %3761
      %vm3763 = vcmask 842752
      %v3764 = vsel %vm3763, %v3756, %v3758
      %v3765 = vsel %vm3763, %v3758, %v3760
      %v3766 = vsel %vm3763, %v3760, %v3762
      %v3772 = vsel %vm2205, %v3750, 0
      %3774 = vmatprep.subr.mxu0 %v3765
      %3775 = vmatpush1.msra.mxu0 %v3764
      %3776 = vmatprep.subr.mxu0 0.0
      %3777 = vmatpush1.msra.mxu0 0.0
      %3778 = vmatprep.subr.mxu0 0.0
      %3779 = vmatpush1.msra.mxu0 0.0
      %3780 = vmatprep.subr.mxu0 0.0
      %3781 = vmatpush1.msra.mxu0 0.0
      %3782 = vmatprep.subr.mxu0 0.0
      %3783 = vmatpush1.msra.mxu0 0.0
      %3784 = vmatprep.subr.mxu0 0.0
      %3785 = vmatpush1.msra.mxu0 0.0
      %3786 = vmatprep.subr.mxu0 0.0
      %3787 = vmatpush1.msra.mxu0 0.0
      %3788 = vmatprep.subr.mxu0 0.0
      %3789 = vmatpush1.msra.mxu0 0.0
      %3790 = vmatprep.subr.mxu0 0.0
      %3791 = vmatpush1.msra.mxu0 0.0
      %3792 = vmatprep.subr.mxu0 0.0
      %3793 = vmatpush1.msra.mxu0 0.0
      %3794 = vmatprep.subr.mxu0 0.0
      %3795 = vmatpush1.msra.mxu0 0.0
      %3796 = vmatprep.subr.mxu0 0.0
      %3797 = vmatpush1.msra.mxu0 0.0
      %3798 = vmatprep.subr.mxu0 0.0
      %3799 = vmatpush1.msra.mxu0 0.0
      %3800 = vmatprep.subr.mxu0 0.0
      %3801 = vmatpush1.msra.mxu0 0.0
      %3802 = vmatprep.subr.mxu0 0.0
      %3803 = vmatpush1.msra.mxu0 0.0
      %3804 = vmatprep.subr.mxu0 0.0
      %3805 = vmatpush1.msra.mxu0 0.0
      %3806 = vmatprep.subr.mxu0 0.0
      %3807 = vmatpush1.msra.mxu0 0.0
      %3808 = vmatprep.subr.mxu0 0.0
      %3809 = vmatpush1.msra.mxu0 0.0
      %3810 = vmatprep.subr.mxu0 0.0
      %3811 = vmatpush1.msra.mxu0 0.0
      %3812 = vmatprep.subr.mxu0 0.0
      %3813 = vmatpush1.msra.mxu0 0.0
      %3814 = vmatprep.subr.mxu0 0.0
      %3815 = vmatpush1.msra.mxu0 0.0
      %3816 = vmatprep.subr.mxu0 0.0
      %3817 = vmatpush1.msra.mxu0 0.0
      %3818 = vmatprep.subr.mxu0 0.0
      %3819 = vmatpush1.msra.mxu0 0.0
      %3820 = vmatprep.subr.mxu0 0.0
      %3821 = vmatpush1.msra.mxu0 0.0
      %3822 = vmatprep.subr.mxu0 0.0
      %3823 = vmatpush1.msra.mxu0 0.0
      %3824 = vmatprep.subr.mxu0 0.0
      %3825 = vmatpush1.msra.mxu0 0.0
      %3826 = vmatprep.subr.mxu0 0.0
      %3827 = vmatpush1.msra.mxu0 0.0
      %3828 = vmatprep.subr.mxu0 0.0
      %3829 = vmatpush1.msra.mxu0 0.0
      %3830 = vmatprep.subr.mxu0 0.0
      %3831 = vmatpush1.msra.mxu0 0.0
      %3832 = vmatprep.subr.mxu0 0.0
      %3833 = vmatpush1.msra.mxu0 0.0
      %3834 = vmatprep.subr.mxu0 0.0
      %3835 = vmatpush1.msra.mxu0 0.0
      %3836 = vmatprep.subr.mxu0 0.0
      %3837 = vmatpush1.msra.mxu0 0.0
      %3838 = vmatprep.mubr.f32.mxu0 0.0
      %3839 = vmatmul.mubr.f32.gmra.mrb[0].mxu0 %v3772
      %v3840 = vpop.f32.mrb[0].mxu0
      %v3841 = vadd.f32 0.0, %v3840
      %v3842 = vpop.f32.mrb[0].mxu0
      %v3843 = vadd.f32 0.0, %v3842
      %3844 = vdwg.mxu0
      %3845 = vmatprep.subr.mxu0 %v3762
      %3846 = vmatpush1.msra.mxu0 %v3766
      %3847 = vmatprep.subr.mxu0 0.0
      %3848 = vmatpush1.msra.mxu0 0.0
      %3849 = vmatprep.subr.mxu0 0.0
      %3850 = vmatpush1.msra.mxu0 0.0
      %3851 = vmatprep.subr.mxu0 0.0
      %3852 = vmatpush1.msra.mxu0 0.0
      %3853 = vmatprep.subr.mxu0 0.0
      %3854 = vmatpush1.msra.mxu0 0.0
      %3855 = vmatprep.subr.mxu0 0.0
      %3856 = vmatpush1.msra.mxu0 0.0
      %3857 = vmatprep.subr.mxu0 0.0
      %3858 = vmatpush1.msra.mxu0 0.0
      %3859 = vmatprep.subr.mxu0 0.0
      %3860 = vmatpush1.msra.mxu0 0.0
      %3861 = vmatprep.subr.mxu0 0.0
      %3862 = vmatpush1.msra.mxu0 0.0
      %3863 = vmatprep.subr.mxu0 0.0
      %3864 = vmatpush1.msra.mxu0 0.0
      %3865 = vmatprep.subr.mxu0 0.0
      %3866 = vmatpush1.msra.mxu0 0.0
      %3867 = vmatprep.subr.mxu0 0.0
      %3868 = vmatpush1.msra.mxu0 0.0
      %3869 = vmatprep.subr.mxu0 0.0
      %3870 = vmatpush1.msra.mxu0 0.0
      %3871 = vmatprep.subr.mxu0 0.0
      %3872 = vmatpush1.msra.mxu0 0.0
      %3873 = vmatprep.subr.mxu0 0.0
      %3874 = vmatpush1.msra.mxu0 0.0
      %3875 = vmatprep.subr.mxu0 0.0
      %3876 = vmatpush1.msra.mxu0 0.0
      %3877 = vmatprep.subr.mxu0 0.0
      %3878 = vmatpush1.msra.mxu0 0.0
      %3879 = vmatprep.subr.mxu0 0.0
      %3880 = vmatpush1.msra.mxu0 0.0
      %3881 = vmatprep.subr.mxu0 0.0
      %3882 = vmatpush1.msra.mxu0 0.0
      %3883 = vmatprep.subr.mxu0 0.0
      %3884 = vmatpush1.msra.mxu0 0.0
      %3885 = vmatprep.subr.mxu0 0.0
      %3886 = vmatpush1.msra.mxu0 0.0
      %3887 = vmatprep.subr.mxu0 0.0
      %3888 = vmatpush1.msra.mxu0 0.0
      %3889 = vmatprep.subr.mxu0 0.0
      %3890 = vmatpush1.msra.mxu0 0.0
      %3891 = vmatprep.subr.mxu0 0.0
      %3892 = vmatpush1.msra.mxu0 0.0
      %3893 = vmatprep.subr.mxu0 0.0
      %3894 = vmatpush1.msra.mxu0 0.0
      %3895 = vmatprep.subr.mxu0 0.0
      %3896 = vmatpush1.msra.mxu0 0.0
      %3897 = vmatprep.subr.mxu0 0.0
      %3898 = vmatpush1.msra.mxu0 0.0
      %3899 = vmatprep.subr.mxu0 0.0
      %3900 = vmatpush1.msra.mxu0 0.0
      %3901 = vmatprep.subr.mxu0 0.0
      %3902 = vmatpush1.msra.mxu0 0.0
      %3903 = vmatprep.subr.mxu0 0.0
      %3904 = vmatpush1.msra.mxu0 0.0
      %3905 = vmatprep.subr.mxu0 0.0
      %3906 = vmatpush1.msra.mxu0 0.0
      %3907 = vmatprep.subr.mxu0 0.0
      %3908 = vmatpush1.msra.mxu0 0.0
      %3909 = vmatprep.mubr.f32.mxu0 0.0
      %3910 = vmatmul.mubr.f32.gmra.mrb[0].mxu0 %v3772
      %v3911 = vpop.f32.mrb[0].mxu0
      %v3912 = vadd.f32 0.0, %v3911
      %v3913 = vpop.f32.mrb[0].mxu0
      %v3914 = vadd.f32 0.0, %v3913
      %3915 = vdwg.mxu0
      %3916 = vrot.lane.b32.xlu0 %v3744, 105
      %v3917 = vpop.permute.xlu0 %3916
      %3918 = vrot.lane.b32.xlu0 %v3745, 105
      %v3919 = vpop.permute.xlu0 %3918
      %3920 = vrot.lane.b32.xlu0 %v3746, 105
      %v3921 = vpop.permute.xlu0 %3920
      %3922 = vrot.lane.b32.xlu0 %v3747, 105
      %v3923 = vpop.permute.xlu0 %3922
      %vm3924 = vcmask 859136
      %v3925 = vsel %vm3924, %v3917, %v3919
      %v3926 = vsel %vm3924, %v3919, %v3921
      %v3927 = vsel %vm3924, %v3921, %v3923
      %v3933 = vsel %vm2205, %v3748, 0
      %3935 = vmatprep.subr.mxu0 %v3926
      %3936 = vmatpush1.msra.mxu0 %v3925
      %3937 = vmatprep.subr.mxu0 0.0
      %3938 = vmatpush1.msra.mxu0 0.0
      %3939 = vmatprep.subr.mxu0 0.0
      %3940 = vmatpush1.msra.mxu0 0.0
      %3941 = vmatprep.subr.mxu0 0.0
      %3942 = vmatpush1.msra.mxu0 0.0
      %3943 = vmatprep.subr.mxu0 0.0
      %3944 = vmatpush1.msra.mxu0 0.0
      %3945 = vmatprep.subr.mxu0 0.0
      %3946 = vmatpush1.msra.mxu0 0.0
      %3947 = vmatprep.subr.mxu0 0.0
      %3948 = vmatpush1.msra.mxu0 0.0
      %3949 = vmatprep.subr.mxu0 0.0
      %3950 = vmatpush1.msra.mxu0 0.0
      %3951 = vmatprep.subr.mxu0 0.0
      %3952 = vmatpush1.msra.mxu0 0.0
      %3953 = vmatprep.subr.mxu0 0.0
      %3954 = vmatpush1.msra.mxu0 0.0
      %3955 = vmatprep.subr.mxu0 0.0
      %3956 = vmatpush1.msra.mxu0 0.0
      %3957 = vmatprep.subr.mxu0 0.0
      %3958 = vmatpush1.msra.mxu0 0.0
      %3959 = vmatprep.subr.mxu0 0.0
      %3960 = vmatpush1.msra.mxu0 0.0
      %3961 = vmatprep.subr.mxu0 0.0
      %3962 = vmatpush1.msra.mxu0 0.0
      %3963 = vmatprep.subr.mxu0 0.0
      %3964 = vmatpush1.msra.mxu0 0.0
      %3965 = vmatprep.subr.mxu0 0.0
      %3966 = vmatpush1.msra.mxu0 0.0
      %3967 = vmatprep.subr.mxu0 0.0
      %3968 = vmatpush1.msra.mxu0 0.0
      %3969 = vmatprep.subr.mxu0 0.0
      %3970 = vmatpush1.msra.mxu0 0.0
      %3971 = vmatprep.subr.mxu0 0.0
      %3972 = vmatpush1.msra.mxu0 0.0
      %3973 = vmatprep.subr.mxu0 0.0
      %3974 = vmatpush1.msra.mxu0 0.0
      %3975 = vmatprep.subr.mxu0 0.0
      %3976 = vmatpush1.msra.mxu0 0.0
      %3977 = vmatprep.subr.mxu0 0.0
      %3978 = vmatpush1.msra.mxu0 0.0
      %3979 = vmatprep.subr.mxu0 0.0
      %3980 = vmatpush1.msra.mxu0 0.0
      %3981 = vmatprep.subr.mxu0 0.0
      %3982 = vmatpush1.msra.mxu0 0.0
      %3983 = vmatprep.subr.mxu0 0.0
      %3984 = vmatpush1.msra.mxu0 0.0
      %3985 = vmatprep.subr.mxu0 0.0
      %3986 = vmatpush1.msra.mxu0 0.0
      %3987 = vmatprep.subr.mxu0 0.0
      %3988 = vmatpush1.msra.mxu0 0.0
      %3989 = vmatprep.subr.mxu0 0.0
      %3990 = vmatpush1.msra.mxu0 0.0
      %3991 = vmatprep.subr.mxu0 0.0
      %3992 = vmatpush1.msra.mxu0 0.0
      %3993 = vmatprep.subr.mxu0 0.0
      %3994 = vmatpush1.msra.mxu0 0.0
      %3995 = vmatprep.subr.mxu0 0.0
      %3996 = vmatpush1.msra.mxu0 0.0
      %3997 = vmatprep.subr.mxu0 0.0
      %3998 = vmatpush1.msra.mxu0 0.0
      %3999 = vmatprep.mubr.f32.mxu0 0.0
      %4000 = vmatmul.mubr.f32.gmra.mrb[0].mxu0 %v3933
      %v4001 = vpop.f32.mrb[0].mxu0
      %v4002 = vadd.f32 %v3841, %v4001
      %v4003 = vpop.f32.mrb[0].mxu0
      %v4004 = vadd.f32 %v3843, %v4003
      %4005 = vdwg.mxu0
      %4006 = vmatprep.subr.mxu0 %v3923
      %4007 = vmatpush1.msra.mxu0 %v3927
      %4008 = vmatprep.subr.mxu0 0.0
      %4009 = vmatpush1.msra.mxu0 0.0
      %4010 = vmatprep.subr.mxu0 0.0
      %4011 = vmatpush1.msra.mxu0 0.0
      %4012 = vmatprep.subr.mxu0 0.0
      %4013 = vmatpush1.msra.mxu0 0.0
      %4014 = vmatprep.subr.mxu0 0.0
      %4015 = vmatpush1.msra.mxu0 0.0
      %4016 = vmatprep.subr.mxu0 0.0
      %4017 = vmatpush1.msra.mxu0 0.0
      %4018 = vmatprep.subr.mxu0 0.0
      %4019 = vmatpush1.msra.mxu0 0.0
      %4020 = vmatprep.subr.mxu0 0.0
      %4021 = vmatpush1.msra.mxu0 0.0
      %4022 = vmatprep.subr.mxu0 0.0
      %4023 = vmatpush1.msra.mxu0 0.0
      %4024 = vmatprep.subr.mxu0 0.0
      %4025 = vmatpush1.msra.mxu0 0.0
      %4026 = vmatprep.subr.mxu0 0.0
      %4027 = vmatpush1.msra.mxu0 0.0
      %4028 = vmatprep.subr.mxu0 0.0
      %4029 = vmatpush1.msra.mxu0 0.0
      %4030 = vmatprep.subr.mxu0 0.0
      %4031 = vmatpush1.msra.mxu0 0.0
      %4032 = vmatprep.subr.mxu0 0.0
      %4033 = vmatpush1.msra.mxu0 0.0
      %4034 = vmatprep.subr.mxu0 0.0
      %4035 = vmatpush1.msra.mxu0 0.0
      %4036 = vmatprep.subr.mxu0 0.0
      %4037 = vmatpush1.msra.mxu0 0.0
      %4038 = vmatprep.subr.mxu0 0.0
      %4039 = vmatpush1.msra.mxu0 0.0
      %4040 = vmatprep.subr.mxu0 0.0
      %4041 = vmatpush1.msra.mxu0 0.0
      %4042 = vmatprep.subr.mxu0 0.0
      %4043 = vmatpush1.msra.mxu0 0.0
      %4044 = vmatprep.subr.mxu0 0.0
      %4045 = vmatpush1.msra.mxu0 0.0
      %4046 = vmatprep.subr.mxu0 0.0
      %4047 = vmatpush1.msra.mxu0 0.0
      %4048 = vmatprep.subr.mxu0 0.0
      %4049 = vmatpush1.msra.mxu0 0.0
      %4050 = vmatprep.subr.mxu0 0.0
      %4051 = vmatpush1.msra.mxu0 0.0
      %4052 = vmatprep.subr.mxu0 0.0
      %4053 = vmatpush1.msra.mxu0 0.0
      %4054 = vmatprep.subr.mxu0 0.0
      %4055 = vmatpush1.msra.mxu0 0.0
      %4056 = vmatprep.subr.mxu0 0.0
      %4057 = vmatpush1.msra.mxu0 0.0
      %4058 = vmatprep.subr.mxu0 0.0
      %4059 = vmatpush1.msra.mxu0 0.0
      %4060 = vmatprep.subr.mxu0 0.0
      %4061 = vmatpush1.msra.mxu0 0.0
      %4062 = vmatprep.subr.mxu0 0.0
      %4063 = vmatpush1.msra.mxu0 0.0
      %4064 = vmatprep.subr.mxu0 0.0
      %4065 = vmatpush1.msra.mxu0 0.0
      %4066 = vmatprep.subr.mxu0 0.0
      %4067 = vmatpush1.msra.mxu0 0.0
      %4068 = vmatprep.subr.mxu0 0.0
      %4069 = vmatpush1.msra.mxu0 0.0
      %4070 = vmatprep.mubr.f32.mxu0 0.0
      %4071 = vmatmul.mubr.f32.gmra.mrb[0].mxu0 %v3933
      %v4072 = vpop.f32.mrb[0].mxu0
      %v4073 = vadd.f32 %v3912, %v4072
      %v4074 = vpop.f32.mrb[0].mxu0
      %v4075 = vadd.f32 %v3914, %v4074
      %4076 = vdwg.mxu0
      %s4077 = scalar_lea.vmem %s6, 16
      %v4078 = vld [vmem:[%s4077] sm:$0xff]
      %4079 = vrot.lane.b32.xlu0 %v3744, 101
      %v4080 = vpop.permute.xlu0 %4079
      %4081 = vrot.lane.b32.xlu0 %v3745, 101
      %v4082 = vpop.permute.xlu0 %4081
      %4083 = vrot.lane.b32.xlu0 %v3746, 101
      %v4084 = vpop.permute.xlu0 %4083
      %4085 = vrot.lane.b32.xlu0 %v3747, 101
      %v4086 = vpop.permute.xlu0 %4085
      %vm4087 = vcmask 826368
      %v4088 = vsel %vm4087, %v4080, %v4082
      %v4089 = vsel %vm4087, %v4082, %v4084
      %v4090 = vsel %vm4087, %v4084, %v4086
      %v4096 = vsel %vm2205, %v4078, 0
      %4098 = vmatprep.subr.mxu0 %v4089
      %4099 = vmatpush1.msra.mxu0 %v4088
      %4100 = vmatprep.subr.mxu0 0.0
      %4101 = vmatpush1.msra.mxu0 0.0
      %4102 = vmatprep.subr.mxu0 0.0
      %4103 = vmatpush1.msra.mxu0 0.0
      %4104 = vmatprep.subr.mxu0 0.0
      %4105 = vmatpush1.msra.mxu0 0.0
      %4106 = vmatprep.subr.mxu0 0.0
      %4107 = vmatpush1.msra.mxu0 0.0
      %4108 = vmatprep.subr.mxu0 0.0
      %4109 = vmatpush1.msra.mxu0 0.0
      %4110 = vmatprep.subr.mxu0 0.0
      %4111 = vmatpush1.msra.mxu0 0.0
      %4112 = vmatprep.subr.mxu0 0.0
      %4113 = vmatpush1.msra.mxu0 0.0
      %4114 = vmatprep.subr.mxu0 0.0
      %4115 = vmatpush1.msra.mxu0 0.0
      %4116 = vmatprep.subr.mxu0 0.0
      %4117 = vmatpush1.msra.mxu0 0.0
      %4118 = vmatprep.subr.mxu0 0.0
      %4119 = vmatpush1.msra.mxu0 0.0
      %4120 = vmatprep.subr.mxu0 0.0
      %4121 = vmatpush1.msra.mxu0 0.0
      %4122 = vmatprep.subr.mxu0 0.0
      %4123 = vmatpush1.msra.mxu0 0.0
      %4124 = vmatprep.subr.mxu0 0.0
      %4125 = vmatpush1.msra.mxu0 0.0
      %4126 = vmatprep.subr.mxu0 0.0
      %4127 = vmatpush1.msra.mxu0 0.0
      %4128 = vmatprep.subr.mxu0 0.0
      %4129 = vmatpush1.msra.mxu0 0.0
      %4130 = vmatprep.subr.mxu0 0.0
      %4131 = vmatpush1.msra.mxu0 0.0
      %4132 = vmatprep.subr.mxu0 0.0
      %4133 = vmatpush1.msra.mxu0 0.0
      %4134 = vmatprep.subr.mxu0 0.0
      %4135 = vmatpush1.msra.mxu0 0.0
      %4136 = vmatprep.subr.mxu0 0.0
      %4137 = vmatpush1.msra.mxu0 0.0
      %4138 = vmatprep.subr.mxu0 0.0
      %4139 = vmatpush1.msra.mxu0 0.0
      %4140 = vmatprep.subr.mxu0 0.0
      %4141 = vmatpush1.msra.mxu0 0.0
      %4142 = vmatprep.subr.mxu0 0.0
      %4143 = vmatpush1.msra.mxu0 0.0
      %4144 = vmatprep.subr.mxu0 0.0
      %4145 = vmatpush1.msra.mxu0 0.0
      %4146 = vmatprep.subr.mxu0 0.0
      %4147 = vmatpush1.msra.mxu0 0.0
      %4148 = vmatprep.subr.mxu0 0.0
      %4149 = vmatpush1.msra.mxu0 0.0
      %4150 = vmatprep.subr.mxu0 0.0
      %4151 = vmatpush1.msra.mxu0 0.0
      %4152 = vmatprep.subr.mxu0 0.0
      %4153 = vmatpush1.msra.mxu0 0.0
      %4154 = vmatprep.subr.mxu0 0.0
      %4155 = vmatpush1.msra.mxu0 0.0
      %4156 = vmatprep.subr.mxu0 0.0
      %4157 = vmatpush1.msra.mxu0 0.0
      %4158 = vmatprep.subr.mxu0 0.0
      %4159 = vmatpush1.msra.mxu0 0.0
      %4160 = vmatprep.subr.mxu0 0.0
      %4161 = vmatpush1.msra.mxu0 0.0
      %4162 = vmatprep.mubr.f32.mxu0 0.0
      %4163 = vmatmul.mubr.f32.gmra.mrb[0].mxu0 %v4096
      %v4164 = vpop.f32.mrb[0].mxu0
      %v4165 = vadd.f32 0.0, %v4164
      %v4166 = vpop.f32.mrb[0].mxu0
      %v4167 = vadd.f32 0.0, %v4166
      %4168 = vdwg.mxu0
      %4169 = vmatprep.subr.mxu0 %v4086
      %4170 = vmatpush1.msra.mxu0 %v4090
      %4171 = vmatprep.subr.mxu0 0.0
      %4172 = vmatpush1.msra.mxu0 0.0
      %4173 = vmatprep.subr.mxu0 0.0
      %4174 = vmatpush1.msra.mxu0 0.0
      %4175 = vmatprep.subr.mxu0 0.0
      %4176 = vmatpush1.msra.mxu0 0.0
      %4177 = vmatprep.subr.mxu0 0.0
      %4178 = vmatpush1.msra.mxu0 0.0
      %4179 = vmatprep.subr.mxu0 0.0
      %4180 = vmatpush1.msra.mxu0 0.0
      %4181 = vmatprep.subr.mxu0 0.0
      %4182 = vmatpush1.msra.mxu0 0.0
      %4183 = vmatprep.subr.mxu0 0.0
      %4184 = vmatpush1.msra.mxu0 0.0
      %4185 = vmatprep.subr.mxu0 0.0
      %4186 = vmatpush1.msra.mxu0 0.0
      %4187 = vmatprep.subr.mxu0 0.0
      %4188 = vmatpush1.msra.mxu0 0.0
      %4189 = vmatprep.subr.mxu0 0.0
      %4190 = vmatpush1.msra.mxu0 0.0
      %4191 = vmatprep.subr.mxu0 0.0
      %4192 = vmatpush1.msra.mxu0 0.0
      %4193 = vmatprep.subr.mxu0 0.0
      %4194 = vmatpush1.msra.mxu0 0.0
      %4195 = vmatprep.subr.mxu0 0.0
      %4196 = vmatpush1.msra.mxu0 0.0
      %4197 = vmatprep.subr.mxu0 0.0
      %4198 = vmatpush1.msra.mxu0 0.0
      %4199 = vmatprep.subr.mxu0 0.0
      %4200 = vmatpush1.msra.mxu0 0.0
      %4201 = vmatprep.subr.mxu0 0.0
      %4202 = vmatpush1.msra.mxu0 0.0
      %4203 = vmatprep.subr.mxu0 0.0
      %4204 = vmatpush1.msra.mxu0 0.0
      %4205 = vmatprep.subr.mxu0 0.0
      %4206 = vmatpush1.msra.mxu0 0.0
      %4207 = vmatprep.subr.mxu0 0.0
      %4208 = vmatpush1.msra.mxu0 0.0
      %4209 = vmatprep.subr.mxu0 0.0
      %4210 = vmatpush1.msra.mxu0 0.0
      %4211 = vmatprep.subr.mxu0 0.0
      %4212 = vmatpush1.msra.mxu0 0.0
      %4213 = vmatprep.subr.mxu0 0.0
      %4214 = vmatpush1.msra.mxu0 0.0
      %4215 = vmatprep.subr.mxu0 0.0
      %4216 = vmatpush1.msra.mxu0 0.0
      %4217 = vmatprep.subr.mxu0 0.0
      %4218 = vmatpush1.msra.mxu0 0.0
      %4219 = vmatprep.subr.mxu0 0.0
      %4220 = vmatpush1.msra.mxu0 0.0
      %4221 = vmatprep.subr.mxu0 0.0
      %4222 = vmatpush1.msra.mxu0 0.0
      %4223 = vmatprep.subr.mxu0 0.0
      %4224 = vmatpush1.msra.mxu0 0.0
      %4225 = vmatprep.subr.mxu0 0.0
      %4226 = vmatpush1.msra.mxu0 0.0
      %4227 = vmatprep.subr.mxu0 0.0
      %4228 = vmatpush1.msra.mxu0 0.0
      %4229 = vmatprep.subr.mxu0 0.0
      %4230 = vmatpush1.msra.mxu0 0.0
      %4231 = vmatprep.subr.mxu0 0.0
      %4232 = vmatpush1.msra.mxu0 0.0
      %4233 = vmatprep.mubr.f32.mxu0 0.0
      %4234 = vmatmul.mubr.f32.gmra.mrb[0].mxu0 %v4096
      %v4235 = vpop.f32.mrb[0].mxu0
      %v4236 = vadd.f32 0.0, %v4235
      %v4237 = vpop.f32.mrb[0].mxu0
      %v4238 = vadd.f32 0.0, %v4237
      %4239 = vdwg.mxu0
      %v4240 = vadd.f32 %v4002, %v4165
      %v4241 = vadd.f32 %v4004, %v4167
      %v4242 = vadd.f32 %v4073, %v4236
      %v4243 = vadd.f32 %v4075, %v4238
      %v4244 = vld [vmem:[#allocation2] sm:$0xff]
      %v4245 = vld [vmem:[#allocation2 + $0x8] sm:$0xff]
      %v4246 = vld [vmem:[#allocation2 + $0x10] sm:$0xff]
      %v4247 = vld [vmem:[#allocation2 + $0x18] sm:$0xff]
      %v4248 = vld [vmem:[#allocation2 + $0x20] sm:$0xff]
      %s4249 = scalar_lea.vmem %s6, 24
      %v4250 = vld [vmem:[%s4249] sm:$0xff]
      %4256 = vrot.lane.b32.xlu0 %v4244, 61
      %v4257 = vpop.permute.xlu0 %4256
      %4258 = vrot.lane.b32.xlu0 %v4245, 61
      %v4259 = vpop.permute.xlu0 %4258
      %4260 = vrot.lane.b32.xlu0 %v4246, 61
      %v4261 = vpop.permute.xlu0 %4260
      %4262 = vrot.lane.b32.xlu0 %v4247, 61
      %v4263 = vpop.permute.xlu0 %4262
      %4264 = vrot.lane.b32.xlu0 %v4248, 61
      %v4265 = vpop.permute.xlu0 %4264
      %vm4266 = vcmask 498688
      %v4267 = vsel %vm4266, %v4257, %v4259
      %v4268 = vsel %vm4266, %v4259, %v4261
      %v4269 = vsel %vm4266, %v4261, %v4263
      %v4270 = vsel %vm4266, %v4263, %v4265
      %v4276 = vsel %vm2205, %v4250, 0
      %4278 = vmatprep.subr.mxu0 %v4268
      %4279 = vmatpush1.msra.mxu0 %v4267
      %4280 = vmatprep.subr.mxu0 0.0
      %4281 = vmatpush1.msra.mxu0 0.0
      %4282 = vmatprep.subr.mxu0 0.0
      %4283 = vmatpush1.msra.mxu0 0.0
      %4284 = vmatprep.subr.mxu0 0.0
      %4285 = vmatpush1.msra.mxu0 0.0
      %4286 = vmatprep.subr.mxu0 0.0
      %4287 = vmatpush1.msra.mxu0 0.0
      %4288 = vmatprep.subr.mxu0 0.0
      %4289 = vmatpush1.msra.mxu0 0.0
      %4290 = vmatprep.subr.mxu0 0.0
      %4291 = vmatpush1.msra.mxu0 0.0
      %4292 = vmatprep.subr.mxu0 0.0
      %4293 = vmatpush1.msra.mxu0 0.0
      %4294 = vmatprep.subr.mxu0 0.0
      %4295 = vmatpush1.msra.mxu0 0.0
      %4296 = vmatprep.subr.mxu0 0.0
      %4297 = vmatpush1.msra.mxu0 0.0
      %4298 = vmatprep.subr.mxu0 0.0
      %4299 = vmatpush1.msra.mxu0 0.0
      %4300 = vmatprep.subr.mxu0 0.0
      %4301 = vmatpush1.msra.mxu0 0.0
      %4302 = vmatprep.subr.mxu0 0.0
      %4303 = vmatpush1.msra.mxu0 0.0
      %4304 = vmatprep.subr.mxu0 0.0
      %4305 = vmatpush1.msra.mxu0 0.0
      %4306 = vmatprep.subr.mxu0 0.0
      %4307 = vmatpush1.msra.mxu0 0.0
      %4308 = vmatprep.subr.mxu0 0.0
      %4309 = vmatpush1.msra.mxu0 0.0
      %4310 = vmatprep.subr.mxu0 0.0
      %4311 = vmatpush1.msra.mxu0 0.0
      %4312 = vmatprep.subr.mxu0 0.0
      %4313 = vmatpush1.msra.mxu0 0.0
      %4314 = vmatprep.subr.mxu0 0.0
      %4315 = vmatpush1.msra.mxu0 0.0
      %4316 = vmatprep.subr.mxu0 0.0
      %4317 = vmatpush1.msra.mxu0 0.0
      %4318 = vmatprep.subr.mxu0 0.0
      %4319 = vmatpush1.msra.mxu0 0.0
      %4320 = vmatprep.subr.mxu0 0.0
      %4321 = vmatpush1.msra.mxu0 0.0
      %4322 = vmatprep.subr.mxu0 0.0
      %4323 = vmatpush1.msra.mxu0 0.0
      %4324 = vmatprep.subr.mxu0 0.0
      %4325 = vmatpush1.msra.mxu0 0.0
      %4326 = vmatprep.subr.mxu0 0.0
      %4327 = vmatpush1.msra.mxu0 0.0
      %4328 = vmatprep.subr.mxu0 0.0
      %4329 = vmatpush1.msra.mxu0 0.0
      %4330 = vmatprep.subr.mxu0 0.0
      %4331 = vmatpush1.msra.mxu0 0.0
      %4332 = vmatprep.subr.mxu0 0.0
      %4333 = vmatpush1.msra.mxu0 0.0
      %4334 = vmatprep.subr.mxu0 0.0
      %4335 = vmatpush1.msra.mxu0 0.0
      %4336 = vmatprep.subr.mxu0 0.0
      %4337 = vmatpush1.msra.mxu0 0.0
      %4338 = vmatprep.subr.mxu0 0.0
      %4339 = vmatpush1.msra.mxu0 0.0
      %4340 = vmatprep.subr.mxu0 0.0
      %4341 = vmatpush1.msra.mxu0 0.0
      %4342 = vmatprep.mubr.f32.mxu0 0.0
      %4343 = vmatmul.mubr.f32.gmra.mrb[0].mxu0 %v4276
      %v4344 = vpop.f32.mrb[0].mxu0
      %v4345 = vadd.f32 0.0, %v4344
      %v4346 = vpop.f32.mrb[0].mxu0
      %v4347 = vadd.f32 0.0, %v4346
      %4348 = vdwg.mxu0
      %4349 = vmatprep.subr.mxu0 %v4270
      %4350 = vmatpush1.msra.mxu0 %v4269
      %4351 = vmatprep.subr.mxu0 0.0
      %4352 = vmatpush1.msra.mxu0 0.0
      %4353 = vmatprep.subr.mxu0 0.0
      %4354 = vmatpush1.msra.mxu0 0.0
      %4355 = vmatprep.subr.mxu0 0.0
      %4356 = vmatpush1.msra.mxu0 0.0
      %4357 = vmatprep.subr.mxu0 0.0
      %4358 = vmatpush1.msra.mxu0 0.0
      %4359 = vmatprep.subr.mxu0 0.0
      %4360 = vmatpush1.msra.mxu0 0.0
      %4361 = vmatprep.subr.mxu0 0.0
      %4362 = vmatpush1.msra.mxu0 0.0
      %4363 = vmatprep.subr.mxu0 0.0
      %4364 = vmatpush1.msra.mxu0 0.0
      %4365 = vmatprep.subr.mxu0 0.0
      %4366 = vmatpush1.msra.mxu0 0.0
      %4367 = vmatprep.subr.mxu0 0.0
      %4368 = vmatpush1.msra.mxu0 0.0
      %4369 = vmatprep.subr.mxu0 0.0
      %4370 = vmatpush1.msra.mxu0 0.0
      %4371 = vmatprep.subr.mxu0 0.0
      %4372 = vmatpush1.msra.mxu0 0.0
      %4373 = vmatprep.subr.mxu0 0.0
      %4374 = vmatpush1.msra.mxu0 0.0
      %4375 = vmatprep.subr.mxu0 0.0
      %4376 = vmatpush1.msra.mxu0 0.0
      %4377 = vmatprep.subr.mxu0 0.0
      %4378 = vmatpush1.msra.mxu0 0.0
      %4379 = vmatprep.subr.mxu0 0.0
      %4380 = vmatpush1.msra.mxu0 0.0
      %4381 = vmatprep.subr.mxu0 0.0
      %4382 = vmatpush1.msra.mxu0 0.0
      %4383 = vmatprep.subr.mxu0 0.0
      %4384 = vmatpush1.msra.mxu0 0.0
      %4385 = vmatprep.subr.mxu0 0.0
      %4386 = vmatpush1.msra.mxu0 0.0
      %4387 = vmatprep.subr.mxu0 0.0
      %4388 = vmatpush1.msra.mxu0 0.0
      %4389 = vmatprep.subr.mxu0 0.0
      %4390 = vmatpush1.msra.mxu0 0.0
      %4391 = vmatprep.subr.mxu0 0.0
      %4392 = vmatpush1.msra.mxu0 0.0
      %4393 = vmatprep.subr.mxu0 0.0
      %4394 = vmatpush1.msra.mxu0 0.0
      %4395 = vmatprep.subr.mxu0 0.0
      %4396 = vmatpush1.msra.mxu0 0.0
      %4397 = vmatprep.subr.mxu0 0.0
      %4398 = vmatpush1.msra.mxu0 0.0
      %4399 = vmatprep.subr.mxu0 0.0
      %4400 = vmatpush1.msra.mxu0 0.0
      %4401 = vmatprep.subr.mxu0 0.0
      %4402 = vmatpush1.msra.mxu0 0.0
      %4403 = vmatprep.subr.mxu0 0.0
      %4404 = vmatpush1.msra.mxu0 0.0
      %4405 = vmatprep.subr.mxu0 0.0
      %4406 = vmatpush1.msra.mxu0 0.0
      %4407 = vmatprep.subr.mxu0 0.0
      %4408 = vmatpush1.msra.mxu0 0.0
      %4409 = vmatprep.subr.mxu0 0.0
      %4410 = vmatpush1.msra.mxu0 0.0
      %4411 = vmatprep.subr.mxu0 0.0
      %4412 = vmatpush1.msra.mxu0 0.0
      %4413 = vmatprep.mubr.f32.mxu0 0.0
      %4414 = vmatmul.mubr.f32.gmra.mrb[0].mxu0 %v4276
      %v4415 = vpop.f32.mrb[0].mxu0
      %v4416 = vadd.f32 0.0, %v4415
      %v4417 = vpop.f32.mrb[0].mxu0
      %v4418 = vadd.f32 0.0, %v4417
      %4419 = vdwg.mxu0
      %v4420 = vadd.f32 %v4240, %v4345
      %v4421 = vadd.f32 %v4241, %v4347
      %v4422 = vadd.f32 %v4242, %v4416
      %v4423 = vadd.f32 %v4243, %v4418
      %s4424 = scalar_lea.vmem %s6, 32
      %v4425 = vld [vmem:[%s4424] sm:$0xff]
      %4426 = vrot.lane.b32.xlu0 %v4244, 59
      %v4427 = vpop.permute.xlu0 %4426
      %4428 = vrot.lane.b32.xlu0 %v4245, 59
      %v4429 = vpop.permute.xlu0 %4428
      %4430 = vrot.lane.b32.xlu0 %v4246, 59
      %v4431 = vpop.permute.xlu0 %4430
      %4432 = vrot.lane.b32.xlu0 %v4247, 59
      %v4433 = vpop.permute.xlu0 %4432
      %4434 = vrot.lane.b32.xlu0 %v4248, 59
      %v4435 = vpop.permute.xlu0 %4434
      %v4436 = vsel %vm1246, %v4427, %v4429
      %v4437 = vsel %vm1246, %v4429, %v4431
      %v4438 = vsel %vm1246, %v4431, %v4433
      %v4439 = vsel %vm1246, %v4433, %v4435
      %v4445 = vsel %vm2205, %v4425, 0
      %4447 = vmatprep.subr.mxu0 %v4437
      %4448 = vmatpush1.msra.mxu0 %v4436
      %4449 = vmatprep.subr.mxu0 0.0
      %4450 = vmatpush1.msra.mxu0 0.0
      %4451 = vmatprep.subr.mxu0 0.0
      %4452 = vmatpush1.msra.mxu0 0.0
      %4453 = vmatprep.subr.mxu0 0.0
      %4454 = vmatpush1.msra.mxu0 0.0
      %4455 = vmatprep.subr.mxu0 0.0
      %4456 = vmatpush1.msra.mxu0 0.0
      %4457 = vmatprep.subr.mxu0 0.0
      %4458 = vmatpush1.msra.mxu0 0.0
      %4459 = vmatprep.subr.mxu0 0.0
      %4460 = vmatpush1.msra.mxu0 0.0
      %4461 = vmatprep.subr.mxu0 0.0
      %4462 = vmatpush1.msra.mxu0 0.0
      %4463 = vmatprep.subr.mxu0 0.0
      %4464 = vmatpush1.msra.mxu0 0.0
      %4465 = vmatprep.subr.mxu0 0.0
      %4466 = vmatpush1.msra.mxu0 0.0
      %4467 = vmatprep.subr.mxu0 0.0
      %4468 = vmatpush1.msra.mxu0 0.0
      %4469 = vmatprep.subr.mxu0 0.0
      %4470 = vmatpush1.msra.mxu0 0.0
      %4471 = vmatprep.subr.mxu0 0.0
      %4472 = vmatpush1.msra.mxu0 0.0
      %4473 = vmatprep.subr.mxu0 0.0
      %4474 = vmatpush1.msra.mxu0 0.0
      %4475 = vmatprep.subr.mxu0 0.0
      %4476 = vmatpush1.msra.mxu0 0.0
      %4477 = vmatprep.subr.mxu0 0.0
      %4478 = vmatpush1.msra.mxu0 0.0
      %4479 = vmatprep.subr.mxu0 0.0
      %4480 = vmatpush1.msra.mxu0 0.0
      %4481 = vmatprep.subr.mxu0 0.0
      %4482 = vmatpush1.msra.mxu0 0.0
      %4483 = vmatprep.subr.mxu0 0.0
      %4484 = vmatpush1.msra.mxu0 0.0
      %4485 = vmatprep.subr.mxu0 0.0
      %4486 = vmatpush1.msra.mxu0 0.0
      %4487 = vmatprep.subr.mxu0 0.0
      %4488 = vmatpush1.msra.mxu0 0.0
      %4489 = vmatprep.subr.mxu0 0.0
      %4490 = vmatpush1.msra.mxu0 0.0
      %4491 = vmatprep.subr.mxu0 0.0
      %4492 = vmatpush1.msra.mxu0 0.0
      %4493 = vmatprep.subr.mxu0 0.0
      %4494 = vmatpush1.msra.mxu0 0.0
      %4495 = vmatprep.subr.mxu0 0.0
      %4496 = vmatpush1.msra.mxu0 0.0
      %4497 = vmatprep.subr.mxu0 0.0
      %4498 = vmatpush1.msra.mxu0 0.0
      %4499 = vmatprep.subr.mxu0 0.0
      %4500 = vmatpush1.msra.mxu0 0.0
      %4501 = vmatprep.subr.mxu0 0.0
      %4502 = vmatpush1.msra.mxu0 0.0
      %4503 = vmatprep.subr.mxu0 0.0
      %4504 = vmatpush1.msra.mxu0 0.0
      %4505 = vmatprep.subr.mxu0 0.0
      %4506 = vmatpush1.msra.mxu0 0.0
      %4507 = vmatprep.subr.mxu0 0.0
      %4508 = vmatpush1.msra.mxu0 0.0
      %4509 = vmatprep.subr.mxu0 0.0
      %4510 = vmatpush1.msra.mxu0 0.0
      %4511 = vmatprep.mubr.f32.mxu0 0.0
      %4512 = vmatmul.mubr.f32.gmra.mrb[0].mxu0 %v4445
      %v4513 = vpop.f32.mrb[0].mxu0
      %v4514 = vadd.f32 0.0, %v4513
      %v4515 = vpop.f32.mrb[0].mxu0
      %v4516 = vadd.f32 0.0, %v4515
      %4517 = vdwg.mxu0
      %4518 = vmatprep.subr.mxu0 %v4439
      %4519 = vmatpush1.msra.mxu0 %v4438
      %4520 = vmatprep.subr.mxu0 0.0
      %4521 = vmatpush1.msra.mxu0 0.0
      %4522 = vmatprep.subr.mxu0 0.0
      %4523 = vmatpush1.msra.mxu0 0.0
      %4524 = vmatprep.subr.mxu0 0.0
      %4525 = vmatpush1.msra.mxu0 0.0
      %4526 = vmatprep.subr.mxu0 0.0
      %4527 = vmatpush1.msra.mxu0 0.0
      %4528 = vmatprep.subr.mxu0 0.0
      %4529 = vmatpush1.msra.mxu0 0.0
      %4530 = vmatprep.subr.mxu0 0.0
      %4531 = vmatpush1.msra.mxu0 0.0
      %4532 = vmatprep.subr.mxu0 0.0
      %4533 = vmatpush1.msra.mxu0 0.0
      %4534 = vmatprep.subr.mxu0 0.0
      %4535 = vmatpush1.msra.mxu0 0.0
      %4536 = vmatprep.subr.mxu0 0.0
      %4537 = vmatpush1.msra.mxu0 0.0
      %4538 = vmatprep.subr.mxu0 0.0
      %4539 = vmatpush1.msra.mxu0 0.0
      %4540 = vmatprep.subr.mxu0 0.0
      %4541 = vmatpush1.msra.mxu0 0.0
      %4542 = vmatprep.subr.mxu0 0.0
      %4543 = vmatpush1.msra.mxu0 0.0
      %4544 = vmatprep.subr.mxu0 0.0
      %4545 = vmatpush1.msra.mxu0 0.0
      %4546 = vmatprep.subr.mxu0 0.0
      %4547 = vmatpush1.msra.mxu0 0.0
      %4548 = vmatprep.subr.mxu0 0.0
      %4549 = vmatpush1.msra.mxu0 0.0
      %4550 = vmatprep.subr.mxu0 0.0
      %4551 = vmatpush1.msra.mxu0 0.0
      %4552 = vmatprep.subr.mxu0 0.0
      %4553 = vmatpush1.msra.mxu0 0.0
      %4554 = vmatprep.subr.mxu0 0.0
      %4555 = vmatpush1.msra.mxu0 0.0
      %4556 = vmatprep.subr.mxu0 0.0
      %4557 = vmatpush1.msra.mxu0 0.0
      %4558 = vmatprep.subr.mxu0 0.0
      %4559 = vmatpush1.msra.mxu0 0.0
      %4560 = vmatprep.subr.mxu0 0.0
      %4561 = vmatpush1.msra.mxu0 0.0
      %4562 = vmatprep.subr.mxu0 0.0
      %4563 = vmatpush1.msra.mxu0 0.0
      %4564 = vmatprep.subr.mxu0 0.0
      %4565 = vmatpush1.msra.mxu0 0.0
      %4566 = vmatprep.subr.mxu0 0.0
      %4567 = vmatpush1.msra.mxu0 0.0
      %4568 = vmatprep.subr.mxu0 0.0
      %4569 = vmatpush1.msra.mxu0 0.0
      %4570 = vmatprep.subr.mxu0 0.0
      %4571 = vmatpush1.msra.mxu0 0.0
      %4572 = vmatprep.subr.mxu0 0.0
      %4573 = vmatpush1.msra.mxu0 0.0
      %4574 = vmatprep.subr.mxu0 0.0
      %4575 = vmatpush1.msra.mxu0 0.0
      %4576 = vmatprep.subr.mxu0 0.0
      %4577 = vmatpush1.msra.mxu0 0.0
      %4578 = vmatprep.subr.mxu0 0.0
      %4579 = vmatpush1.msra.mxu0 0.0
      %4580 = vmatprep.subr.mxu0 0.0
      %4581 = vmatpush1.msra.mxu0 0.0
      %4582 = vmatprep.mubr.f32.mxu0 0.0
      %4583 = vmatmul.mubr.f32.gmra.mrb[0].mxu0 %v4445
      %v4584 = vpop.f32.mrb[0].mxu0
      %v4585 = vadd.f32 0.0, %v4584
      %v4586 = vpop.f32.mrb[0].mxu0
      %v4587 = vadd.f32 0.0, %v4586
      %4588 = vdwg.mxu0
      %v4589 = vadd.f32 %v4420, %v4514
      %v4590 = vadd.f32 %v4421, %v4516
      %v4591 = vadd.f32 %v4422, %v4585
      %v4592 = vadd.f32 %v4423, %v4587
      %s4593 = scalar_lea.vmem %s6, 40
      %v4594 = vld [vmem:[%s4593] sm:$0xff]
      %4595 = vrot.lane.b32.xlu0 %v4244, 57
      %v4596 = vpop.permute.xlu0 %4595
      %4597 = vrot.lane.b32.xlu0 %v4245, 57
      %v4598 = vpop.permute.xlu0 %4597
      %4599 = vrot.lane.b32.xlu0 %v4246, 57
      %v4600 = vpop.permute.xlu0 %4599
      %4601 = vrot.lane.b32.xlu0 %v4247, 57
      %v4602 = vpop.permute.xlu0 %4601
      %4603 = vrot.lane.b32.xlu0 %v4248, 57
      %v4604 = vpop.permute.xlu0 %4603
      %vm4605 = vcmask 465920
      %v4606 = vsel %vm4605, %v4596, %v4598
      %v4607 = vsel %vm4605, %v4598, %v4600
      %v4608 = vsel %vm4605, %v4600, %v4602
      %v4609 = vsel %vm4605, %v4602, %v4604
      %v4615 = vsel %vm2205, %v4594, 0
      %4617 = vmatprep.subr.mxu0 %v4607
      %4618 = vmatpush1.msra.mxu0 %v4606
      %4619 = vmatprep.subr.mxu0 0.0
      %4620 = vmatpush1.msra.mxu0 0.0
      %4621 = vmatprep.subr.mxu0 0.0
      %4622 = vmatpush1.msra.mxu0 0.0
      %4623 = vmatprep.subr.mxu0 0.0
      %4624 = vmatpush1.msra.mxu0 0.0
      %4625 = vmatprep.subr.mxu0 0.0
      %4626 = vmatpush1.msra.mxu0 0.0
      %4627 = vmatprep.subr.mxu0 0.0
      %4628 = vmatpush1.msra.mxu0 0.0
      %4629 = vmatprep.subr.mxu0 0.0
      %4630 = vmatpush1.msra.mxu0 0.0
      %4631 = vmatprep.subr.mxu0 0.0
      %4632 = vmatpush1.msra.mxu0 0.0
      %4633 = vmatprep.subr.mxu0 0.0
      %4634 = vmatpush1.msra.mxu0 0.0
      %4635 = vmatprep.subr.mxu0 0.0
      %4636 = vmatpush1.msra.mxu0 0.0
      %4637 = vmatprep.subr.mxu0 0.0
      %4638 = vmatpush1.msra.mxu0 0.0
      %4639 = vmatprep.subr.mxu0 0.0
      %4640 = vmatpush1.msra.mxu0 0.0
      %4641 = vmatprep.subr.mxu0 0.0
      %4642 = vmatpush1.msra.mxu0 0.0
      %4643 = vmatprep.subr.mxu0 0.0
      %4644 = vmatpush1.msra.mxu0 0.0
      %4645 = vmatprep.subr.mxu0 0.0
      %4646 = vmatpush1.msra.mxu0 0.0
      %4647 = vmatprep.subr.mxu0 0.0
      %4648 = vmatpush1.msra.mxu0 0.0
      %4649 = vmatprep.subr.mxu0 0.0
      %4650 = vmatpush1.msra.mxu0 0.0
      %4651 = vmatprep.subr.mxu0 0.0
      %4652 = vmatpush1.msra.mxu0 0.0
      %4653 = vmatprep.subr.mxu0 0.0
      %4654 = vmatpush1.msra.mxu0 0.0
      %4655 = vmatprep.subr.mxu0 0.0
      %4656 = vmatpush1.msra.mxu0 0.0
      %4657 = vmatprep.subr.mxu0 0.0
      %4658 = vmatpush1.msra.mxu0 0.0
      %4659 = vmatprep.subr.mxu0 0.0
      %4660 = vmatpush1.msra.mxu0 0.0
      %4661 = vmatprep.subr.mxu0 0.0
      %4662 = vmatpush1.msra.mxu0 0.0
      %4663 = vmatprep.subr.mxu0 0.0
      %4664 = vmatpush1.msra.mxu0 0.0
      %4665 = vmatprep.subr.mxu0 0.0
      %4666 = vmatpush1.msra.mxu0 0.0
      %4667 = vmatprep.subr.mxu0 0.0
      %4668 = vmatpush1.msra.mxu0 0.0
      %4669 = vmatprep.subr.mxu0 0.0
      %4670 = vmatpush1.msra.mxu0 0.0
      %4671 = vmatprep.subr.mxu0 0.0
      %4672 = vmatpush1.msra.mxu0 0.0
      %4673 = vmatprep.subr.mxu0 0.0
      %4674 = vmatpush1.msra.mxu0 0.0
      %4675 = vmatprep.subr.mxu0 0.0
      %4676 = vmatpush1.msra.mxu0 0.0
      %4677 = vmatprep.subr.mxu0 0.0
      %4678 = vmatpush1.msra.mxu0 0.0
      %4679 = vmatprep.subr.mxu0 0.0
      %4680 = vmatpush1.msra.mxu0 0.0
      %4681 = vmatprep.mubr.f32.mxu0 0.0
      %4682 = vmatmul.mubr.f32.gmra.mrb[0].mxu0 %v4615
      %v4683 = vpop.f32.mrb[0].mxu0
      %v4684 = vadd.f32 0.0, %v4683
      %v4685 = vpop.f32.mrb[0].mxu0
      %v4686 = vadd.f32 0.0, %v4685
      %4687 = vdwg.mxu0
      %4688 = vmatprep.subr.mxu0 %v4609
      %4689 = vmatpush1.msra.mxu0 %v4608
      %4690 = vmatprep.subr.mxu0 0.0
      %4691 = vmatpush1.msra.mxu0 0.0
      %4692 = vmatprep.subr.mxu0 0.0
      %4693 = vmatpush1.msra.mxu0 0.0
      %4694 = vmatprep.subr.mxu0 0.0
      %4695 = vmatpush1.msra.mxu0 0.0
      %4696 = vmatprep.subr.mxu0 0.0
      %4697 = vmatpush1.msra.mxu0 0.0
      %4698 = vmatprep.subr.mxu0 0.0
      %4699 = vmatpush1.msra.mxu0 0.0
      %4700 = vmatprep.subr.mxu0 0.0
      %4701 = vmatpush1.msra.mxu0 0.0
      %4702 = vmatprep.subr.mxu0 0.0
      %4703 = vmatpush1.msra.mxu0 0.0
      %4704 = vmatprep.subr.mxu0 0.0
      %4705 = vmatpush1.msra.mxu0 0.0
      %4706 = vmatprep.subr.mxu0 0.0
      %4707 = vmatpush1.msra.mxu0 0.0
      %4708 = vmatprep.subr.mxu0 0.0
      %4709 = vmatpush1.msra.mxu0 0.0
      %4710 = vmatprep.subr.mxu0 0.0
      %4711 = vmatpush1.msra.mxu0 0.0
      %4712 = vmatprep.subr.mxu0 0.0
      %4713 = vmatpush1.msra.mxu0 0.0
      %4714 = vmatprep.subr.mxu0 0.0
      %4715 = vmatpush1.msra.mxu0 0.0
      %4716 = vmatprep.subr.mxu0 0.0
      %4717 = vmatpush1.msra.mxu0 0.0
      %4718 = vmatprep.subr.mxu0 0.0
      %4719 = vmatpush1.msra.mxu0 0.0
      %4720 = vmatprep.subr.mxu0 0.0
      %4721 = vmatpush1.msra.mxu0 0.0
      %4722 = vmatprep.subr.mxu0 0.0
      %4723 = vmatpush1.msra.mxu0 0.0
      %4724 = vmatprep.subr.mxu0 0.0
      %4725 = vmatpush1.msra.mxu0 0.0
      %4726 = vmatprep.subr.mxu0 0.0
      %4727 = vmatpush1.msra.mxu0 0.0
      %4728 = vmatprep.subr.mxu0 0.0
      %4729 = vmatpush1.msra.mxu0 0.0
      %4730 = vmatprep.subr.mxu0 0.0
      %4731 = vmatpush1.msra.mxu0 0.0
      %4732 = vmatprep.subr.mxu0 0.0
      %4733 = vmatpush1.msra.mxu0 0.0
      %4734 = vmatprep.subr.mxu0 0.0
      %4735 = vmatpush1.msra.mxu0 0.0
      %4736 = vmatprep.subr.mxu0 0.0
      %4737 = vmatpush1.msra.mxu0 0.0
      %4738 = vmatprep.subr.mxu0 0.0
      %4739 = vmatpush1.msra.mxu0 0.0
      %4740 = vmatprep.subr.mxu0 0.0
      %4741 = vmatpush1.msra.mxu0 0.0
      %4742 = vmatprep.subr.mxu0 0.0
      %4743 = vmatpush1.msra.mxu0 0.0
      %4744 = vmatprep.subr.mxu0 0.0
      %4745 = vmatpush1.msra.mxu0 0.0
      %4746 = vmatprep.subr.mxu0 0.0
      %4747 = vmatpush1.msra.mxu0 0.0
      %4748 = vmatprep.subr.mxu0 0.0
      %4749 = vmatpush1.msra.mxu0 0.0
      %4750 = vmatprep.subr.mxu0 0.0
      %4751 = vmatpush1.msra.mxu0 0.0
      %4752 = vmatprep.mubr.f32.mxu0 0.0
      %4753 = vmatmul.mubr.f32.gmra.mrb[0].mxu0 %v4615
      %v4754 = vpop.f32.mrb[0].mxu0
      %v4755 = vadd.f32 0.0, %v4754
      %v4756 = vpop.f32.mrb[0].mxu0
      %v4757 = vadd.f32 0.0, %v4756
      %4758 = vdwg.mxu0
      %v4759 = vadd.f32 %v4589, %v4684
      %v4760 = vadd.f32 %v4590, %v4686
      %v4761 = vadd.f32 %v4591, %v4755
      %v4762 = vadd.f32 %v4592, %v4757
      %s4763 = scalar_lea.vmem %s6, 48
      %v4764 = vld [vmem:[%s4763] sm:$0xff]
      %4765 = vrot.lane.b32.xlu0 %v4244, 17
      %v4766 = vpop.permute.xlu0 %4765
      %4767 = vrot.lane.b32.xlu0 %v4245, 17
      %v4768 = vpop.permute.xlu0 %4767
      %4769 = vrot.lane.b32.xlu0 %v4246, 17
      %v4770 = vpop.permute.xlu0 %4769
      %4771 = vrot.lane.b32.xlu0 %v4247, 17
      %v4772 = vpop.permute.xlu0 %4771
      %4773 = vrot.lane.b32.xlu0 %v4248, 17
      %v4774 = vpop.permute.xlu0 %4773
      %vm4775 = vcmask 138240
      %v4776 = vsel %vm4775, %v4766, %v4768
      %v4777 = vsel %vm4775, %v4768, %v4770
      %v4778 = vsel %vm4775, %v4770, %v4772
      %v4779 = vsel %vm4775, %v4772, %v4774
      %v4785 = vsel %vm2205, %v4764, 0
      %4787 = vmatprep.subr.mxu0 %v4777
      %4788 = vmatpush1.msra.mxu0 %v4776
      %4789 = vmatprep.subr.mxu0 0.0
      %4790 = vmatpush1.msra.mxu0 0.0
      %4791 = vmatprep.subr.mxu0 0.0
      %4792 = vmatpush1.msra.mxu0 0.0
      %4793 = vmatprep.subr.mxu0 0.0
      %4794 = vmatpush1.msra.mxu0 0.0
      %4795 = vmatprep.subr.mxu0 0.0
      %4796 = vmatpush1.msra.mxu0 0.0
      %4797 = vmatprep.subr.mxu0 0.0
      %4798 = vmatpush1.msra.mxu0 0.0
      %4799 = vmatprep.subr.mxu0 0.0
      %4800 = vmatpush1.msra.mxu0 0.0
      %4801 = vmatprep.subr.mxu0 0.0
      %4802 = vmatpush1.msra.mxu0 0.0
      %4803 = vmatprep.subr.mxu0 0.0
      %4804 = vmatpush1.msra.mxu0 0.0
      %4805 = vmatprep.subr.mxu0 0.0
      %4806 = vmatpush1.msra.mxu0 0.0
      %4807 = vmatprep.subr.mxu0 0.0
      %4808 = vmatpush1.msra.mxu0 0.0
      %4809 = vmatprep.subr.mxu0 0.0
      %4810 = vmatpush1.msra.mxu0 0.0
      %4811 = vmatprep.subr.mxu0 0.0
      %4812 = vmatpush1.msra.mxu0 0.0
      %4813 = vmatprep.subr.mxu0 0.0
      %4814 = vmatpush1.msra.mxu0 0.0
      %4815 = vmatprep.subr.mxu0 0.0
      %4816 = vmatpush1.msra.mxu0 0.0
      %4817 = vmatprep.subr.mxu0 0.0
      %4818 = vmatpush1.msra.mxu0 0.0
      %4819 = vmatprep.subr.mxu0 0.0
      %4820 = vmatpush1.msra.mxu0 0.0
      %4821 = vmatprep.subr.mxu0 0.0
      %4822 = vmatpush1.msra.mxu0 0.0
      %4823 = vmatprep.subr.mxu0 0.0
      %4824 = vmatpush1.msra.mxu0 0.0
      %4825 = vmatprep.subr.mxu0 0.0
      %4826 = vmatpush1.msra.mxu0 0.0
      %4827 = vmatprep.subr.mxu0 0.0
      %4828 = vmatpush1.msra.mxu0 0.0
      %4829 = vmatprep.subr.mxu0 0.0
      %4830 = vmatpush1.msra.mxu0 0.0
      %4831 = vmatprep.subr.mxu0 0.0
      %4832 = vmatpush1.msra.mxu0 0.0
      %4833 = vmatprep.subr.mxu0 0.0
      %4834 = vmatpush1.msra.mxu0 0.0
      %4835 = vmatprep.subr.mxu0 0.0
      %4836 = vmatpush1.msra.mxu0 0.0
      %4837 = vmatprep.subr.mxu0 0.0
      %4838 = vmatpush1.msra.mxu0 0.0
      %4839 = vmatprep.subr.mxu0 0.0
      %4840 = vmatpush1.msra.mxu0 0.0
      %4841 = vmatprep.subr.mxu0 0.0
      %4842 = vmatpush1.msra.mxu0 0.0
      %4843 = vmatprep.subr.mxu0 0.0
      %4844 = vmatpush1.msra.mxu0 0.0
      %4845 = vmatprep.subr.mxu0 0.0
      %4846 = vmatpush1.msra.mxu0 0.0
      %4847 = vmatprep.subr.mxu0 0.0
      %4848 = vmatpush1.msra.mxu0 0.0
      %4849 = vmatprep.subr.mxu0 0.0
      %4850 = vmatpush1.msra.mxu0 0.0
      %4851 = vmatprep.mubr.f32.mxu0 0.0
      %4852 = vmatmul.mubr.f32.gmra.mrb[0].mxu0 %v4785
      %v4853 = vpop.f32.mrb[0].mxu0
      %v4854 = vadd.f32 0.0, %v4853
      %v4855 = vpop.f32.mrb[0].mxu0
      %v4856 = vadd.f32 0.0, %v4855
      %4857 = vdwg.mxu0
      %4858 = vmatprep.subr.mxu0 %v4779
      %4859 = vmatpush1.msra.mxu0 %v4778
      %4860 = vmatprep.subr.mxu0 0.0
      %4861 = vmatpush1.msra.mxu0 0.0
      %4862 = vmatprep.subr.mxu0 0.0
      %4863 = vmatpush1.msra.mxu0 0.0
      %4864 = vmatprep.subr.mxu0 0.0
      %4865 = vmatpush1.msra.mxu0 0.0
      %4866 = vmatprep.subr.mxu0 0.0
      %4867 = vmatpush1.msra.mxu0 0.0
      %4868 = vmatprep.subr.mxu0 0.0
      %4869 = vmatpush1.msra.mxu0 0.0
      %4870 = vmatprep.subr.mxu0 0.0
      %4871 = vmatpush1.msra.mxu0 0.0
      %4872 = vmatprep.subr.mxu0 0.0
      %4873 = vmatpush1.msra.mxu0 0.0
      %4874 = vmatprep.subr.mxu0 0.0
      %4875 = vmatpush1.msra.mxu0 0.0
      %4876 = vmatprep.subr.mxu0 0.0
      %4877 = vmatpush1.msra.mxu0 0.0
      %4878 = vmatprep.subr.mxu0 0.0
      %4879 = vmatpush1.msra.mxu0 0.0
      %4880 = vmatprep.subr.mxu0 0.0
      %4881 = vmatpush1.msra.mxu0 0.0
      %4882 = vmatprep.subr.mxu0 0.0
      %4883 = vmatpush1.msra.mxu0 0.0
      %4884 = vmatprep.subr.mxu0 0.0
      %4885 = vmatpush1.msra.mxu0 0.0
      %4886 = vmatprep.subr.mxu0 0.0
      %4887 = vmatpush1.msra.mxu0 0.0
      %4888 = vmatprep.subr.mxu0 0.0
      %4889 = vmatpush1.msra.mxu0 0.0
      %4890 = vmatprep.subr.mxu0 0.0
      %4891 = vmatpush1.msra.mxu0 0.0
      %4892 = vmatprep.subr.mxu0 0.0
      %4893 = vmatpush1.msra.mxu0 0.0
      %4894 = vmatprep.subr.mxu0 0.0
      %4895 = vmatpush1.msra.mxu0 0.0
      %4896 = vmatprep.subr.mxu0 0.0
      %4897 = vmatpush1.msra.mxu0 0.0
      %4898 = vmatprep.subr.mxu0 0.0
      %4899 = vmatpush1.msra.mxu0 0.0
      %4900 = vmatprep.subr.mxu0 0.0
      %4901 = vmatpush1.msra.mxu0 0.0
      %4902 = vmatprep.subr.mxu0 0.0
      %4903 = vmatpush1.msra.mxu0 0.0
      %4904 = vmatprep.subr.mxu0 0.0
      %4905 = vmatpush1.msra.mxu0 0.0
      %4906 = vmatprep.subr.mxu0 0.0
      %4907 = vmatpush1.msra.mxu0 0.0
      %4908 = vmatprep.subr.mxu0 0.0
      %4909 = vmatpush1.msra.mxu0 0.0
      %4910 = vmatprep.subr.mxu0 0.0
      %4911 = vmatpush1.msra.mxu0 0.0
      %4912 = vmatprep.subr.mxu0 0.0
      %4913 = vmatpush1.msra.mxu0 0.0
      %4914 = vmatprep.subr.mxu0 0.0
      %4915 = vmatpush1.msra.mxu0 0.0
      %4916 = vmatprep.subr.mxu0 0.0
      %4917 = vmatpush1.msra.mxu0 0.0
      %4918 = vmatprep.subr.mxu0 0.0
      %4919 = vmatpush1.msra.mxu0 0.0
      %4920 = vmatprep.subr.mxu0 0.0
      %4921 = vmatpush1.msra.mxu0 0.0
      %4922 = vmatprep.mubr.f32.mxu0 0.0
      %4923 = vmatmul.mubr.f32.gmra.mrb[0].mxu0 %v4785
      %v4924 = vpop.f32.mrb[0].mxu0
      %v4925 = vadd.f32 0.0, %v4924
      %v4926 = vpop.f32.mrb[0].mxu0
      %v4927 = vadd.f32 0.0, %v4926
      %4928 = vdwg.mxu0
      %v4929 = vadd.f32 %v4759, %v4854
      %v4930 = vadd.f32 %v4760, %v4856
      %v4931 = vadd.f32 %v4761, %v4925
      %v4932 = vadd.f32 %v4762, %v4927
      %s4933 = scalar_lea.vmem %s6, 56
      %v4934 = vld [vmem:[%s4933] sm:$0xff]
      %4935 = vrot.lane.b32.xlu0 %v4244, 15
      %v4936 = vpop.permute.xlu0 %4935
      %4937 = vrot.lane.b32.xlu0 %v4245, 15
      %v4938 = vpop.permute.xlu0 %4937
      %4939 = vrot.lane.b32.xlu0 %v4246, 15
      %v4940 = vpop.permute.xlu0 %4939
      %4941 = vrot.lane.b32.xlu0 %v4247, 15
      %v4942 = vpop.permute.xlu0 %4941
      %4943 = vrot.lane.b32.xlu0 %v4248, 15
      %v4944 = vpop.permute.xlu0 %4943
      %vm4945 = vcmask 121856
      %v4946 = vsel %vm4945, %v4936, %v4938
      %v4947 = vsel %vm4945, %v4938, %v4940
      %v4948 = vsel %vm4945, %v4940, %v4942
      %v4949 = vsel %vm4945, %v4942, %v4944
      %v4955 = vsel %vm2205, %v4934, 0
      %4957 = vmatprep.subr.mxu0 %v4947
      %4958 = vmatpush1.msra.mxu0 %v4946
      %4959 = vmatprep.subr.mxu0 0.0
      %4960 = vmatpush1.msra.mxu0 0.0
      %4961 = vmatprep.subr.mxu0 0.0
      %4962 = vmatpush1.msra.mxu0 0.0
      %4963 = vmatprep.subr.mxu0 0.0
      %4964 = vmatpush1.msra.mxu0 0.0
      %4965 = vmatprep.subr.mxu0 0.0
      %4966 = vmatpush1.msra.mxu0 0.0
      %4967 = vmatprep.subr.mxu0 0.0
      %4968 = vmatpush1.msra.mxu0 0.0
      %4969 = vmatprep.subr.mxu0 0.0
      %4970 = vmatpush1.msra.mxu0 0.0
      %4971 = vmatprep.subr.mxu0 0.0
      %4972 = vmatpush1.msra.mxu0 0.0
      %4973 = vmatprep.subr.mxu0 0.0
      %4974 = vmatpush1.msra.mxu0 0.0
      %4975 = vmatprep.subr.mxu0 0.0
      %4976 = vmatpush1.msra.mxu0 0.0
      %4977 = vmatprep.subr.mxu0 0.0
      %4978 = vmatpush1.msra.mxu0 0.0
      %4979 = vmatprep.subr.mxu0 0.0
      %4980 = vmatpush1.msra.mxu0 0.0
      %4981 = vmatprep.subr.mxu0 0.0
      %4982 = vmatpush1.msra.mxu0 0.0
      %4983 = vmatprep.subr.mxu0 0.0
      %4984 = vmatpush1.msra.mxu0 0.0
      %4985 = vmatprep.subr.mxu0 0.0
      %4986 = vmatpush1.msra.mxu0 0.0
      %4987 = vmatprep.subr.mxu0 0.0
      %4988 = vmatpush1.msra.mxu0 0.0
      %4989 = vmatprep.subr.mxu0 0.0
      %4990 = vmatpush1.msra.mxu0 0.0
      %4991 = vmatprep.subr.mxu0 0.0
      %4992 = vmatpush1.msra.mxu0 0.0
      %4993 = vmatprep.subr.mxu0 0.0
      %4994 = vmatpush1.msra.mxu0 0.0
      %4995 = vmatprep.subr.mxu0 0.0
      %4996 = vmatpush1.msra.mxu0 0.0
      %4997 = vmatprep.subr.mxu0 0.0
      %4998 = vmatpush1.msra.mxu0 0.0
      %4999 = vmatprep.subr.mxu0 0.0
      %5000 = vmatpush1.msra.mxu0 0.0
      %5001 = vmatprep.subr.mxu0 0.0
      %5002 = vmatpush1.msra.mxu0 0.0
      %5003 = vmatprep.subr.mxu0 0.0
      %5004 = vmatpush1.msra.mxu0 0.0
      %5005 = vmatprep.subr.mxu0 0.0
      %5006 = vmatpush1.msra.mxu0 0.0
      %5007 = vmatprep.subr.mxu0 0.0
      %5008 = vmatpush1.msra.mxu0 0.0
      %5009 = vmatprep.subr.mxu0 0.0
      %5010 = vmatpush1.msra.mxu0 0.0
      %5011 = vmatprep.subr.mxu0 0.0
      %5012 = vmatpush1.msra.mxu0 0.0
      %5013 = vmatprep.subr.mxu0 0.0
      %5014 = vmatpush1.msra.mxu0 0.0
      %5015 = vmatprep.subr.mxu0 0.0
      %5016 = vmatpush1.msra.mxu0 0.0
      %5017 = vmatprep.subr.mxu0 0.0
      %5018 = vmatpush1.msra.mxu0 0.0
      %5019 = vmatprep.subr.mxu0 0.0
      %5020 = vmatpush1.msra.mxu0 0.0
      %5021 = vmatprep.mubr.f32.mxu0 0.0
      %5022 = vmatmul.mubr.f32.gmra.mrb[0].mxu0 %v4955
      %v5023 = vpop.f32.mrb[0].mxu0
      %v5024 = vadd.f32 0.0, %v5023
      %v5025 = vpop.f32.mrb[0].mxu0
      %v5026 = vadd.f32 0.0, %v5025
      %5027 = vdwg.mxu0
      %5028 = vmatprep.subr.mxu0 %v4949
      %5029 = vmatpush1.msra.mxu0 %v4948
      %5030 = vmatprep.subr.mxu0 0.0
      %5031 = vmatpush1.msra.mxu0 0.0
      %5032 = vmatprep.subr.mxu0 0.0
      %5033 = vmatpush1.msra.mxu0 0.0
      %5034 = vmatprep.subr.mxu0 0.0
      %5035 = vmatpush1.msra.mxu0 0.0
      %5036 = vmatprep.subr.mxu0 0.0
      %5037 = vmatpush1.msra.mxu0 0.0
      %5038 = vmatprep.subr.mxu0 0.0
      %5039 = vmatpush1.msra.mxu0 0.0
      %5040 = vmatprep.subr.mxu0 0.0
      %5041 = vmatpush1.msra.mxu0 0.0
      %5042 = vmatprep.subr.mxu0 0.0
      %5043 = vmatpush1.msra.mxu0 0.0
      %5044 = vmatprep.subr.mxu0 0.0
      %5045 = vmatpush1.msra.mxu0 0.0
      %5046 = vmatprep.subr.mxu0 0.0
      %5047 = vmatpush1.msra.mxu0 0.0
      %5048 = vmatprep.subr.mxu0 0.0
      %5049 = vmatpush1.msra.mxu0 0.0
      %5050 = vmatprep.subr.mxu0 0.0
      %5051 = vmatpush1.msra.mxu0 0.0
      %5052 = vmatprep.subr.mxu0 0.0
      %5053 = vmatpush1.msra.mxu0 0.0
      %5054 = vmatprep.subr.mxu0 0.0
      %5055 = vmatpush1.msra.mxu0 0.0
      %5056 = vmatprep.subr.mxu0 0.0
      %5057 = vmatpush1.msra.mxu0 0.0
      %5058 = vmatprep.subr.mxu0 0.0
      %5059 = vmatpush1.msra.mxu0 0.0
      %5060 = vmatprep.subr.mxu0 0.0
      %5061 = vmatpush1.msra.mxu0 0.0
      %5062 = vmatprep.subr.mxu0 0.0
      %5063 = vmatpush1.msra.mxu0 0.0
      %5064 = vmatprep.subr.mxu0 0.0
      %5065 = vmatpush1.msra.mxu0 0.0
      %5066 = vmatprep.subr.mxu0 0.0
      %5067 = vmatpush1.msra.mxu0 0.0
      %5068 = vmatprep.subr.mxu0 0.0
      %5069 = vmatpush1.msra.mxu0 0.0
      %5070 = vmatprep.subr.mxu0 0.0
      %5071 = vmatpush1.msra.mxu0 0.0
      %5072 = vmatprep.subr.mxu0 0.0
      %5073 = vmatpush1.msra.mxu0 0.0
      %5074 = vmatprep.subr.mxu0 0.0
      %5075 = vmatpush1.msra.mxu0 0.0
      %5076 = vmatprep.subr.mxu0 0.0
      %5077 = vmatpush1.msra.mxu0 0.0
      %5078 = vmatprep.subr.mxu0 0.0
      %5079 = vmatpush1.msra.mxu0 0.0
      %5080 = vmatprep.subr.mxu0 0.0
      %5081 = vmatpush1.msra.mxu0 0.0
      %5082 = vmatprep.subr.mxu0 0.0
      %5083 = vmatpush1.msra.mxu0 0.0
      %5084 = vmatprep.subr.mxu0 0.0
      %5085 = vmatpush1.msra.mxu0 0.0
      %5086 = vmatprep.subr.mxu0 0.0
      %5087 = vmatpush1.msra.mxu0 0.0
      %5088 = vmatprep.subr.mxu0 0.0
      %5089 = vmatpush1.msra.mxu0 0.0
      %5090 = vmatprep.subr.mxu0 0.0
      %5091 = vmatpush1.msra.mxu0 0.0
      %5092 = vmatprep.mubr.f32.mxu0 0.0
      %5093 = vmatmul.mubr.f32.gmra.mrb[0].mxu0 %v4955
      %v5094 = vpop.f32.mrb[0].mxu0
      %v5095 = vadd.f32 0.0, %v5094
      %v5096 = vpop.f32.mrb[0].mxu0
      %v5097 = vadd.f32 0.0, %v5096
      %5098 = vdwg.mxu0
      %v5099 = vadd.f32 %v4929, %v5024
      %v5100 = vadd.f32 %v4930, %v5026
      %v5101 = vadd.f32 %v4931, %v5095
      %v5102 = vadd.f32 %v4932, %v5097
      %s5103 = scalar_lea.vmem %s6, 64
      %v5104 = vld [vmem:[%s5103] sm:$0xff]
      %5105 = vrot.lane.b32.xlu0 %v4244, 13
      %v5106 = vpop.permute.xlu0 %5105
      %5107 = vrot.lane.b32.xlu0 %v4245, 13
      %v5108 = vpop.permute.xlu0 %5107
      %5109 = vrot.lane.b32.xlu0 %v4246, 13
      %v5110 = vpop.permute.xlu0 %5109
      %5111 = vrot.lane.b32.xlu0 %v4247, 13
      %v5112 = vpop.permute.xlu0 %5111
      %5113 = vrot.lane.b32.xlu0 %v4248, 13
      %v5114 = vpop.permute.xlu0 %5113
      %vm5115 = vcmask 105472
      %v5116 = vsel %vm5115, %v5106, %v5108
      %v5117 = vsel %vm5115, %v5108, %v5110
      %v5118 = vsel %vm5115, %v5110, %v5112
      %v5119 = vsel %vm5115, %v5112, %v5114
      %v5125 = vsel %vm2205, %v5104, 0
      %5127 = vmatprep.subr.mxu0 %v5117
      %5128 = vmatpush1.msra.mxu0 %v5116
      %5129 = vmatprep.subr.mxu0 0.0
      %5130 = vmatpush1.msra.mxu0 0.0
      %5131 = vmatprep.subr.mxu0 0.0
      %5132 = vmatpush1.msra.mxu0 0.0
      %5133 = vmatprep.subr.mxu0 0.0
      %5134 = vmatpush1.msra.mxu0 0.0
      %5135 = vmatprep.subr.mxu0 0.0
      %5136 = vmatpush1.msra.mxu0 0.0
      %5137 = vmatprep.subr.mxu0 0.0
      %5138 = vmatpush1.msra.mxu0 0.0
      %5139 = vmatprep.subr.mxu0 0.0
      %5140 = vmatpush1.msra.mxu0 0.0
      %5141 = vmatprep.subr.mxu0 0.0
      %5142 = vmatpush1.msra.mxu0 0.0
      %5143 = vmatprep.subr.mxu0 0.0
      %5144 = vmatpush1.msra.mxu0 0.0
      %5145 = vmatprep.subr.mxu0 0.0
      %5146 = vmatpush1.msra.mxu0 0.0
      %5147 = vmatprep.subr.mxu0 0.0
      %5148 = vmatpush1.msra.mxu0 0.0
      %5149 = vmatprep.subr.mxu0 0.0
      %5150 = vmatpush1.msra.mxu0 0.0
      %5151 = vmatprep.subr.mxu0 0.0
      %5152 = vmatpush1.msra.mxu0 0.0
      %5153 = vmatprep.subr.mxu0 0.0
      %5154 = vmatpush1.msra.mxu0 0.0
      %5155 = vmatprep.subr.mxu0 0.0
      %5156 = vmatpush1.msra.mxu0 0.0
      %5157 = vmatprep.subr.mxu0 0.0
      %5158 = vmatpush1.msra.mxu0 0.0
      %5159 = vmatprep.subr.mxu0 0.0
      %5160 = vmatpush1.msra.mxu0 0.0
      %5161 = vmatprep.subr.mxu0 0.0
      %5162 = vmatpush1.msra.mxu0 0.0
      %5163 = vmatprep.subr.mxu0 0.0
      %5164 = vmatpush1.msra.mxu0 0.0
      %5165 = vmatprep.subr.mxu0 0.0
      %5166 = vmatpush1.msra.mxu0 0.0
      %5167 = vmatprep.subr.mxu0 0.0
      %5168 = vmatpush1.msra.mxu0 0.0
      %5169 = vmatprep.subr.mxu0 0.0
      %5170 = vmatpush1.msra.mxu0 0.0
      %5171 = vmatprep.subr.mxu0 0.0
      %5172 = vmatpush1.msra.mxu0 0.0
      %5173 = vmatprep.subr.mxu0 0.0
      %5174 = vmatpush1.msra.mxu0 0.0
      %5175 = vmatprep.subr.mxu0 0.0
      %5176 = vmatpush1.msra.mxu0 0.0
      %5177 = vmatprep.subr.mxu0 0.0
      %5178 = vmatpush1.msra.mxu0 0.0
      %5179 = vmatprep.subr.mxu0 0.0
      %5180 = vmatpush1.msra.mxu0 0.0
      %5181 = vmatprep.subr.mxu0 0.0
      %5182 = vmatpush1.msra.mxu0 0.0
      %5183 = vmatprep.subr.mxu0 0.0
      %5184 = vmatpush1.msra.mxu0 0.0
      %5185 = vmatprep.subr.mxu0 0.0
      %5186 = vmatpush1.msra.mxu0 0.0
      %5187 = vmatprep.subr.mxu0 0.0
      %5188 = vmatpush1.msra.mxu0 0.0
      %5189 = vmatprep.subr.mxu0 0.0
      %5190 = vmatpush1.msra.mxu0 0.0
      %5191 = vmatprep.mubr.f32.mxu0 0.0
      %5192 = vmatmul.mubr.f32.gmra.mrb[0].mxu0 %v5125
      %v5193 = vpop.f32.mrb[0].mxu0
      %v5194 = vadd.f32 0.0, %v5193
      %v5195 = vpop.f32.mrb[0].mxu0
      %v5196 = vadd.f32 0.0, %v5195
      %5197 = vdwg.mxu0
      %5198 = vmatprep.subr.mxu0 %v5119
      %5199 = vmatpush1.msra.mxu0 %v5118
      %5200 = vmatprep.subr.mxu0 0.0
      %5201 = vmatpush1.msra.mxu0 0.0
      %5202 = vmatprep.subr.mxu0 0.0
      %5203 = vmatpush1.msra.mxu0 0.0
      %5204 = vmatprep.subr.mxu0 0.0
      %5205 = vmatpush1.msra.mxu0 0.0
      %5206 = vmatprep.subr.mxu0 0.0
      %5207 = vmatpush1.msra.mxu0 0.0
      %5208 = vmatprep.subr.mxu0 0.0
      %5209 = vmatpush1.msra.mxu0 0.0
      %5210 = vmatprep.subr.mxu0 0.0
      %5211 = vmatpush1.msra.mxu0 0.0
      %5212 = vmatprep.subr.mxu0 0.0
      %5213 = vmatpush1.msra.mxu0 0.0
      %5214 = vmatprep.subr.mxu0 0.0
      %5215 = vmatpush1.msra.mxu0 0.0
      %5216 = vmatprep.subr.mxu0 0.0
      %5217 = vmatpush1.msra.mxu0 0.0
      %5218 = vmatprep.subr.mxu0 0.0
      %5219 = vmatpush1.msra.mxu0 0.0
      %5220 = vmatprep.subr.mxu0 0.0
      %5221 = vmatpush1.msra.mxu0 0.0
      %5222 = vmatprep.subr.mxu0 0.0
      %5223 = vmatpush1.msra.mxu0 0.0
      %5224 = vmatprep.subr.mxu0 0.0
      %5225 = vmatpush1.msra.mxu0 0.0
      %5226 = vmatprep.subr.mxu0 0.0
      %5227 = vmatpush1.msra.mxu0 0.0
      %5228 = vmatprep.subr.mxu0 0.0
      %5229 = vmatpush1.msra.mxu0 0.0
      %5230 = vmatprep.subr.mxu0 0.0
      %5231 = vmatpush1.msra.mxu0 0.0
      %5232 = vmatprep.subr.mxu0 0.0
      %5233 = vmatpush1.msra.mxu0 0.0
      %5234 = vmatprep.subr.mxu0 0.0
      %5235 = vmatpush1.msra.mxu0 0.0
      %5236 = vmatprep.subr.mxu0 0.0
      %5237 = vmatpush1.msra.mxu0 0.0
      %5238 = vmatprep.subr.mxu0 0.0
      %5239 = vmatpush1.msra.mxu0 0.0
      %5240 = vmatprep.subr.mxu0 0.0
      %5241 = vmatpush1.msra.mxu0 0.0
      %5242 = vmatprep.subr.mxu0 0.0
      %5243 = vmatpush1.msra.mxu0 0.0
      %5244 = vmatprep.subr.mxu0 0.0
      %5245 = vmatpush1.msra.mxu0 0.0
      %5246 = vmatprep.subr.mxu0 0.0
      %5247 = vmatpush1.msra.mxu0 0.0
      %5248 = vmatprep.subr.mxu0 0.0
      %5249 = vmatpush1.msra.mxu0 0.0
      %5250 = vmatprep.subr.mxu0 0.0
      %5251 = vmatpush1.msra.mxu0 0.0
      %5252 = vmatprep.subr.mxu0 0.0
      %5253 = vmatpush1.msra.mxu0 0.0
      %5254 = vmatprep.subr.mxu0 0.0
      %5255 = vmatpush1.msra.mxu0 0.0
      %5256 = vmatprep.subr.mxu0 0.0
      %5257 = vmatpush1.msra.mxu0 0.0
      %5258 = vmatprep.subr.mxu0 0.0
      %5259 = vmatpush1.msra.mxu0 0.0
      %5260 = vmatprep.subr.mxu0 0.0
      %5261 = vmatpush1.msra.mxu0 0.0
      %5262 = vmatprep.mubr.f32.mxu0 0.0
      %5263 = vmatmul.mubr.f32.gmra.mrb[0].mxu0 %v5125
      %v5264 = vpop.f32.mrb[0].mxu0
      %v5265 = vadd.f32 0.0, %v5264
      %v5266 = vpop.f32.mrb[0].mxu0
      %v5267 = vadd.f32 0.0, %v5266
      %5268 = vdwg.mxu0
      %v5269 = vadd.f32 %v5099, %v5194
      %v5270 = vadd.f32 %v5100, %v5196
      %v5271 = vadd.f32 %v5101, %v5265
      %v5272 = vadd.f32 %v5102, %v5267
      %v5273 = vld [vmem:[%s7] sm:$0xff]
      %5275 = vset.pattern.permute.xlu0 0
      %5276 = vperm.xlu0 %5275, %v5273
      %v5277 = vpop.permute.xlu0 %5276
      %v5279 = vadd.f32 %v5269, %v5277
      %v5280 = vadd.f32 %v5270, %v5277
      %v5281 = vadd.f32 %v5271, %v5277
      %v5282 = vadd.f32 %v5272, %v5277
      %v5283 = vmul.f32 %v5279, 0.01
      %v5284 = vmul.f32 %v5280, 0.01
      %v5285 = vmul.f32 %v5281, 0.01
      %v5286 = vmul.f32 %v5282, 0.01
      %v5287 = vmax.f32 %v5279, %v5283
      %v5288 = vmax.f32 %v5280, %v5284
      %v5289 = vmax.f32 %v5281, %v5285
      %v5290 = vmax.f32 %v5282, %v5286
      %v5291 = vmul.f32 %v5287, %v2126
      %v5292 = vmul.f32 %v5288, %v2130
      %v5293 = vmul.f32 %v5289, %v2134
      %v5294 = vmul.f32 %v5290, %v2138
      %5299 = vrot.lane.b32.xlu0 %v5291, 69
      %v5300 = vpop.permute.xlu0 %5299
      %5301 = vrot.lane.b32.xlu0 %v5292, 69
      %v5302 = vpop.permute.xlu0 %5301
      %5303 = vrot.lane.b32.xlu0 %v5293, 69
      %v5304 = vpop.permute.xlu0 %5303
      %5305 = vrot.lane.b32.xlu0 %v5294, 69
      %v5306 = vpop.permute.xlu0 %5305
      %v5307 = vsel %vm488, %v5300, %v5302
      %v5308 = vsel %vm488, %v5302, %v5304
      %v5309 = vsel %vm488, %v5304, %v5306
      %5315 = vst.msk [vmem:[#allocation2] sm:$0xff] %vm2167, %v5300
      %5316 = vst [vmem:[#allocation2 + $0x8] sm:$0xff] %v5307
      %5317 = vst [vmem:[#allocation2 + $0x10] sm:$0xff] %v5308
      %5318 = vst [vmem:[#allocation2 + $0x18] sm:$0xff] %v5309
      %5319 = vst.msk [vmem:[#allocation2 + $0x20] sm:$0xff] %vm2172, %v5306
      %v5320 = vld [vmem:[#allocation2] sm:$0xff]
      %v5321 = vld [vmem:[#allocation2 + $0x8] sm:$0xff]
      %v5322 = vld [vmem:[#allocation2 + $0x10] sm:$0xff]
      %v5323 = vld [vmem:[#allocation2 + $0x18] sm:$0xff]
      %v5324 = vld [vmem:[%s8] sm:$0xff]
      %s5325 = scalar_lea.vmem %s8, 8
      %v5326 = vld [vmem:[%s5325] sm:$0xff]
      %5331 = vrot.lane.b32.xlu0 %v5320, 125
      %v5332 = vpop.permute.xlu0 %5331
      %5333 = vrot.lane.b32.xlu0 %v5321, 125
      %v5334 = vpop.permute.xlu0 %5333
      %5335 = vrot.lane.b32.xlu0 %v5322, 125
      %v5336 = vpop.permute.xlu0 %5335
      %5337 = vrot.lane.b32.xlu0 %v5323, 125
      %v5338 = vpop.permute.xlu0 %5337
      %vm5339 = vcmask 1022976
      %v5340 = vsel %vm5339, %v5332, %v5334
      %v5341 = vsel %vm5339, %v5334, %v5336
      %v5342 = vsel %vm5339, %v5336, %v5338
      %v5348 = vsel %vm2205, %v5326, 0
      %5350 = vmatprep.subr.mxu0 %v5341
      %5351 = vmatpush1.msra.mxu0 %v5340
      %5352 = vmatprep.subr.mxu0 0.0
      %5353 = vmatpush1.msra.mxu0 0.0
      %5354 = vmatprep.subr.mxu0 0.0
      %5355 = vmatpush1.msra.mxu0 0.0
      %5356 = vmatprep.subr.mxu0 0.0
      %5357 = vmatpush1.msra.mxu0 0.0
      %5358 = vmatprep.subr.mxu0 0.0
      %5359 = vmatpush1.msra.mxu0 0.0
      %5360 = vmatprep.subr.mxu0 0.0
      %5361 = vmatpush1.msra.mxu0 0.0
      %5362 = vmatprep.subr.mxu0 0.0
      %5363 = vmatpush1.msra.mxu0 0.0
      %5364 = vmatprep.subr.mxu0 0.0
      %5365 = vmatpush1.msra.mxu0 0.0
      %5366 = vmatprep.subr.mxu0 0.0
      %5367 = vmatpush1.msra.mxu0 0.0
      %5368 = vmatprep.subr.mxu0 0.0
      %5369 = vmatpush1.msra.mxu0 0.0
      %5370 = vmatprep.subr.mxu0 0.0
      %5371 = vmatpush1.msra.mxu0 0.0
      %5372 = vmatprep.subr.mxu0 0.0
      %5373 = vmatpush1.msra.mxu0 0.0
      %5374 = vmatprep.subr.mxu0 0.0
      %5375 = vmatpush1.msra.mxu0 0.0
      %5376 = vmatprep.subr.mxu0 0.0
      %5377 = vmatpush1.msra.mxu0 0.0
      %5378 = vmatprep.subr.mxu0 0.0
      %5379 = vmatpush1.msra.mxu0 0.0
      %5380 = vmatprep.subr.mxu0 0.0
      %5381 = vmatpush1.msra.mxu0 0.0
      %5382 = vmatprep.subr.mxu0 0.0
      %5383 = vmatpush1.msra.mxu0 0.0
      %5384 = vmatprep.subr.mxu0 0.0
      %5385 = vmatpush1.msra.mxu0 0.0
      %5386 = vmatprep.subr.mxu0 0.0
      %5387 = vmatpush1.msra.mxu0 0.0
      %5388 = vmatprep.subr.mxu0 0.0
      %5389 = vmatpush1.msra.mxu0 0.0
      %5390 = vmatprep.subr.mxu0 0.0
      %5391 = vmatpush1.msra.mxu0 0.0
      %5392 = vmatprep.subr.mxu0 0.0
      %5393 = vmatpush1.msra.mxu0 0.0
      %5394 = vmatprep.subr.mxu0 0.0
      %5395 = vmatpush1.msra.mxu0 0.0
      %5396 = vmatprep.subr.mxu0 0.0
      %5397 = vmatpush1.msra.mxu0 0.0
      %5398 = vmatprep.subr.mxu0 0.0
      %5399 = vmatpush1.msra.mxu0 0.0
      %5400 = vmatprep.subr.mxu0 0.0
      %5401 = vmatpush1.msra.mxu0 0.0
      %5402 = vmatprep.subr.mxu0 0.0
      %5403 = vmatpush1.msra.mxu0 0.0
      %5404 = vmatprep.subr.mxu0 0.0
      %5405 = vmatpush1.msra.mxu0 0.0
      %5406 = vmatprep.subr.mxu0 0.0
      %5407 = vmatpush1.msra.mxu0 0.0
      %5408 = vmatprep.subr.mxu0 0.0
      %5409 = vmatpush1.msra.mxu0 0.0
      %5410 = vmatprep.subr.mxu0 0.0
      %5411 = vmatpush1.msra.mxu0 0.0
      %5412 = vmatprep.subr.mxu0 0.0
      %5413 = vmatpush1.msra.mxu0 0.0
      %5414 = vmatprep.mubr.f32.mxu0 0.0
      %5415 = vmatmul.mubr.f32.gmra.mrb[0].mxu0 %v5348
      %v5416 = vpop.f32.mrb[0].mxu0
      %v5417 = vadd.f32 0.0, %v5416
      %v5418 = vpop.f32.mrb[0].mxu0
      %v5419 = vadd.f32 0.0, %v5418
      %5420 = vdwg.mxu0
      %5421 = vmatprep.subr.mxu0 %v5338
      %5422 = vmatpush1.msra.mxu0 %v5342
      %5423 = vmatprep.subr.mxu0 0.0
      %5424 = vmatpush1.msra.mxu0 0.0
      %5425 = vmatprep.subr.mxu0 0.0
      %5426 = vmatpush1.msra.mxu0 0.0
      %5427 = vmatprep.subr.mxu0 0.0
      %5428 = vmatpush1.msra.mxu0 0.0
      %5429 = vmatprep.subr.mxu0 0.0
      %5430 = vmatpush1.msra.mxu0 0.0
      %5431 = vmatprep.subr.mxu0 0.0
      %5432 = vmatpush1.msra.mxu0 0.0
      %5433 = vmatprep.subr.mxu0 0.0
      %5434 = vmatpush1.msra.mxu0 0.0
      %5435 = vmatprep.subr.mxu0 0.0
      %5436 = vmatpush1.msra.mxu0 0.0
      %5437 = vmatprep.subr.mxu0 0.0
      %5438 = vmatpush1.msra.mxu0 0.0
      %5439 = vmatprep.subr.mxu0 0.0
      %5440 = vmatpush1.msra.mxu0 0.0
      %5441 = vmatprep.subr.mxu0 0.0
      %5442 = vmatpush1.msra.mxu0 0.0
      %5443 = vmatprep.subr.mxu0 0.0
      %5444 = vmatpush1.msra.mxu0 0.0
      %5445 = vmatprep.subr.mxu0 0.0
      %5446 = vmatpush1.msra.mxu0 0.0
      %5447 = vmatprep.subr.mxu0 0.0
      %5448 = vmatpush1.msra.mxu0 0.0
      %5449 = vmatprep.subr.mxu0 0.0
      %5450 = vmatpush1.msra.mxu0 0.0
      %5451 = vmatprep.subr.mxu0 0.0
      %5452 = vmatpush1.msra.mxu0 0.0
      %5453 = vmatprep.subr.mxu0 0.0
      %5454 = vmatpush1.msra.mxu0 0.0
      %5455 = vmatprep.subr.mxu0 0.0
      %5456 = vmatpush1.msra.mxu0 0.0
      %5457 = vmatprep.subr.mxu0 0.0
      %5458 = vmatpush1.msra.mxu0 0.0
      %5459 = vmatprep.subr.mxu0 0.0
      %5460 = vmatpush1.msra.mxu0 0.0
      %5461 = vmatprep.subr.mxu0 0.0
      %5462 = vmatpush1.msra.mxu0 0.0
      %5463 = vmatprep.subr.mxu0 0.0
      %5464 = vmatpush1.msra.mxu0 0.0
      %5465 = vmatprep.subr.mxu0 0.0
      %5466 = vmatpush1.msra.mxu0 0.0
      %5467 = vmatprep.subr.mxu0 0.0
      %5468 = vmatpush1.msra.mxu0 0.0
      %5469 = vmatprep.subr.mxu0 0.0
      %5470 = vmatpush1.msra.mxu0 0.0
      %5471 = vmatprep.subr.mxu0 0.0
      %5472 = vmatpush1.msra.mxu0 0.0
      %5473 = vmatprep.subr.mxu0 0.0
      %5474 = vmatpush1.msra.mxu0 0.0
      %5475 = vmatprep.subr.mxu0 0.0
      %5476 = vmatpush1.msra.mxu0 0.0
      %5477 = vmatprep.subr.mxu0 0.0
      %5478 = vmatpush1.msra.mxu0 0.0
      %5479 = vmatprep.subr.mxu0 0.0
      %5480 = vmatpush1.msra.mxu0 0.0
      %5481 = vmatprep.subr.mxu0 0.0
      %5482 = vmatpush1.msra.mxu0 0.0
      %5483 = vmatprep.subr.mxu0 0.0
      %5484 = vmatpush1.msra.mxu0 0.0
      %5485 = vmatprep.mubr.f32.mxu0 0.0
      %5486 = vmatmul.mubr.f32.gmra.mrb[0].mxu0 %v5348
      %v5487 = vpop.f32.mrb[0].mxu0
      %v5488 = vadd.f32 0.0, %v5487
      %v5489 = vpop.f32.mrb[0].mxu0
      %v5490 = vadd.f32 0.0, %v5489
      %5491 = vdwg.mxu0
      %v5493 = vsel %vm2205, %v5324, 0
      %5495 = vmatprep.subr.mxu0 %v5321
      %5496 = vmatpush1.msra.mxu0 %v5320
      %5497 = vmatprep.subr.mxu0 0.0
      %5498 = vmatpush1.msra.mxu0 0.0
      %5499 = vmatprep.subr.mxu0 0.0
      %5500 = vmatpush1.msra.mxu0 0.0
      %5501 = vmatprep.subr.mxu0 0.0
      %5502 = vmatpush1.msra.mxu0 0.0
      %5503 = vmatprep.subr.mxu0 0.0
      %5504 = vmatpush1.msra.mxu0 0.0
      %5505 = vmatprep.subr.mxu0 0.0
      %5506 = vmatpush1.msra.mxu0 0.0
      %5507 = vmatprep.subr.mxu0 0.0
      %5508 = vmatpush1.msra.mxu0 0.0
      %5509 = vmatprep.subr.mxu0 0.0
      %5510 = vmatpush1.msra.mxu0 0.0
      %5511 = vmatprep.subr.mxu0 0.0
      %5512 = vmatpush1.msra.mxu0 0.0
      %5513 = vmatprep.subr.mxu0 0.0
      %5514 = vmatpush1.msra.mxu0 0.0
      %5515 = vmatprep.subr.mxu0 0.0
      %5516 = vmatpush1.msra.mxu0 0.0
      %5517 = vmatprep.subr.mxu0 0.0
      %5518 = vmatpush1.msra.mxu0 0.0
      %5519 = vmatprep.subr.mxu0 0.0
      %5520 = vmatpush1.msra.mxu0 0.0
      %5521 = vmatprep.subr.mxu0 0.0
      %5522 = vmatpush1.msra.mxu0 0.0
      %5523 = vmatprep.subr.mxu0 0.0
      %5524 = vmatpush1.msra.mxu0 0.0
      %5525 = vmatprep.subr.mxu0 0.0
      %5526 = vmatpush1.msra.mxu0 0.0
      %5527 = vmatprep.subr.mxu0 0.0
      %5528 = vmatpush1.msra.mxu0 0.0
      %5529 = vmatprep.subr.mxu0 0.0
      %5530 = vmatpush1.msra.mxu0 0.0
      %5531 = vmatprep.subr.mxu0 0.0
      %5532 = vmatpush1.msra.mxu0 0.0
      %5533 = vmatprep.subr.mxu0 0.0
      %5534 = vmatpush1.msra.mxu0 0.0
      %5535 = vmatprep.subr.mxu0 0.0
      %5536 = vmatpush1.msra.mxu0 0.0
      %5537 = vmatprep.subr.mxu0 0.0
      %5538 = vmatpush1.msra.mxu0 0.0
      %5539 = vmatprep.subr.mxu0 0.0
      %5540 = vmatpush1.msra.mxu0 0.0
      %5541 = vmatprep.subr.mxu0 0.0
      %5542 = vmatpush1.msra.mxu0 0.0
      %5543 = vmatprep.subr.mxu0 0.0
      %5544 = vmatpush1.msra.mxu0 0.0
      %5545 = vmatprep.subr.mxu0 0.0
      %5546 = vmatpush1.msra.mxu0 0.0
      %5547 = vmatprep.subr.mxu0 0.0
      %5548 = vmatpush1.msra.mxu0 0.0
      %5549 = vmatprep.subr.mxu0 0.0
      %5550 = vmatpush1.msra.mxu0 0.0
      %5551 = vmatprep.subr.mxu0 0.0
      %5552 = vmatpush1.msra.mxu0 0.0
      %5553 = vmatprep.subr.mxu0 0.0
      %5554 = vmatpush1.msra.mxu0 0.0
      %5555 = vmatprep.subr.mxu0 0.0
      %5556 = vmatpush1.msra.mxu0 0.0
      %5557 = vmatprep.subr.mxu0 0.0
      %5558 = vmatpush1.msra.mxu0 0.0
      %5559 = vmatprep.mubr.f32.mxu0 0.0
      %5560 = vmatmul.mubr.f32.gmra.mrb[0].mxu0 %v5493
      %v5561 = vpop.f32.mrb[0].mxu0
      %v5562 = vadd.f32 %v5417, %v5561
      %v5563 = vpop.f32.mrb[0].mxu0
      %v5564 = vadd.f32 %v5419, %v5563
      %5565 = vdwg.mxu0
      %5566 = vmatprep.subr.mxu0 %v5323
      %5567 = vmatpush1.msra.mxu0 %v5322
      %5568 = vmatprep.subr.mxu0 0.0
      %5569 = vmatpush1.msra.mxu0 0.0
      %5570 = vmatprep.subr.mxu0 0.0
      %5571 = vmatpush1.msra.mxu0 0.0
      %5572 = vmatprep.subr.mxu0 0.0
      %5573 = vmatpush1.msra.mxu0 0.0
      %5574 = vmatprep.subr.mxu0 0.0
      %5575 = vmatpush1.msra.mxu0 0.0
      %5576 = vmatprep.subr.mxu0 0.0
      %5577 = vmatpush1.msra.mxu0 0.0
      %5578 = vmatprep.subr.mxu0 0.0
      %5579 = vmatpush1.msra.mxu0 0.0
      %5580 = vmatprep.subr.mxu0 0.0
      %5581 = vmatpush1.msra.mxu0 0.0
      %5582 = vmatprep.subr.mxu0 0.0
      %5583 = vmatpush1.msra.mxu0 0.0
      %5584 = vmatprep.subr.mxu0 0.0
      %5585 = vmatpush1.msra.mxu0 0.0
      %5586 = vmatprep.subr.mxu0 0.0
      %5587 = vmatpush1.msra.mxu0 0.0
      %5588 = vmatprep.subr.mxu0 0.0
      %5589 = vmatpush1.msra.mxu0 0.0
      %5590 = vmatprep.subr.mxu0 0.0
      %5591 = vmatpush1.msra.mxu0 0.0
      %5592 = vmatprep.subr.mxu0 0.0
      %5593 = vmatpush1.msra.mxu0 0.0
      %5594 = vmatprep.subr.mxu0 0.0
      %5595 = vmatpush1.msra.mxu0 0.0
      %5596 = vmatprep.subr.mxu0 0.0
      %5597 = vmatpush1.msra.mxu0 0.0
      %5598 = vmatprep.subr.mxu0 0.0
      %5599 = vmatpush1.msra.mxu0 0.0
      %5600 = vmatprep.subr.mxu0 0.0
      %5601 = vmatpush1.msra.mxu0 0.0
      %5602 = vmatprep.subr.mxu0 0.0
      %5603 = vmatpush1.msra.mxu0 0.0
      %5604 = vmatprep.subr.mxu0 0.0
      %5605 = vmatpush1.msra.mxu0 0.0
      %5606 = vmatprep.subr.mxu0 0.0
      %5607 = vmatpush1.msra.mxu0 0.0
      %5608 = vmatprep.subr.mxu0 0.0
      %5609 = vmatpush1.msra.mxu0 0.0
      %5610 = vmatprep.subr.mxu0 0.0
      %5611 = vmatpush1.msra.mxu0 0.0
      %5612 = vmatprep.subr.mxu0 0.0
      %5613 = vmatpush1.msra.mxu0 0.0
      %5614 = vmatprep.subr.mxu0 0.0
      %5615 = vmatpush1.msra.mxu0 0.0
      %5616 = vmatprep.subr.mxu0 0.0
      %5617 = vmatpush1.msra.mxu0 0.0
      %5618 = vmatprep.subr.mxu0 0.0
      %5619 = vmatpush1.msra.mxu0 0.0
      %5620 = vmatprep.subr.mxu0 0.0
      %5621 = vmatpush1.msra.mxu0 0.0
      %5622 = vmatprep.subr.mxu0 0.0
      %5623 = vmatpush1.msra.mxu0 0.0
      %5624 = vmatprep.subr.mxu0 0.0
      %5625 = vmatpush1.msra.mxu0 0.0
      %5626 = vmatprep.subr.mxu0 0.0
      %5627 = vmatpush1.msra.mxu0 0.0
      %5628 = vmatprep.subr.mxu0 0.0
      %5629 = vmatpush1.msra.mxu0 0.0
      %5630 = vmatprep.mubr.f32.mxu0 0.0
      %5631 = vmatmul.mubr.f32.gmra.mrb[0].mxu0 %v5493
      %v5632 = vpop.f32.mrb[0].mxu0
      %v5633 = vadd.f32 %v5488, %v5632
      %v5634 = vpop.f32.mrb[0].mxu0
      %v5635 = vadd.f32 %v5490, %v5634
      %5636 = vdwg.mxu0
      %s5637 = scalar_lea.vmem %s8, 16
      %v5638 = vld [vmem:[%s5637] sm:$0xff]
      %5639 = vrot.lane.b32.xlu0 %v5320, 122
      %v5640 = vpop.permute.xlu0 %5639
      %5641 = vrot.lane.b32.xlu0 %v5321, 122
      %v5642 = vpop.permute.xlu0 %5641
      %5643 = vrot.lane.b32.xlu0 %v5322, 122
      %v5644 = vpop.permute.xlu0 %5643
      %5645 = vrot.lane.b32.xlu0 %v5323, 122
      %v5646 = vpop.permute.xlu0 %5645
      %vm5647 = vcmask 998400
      %v5648 = vsel %vm5647, %v5640, %v5642
      %v5649 = vsel %vm5647, %v5642, %v5644
      %v5650 = vsel %vm5647, %v5644, %v5646
      %v5656 = vsel %vm2205, %v5638, 0
      %5658 = vmatprep.subr.mxu0 %v5649
      %5659 = vmatpush1.msra.mxu0 %v5648
      %5660 = vmatprep.subr.mxu0 0.0
      %5661 = vmatpush1.msra.mxu0 0.0
      %5662 = vmatprep.subr.mxu0 0.0
      %5663 = vmatpush1.msra.mxu0 0.0
      %5664 = vmatprep.subr.mxu0 0.0
      %5665 = vmatpush1.msra.mxu0 0.0
      %5666 = vmatprep.subr.mxu0 0.0
      %5667 = vmatpush1.msra.mxu0 0.0
      %5668 = vmatprep.subr.mxu0 0.0
      %5669 = vmatpush1.msra.mxu0 0.0
      %5670 = vmatprep.subr.mxu0 0.0
      %5671 = vmatpush1.msra.mxu0 0.0
      %5672 = vmatprep.subr.mxu0 0.0
      %5673 = vmatpush1.msra.mxu0 0.0
      %5674 = vmatprep.subr.mxu0 0.0
      %5675 = vmatpush1.msra.mxu0 0.0
      %5676 = vmatprep.subr.mxu0 0.0
      %5677 = vmatpush1.msra.mxu0 0.0
      %5678 = vmatprep.subr.mxu0 0.0
      %5679 = vmatpush1.msra.mxu0 0.0
      %5680 = vmatprep.subr.mxu0 0.0
      %5681 = vmatpush1.msra.mxu0 0.0
      %5682 = vmatprep.subr.mxu0 0.0
      %5683 = vmatpush1.msra.mxu0 0.0
      %5684 = vmatprep.subr.mxu0 0.0
      %5685 = vmatpush1.msra.mxu0 0.0
      %5686 = vmatprep.subr.mxu0 0.0
      %5687 = vmatpush1.msra.mxu0 0.0
      %5688 = vmatprep.subr.mxu0 0.0
      %5689 = vmatpush1.msra.mxu0 0.0
      %5690 = vmatprep.subr.mxu0 0.0
      %5691 = vmatpush1.msra.mxu0 0.0
      %5692 = vmatprep.subr.mxu0 0.0
      %5693 = vmatpush1.msra.mxu0 0.0
      %5694 = vmatprep.subr.mxu0 0.0
      %5695 = vmatpush1.msra.mxu0 0.0
      %5696 = vmatprep.subr.mxu0 0.0
      %5697 = vmatpush1.msra.mxu0 0.0
      %5698 = vmatprep.subr.mxu0 0.0
      %5699 = vmatpush1.msra.mxu0 0.0
      %5700 = vmatprep.subr.mxu0 0.0
      %5701 = vmatpush1.msra.mxu0 0.0
      %5702 = vmatprep.subr.mxu0 0.0
      %5703 = vmatpush1.msra.mxu0 0.0
      %5704 = vmatprep.subr.mxu0 0.0
      %5705 = vmatpush1.msra.mxu0 0.0
      %5706 = vmatprep.subr.mxu0 0.0
      %5707 = vmatpush1.msra.mxu0 0.0
      %5708 = vmatprep.subr.mxu0 0.0
      %5709 = vmatpush1.msra.mxu0 0.0
      %5710 = vmatprep.subr.mxu0 0.0
      %5711 = vmatpush1.msra.mxu0 0.0
      %5712 = vmatprep.subr.mxu0 0.0
      %5713 = vmatpush1.msra.mxu0 0.0
      %5714 = vmatprep.subr.mxu0 0.0
      %5715 = vmatpush1.msra.mxu0 0.0
      %5716 = vmatprep.subr.mxu0 0.0
      %5717 = vmatpush1.msra.mxu0 0.0
      %5718 = vmatprep.subr.mxu0 0.0
      %5719 = vmatpush1.msra.mxu0 0.0
      %5720 = vmatprep.subr.mxu0 0.0
      %5721 = vmatpush1.msra.mxu0 0.0
      %5722 = vmatprep.mubr.f32.mxu0 0.0
      %5723 = vmatmul.mubr.f32.gmra.mrb[0].mxu0 %v5656
      %v5724 = vpop.f32.mrb[0].mxu0
      %v5725 = vadd.f32 0.0, %v5724
      %v5726 = vpop.f32.mrb[0].mxu0
      %v5727 = vadd.f32 0.0, %v5726
      %5728 = vdwg.mxu0
      %5729 = vmatprep.subr.mxu0 %v5646
      %5730 = vmatpush1.msra.mxu0 %v5650
      %5731 = vmatprep.subr.mxu0 0.0
      %5732 = vmatpush1.msra.mxu0 0.0
      %5733 = vmatprep.subr.mxu0 0.0
      %5734 = vmatpush1.msra.mxu0 0.0
      %5735 = vmatprep.subr.mxu0 0.0
      %5736 = vmatpush1.msra.mxu0 0.0
      %5737 = vmatprep.subr.mxu0 0.0
      %5738 = vmatpush1.msra.mxu0 0.0
      %5739 = vmatprep.subr.mxu0 0.0
      %5740 = vmatpush1.msra.mxu0 0.0
      %5741 = vmatprep.subr.mxu0 0.0
      %5742 = vmatpush1.msra.mxu0 0.0
      %5743 = vmatprep.subr.mxu0 0.0
      %5744 = vmatpush1.msra.mxu0 0.0
      %5745 = vmatprep.subr.mxu0 0.0
      %5746 = vmatpush1.msra.mxu0 0.0
      %5747 = vmatprep.subr.mxu0 0.0
      %5748 = vmatpush1.msra.mxu0 0.0
      %5749 = vmatprep.subr.mxu0 0.0
      %5750 = vmatpush1.msra.mxu0 0.0
      %5751 = vmatprep.subr.mxu0 0.0
      %5752 = vmatpush1.msra.mxu0 0.0
      %5753 = vmatprep.subr.mxu0 0.0
      %5754 = vmatpush1.msra.mxu0 0.0
      %5755 = vmatprep.subr.mxu0 0.0
      %5756 = vmatpush1.msra.mxu0 0.0
      %5757 = vmatprep.subr.mxu0 0.0
      %5758 = vmatpush1.msra.mxu0 0.0
      %5759 = vmatprep.subr.mxu0 0.0
      %5760 = vmatpush1.msra.mxu0 0.0
      %5761 = vmatprep.subr.mxu0 0.0
      %5762 = vmatpush1.msra.mxu0 0.0
      %5763 = vmatprep.subr.mxu0 0.0
      %5764 = vmatpush1.msra.mxu0 0.0
      %5765 = vmatprep.subr.mxu0 0.0
      %5766 = vmatpush1.msra.mxu0 0.0
      %5767 = vmatprep.subr.mxu0 0.0
      %5768 = vmatpush1.msra.mxu0 0.0
      %5769 = vmatprep.subr.mxu0 0.0
      %5770 = vmatpush1.msra.mxu0 0.0
      %5771 = vmatprep.subr.mxu0 0.0
      %5772 = vmatpush1.msra.mxu0 0.0
      %5773 = vmatprep.subr.mxu0 0.0
      %5774 = vmatpush1.msra.mxu0 0.0
      %5775 = vmatprep.subr.mxu0 0.0
      %5776 = vmatpush1.msra.mxu0 0.0
      %5777 = vmatprep.subr.mxu0 0.0
      %5778 = vmatpush1.msra.mxu0 0.0
      %5779 = vmatprep.subr.mxu0 0.0
      %5780 = vmatpush1.msra.mxu0 0.0
      %5781 = vmatprep.subr.mxu0 0.0
      %5782 = vmatpush1.msra.mxu0 0.0
      %5783 = vmatprep.subr.mxu0 0.0
      %5784 = vmatpush1.msra.mxu0 0.0
      %5785 = vmatprep.subr.mxu0 0.0
      %5786 = vmatpush1.msra.mxu0 0.0
      %5787 = vmatprep.subr.mxu0 0.0
      %5788 = vmatpush1.msra.mxu0 0.0
      %5789 = vmatprep.subr.mxu0 0.0
      %5790 = vmatpush1.msra.mxu0 0.0
      %5791 = vmatprep.subr.mxu0 0.0
      %5792 = vmatpush1.msra.mxu0 0.0
      %5793 = vmatprep.mubr.f32.mxu0 0.0
      %5794 = vmatmul.mubr.f32.gmra.mrb[0].mxu0 %v5656
      %v5795 = vpop.f32.mrb[0].mxu0
      %v5796 = vadd.f32 0.0, %v5795
      %v5797 = vpop.f32.mrb[0].mxu0
      %v5798 = vadd.f32 0.0, %v5797
      %5799 = vdwg.mxu0
      %v5800 = vadd.f32 %v5562, %v5725
      %v5801 = vadd.f32 %v5564, %v5727
      %v5802 = vadd.f32 %v5633, %v5796
      %v5803 = vadd.f32 %v5635, %v5798
      %v5804 = vld [vmem:[#allocation2] sm:$0xff]
      %v5805 = vld [vmem:[#allocation2 + $0x8] sm:$0xff]
      %v5806 = vld [vmem:[#allocation2 + $0x10] sm:$0xff]
      %v5807 = vld [vmem:[#allocation2 + $0x18] sm:$0xff]
      %v5808 = vld [vmem:[#allocation2 + $0x20] sm:$0xff]
      %s5809 = scalar_lea.vmem %s8, 24
      %v5810 = vld [vmem:[%s5809] sm:$0xff]
      %5816 = vrot.lane.b32.xlu0 %v5804, 62
      %v5817 = vpop.permute.xlu0 %5816
      %5818 = vrot.lane.b32.xlu0 %v5805, 62
      %v5819 = vpop.permute.xlu0 %5818
      %5820 = vrot.lane.b32.xlu0 %v5806, 62
      %v5821 = vpop.permute.xlu0 %5820
      %5822 = vrot.lane.b32.xlu0 %v5807, 62
      %v5823 = vpop.permute.xlu0 %5822
      %5824 = vrot.lane.b32.xlu0 %v5808, 62
      %v5825 = vpop.permute.xlu0 %5824
      %vm5826 = vcmask 506880
      %v5827 = vsel %vm5826, %v5817, %v5819
      %v5828 = vsel %vm5826, %v5819, %v5821
      %v5829 = vsel %vm5826, %v5821, %v5823
      %v5830 = vsel %vm5826, %v5823, %v5825
      %v5836 = vsel %vm2205, %v5810, 0
      %5838 = vmatprep.subr.mxu0 %v5828
      %5839 = vmatpush1.msra.mxu0 %v5827
      %5840 = vmatprep.subr.mxu0 0.0
      %5841 = vmatpush1.msra.mxu0 0.0
      %5842 = vmatprep.subr.mxu0 0.0
      %5843 = vmatpush1.msra.mxu0 0.0
      %5844 = vmatprep.subr.mxu0 0.0
      %5845 = vmatpush1.msra.mxu0 0.0
      %5846 = vmatprep.subr.mxu0 0.0
      %5847 = vmatpush1.msra.mxu0 0.0
      %5848 = vmatprep.subr.mxu0 0.0
      %5849 = vmatpush1.msra.mxu0 0.0
      %5850 = vmatprep.subr.mxu0 0.0
      %5851 = vmatpush1.msra.mxu0 0.0
      %5852 = vmatprep.subr.mxu0 0.0
      %5853 = vmatpush1.msra.mxu0 0.0
      %5854 = vmatprep.subr.mxu0 0.0
      %5855 = vmatpush1.msra.mxu0 0.0
      %5856 = vmatprep.subr.mxu0 0.0
      %5857 = vmatpush1.msra.mxu0 0.0
      %5858 = vmatprep.subr.mxu0 0.0
      %5859 = vmatpush1.msra.mxu0 0.0
      %5860 = vmatprep.subr.mxu0 0.0
      %5861 = vmatpush1.msra.mxu0 0.0
      %5862 = vmatprep.subr.mxu0 0.0
      %5863 = vmatpush1.msra.mxu0 0.0
      %5864 = vmatprep.subr.mxu0 0.0
      %5865 = vmatpush1.msra.mxu0 0.0
      %5866 = vmatprep.subr.mxu0 0.0
      %5867 = vmatpush1.msra.mxu0 0.0
      %5868 = vmatprep.subr.mxu0 0.0
      %5869 = vmatpush1.msra.mxu0 0.0
      %5870 = vmatprep.subr.mxu0 0.0
      %5871 = vmatpush1.msra.mxu0 0.0
      %5872 = vmatprep.subr.mxu0 0.0
      %5873 = vmatpush1.msra.mxu0 0.0
      %5874 = vmatprep.subr.mxu0 0.0
      %5875 = vmatpush1.msra.mxu0 0.0
      %5876 = vmatprep.subr.mxu0 0.0
      %5877 = vmatpush1.msra.mxu0 0.0
      %5878 = vmatprep.subr.mxu0 0.0
      %5879 = vmatpush1.msra.mxu0 0.0
      %5880 = vmatprep.subr.mxu0 0.0
      %5881 = vmatpush1.msra.mxu0 0.0
      %5882 = vmatprep.subr.mxu0 0.0
      %5883 = vmatpush1.msra.mxu0 0.0
      %5884 = vmatprep.subr.mxu0 0.0
      %5885 = vmatpush1.msra.mxu0 0.0
      %5886 = vmatprep.subr.mxu0 0.0
      %5887 = vmatpush1.msra.mxu0 0.0
      %5888 = vmatprep.subr.mxu0 0.0
      %5889 = vmatpush1.msra.mxu0 0.0
      %5890 = vmatprep.subr.mxu0 0.0
      %5891 = vmatpush1.msra.mxu0 0.0
      %5892 = vmatprep.subr.mxu0 0.0
      %5893 = vmatpush1.msra.mxu0 0.0
      %5894 = vmatprep.subr.mxu0 0.0
      %5895 = vmatpush1.msra.mxu0 0.0
      %5896 = vmatprep.subr.mxu0 0.0
      %5897 = vmatpush1.msra.mxu0 0.0
      %5898 = vmatprep.subr.mxu0 0.0
      %5899 = vmatpush1.msra.mxu0 0.0
      %5900 = vmatprep.subr.mxu0 0.0
      %5901 = vmatpush1.msra.mxu0 0.0
      %5902 = vmatprep.mubr.f32.mxu0 0.0
      %5903 = vmatmul.mubr.f32.gmra.mrb[0].mxu0 %v5836
      %v5904 = vpop.f32.mrb[0].mxu0
      %v5905 = vadd.f32 0.0, %v5904
      %v5906 = vpop.f32.mrb[0].mxu0
      %v5907 = vadd.f32 0.0, %v5906
      %5908 = vdwg.mxu0
      %5909 = vmatprep.subr.mxu0 %v5830
      %5910 = vmatpush1.msra.mxu0 %v5829
      %5911 = vmatprep.subr.mxu0 0.0
      %5912 = vmatpush1.msra.mxu0 0.0
      %5913 = vmatprep.subr.mxu0 0.0
      %5914 = vmatpush1.msra.mxu0 0.0
      %5915 = vmatprep.subr.mxu0 0.0
      %5916 = vmatpush1.msra.mxu0 0.0
      %5917 = vmatprep.subr.mxu0 0.0
      %5918 = vmatpush1.msra.mxu0 0.0
      %5919 = vmatprep.subr.mxu0 0.0
      %5920 = vmatpush1.msra.mxu0 0.0
      %5921 = vmatprep.subr.mxu0 0.0
      %5922 = vmatpush1.msra.mxu0 0.0
      %5923 = vmatprep.subr.mxu0 0.0
      %5924 = vmatpush1.msra.mxu0 0.0
      %5925 = vmatprep.subr.mxu0 0.0
      %5926 = vmatpush1.msra.mxu0 0.0
      %5927 = vmatprep.subr.mxu0 0.0
      %5928 = vmatpush1.msra.mxu0 0.0
      %5929 = vmatprep.subr.mxu0 0.0
      %5930 = vmatpush1.msra.mxu0 0.0
      %5931 = vmatprep.subr.mxu0 0.0
      %5932 = vmatpush1.msra.mxu0 0.0
      %5933 = vmatprep.subr.mxu0 0.0
      %5934 = vmatpush1.msra.mxu0 0.0
      %5935 = vmatprep.subr.mxu0 0.0
      %5936 = vmatpush1.msra.mxu0 0.0
      %5937 = vmatprep.subr.mxu0 0.0
      %5938 = vmatpush1.msra.mxu0 0.0
      %5939 = vmatprep.subr.mxu0 0.0
      %5940 = vmatpush1.msra.mxu0 0.0
      %5941 = vmatprep.subr.mxu0 0.0
      %5942 = vmatpush1.msra.mxu0 0.0
      %5943 = vmatprep.subr.mxu0 0.0
      %5944 = vmatpush1.msra.mxu0 0.0
      %5945 = vmatprep.subr.mxu0 0.0
      %5946 = vmatpush1.msra.mxu0 0.0
      %5947 = vmatprep.subr.mxu0 0.0
      %5948 = vmatpush1.msra.mxu0 0.0
      %5949 = vmatprep.subr.mxu0 0.0
      %5950 = vmatpush1.msra.mxu0 0.0
      %5951 = vmatprep.subr.mxu0 0.0
      %5952 = vmatpush1.msra.mxu0 0.0
      %5953 = vmatprep.subr.mxu0 0.0
      %5954 = vmatpush1.msra.mxu0 0.0
      %5955 = vmatprep.subr.mxu0 0.0
      %5956 = vmatpush1.msra.mxu0 0.0
      %5957 = vmatprep.subr.mxu0 0.0
      %5958 = vmatpush1.msra.mxu0 0.0
      %5959 = vmatprep.subr.mxu0 0.0
      %5960 = vmatpush1.msra.mxu0 0.0
      %5961 = vmatprep.subr.mxu0 0.0
      %5962 = vmatpush1.msra.mxu0 0.0
      %5963 = vmatprep.subr.mxu0 0.0
      %5964 = vmatpush1.msra.mxu0 0.0
      %5965 = vmatprep.subr.mxu0 0.0
      %5966 = vmatpush1.msra.mxu0 0.0
      %5967 = vmatprep.subr.mxu0 0.0
      %5968 = vmatpush1.msra.mxu0 0.0
      %5969 = vmatprep.subr.mxu0 0.0
      %5970 = vmatpush1.msra.mxu0 0.0
      %5971 = vmatprep.subr.mxu0 0.0
      %5972 = vmatpush1.msra.mxu0 0.0
      %5973 = vmatprep.mubr.f32.mxu0 0.0
      %5974 = vmatmul.mubr.f32.gmra.mrb[0].mxu0 %v5836
      %v5975 = vpop.f32.mrb[0].mxu0
      %v5976 = vadd.f32 0.0, %v5975
      %v5977 = vpop.f32.mrb[0].mxu0
      %v5978 = vadd.f32 0.0, %v5977
      %5979 = vdwg.mxu0
      %v5980 = vadd.f32 %v5800, %v5905
      %v5981 = vadd.f32 %v5801, %v5907
      %v5982 = vadd.f32 %v5802, %v5976
      %v5983 = vadd.f32 %v5803, %v5978
      %s5984 = scalar_lea.vmem %s8, 32
      %v5985 = vld [vmem:[%s5984] sm:$0xff]
      %5986 = vrot.lane.b32.xlu0 %v5804, 59
      %v5987 = vpop.permute.xlu0 %5986
      %5988 = vrot.lane.b32.xlu0 %v5805, 59
      %v5989 = vpop.permute.xlu0 %5988
      %5990 = vrot.lane.b32.xlu0 %v5806, 59
      %v5991 = vpop.permute.xlu0 %5990
      %5992 = vrot.lane.b32.xlu0 %v5807, 59
      %v5993 = vpop.permute.xlu0 %5992
      %5994 = vrot.lane.b32.xlu0 %v5808, 59
      %v5995 = vpop.permute.xlu0 %5994
      %v5996 = vsel %vm1246, %v5987, %v5989
      %v5997 = vsel %vm1246, %v5989, %v5991
      %v5998 = vsel %vm1246, %v5991, %v5993
      %v5999 = vsel %vm1246, %v5993, %v5995
      %v6005 = vsel %vm2205, %v5985, 0
      %6007 = vmatprep.subr.mxu0 %v5997
      %6008 = vmatpush1.msra.mxu0 %v5996
      %6009 = vmatprep.subr.mxu0 0.0
      %6010 = vmatpush1.msra.mxu0 0.0
      %6011 = vmatprep.subr.mxu0 0.0
      %6012 = vmatpush1.msra.mxu0 0.0
      %6013 = vmatprep.subr.mxu0 0.0
      %6014 = vmatpush1.msra.mxu0 0.0
      %6015 = vmatprep.subr.mxu0 0.0
      %6016 = vmatpush1.msra.mxu0 0.0
      %6017 = vmatprep.subr.mxu0 0.0
      %6018 = vmatpush1.msra.mxu0 0.0
      %6019 = vmatprep.subr.mxu0 0.0
      %6020 = vmatpush1.msra.mxu0 0.0
      %6021 = vmatprep.subr.mxu0 0.0
      %6022 = vmatpush1.msra.mxu0 0.0
      %6023 = vmatprep.subr.mxu0 0.0
      %6024 = vmatpush1.msra.mxu0 0.0
      %6025 = vmatprep.subr.mxu0 0.0
      %6026 = vmatpush1.msra.mxu0 0.0
      %6027 = vmatprep.subr.mxu0 0.0
      %6028 = vmatpush1.msra.mxu0 0.0
      %6029 = vmatprep.subr.mxu0 0.0
      %6030 = vmatpush1.msra.mxu0 0.0
      %6031 = vmatprep.subr.mxu0 0.0
      %6032 = vmatpush1.msra.mxu0 0.0
      %6033 = vmatprep.subr.mxu0 0.0
      %6034 = vmatpush1.msra.mxu0 0.0
      %6035 = vmatprep.subr.mxu0 0.0
      %6036 = vmatpush1.msra.mxu0 0.0
      %6037 = vmatprep.subr.mxu0 0.0
      %6038 = vmatpush1.msra.mxu0 0.0
      %6039 = vmatprep.subr.mxu0 0.0
      %6040 = vmatpush1.msra.mxu0 0.0
      %6041 = vmatprep.subr.mxu0 0.0
      %6042 = vmatpush1.msra.mxu0 0.0
      %6043 = vmatprep.subr.mxu0 0.0
      %6044 = vmatpush1.msra.mxu0 0.0
      %6045 = vmatprep.subr.mxu0 0.0
      %6046 = vmatpush1.msra.mxu0 0.0
      %6047 = vmatprep.subr.mxu0 0.0
      %6048 = vmatpush1.msra.mxu0 0.0
      %6049 = vmatprep.subr.mxu0 0.0
      %6050 = vmatpush1.msra.mxu0 0.0
      %6051 = vmatprep.subr.mxu0 0.0
      %6052 = vmatpush1.msra.mxu0 0.0
      %6053 = vmatprep.subr.mxu0 0.0
      %6054 = vmatpush1.msra.mxu0 0.0
      %6055 = vmatprep.subr.mxu0 0.0
      %6056 = vmatpush1.msra.mxu0 0.0
      %6057 = vmatprep.subr.mxu0 0.0
      %6058 = vmatpush1.msra.mxu0 0.0
      %6059 = vmatprep.subr.mxu0 0.0
      %6060 = vmatpush1.msra.mxu0 0.0
      %6061 = vmatprep.subr.mxu0 0.0
      %6062 = vmatpush1.msra.mxu0 0.0
      %6063 = vmatprep.subr.mxu0 0.0
      %6064 = vmatpush1.msra.mxu0 0.0
      %6065 = vmatprep.subr.mxu0 0.0
      %6066 = vmatpush1.msra.mxu0 0.0
      %6067 = vmatprep.subr.mxu0 0.0
      %6068 = vmatpush1.msra.mxu0 0.0
      %6069 = vmatprep.subr.mxu0 0.0
      %6070 = vmatpush1.msra.mxu0 0.0
      %6071 = vmatprep.mubr.f32.mxu0 0.0
      %6072 = vmatmul.mubr.f32.gmra.mrb[0].mxu0 %v6005
      %v6073 = vpop.f32.mrb[0].mxu0
      %v6074 = vadd.f32 0.0, %v6073
      %v6075 = vpop.f32.mrb[0].mxu0
      %v6076 = vadd.f32 0.0, %v6075
      %6077 = vdwg.mxu0
      %6078 = vmatprep.subr.mxu0 %v5999
      %6079 = vmatpush1.msra.mxu0 %v5998
      %6080 = vmatprep.subr.mxu0 0.0
      %6081 = vmatpush1.msra.mxu0 0.0
      %6082 = vmatprep.subr.mxu0 0.0
      %6083 = vmatpush1.msra.mxu0 0.0
      %6084 = vmatprep.subr.mxu0 0.0
      %6085 = vmatpush1.msra.mxu0 0.0
      %6086 = vmatprep.subr.mxu0 0.0
      %6087 = vmatpush1.msra.mxu0 0.0
      %6088 = vmatprep.subr.mxu0 0.0
      %6089 = vmatpush1.msra.mxu0 0.0
      %6090 = vmatprep.subr.mxu0 0.0
      %6091 = vmatpush1.msra.mxu0 0.0
      %6092 = vmatprep.subr.mxu0 0.0
      %6093 = vmatpush1.msra.mxu0 0.0
      %6094 = vmatprep.subr.mxu0 0.0
      %6095 = vmatpush1.msra.mxu0 0.0
      %6096 = vmatprep.subr.mxu0 0.0
      %6097 = vmatpush1.msra.mxu0 0.0
      %6098 = vmatprep.subr.mxu0 0.0
      %6099 = vmatpush1.msra.mxu0 0.0
      %6100 = vmatprep.subr.mxu0 0.0
      %6101 = vmatpush1.msra.mxu0 0.0
      %6102 = vmatprep.subr.mxu0 0.0
      %6103 = vmatpush1.msra.mxu0 0.0
      %6104 = vmatprep.subr.mxu0 0.0
      %6105 = vmatpush1.msra.mxu0 0.0
      %6106 = vmatprep.subr.mxu0 0.0
      %6107 = vmatpush1.msra.mxu0 0.0
      %6108 = vmatprep.subr.mxu0 0.0
      %6109 = vmatpush1.msra.mxu0 0.0
      %6110 = vmatprep.subr.mxu0 0.0
      %6111 = vmatpush1.msra.mxu0 0.0
      %6112 = vmatprep.subr.mxu0 0.0
      %6113 = vmatpush1.msra.mxu0 0.0
      %6114 = vmatprep.subr.mxu0 0.0
      %6115 = vmatpush1.msra.mxu0 0.0
      %6116 = vmatprep.subr.mxu0 0.0
      %6117 = vmatpush1.msra.mxu0 0.0
      %6118 = vmatprep.subr.mxu0 0.0
      %6119 = vmatpush1.msra.mxu0 0.0
      %6120 = vmatprep.subr.mxu0 0.0
      %6121 = vmatpush1.msra.mxu0 0.0
      %6122 = vmatprep.subr.mxu0 0.0
      %6123 = vmatpush1.msra.mxu0 0.0
      %6124 = vmatprep.subr.mxu0 0.0
      %6125 = vmatpush1.msra.mxu0 0.0
      %6126 = vmatprep.subr.mxu0 0.0
      %6127 = vmatpush1.msra.mxu0 0.0
      %6128 = vmatprep.subr.mxu0 0.0
      %6129 = vmatpush1.msra.mxu0 0.0
      %6130 = vmatprep.subr.mxu0 0.0
      %6131 = vmatpush1.msra.mxu0 0.0
      %6132 = vmatprep.subr.mxu0 0.0
      %6133 = vmatpush1.msra.mxu0 0.0
      %6134 = vmatprep.subr.mxu0 0.0
      %6135 = vmatpush1.msra.mxu0 0.0
      %6136 = vmatprep.subr.mxu0 0.0
      %6137 = vmatpush1.msra.mxu0 0.0
      %6138 = vmatprep.subr.mxu0 0.0
      %6139 = vmatpush1.msra.mxu0 0.0
      %6140 = vmatprep.subr.mxu0 0.0
      %6141 = vmatpush1.msra.mxu0 0.0
      %6142 = vmatprep.mubr.f32.mxu0 0.0
      %6143 = vmatmul.mubr.f32.gmra.mrb[0].mxu0 %v6005
      %v6144 = vpop.f32.mrb[0].mxu0
      %v6145 = vadd.f32 0.0, %v6144
      %v6146 = vpop.f32.mrb[0].mxu0
      %v6147 = vadd.f32 0.0, %v6146
      %6148 = vdwg.mxu0
      %v6149 = vadd.f32 %v5980, %v6074
      %v6150 = vadd.f32 %v5981, %v6076
      %v6151 = vadd.f32 %v5982, %v6145
      %v6152 = vadd.f32 %v5983, %v6147
      %s6153 = scalar_lea.vmem %s8, 40
      %v6154 = vld [vmem:[%s6153] sm:$0xff]
      %6155 = vrot.lane.b32.xlu0 %v5804, 56
      %v6156 = vpop.permute.xlu0 %6155
      %6157 = vrot.lane.b32.xlu0 %v5805, 56
      %v6158 = vpop.permute.xlu0 %6157
      %6159 = vrot.lane.b32.xlu0 %v5806, 56
      %v6160 = vpop.permute.xlu0 %6159
      %6161 = vrot.lane.b32.xlu0 %v5807, 56
      %v6162 = vpop.permute.xlu0 %6161
      %6163 = vrot.lane.b32.xlu0 %v5808, 56
      %v6164 = vpop.permute.xlu0 %6163
      %vm6165 = vcmask 457728
      %v6166 = vsel %vm6165, %v6156, %v6158
      %v6167 = vsel %vm6165, %v6158, %v6160
      %v6168 = vsel %vm6165, %v6160, %v6162
      %v6169 = vsel %vm6165, %v6162, %v6164
      %v6175 = vsel %vm2205, %v6154, 0
      %6177 = vmatprep.subr.mxu0 %v6167
      %6178 = vmatpush1.msra.mxu0 %v6166
      %6179 = vmatprep.subr.mxu0 0.0
      %6180 = vmatpush1.msra.mxu0 0.0
      %6181 = vmatprep.subr.mxu0 0.0
      %6182 = vmatpush1.msra.mxu0 0.0
      %6183 = vmatprep.subr.mxu0 0.0
      %6184 = vmatpush1.msra.mxu0 0.0
      %6185 = vmatprep.subr.mxu0 0.0
      %6186 = vmatpush1.msra.mxu0 0.0
      %6187 = vmatprep.subr.mxu0 0.0
      %6188 = vmatpush1.msra.mxu0 0.0
      %6189 = vmatprep.subr.mxu0 0.0
      %6190 = vmatpush1.msra.mxu0 0.0
      %6191 = vmatprep.subr.mxu0 0.0
      %6192 = vmatpush1.msra.mxu0 0.0
      %6193 = vmatprep.subr.mxu0 0.0
      %6194 = vmatpush1.msra.mxu0 0.0
      %6195 = vmatprep.subr.mxu0 0.0
      %6196 = vmatpush1.msra.mxu0 0.0
      %6197 = vmatprep.subr.mxu0 0.0
      %6198 = vmatpush1.msra.mxu0 0.0
      %6199 = vmatprep.subr.mxu0 0.0
      %6200 = vmatpush1.msra.mxu0 0.0
      %6201 = vmatprep.subr.mxu0 0.0
      %6202 = vmatpush1.msra.mxu0 0.0
      %6203 = vmatprep.subr.mxu0 0.0
      %6204 = vmatpush1.msra.mxu0 0.0
      %6205 = vmatprep.subr.mxu0 0.0
      %6206 = vmatpush1.msra.mxu0 0.0
      %6207 = vmatprep.subr.mxu0 0.0
      %6208 = vmatpush1.msra.mxu0 0.0
      %6209 = vmatprep.subr.mxu0 0.0
      %6210 = vmatpush1.msra.mxu0 0.0
      %6211 = vmatprep.subr.mxu0 0.0
      %6212 = vmatpush1.msra.mxu0 0.0
      %6213 = vmatprep.subr.mxu0 0.0
      %6214 = vmatpush1.msra.mxu0 0.0
      %6215 = vmatprep.subr.mxu0 0.0
      %6216 = vmatpush1.msra.mxu0 0.0
      %6217 = vmatprep.subr.mxu0 0.0
      %6218 = vmatpush1.msra.mxu0 0.0
      %6219 = vmatprep.subr.mxu0 0.0
      %6220 = vmatpush1.msra.mxu0 0.0
      %6221 = vmatprep.subr.mxu0 0.0
      %6222 = vmatpush1.msra.mxu0 0.0
      %6223 = vmatprep.subr.mxu0 0.0
      %6224 = vmatpush1.msra.mxu0 0.0
      %6225 = vmatprep.subr.mxu0 0.0
      %6226 = vmatpush1.msra.mxu0 0.0
      %6227 = vmatprep.subr.mxu0 0.0
      %6228 = vmatpush1.msra.mxu0 0.0
      %6229 = vmatprep.subr.mxu0 0.0
      %6230 = vmatpush1.msra.mxu0 0.0
      %6231 = vmatprep.subr.mxu0 0.0
      %6232 = vmatpush1.msra.mxu0 0.0
      %6233 = vmatprep.subr.mxu0 0.0
      %6234 = vmatpush1.msra.mxu0 0.0
      %6235 = vmatprep.subr.mxu0 0.0
      %6236 = vmatpush1.msra.mxu0 0.0
      %6237 = vmatprep.subr.mxu0 0.0
      %6238 = vmatpush1.msra.mxu0 0.0
      %6239 = vmatprep.subr.mxu0 0.0
      %6240 = vmatpush1.msra.mxu0 0.0
      %6241 = vmatprep.mubr.f32.mxu0 0.0
      %6242 = vmatmul.mubr.f32.gmra.mrb[0].mxu0 %v6175
      %v6243 = vpop.f32.mrb[0].mxu0
      %v6244 = vadd.f32 0.0, %v6243
      %v6245 = vpop.f32.mrb[0].mxu0
      %v6246 = vadd.f32 0.0, %v6245
      %6247 = vdwg.mxu0
      %6248 = vmatprep.subr.mxu0 %v6169
      %6249 = vmatpush1.msra.mxu0 %v6168
      %6250 = vmatprep.subr.mxu0 0.0
      %6251 = vmatpush1.msra.mxu0 0.0
      %6252 = vmatprep.subr.mxu0 0.0
      %6253 = vmatpush1.msra.mxu0 0.0
      %6254 = vmatprep.subr.mxu0 0.0
      %6255 = vmatpush1.msra.mxu0 0.0
      %6256 = vmatprep.subr.mxu0 0.0
      %6257 = vmatpush1.msra.mxu0 0.0
      %6258 = vmatprep.subr.mxu0 0.0
      %6259 = vmatpush1.msra.mxu0 0.0
      %6260 = vmatprep.subr.mxu0 0.0
      %6261 = vmatpush1.msra.mxu0 0.0
      %6262 = vmatprep.subr.mxu0 0.0
      %6263 = vmatpush1.msra.mxu0 0.0
      %6264 = vmatprep.subr.mxu0 0.0
      %6265 = vmatpush1.msra.mxu0 0.0
      %6266 = vmatprep.subr.mxu0 0.0
      %6267 = vmatpush1.msra.mxu0 0.0
      %6268 = vmatprep.subr.mxu0 0.0
      %6269 = vmatpush1.msra.mxu0 0.0
      %6270 = vmatprep.subr.mxu0 0.0
      %6271 = vmatpush1.msra.mxu0 0.0
      %6272 = vmatprep.subr.mxu0 0.0
      %6273 = vmatpush1.msra.mxu0 0.0
      %6274 = vmatprep.subr.mxu0 0.0
      %6275 = vmatpush1.msra.mxu0 0.0
      %6276 = vmatprep.subr.mxu0 0.0
      %6277 = vmatpush1.msra.mxu0 0.0
      %6278 = vmatprep.subr.mxu0 0.0
      %6279 = vmatpush1.msra.mxu0 0.0
      %6280 = vmatprep.subr.mxu0 0.0
      %6281 = vmatpush1.msra.mxu0 0.0
      %6282 = vmatprep.subr.mxu0 0.0
      %6283 = vmatpush1.msra.mxu0 0.0
      %6284 = vmatprep.subr.mxu0 0.0
      %6285 = vmatpush1.msra.mxu0 0.0
      %6286 = vmatprep.subr.mxu0 0.0
      %6287 = vmatpush1.msra.mxu0 0.0
      %6288 = vmatprep.subr.mxu0 0.0
      %6289 = vmatpush1.msra.mxu0 0.0
      %6290 = vmatprep.subr.mxu0 0.0
      %6291 = vmatpush1.msra.mxu0 0.0
      %6292 = vmatprep.subr.mxu0 0.0
      %6293 = vmatpush1.msra.mxu0 0.0
      %6294 = vmatprep.subr.mxu0 0.0
      %6295 = vmatpush1.msra.mxu0 0.0
      %6296 = vmatprep.subr.mxu0 0.0
      %6297 = vmatpush1.msra.mxu0 0.0
      %6298 = vmatprep.subr.mxu0 0.0
      %6299 = vmatpush1.msra.mxu0 0.0
      %6300 = vmatprep.subr.mxu0 0.0
      %6301 = vmatpush1.msra.mxu0 0.0
      %6302 = vmatprep.subr.mxu0 0.0
      %6303 = vmatpush1.msra.mxu0 0.0
      %6304 = vmatprep.subr.mxu0 0.0
      %6305 = vmatpush1.msra.mxu0 0.0
      %6306 = vmatprep.subr.mxu0 0.0
      %6307 = vmatpush1.msra.mxu0 0.0
      %6308 = vmatprep.subr.mxu0 0.0
      %6309 = vmatpush1.msra.mxu0 0.0
      %6310 = vmatprep.subr.mxu0 0.0
      %6311 = vmatpush1.msra.mxu0 0.0
      %6312 = vmatprep.mubr.f32.mxu0 0.0
      %6313 = vmatmul.mubr.f32.gmra.mrb[0].mxu0 %v6175
      %v6314 = vpop.f32.mrb[0].mxu0
      %v6315 = vadd.f32 0.0, %v6314
      %v6316 = vpop.f32.mrb[0].mxu0
      %v6317 = vadd.f32 0.0, %v6316
      %6318 = vdwg.mxu0
      %v6319 = vadd.f32 %v6149, %v6244
      %v6320 = vadd.f32 %v6150, %v6246
      %v6321 = vadd.f32 %v6151, %v6315
      %v6322 = vadd.f32 %v6152, %v6317
      %s6323 = scalar_lea.vmem %s8, 48
      %v6324 = vld [vmem:[%s6323] sm:$0xff]
      %6325 = vrot.lane.b32.xlu0 %v5805, 124
      %v6326 = vpop.permute.xlu0 %6325
      %6327 = vrot.lane.b32.xlu0 %v5806, 124
      %v6328 = vpop.permute.xlu0 %6327
      %6329 = vrot.lane.b32.xlu0 %v5807, 124
      %v6330 = vpop.permute.xlu0 %6329
      %6331 = vrot.lane.b32.xlu0 %v5808, 124
      %v6332 = vpop.permute.xlu0 %6331
      %vm6333 = vcmask 1014784
      %v6334 = vsel %vm6333, %v6326, %v6328
      %v6335 = vsel %vm6333, %v6328, %v6330
      %v6336 = vsel %vm6333, %v6330, %v6332
      %v6342 = vsel %vm2205, %v6324, 0
      %6344 = vmatprep.subr.mxu0 %v6335
      %6345 = vmatpush1.msra.mxu0 %v6334
      %6346 = vmatprep.subr.mxu0 0.0
      %6347 = vmatpush1.msra.mxu0 0.0
      %6348 = vmatprep.subr.mxu0 0.0
      %6349 = vmatpush1.msra.mxu0 0.0
      %6350 = vmatprep.subr.mxu0 0.0
      %6351 = vmatpush1.msra.mxu0 0.0
      %6352 = vmatprep.subr.mxu0 0.0
      %6353 = vmatpush1.msra.mxu0 0.0
      %6354 = vmatprep.subr.mxu0 0.0
      %6355 = vmatpush1.msra.mxu0 0.0
      %6356 = vmatprep.subr.mxu0 0.0
      %6357 = vmatpush1.msra.mxu0 0.0
      %6358 = vmatprep.subr.mxu0 0.0
      %6359 = vmatpush1.msra.mxu0 0.0
      %6360 = vmatprep.subr.mxu0 0.0
      %6361 = vmatpush1.msra.mxu0 0.0
      %6362 = vmatprep.subr.mxu0 0.0
      %6363 = vmatpush1.msra.mxu0 0.0
      %6364 = vmatprep.subr.mxu0 0.0
      %6365 = vmatpush1.msra.mxu0 0.0
      %6366 = vmatprep.subr.mxu0 0.0
      %6367 = vmatpush1.msra.mxu0 0.0
      %6368 = vmatprep.subr.mxu0 0.0
      %6369 = vmatpush1.msra.mxu0 0.0
      %6370 = vmatprep.subr.mxu0 0.0
      %6371 = vmatpush1.msra.mxu0 0.0
      %6372 = vmatprep.subr.mxu0 0.0
      %6373 = vmatpush1.msra.mxu0 0.0
      %6374 = vmatprep.subr.mxu0 0.0
      %6375 = vmatpush1.msra.mxu0 0.0
      %6376 = vmatprep.subr.mxu0 0.0
      %6377 = vmatpush1.msra.mxu0 0.0
      %6378 = vmatprep.subr.mxu0 0.0
      %6379 = vmatpush1.msra.mxu0 0.0
      %6380 = vmatprep.subr.mxu0 0.0
      %6381 = vmatpush1.msra.mxu0 0.0
      %6382 = vmatprep.subr.mxu0 0.0
      %6383 = vmatpush1.msra.mxu0 0.0
      %6384 = vmatprep.subr.mxu0 0.0
      %6385 = vmatpush1.msra.mxu0 0.0
      %6386 = vmatprep.subr.mxu0 0.0
      %6387 = vmatpush1.msra.mxu0 0.0
      %6388 = vmatprep.subr.mxu0 0.0
      %6389 = vmatpush1.msra.mxu0 0.0
      %6390 = vmatprep.subr.mxu0 0.0
      %6391 = vmatpush1.msra.mxu0 0.0
      %6392 = vmatprep.subr.mxu0 0.0
      %6393 = vmatpush1.msra.mxu0 0.0
      %6394 = vmatprep.subr.mxu0 0.0
      %6395 = vmatpush1.msra.mxu0 0.0
      %6396 = vmatprep.subr.mxu0 0.0
      %6397 = vmatpush1.msra.mxu0 0.0
      %6398 = vmatprep.subr.mxu0 0.0
      %6399 = vmatpush1.msra.mxu0 0.0
      %6400 = vmatprep.subr.mxu0 0.0
      %6401 = vmatpush1.msra.mxu0 0.0
      %6402 = vmatprep.subr.mxu0 0.0
      %6403 = vmatpush1.msra.mxu0 0.0
      %6404 = vmatprep.subr.mxu0 0.0
      %6405 = vmatpush1.msra.mxu0 0.0
      %6406 = vmatprep.subr.mxu0 0.0
      %6407 = vmatpush1.msra.mxu0 0.0
      %6408 = vmatprep.mubr.f32.mxu0 0.0
      %6409 = vmatmul.mubr.f32.gmra.mrb[0].mxu0 %v6342
      %v6410 = vpop.f32.mrb[0].mxu0
      %v6411 = vadd.f32 0.0, %v6410
      %v6412 = vpop.f32.mrb[0].mxu0
      %v6413 = vadd.f32 0.0, %v6412
      %6414 = vdwg.mxu0
      %6415 = vmatprep.subr.mxu0 %v6332
      %6416 = vmatpush1.msra.mxu0 %v6336
      %6417 = vmatprep.subr.mxu0 0.0
      %6418 = vmatpush1.msra.mxu0 0.0
      %6419 = vmatprep.subr.mxu0 0.0
      %6420 = vmatpush1.msra.mxu0 0.0
      %6421 = vmatprep.subr.mxu0 0.0
      %6422 = vmatpush1.msra.mxu0 0.0
      %6423 = vmatprep.subr.mxu0 0.0
      %6424 = vmatpush1.msra.mxu0 0.0
      %6425 = vmatprep.subr.mxu0 0.0
      %6426 = vmatpush1.msra.mxu0 0.0
      %6427 = vmatprep.subr.mxu0 0.0
      %6428 = vmatpush1.msra.mxu0 0.0
      %6429 = vmatprep.subr.mxu0 0.0
      %6430 = vmatpush1.msra.mxu0 0.0
      %6431 = vmatprep.subr.mxu0 0.0
      %6432 = vmatpush1.msra.mxu0 0.0
      %6433 = vmatprep.subr.mxu0 0.0
      %6434 = vmatpush1.msra.mxu0 0.0
      %6435 = vmatprep.subr.mxu0 0.0
      %6436 = vmatpush1.msra.mxu0 0.0
      %6437 = vmatprep.subr.mxu0 0.0
      %6438 = vmatpush1.msra.mxu0 0.0
      %6439 = vmatprep.subr.mxu0 0.0
      %6440 = vmatpush1.msra.mxu0 0.0
      %6441 = vmatprep.subr.mxu0 0.0
      %6442 = vmatpush1.msra.mxu0 0.0
      %6443 = vmatprep.subr.mxu0 0.0
      %6444 = vmatpush1.msra.mxu0 0.0
      %6445 = vmatprep.subr.mxu0 0.0
      %6446 = vmatpush1.msra.mxu0 0.0
      %6447 = vmatprep.subr.mxu0 0.0
      %6448 = vmatpush1.msra.mxu0 0.0
      %6449 = vmatprep.subr.mxu0 0.0
      %6450 = vmatpush1.msra.mxu0 0.0
      %6451 = vmatprep.subr.mxu0 0.0
      %6452 = vmatpush1.msra.mxu0 0.0
      %6453 = vmatprep.subr.mxu0 0.0
      %6454 = vmatpush1.msra.mxu0 0.0
      %6455 = vmatprep.subr.mxu0 0.0
      %6456 = vmatpush1.msra.mxu0 0.0
      %6457 = vmatprep.subr.mxu0 0.0
      %6458 = vmatpush1.msra.mxu0 0.0
      %6459 = vmatprep.subr.mxu0 0.0
      %6460 = vmatpush1.msra.mxu0 0.0
      %6461 = vmatprep.subr.mxu0 0.0
      %6462 = vmatpush1.msra.mxu0 0.0
      %6463 = vmatprep.subr.mxu0 0.0
      %6464 = vmatpush1.msra.mxu0 0.0
      %6465 = vmatprep.subr.mxu0 0.0
      %6466 = vmatpush1.msra.mxu0 0.0
      %6467 = vmatprep.subr.mxu0 0.0
      %6468 = vmatpush1.msra.mxu0 0.0
      %6469 = vmatprep.subr.mxu0 0.0
      %6470 = vmatpush1.msra.mxu0 0.0
      %6471 = vmatprep.subr.mxu0 0.0
      %6472 = vmatpush1.msra.mxu0 0.0
      %6473 = vmatprep.subr.mxu0 0.0
      %6474 = vmatpush1.msra.mxu0 0.0
      %6475 = vmatprep.subr.mxu0 0.0
      %6476 = vmatpush1.msra.mxu0 0.0
      %6477 = vmatprep.subr.mxu0 0.0
      %6478 = vmatpush1.msra.mxu0 0.0
      %6479 = vmatprep.mubr.f32.mxu0 0.0
      %6480 = vmatmul.mubr.f32.gmra.mrb[0].mxu0 %v6342
      %v6481 = vpop.f32.mrb[0].mxu0
      %v6482 = vadd.f32 0.0, %v6481
      %v6483 = vpop.f32.mrb[0].mxu0
      %v6484 = vadd.f32 0.0, %v6483
      %6485 = vdwg.mxu0
      %v6486 = vadd.f32 %v6319, %v6411
      %v6487 = vadd.f32 %v6320, %v6413
      %v6488 = vadd.f32 %v6321, %v6482
      %v6489 = vadd.f32 %v6322, %v6484
      %s6490 = scalar_lea.vmem %s8, 56
      %v6491 = vld [vmem:[%s6490] sm:$0xff]
      %6492 = vrot.lane.b32.xlu0 %v5805, 121
      %v6493 = vpop.permute.xlu0 %6492
      %6494 = vrot.lane.b32.xlu0 %v5806, 121
      %v6495 = vpop.permute.xlu0 %6494
      %6496 = vrot.lane.b32.xlu0 %v5807, 121
      %v6497 = vpop.permute.xlu0 %6496
      %6498 = vrot.lane.b32.xlu0 %v5808, 121
      %v6499 = vpop.permute.xlu0 %6498
      %vm6500 = vcmask 990208
      %v6501 = vsel %vm6500, %v6493, %v6495
      %v6502 = vsel %vm6500, %v6495, %v6497
      %v6503 = vsel %vm6500, %v6497, %v6499
      %v6509 = vsel %vm2205, %v6491, 0
      %6511 = vmatprep.subr.mxu0 %v6502
      %6512 = vmatpush1.msra.mxu0 %v6501
      %6513 = vmatprep.subr.mxu0 0.0
      %6514 = vmatpush1.msra.mxu0 0.0
      %6515 = vmatprep.subr.mxu0 0.0
      %6516 = vmatpush1.msra.mxu0 0.0
      %6517 = vmatprep.subr.mxu0 0.0
      %6518 = vmatpush1.msra.mxu0 0.0
      %6519 = vmatprep.subr.mxu0 0.0
      %6520 = vmatpush1.msra.mxu0 0.0
      %6521 = vmatprep.subr.mxu0 0.0
      %6522 = vmatpush1.msra.mxu0 0.0
      %6523 = vmatprep.subr.mxu0 0.0
      %6524 = vmatpush1.msra.mxu0 0.0
      %6525 = vmatprep.subr.mxu0 0.0
      %6526 = vmatpush1.msra.mxu0 0.0
      %6527 = vmatprep.subr.mxu0 0.0
      %6528 = vmatpush1.msra.mxu0 0.0
      %6529 = vmatprep.subr.mxu0 0.0
      %6530 = vmatpush1.msra.mxu0 0.0
      %6531 = vmatprep.subr.mxu0 0.0
      %6532 = vmatpush1.msra.mxu0 0.0
      %6533 = vmatprep.subr.mxu0 0.0
      %6534 = vmatpush1.msra.mxu0 0.0
      %6535 = vmatprep.subr.mxu0 0.0
      %6536 = vmatpush1.msra.mxu0 0.0
      %6537 = vmatprep.subr.mxu0 0.0
      %6538 = vmatpush1.msra.mxu0 0.0
      %6539 = vmatprep.subr.mxu0 0.0
      %6540 = vmatpush1.msra.mxu0 0.0
      %6541 = vmatprep.subr.mxu0 0.0
      %6542 = vmatpush1.msra.mxu0 0.0
      %6543 = vmatprep.subr.mxu0 0.0
      %6544 = vmatpush1.msra.mxu0 0.0
      %6545 = vmatprep.subr.mxu0 0.0
      %6546 = vmatpush1.msra.mxu0 0.0
      %6547 = vmatprep.subr.mxu0 0.0
      %6548 = vmatpush1.msra.mxu0 0.0
      %6549 = vmatprep.subr.mxu0 0.0
      %6550 = vmatpush1.msra.mxu0 0.0
      %6551 = vmatprep.subr.mxu0 0.0
      %6552 = vmatpush1.msra.mxu0 0.0
      %6553 = vmatprep.subr.mxu0 0.0
      %6554 = vmatpush1.msra.mxu0 0.0
      %6555 = vmatprep.subr.mxu0 0.0
      %6556 = vmatpush1.msra.mxu0 0.0
      %6557 = vmatprep.subr.mxu0 0.0
      %6558 = vmatpush1.msra.mxu0 0.0
      %6559 = vmatprep.subr.mxu0 0.0
      %6560 = vmatpush1.msra.mxu0 0.0
      %6561 = vmatprep.subr.mxu0 0.0
      %6562 = vmatpush1.msra.mxu0 0.0
      %6563 = vmatprep.subr.mxu0 0.0
      %6564 = vmatpush1.msra.mxu0 0.0
      %6565 = vmatprep.subr.mxu0 0.0
      %6566 = vmatpush1.msra.mxu0 0.0
      %6567 = vmatprep.subr.mxu0 0.0
      %6568 = vmatpush1.msra.mxu0 0.0
      %6569 = vmatprep.subr.mxu0 0.0
      %6570 = vmatpush1.msra.mxu0 0.0
      %6571 = vmatprep.subr.mxu0 0.0
      %6572 = vmatpush1.msra.mxu0 0.0
      %6573 = vmatprep.subr.mxu0 0.0
      %6574 = vmatpush1.msra.mxu0 0.0
      %6575 = vmatprep.mubr.f32.mxu0 0.0
      %6576 = vmatmul.mubr.f32.gmra.mrb[0].mxu0 %v6509
      %v6577 = vpop.f32.mrb[0].mxu0
      %v6578 = vadd.f32 0.0, %v6577
      %v6579 = vpop.f32.mrb[0].mxu0
      %v6580 = vadd.f32 0.0, %v6579
      %6581 = vdwg.mxu0
      %6582 = vmatprep.subr.mxu0 %v6499
      %6583 = vmatpush1.msra.mxu0 %v6503
      %6584 = vmatprep.subr.mxu0 0.0
      %6585 = vmatpush1.msra.mxu0 0.0
      %6586 = vmatprep.subr.mxu0 0.0
      %6587 = vmatpush1.msra.mxu0 0.0
      %6588 = vmatprep.subr.mxu0 0.0
      %6589 = vmatpush1.msra.mxu0 0.0
      %6590 = vmatprep.subr.mxu0 0.0
      %6591 = vmatpush1.msra.mxu0 0.0
      %6592 = vmatprep.subr.mxu0 0.0
      %6593 = vmatpush1.msra.mxu0 0.0
      %6594 = vmatprep.subr.mxu0 0.0
      %6595 = vmatpush1.msra.mxu0 0.0
      %6596 = vmatprep.subr.mxu0 0.0
      %6597 = vmatpush1.msra.mxu0 0.0
      %6598 = vmatprep.subr.mxu0 0.0
      %6599 = vmatpush1.msra.mxu0 0.0
      %6600 = vmatprep.subr.mxu0 0.0
      %6601 = vmatpush1.msra.mxu0 0.0
      %6602 = vmatprep.subr.mxu0 0.0
      %6603 = vmatpush1.msra.mxu0 0.0
      %6604 = vmatprep.subr.mxu0 0.0
      %6605 = vmatpush1.msra.mxu0 0.0
      %6606 = vmatprep.subr.mxu0 0.0
      %6607 = vmatpush1.msra.mxu0 0.0
      %6608 = vmatprep.subr.mxu0 0.0
      %6609 = vmatpush1.msra.mxu0 0.0
      %6610 = vmatprep.subr.mxu0 0.0
      %6611 = vmatpush1.msra.mxu0 0.0
      %6612 = vmatprep.subr.mxu0 0.0
      %6613 = vmatpush1.msra.mxu0 0.0
      %6614 = vmatprep.subr.mxu0 0.0
      %6615 = vmatpush1.msra.mxu0 0.0
      %6616 = vmatprep.subr.mxu0 0.0
      %6617 = vmatpush1.msra.mxu0 0.0
      %6618 = vmatprep.subr.mxu0 0.0
      %6619 = vmatpush1.msra.mxu0 0.0
      %6620 = vmatprep.subr.mxu0 0.0
      %6621 = vmatpush1.msra.mxu0 0.0
      %6622 = vmatprep.subr.mxu0 0.0
      %6623 = vmatpush1.msra.mxu0 0.0
      %6624 = vmatprep.subr.mxu0 0.0
      %6625 = vmatpush1.msra.mxu0 0.0
      %6626 = vmatprep.subr.mxu0 0.0
      %6627 = vmatpush1.msra.mxu0 0.0
      %6628 = vmatprep.subr.mxu0 0.0
      %6629 = vmatpush1.msra.mxu0 0.0
      %6630 = vmatprep.subr.mxu0 0.0
      %6631 = vmatpush1.msra.mxu0 0.0
      %6632 = vmatprep.subr.mxu0 0.0
      %6633 = vmatpush1.msra.mxu0 0.0
      %6634 = vmatprep.subr.mxu0 0.0
      %6635 = vmatpush1.msra.mxu0 0.0
      %6636 = vmatprep.subr.mxu0 0.0
      %6637 = vmatpush1.msra.mxu0 0.0
      %6638 = vmatprep.subr.mxu0 0.0
      %6639 = vmatpush1.msra.mxu0 0.0
      %6640 = vmatprep.subr.mxu0 0.0
      %6641 = vmatpush1.msra.mxu0 0.0
      %6642 = vmatprep.subr.mxu0 0.0
      %6643 = vmatpush1.msra.mxu0 0.0
      %6644 = vmatprep.subr.mxu0 0.0
      %6645 = vmatpush1.msra.mxu0 0.0
      %6646 = vmatprep.mubr.f32.mxu0 0.0
      %6647 = vmatmul.mubr.f32.gmra.mrb[0].mxu0 %v6509
      %v6648 = vpop.f32.mrb[0].mxu0
      %v6649 = vadd.f32 0.0, %v6648
      %v6650 = vpop.f32.mrb[0].mxu0
      %v6651 = vadd.f32 0.0, %v6650
      %6652 = vdwg.mxu0
      %v6653 = vadd.f32 %v6486, %v6578
      %v6654 = vadd.f32 %v6487, %v6580
      %v6655 = vadd.f32 %v6488, %v6649
      %v6656 = vadd.f32 %v6489, %v6651
      %s6657 = scalar_lea.vmem %s8, 64
      %v6658 = vld [vmem:[%s6657] sm:$0xff]
      %6659 = vrot.lane.b32.xlu0 %v5805, 118
      %v6660 = vpop.permute.xlu0 %6659
      %6661 = vrot.lane.b32.xlu0 %v5806, 118
      %v6662 = vpop.permute.xlu0 %6661
      %6663 = vrot.lane.b32.xlu0 %v5807, 118
      %v6664 = vpop.permute.xlu0 %6663
      %6665 = vrot.lane.b32.xlu0 %v5808, 118
      %v6666 = vpop.permute.xlu0 %6665
      %vm6667 = vcmask 965632
      %v6668 = vsel %vm6667, %v6660, %v6662
      %v6669 = vsel %vm6667, %v6662, %v6664
      %v6670 = vsel %vm6667, %v6664, %v6666
      %v6676 = vsel %vm2205, %v6658, 0
      %6678 = vmatprep.subr.mxu0 %v6669
      %6679 = vmatpush1.msra.mxu0 %v6668
      %6680 = vmatprep.subr.mxu0 0.0
      %6681 = vmatpush1.msra.mxu0 0.0
      %6682 = vmatprep.subr.mxu0 0.0
      %6683 = vmatpush1.msra.mxu0 0.0
      %6684 = vmatprep.subr.mxu0 0.0
      %6685 = vmatpush1.msra.mxu0 0.0
      %6686 = vmatprep.subr.mxu0 0.0
      %6687 = vmatpush1.msra.mxu0 0.0
      %6688 = vmatprep.subr.mxu0 0.0
      %6689 = vmatpush1.msra.mxu0 0.0
      %6690 = vmatprep.subr.mxu0 0.0
      %6691 = vmatpush1.msra.mxu0 0.0
      %6692 = vmatprep.subr.mxu0 0.0
      %6693 = vmatpush1.msra.mxu0 0.0
      %6694 = vmatprep.subr.mxu0 0.0
      %6695 = vmatpush1.msra.mxu0 0.0
      %6696 = vmatprep.subr.mxu0 0.0
      %6697 = vmatpush1.msra.mxu0 0.0
      %6698 = vmatprep.subr.mxu0 0.0
      %6699 = vmatpush1.msra.mxu0 0.0
      %6700 = vmatprep.subr.mxu0 0.0
      %6701 = vmatpush1.msra.mxu0 0.0
      %6702 = vmatprep.subr.mxu0 0.0
      %6703 = vmatpush1.msra.mxu0 0.0
      %6704 = vmatprep.subr.mxu0 0.0
      %6705 = vmatpush1.msra.mxu0 0.0
      %6706 = vmatprep.subr.mxu0 0.0
      %6707 = vmatpush1.msra.mxu0 0.0
      %6708 = vmatprep.subr.mxu0 0.0
      %6709 = vmatpush1.msra.mxu0 0.0
      %6710 = vmatprep.subr.mxu0 0.0
      %6711 = vmatpush1.msra.mxu0 0.0
      %6712 = vmatprep.subr.mxu0 0.0
      %6713 = vmatpush1.msra.mxu0 0.0
      %6714 = vmatprep.subr.mxu0 0.0
      %6715 = vmatpush1.msra.mxu0 0.0
      %6716 = vmatprep.subr.mxu0 0.0
      %6717 = vmatpush1.msra.mxu0 0.0
      %6718 = vmatprep.subr.mxu0 0.0
      %6719 = vmatpush1.msra.mxu0 0.0
      %6720 = vmatprep.subr.mxu0 0.0
      %6721 = vmatpush1.msra.mxu0 0.0
      %6722 = vmatprep.subr.mxu0 0.0
      %6723 = vmatpush1.msra.mxu0 0.0
      %6724 = vmatprep.subr.mxu0 0.0
      %6725 = vmatpush1.msra.mxu0 0.0
      %6726 = vmatprep.subr.mxu0 0.0
      %6727 = vmatpush1.msra.mxu0 0.0
      %6728 = vmatprep.subr.mxu0 0.0
      %6729 = vmatpush1.msra.mxu0 0.0
      %6730 = vmatprep.subr.mxu0 0.0
      %6731 = vmatpush1.msra.mxu0 0.0
      %6732 = vmatprep.subr.mxu0 0.0
      %6733 = vmatpush1.msra.mxu0 0.0
      %6734 = vmatprep.subr.mxu0 0.0
      %6735 = vmatpush1.msra.mxu0 0.0
      %6736 = vmatprep.subr.mxu0 0.0
      %6737 = vmatpush1.msra.mxu0 0.0
      %6738 = vmatprep.subr.mxu0 0.0
      %6739 = vmatpush1.msra.mxu0 0.0
      %6740 = vmatprep.subr.mxu0 0.0
      %6741 = vmatpush1.msra.mxu0 0.0
      %6742 = vmatprep.mubr.f32.mxu0 0.0
      %6743 = vmatmul.mubr.f32.gmra.mrb[0].mxu0 %v6676
      %v6744 = vpop.f32.mrb[0].mxu0
      %v6745 = vadd.f32 0.0, %v6744
      %v6746 = vpop.f32.mrb[0].mxu0
      %v6747 = vadd.f32 0.0, %v6746
      %6748 = vdwg.mxu0
      %6749 = vmatprep.subr.mxu0 %v6666
      %6750 = vmatpush1.msra.mxu0 %v6670
      %6751 = vmatprep.subr.mxu0 0.0
      %6752 = vmatpush1.msra.mxu0 0.0
      %6753 = vmatprep.subr.mxu0 0.0
      %6754 = vmatpush1.msra.mxu0 0.0
      %6755 = vmatprep.subr.mxu0 0.0
      %6756 = vmatpush1.msra.mxu0 0.0
      %6757 = vmatprep.subr.mxu0 0.0
      %6758 = vmatpush1.msra.mxu0 0.0
      %6759 = vmatprep.subr.mxu0 0.0
      %6760 = vmatpush1.msra.mxu0 0.0
      %6761 = vmatprep.subr.mxu0 0.0
      %6762 = vmatpush1.msra.mxu0 0.0
      %6763 = vmatprep.subr.mxu0 0.0
      %6764 = vmatpush1.msra.mxu0 0.0
      %6765 = vmatprep.subr.mxu0 0.0
      %6766 = vmatpush1.msra.mxu0 0.0
      %6767 = vmatprep.subr.mxu0 0.0
      %6768 = vmatpush1.msra.mxu0 0.0
      %6769 = vmatprep.subr.mxu0 0.0
      %6770 = vmatpush1.msra.mxu0 0.0
      %6771 = vmatprep.subr.mxu0 0.0
      %6772 = vmatpush1.msra.mxu0 0.0
      %6773 = vmatprep.subr.mxu0 0.0
      %6774 = vmatpush1.msra.mxu0 0.0
      %6775 = vmatprep.subr.mxu0 0.0
      %6776 = vmatpush1.msra.mxu0 0.0
      %6777 = vmatprep.subr.mxu0 0.0
      %6778 = vmatpush1.msra.mxu0 0.0
      %6779 = vmatprep.subr.mxu0 0.0
      %6780 = vmatpush1.msra.mxu0 0.0
      %6781 = vmatprep.subr.mxu0 0.0
      %6782 = vmatpush1.msra.mxu0 0.0
      %6783 = vmatprep.subr.mxu0 0.0
      %6784 = vmatpush1.msra.mxu0 0.0
      %6785 = vmatprep.subr.mxu0 0.0
      %6786 = vmatpush1.msra.mxu0 0.0
      %6787 = vmatprep.subr.mxu0 0.0
      %6788 = vmatpush1.msra.mxu0 0.0
      %6789 = vmatprep.subr.mxu0 0.0
      %6790 = vmatpush1.msra.mxu0 0.0
      %6791 = vmatprep.subr.mxu0 0.0
      %6792 = vmatpush1.msra.mxu0 0.0
      %6793 = vmatprep.subr.mxu0 0.0
      %6794 = vmatpush1.msra.mxu0 0.0
      %6795 = vmatprep.subr.mxu0 0.0
      %6796 = vmatpush1.msra.mxu0 0.0
      %6797 = vmatprep.subr.mxu0 0.0
      %6798 = vmatpush1.msra.mxu0 0.0
      %6799 = vmatprep.subr.mxu0 0.0
      %6800 = vmatpush1.msra.mxu0 0.0
      %6801 = vmatprep.subr.mxu0 0.0
      %6802 = vmatpush1.msra.mxu0 0.0
      %6803 = vmatprep.subr.mxu0 0.0
      %6804 = vmatpush1.msra.mxu0 0.0
      %6805 = vmatprep.subr.mxu0 0.0
      %6806 = vmatpush1.msra.mxu0 0.0
      %6807 = vmatprep.subr.mxu0 0.0
      %6808 = vmatpush1.msra.mxu0 0.0
      %6809 = vmatprep.subr.mxu0 0.0
      %6810 = vmatpush1.msra.mxu0 0.0
      %6811 = vmatprep.subr.mxu0 0.0
      %6812 = vmatpush1.msra.mxu0 0.0
      %6813 = vmatprep.mubr.f32.mxu0 0.0
      %6814 = vmatmul.mubr.f32.gmra.mrb[0].mxu0 %v6676
      %v6815 = vpop.f32.mrb[0].mxu0
      %v6816 = vadd.f32 0.0, %v6815
      %v6817 = vpop.f32.mrb[0].mxu0
      %v6818 = vadd.f32 0.0, %v6817
      %6819 = vdwg.mxu0
      %v6820 = vadd.f32 %v6653, %v6745
      %v6821 = vadd.f32 %v6654, %v6747
      %v6822 = vadd.f32 %v6655, %v6816
      %v6823 = vadd.f32 %v6656, %v6818
      %v6824 = vld [vmem:[%s9] sm:$0xff]
      %6826 = vset.pattern.permute.xlu0 0
      %6827 = vperm.xlu0 %6826, %v6824
      %v6828 = vpop.permute.xlu0 %6827
      %v6830 = vadd.f32 %v6820, %v6828
      %v6831 = vadd.f32 %v6821, %v6828
      %v6832 = vadd.f32 %v6822, %v6828
      %v6833 = vadd.f32 %v6823, %v6828
      %v6834 = vmul.f32 %v6830, 0.01
      %v6835 = vmul.f32 %v6831, 0.01
      %v6836 = vmul.f32 %v6832, 0.01
      %v6837 = vmul.f32 %v6833, 0.01
      %v6838 = vmax.f32 %v6830, %v6834
      %v6839 = vmax.f32 %v6831, %v6835
      %v6840 = vmax.f32 %v6832, %v6836
      %v6841 = vmax.f32 %v6833, %v6837
      %v6842 = vmul.f32 %v6838, %v2126
      %v6843 = vmul.f32 %v6839, %v2130
      %v6844 = vmul.f32 %v6840, %v2134
      %v6845 = vmul.f32 %v6841, %v2138
      %v6846 = vadd.f32 %v6842, %v2143
      %v6847 = vadd.f32 %v6843, %v2144
      %v6848 = vadd.f32 %v6844, %v2145
      %v6849 = vadd.f32 %v6845, %v2146
      %6854 = vrot.lane.b32.xlu0 %v6846, 69
      %v6855 = vpop.permute.xlu0 %6854
      %6856 = vrot.lane.b32.xlu0 %v6847, 69
      %v6857 = vpop.permute.xlu0 %6856
      %6858 = vrot.lane.b32.xlu0 %v6848, 69
      %v6859 = vpop.permute.xlu0 %6858
      %6860 = vrot.lane.b32.xlu0 %v6849, 69
      %v6861 = vpop.permute.xlu0 %6860
      %v6862 = vsel %vm488, %v6855, %v6857
      %v6863 = vsel %vm488, %v6857, %v6859
      %v6864 = vsel %vm488, %v6859, %v6861
      %6870 = vst.msk [vmem:[#allocation2] sm:$0xff] %vm2167, %v6855
      %6871 = vst [vmem:[#allocation2 + $0x8] sm:$0xff] %v6862
      %6872 = vst [vmem:[#allocation2 + $0x10] sm:$0xff] %v6863
      %6873 = vst [vmem:[#allocation2 + $0x18] sm:$0xff] %v6864
      %6874 = vst.msk [vmem:[#allocation2 + $0x20] sm:$0xff] %vm2172, %v6861
      %v6875 = vld [vmem:[#allocation2] sm:$0xff]
      %v6876 = vld [vmem:[#allocation2 + $0x8] sm:$0xff]
      %v6877 = vld [vmem:[#allocation2 + $0x10] sm:$0xff]
      %v6878 = vld [vmem:[#allocation2 + $0x18] sm:$0xff]
      %v6879 = vld [vmem:[#allocation2 + $0x20] sm:$0xff]
      %v6880 = vld [vmem:[%s10] sm:$0x3]
      %s6881 = scalar_lea.vmem %s10, 2
      %v6882 = vld [vmem:[%s6881] sm:$0x3]
      %6888 = vrot.lane.b32.xlu0 %v6875, 81
      %v6889 = vpop.permute.xlu0 %6888
      %6890 = vrot.lane.b32.xlu0 %v6876, 81
      %v6891 = vpop.permute.xlu0 %6890
      %6892 = vrot.lane.b32.xlu0 %v6877, 81
      %v6893 = vpop.permute.xlu0 %6892
      %6894 = vrot.lane.b32.xlu0 %v6878, 81
      %v6895 = vpop.permute.xlu0 %6894
      %6896 = vrot.lane.b32.xlu0 %v6879, 81
      %v6897 = vpop.permute.xlu0 %6896
      %v6898 = vsel %vm558, %v6889, %v6891
      %v6899 = vsel %vm558, %v6891, %v6893
      %v6900 = vsel %vm558, %v6893, %v6895
      %v6901 = vsel %vm558, %v6895, %v6897
      %v6907 = vsel %vm2205, %v6882, 0
      %6909 = vmatprep.subr.mxu0 %v6899
      %6910 = vmatpush1.msra.mxu0 %v6898
      %6911 = vmatprep.subr.mxu0 0.0
      %6912 = vmatpush1.msra.mxu0 0.0
      %6913 = vmatprep.subr.mxu0 0.0
      %6914 = vmatpush1.msra.mxu0 0.0
      %6915 = vmatprep.subr.mxu0 0.0
      %6916 = vmatpush1.msra.mxu0 0.0
      %6917 = vmatprep.subr.mxu0 0.0
      %6918 = vmatpush1.msra.mxu0 0.0
      %6919 = vmatprep.subr.mxu0 0.0
      %6920 = vmatpush1.msra.mxu0 0.0
      %6921 = vmatprep.subr.mxu0 0.0
      %6922 = vmatpush1.msra.mxu0 0.0
      %6923 = vmatprep.subr.mxu0 0.0
      %6924 = vmatpush1.msra.mxu0 0.0
      %6925 = vmatprep.subr.mxu0 0.0
      %6926 = vmatpush1.msra.mxu0 0.0
      %6927 = vmatprep.subr.mxu0 0.0
      %6928 = vmatpush1.msra.mxu0 0.0
      %6929 = vmatprep.subr.mxu0 0.0
      %6930 = vmatpush1.msra.mxu0 0.0
      %6931 = vmatprep.subr.mxu0 0.0
      %6932 = vmatpush1.msra.mxu0 0.0
      %6933 = vmatprep.subr.mxu0 0.0
      %6934 = vmatpush1.msra.mxu0 0.0
      %6935 = vmatprep.subr.mxu0 0.0
      %6936 = vmatpush1.msra.mxu0 0.0
      %6937 = vmatprep.subr.mxu0 0.0
      %6938 = vmatpush1.msra.mxu0 0.0
      %6939 = vmatprep.subr.mxu0 0.0
      %6940 = vmatpush1.msra.mxu0 0.0
      %6941 = vmatprep.subr.mxu0 0.0
      %6942 = vmatpush1.msra.mxu0 0.0
      %6943 = vmatprep.subr.mxu0 0.0
      %6944 = vmatpush1.msra.mxu0 0.0
      %6945 = vmatprep.subr.mxu0 0.0
      %6946 = vmatpush1.msra.mxu0 0.0
      %6947 = vmatprep.subr.mxu0 0.0
      %6948 = vmatpush1.msra.mxu0 0.0
      %6949 = vmatprep.subr.mxu0 0.0
      %6950 = vmatpush1.msra.mxu0 0.0
      %6951 = vmatprep.subr.mxu0 0.0
      %6952 = vmatpush1.msra.mxu0 0.0
      %6953 = vmatprep.subr.mxu0 0.0
      %6954 = vmatpush1.msra.mxu0 0.0
      %6955 = vmatprep.subr.mxu0 0.0
      %6956 = vmatpush1.msra.mxu0 0.0
      %6957 = vmatprep.subr.mxu0 0.0
      %6958 = vmatpush1.msra.mxu0 0.0
      %6959 = vmatprep.subr.mxu0 0.0
      %6960 = vmatpush1.msra.mxu0 0.0
      %6961 = vmatprep.subr.mxu0 0.0
      %6962 = vmatpush1.msra.mxu0 0.0
      %6963 = vmatprep.subr.mxu0 0.0
      %6964 = vmatpush1.msra.mxu0 0.0
      %6965 = vmatprep.subr.mxu0 0.0
      %6966 = vmatpush1.msra.mxu0 0.0
      %6967 = vmatprep.subr.mxu0 0.0
      %6968 = vmatpush1.msra.mxu0 0.0
      %6969 = vmatprep.subr.mxu0 0.0
      %6970 = vmatpush1.msra.mxu0 0.0
      %6971 = vmatprep.subr.mxu0 0.0
      %6972 = vmatpush1.msra.mxu0 0.0
      %6973 = vmatprep.mubr.f32.mxu0 0.0
      %6974 = vmatmul.mubr.f32.gmra.mrb[0].mxu0 %v6907
      %v6975 = vpop.f32.mrb[0].mxu0
      %v6976 = vadd.f32 0.0, %v6975
      %v6977 = vpop.f32.mrb[0].mxu0
      %v6978 = vadd.f32 0.0, %v6977
      %6979 = vdwg.mxu0
      %6980 = vmatprep.subr.mxu0 %v6901
      %6981 = vmatpush1.msra.mxu0 %v6900
      %6982 = vmatprep.subr.mxu0 0.0
      %6983 = vmatpush1.msra.mxu0 0.0
      %6984 = vmatprep.subr.mxu0 0.0
      %6985 = vmatpush1.msra.mxu0 0.0
      %6986 = vmatprep.subr.mxu0 0.0
      %6987 = vmatpush1.msra.mxu0 0.0
      %6988 = vmatprep.subr.mxu0 0.0
      %6989 = vmatpush1.msra.mxu0 0.0
      %6990 = vmatprep.subr.mxu0 0.0
      %6991 = vmatpush1.msra.mxu0 0.0
      %6992 = vmatprep.subr.mxu0 0.0
      %6993 = vmatpush1.msra.mxu0 0.0
      %6994 = vmatprep.subr.mxu0 0.0
      %6995 = vmatpush1.msra.mxu0 0.0
      %6996 = vmatprep.subr.mxu0 0.0
      %6997 = vmatpush1.msra.mxu0 0.0
      %6998 = vmatprep.subr.mxu0 0.0
      %6999 = vmatpush1.msra.mxu0 0.0
      %7000 = vmatprep.subr.mxu0 0.0
      %7001 = vmatpush1.msra.mxu0 0.0
      %7002 = vmatprep.subr.mxu0 0.0
      %7003 = vmatpush1.msra.mxu0 0.0
      %7004 = vmatprep.subr.mxu0 0.0
      %7005 = vmatpush1.msra.mxu0 0.0
      %7006 = vmatprep.subr.mxu0 0.0
      %7007 = vmatpush1.msra.mxu0 0.0
      %7008 = vmatprep.subr.mxu0 0.0
      %7009 = vmatpush1.msra.mxu0 0.0
      %7010 = vmatprep.subr.mxu0 0.0
      %7011 = vmatpush1.msra.mxu0 0.0
      %7012 = vmatprep.subr.mxu0 0.0
      %7013 = vmatpush1.msra.mxu0 0.0
      %7014 = vmatprep.subr.mxu0 0.0
      %7015 = vmatpush1.msra.mxu0 0.0
      %7016 = vmatprep.subr.mxu0 0.0
      %7017 = vmatpush1.msra.mxu0 0.0
      %7018 = vmatprep.subr.mxu0 0.0
      %7019 = vmatpush1.msra.mxu0 0.0
      %7020 = vmatprep.subr.mxu0 0.0
      %7021 = vmatpush1.msra.mxu0 0.0
      %7022 = vmatprep.subr.mxu0 0.0
      %7023 = vmatpush1.msra.mxu0 0.0
      %7024 = vmatprep.subr.mxu0 0.0
      %7025 = vmatpush1.msra.mxu0 0.0
      %7026 = vmatprep.subr.mxu0 0.0
      %7027 = vmatpush1.msra.mxu0 0.0
      %7028 = vmatprep.subr.mxu0 0.0
      %7029 = vmatpush1.msra.mxu0 0.0
      %7030 = vmatprep.subr.mxu0 0.0
      %7031 = vmatpush1.msra.mxu0 0.0
      %7032 = vmatprep.subr.mxu0 0.0
      %7033 = vmatpush1.msra.mxu0 0.0
      %7034 = vmatprep.subr.mxu0 0.0
      %7035 = vmatpush1.msra.mxu0 0.0
      %7036 = vmatprep.subr.mxu0 0.0
      %7037 = vmatpush1.msra.mxu0 0.0
      %7038 = vmatprep.subr.mxu0 0.0
      %7039 = vmatpush1.msra.mxu0 0.0
      %7040 = vmatprep.subr.mxu0 0.0
      %7041 = vmatpush1.msra.mxu0 0.0
      %7042 = vmatprep.subr.mxu0 0.0
      %7043 = vmatpush1.msra.mxu0 0.0
      %7044 = vmatprep.mubr.f32.mxu0 0.0
      %7045 = vmatmul.mubr.f32.gmra.mrb[0].mxu0 %v6907
      %v7046 = vpop.f32.mrb[0].mxu0
      %v7047 = vadd.f32 0.0, %v7046
      %v7048 = vpop.f32.mrb[0].mxu0
      %v7049 = vadd.f32 0.0, %v7048
      %7050 = vdwg.mxu0
      %7051 = vrot.lane.b32.xlu0 %v6875, 82
      %v7052 = vpop.permute.xlu0 %7051
      %7053 = vrot.lane.b32.xlu0 %v6876, 82
      %v7054 = vpop.permute.xlu0 %7053
      %7055 = vrot.lane.b32.xlu0 %v6877, 82
      %v7056 = vpop.permute.xlu0 %7055
      %7057 = vrot.lane.b32.xlu0 %v6878, 82
      %v7058 = vpop.permute.xlu0 %7057
      %7059 = vrot.lane.b32.xlu0 %v6879, 82
      %v7060 = vpop.permute.xlu0 %7059
      %v7061 = vsel %vm728, %v7052, %v7054
      %v7062 = vsel %vm728, %v7054, %v7056
      %v7063 = vsel %vm728, %v7056, %v7058
      %v7064 = vsel %vm728, %v7058, %v7060
      %v7070 = vsel %vm2205, %v6880, 0
      %7072 = vmatprep.subr.mxu0 %v7062
      %7073 = vmatpush1.msra.mxu0 %v7061
      %7074 = vmatprep.subr.mxu0 0.0
      %7075 = vmatpush1.msra.mxu0 0.0
      %7076 = vmatprep.subr.mxu0 0.0
      %7077 = vmatpush1.msra.mxu0 0.0
      %7078 = vmatprep.subr.mxu0 0.0
      %7079 = vmatpush1.msra.mxu0 0.0
      %7080 = vmatprep.subr.mxu0 0.0
      %7081 = vmatpush1.msra.mxu0 0.0
      %7082 = vmatprep.subr.mxu0 0.0
      %7083 = vmatpush1.msra.mxu0 0.0
      %7084 = vmatprep.subr.mxu0 0.0
      %7085 = vmatpush1.msra.mxu0 0.0
      %7086 = vmatprep.subr.mxu0 0.0
      %7087 = vmatpush1.msra.mxu0 0.0
      %7088 = vmatprep.subr.mxu0 0.0
      %7089 = vmatpush1.msra.mxu0 0.0
      %7090 = vmatprep.subr.mxu0 0.0
      %7091 = vmatpush1.msra.mxu0 0.0
      %7092 = vmatprep.subr.mxu0 0.0
      %7093 = vmatpush1.msra.mxu0 0.0
      %7094 = vmatprep.subr.mxu0 0.0
      %7095 = vmatpush1.msra.mxu0 0.0
      %7096 = vmatprep.subr.mxu0 0.0
      %7097 = vmatpush1.msra.mxu0 0.0
      %7098 = vmatprep.subr.mxu0 0.0
      %7099 = vmatpush1.msra.mxu0 0.0
      %7100 = vmatprep.subr.mxu0 0.0
      %7101 = vmatpush1.msra.mxu0 0.0
      %7102 = vmatprep.subr.mxu0 0.0
      %7103 = vmatpush1.msra.mxu0 0.0
      %7104 = vmatprep.subr.mxu0 0.0
      %7105 = vmatpush1.msra.mxu0 0.0
      %7106 = vmatprep.subr.mxu0 0.0
      %7107 = vmatpush1.msra.mxu0 0.0
      %7108 = vmatprep.subr.mxu0 0.0
      %7109 = vmatpush1.msra.mxu0 0.0
      %7110 = vmatprep.subr.mxu0 0.0
      %7111 = vmatpush1.msra.mxu0 0.0
      %7112 = vmatprep.subr.mxu0 0.0
      %7113 = vmatpush1.msra.mxu0 0.0
      %7114 = vmatprep.subr.mxu0 0.0
      %7115 = vmatpush1.msra.mxu0 0.0
      %7116 = vmatprep.subr.mxu0 0.0
      %7117 = vmatpush1.msra.mxu0 0.0
      %7118 = vmatprep.subr.mxu0 0.0
      %7119 = vmatpush1.msra.mxu0 0.0
      %7120 = vmatprep.subr.mxu0 0.0
      %7121 = vmatpush1.msra.mxu0 0.0
      %7122 = vmatprep.subr.mxu0 0.0
      %7123 = vmatpush1.msra.mxu0 0.0
      %7124 = vmatprep.subr.mxu0 0.0
      %7125 = vmatpush1.msra.mxu0 0.0
      %7126 = vmatprep.subr.mxu0 0.0
      %7127 = vmatpush1.msra.mxu0 0.0
      %7128 = vmatprep.subr.mxu0 0.0
      %7129 = vmatpush1.msra.mxu0 0.0
      %7130 = vmatprep.subr.mxu0 0.0
      %7131 = vmatpush1.msra.mxu0 0.0
      %7132 = vmatprep.subr.mxu0 0.0
      %7133 = vmatpush1.msra.mxu0 0.0
      %7134 = vmatprep.subr.mxu0 0.0
      %7135 = vmatpush1.msra.mxu0 0.0
      %7136 = vmatprep.mubr.f32.mxu0 0.0
      %7137 = vmatmul.mubr.f32.gmra.mrb[0].mxu0 %v7070
      %v7138 = vpop.f32.mrb[0].mxu0
      %v7139 = vadd.f32 %v6976, %v7138
      %v7140 = vpop.f32.mrb[0].mxu0
      %v7141 = vadd.f32 %v6978, %v7140
      %7142 = vdwg.mxu0
      %7143 = vmatprep.subr.mxu0 %v7064
      %7144 = vmatpush1.msra.mxu0 %v7063
      %7145 = vmatprep.subr.mxu0 0.0
      %7146 = vmatpush1.msra.mxu0 0.0
      %7147 = vmatprep.subr.mxu0 0.0
      %7148 = vmatpush1.msra.mxu0 0.0
      %7149 = vmatprep.subr.mxu0 0.0
      %7150 = vmatpush1.msra.mxu0 0.0
      %7151 = vmatprep.subr.mxu0 0.0
      %7152 = vmatpush1.msra.mxu0 0.0
      %7153 = vmatprep.subr.mxu0 0.0
      %7154 = vmatpush1.msra.mxu0 0.0
      %7155 = vmatprep.subr.mxu0 0.0
      %7156 = vmatpush1.msra.mxu0 0.0
      %7157 = vmatprep.subr.mxu0 0.0
      %7158 = vmatpush1.msra.mxu0 0.0
      %7159 = vmatprep.subr.mxu0 0.0
      %7160 = vmatpush1.msra.mxu0 0.0
      %7161 = vmatprep.subr.mxu0 0.0
      %7162 = vmatpush1.msra.mxu0 0.0
      %7163 = vmatprep.subr.mxu0 0.0
      %7164 = vmatpush1.msra.mxu0 0.0
      %7165 = vmatprep.subr.mxu0 0.0
      %7166 = vmatpush1.msra.mxu0 0.0
      %7167 = vmatprep.subr.mxu0 0.0
      %7168 = vmatpush1.msra.mxu0 0.0
      %7169 = vmatprep.subr.mxu0 0.0
      %7170 = vmatpush1.msra.mxu0 0.0
      %7171 = vmatprep.subr.mxu0 0.0
      %7172 = vmatpush1.msra.mxu0 0.0
      %7173 = vmatprep.subr.mxu0 0.0
      %7174 = vmatpush1.msra.mxu0 0.0
      %7175 = vmatprep.subr.mxu0 0.0
      %7176 = vmatpush1.msra.mxu0 0.0
      %7177 = vmatprep.subr.mxu0 0.0
      %7178 = vmatpush1.msra.mxu0 0.0
      %7179 = vmatprep.subr.mxu0 0.0
      %7180 = vmatpush1.msra.mxu0 0.0
      %7181 = vmatprep.subr.mxu0 0.0
      %7182 = vmatpush1.msra.mxu0 0.0
      %7183 = vmatprep.subr.mxu0 0.0
      %7184 = vmatpush1.msra.mxu0 0.0
      %7185 = vmatprep.subr.mxu0 0.0
      %7186 = vmatpush1.msra.mxu0 0.0
      %7187 = vmatprep.subr.mxu0 0.0
      %7188 = vmatpush1.msra.mxu0 0.0
      %7189 = vmatprep.subr.mxu0 0.0
      %7190 = vmatpush1.msra.mxu0 0.0
      %7191 = vmatprep.subr.mxu0 0.0
      %7192 = vmatpush1.msra.mxu0 0.0
      %7193 = vmatprep.subr.mxu0 0.0
      %7194 = vmatpush1.msra.mxu0 0.0
      %7195 = vmatprep.subr.mxu0 0.0
      %7196 = vmatpush1.msra.mxu0 0.0
      %7197 = vmatprep.subr.mxu0 0.0
      %7198 = vmatpush1.msra.mxu0 0.0
      %7199 = vmatprep.subr.mxu0 0.0
      %7200 = vmatpush1.msra.mxu0 0.0
      %7201 = vmatprep.subr.mxu0 0.0
      %7202 = vmatpush1.msra.mxu0 0.0
      %7203 = vmatprep.subr.mxu0 0.0
      %7204 = vmatpush1.msra.mxu0 0.0
      %7205 = vmatprep.subr.mxu0 0.0
      %7206 = vmatpush1.msra.mxu0 0.0
      %7207 = vmatprep.mubr.f32.mxu0 0.0
      %7208 = vmatmul.mubr.f32.gmra.mrb[0].mxu0 %v7070
      %v7209 = vpop.f32.mrb[0].mxu0
      %v7210 = vadd.f32 %v7047, %v7209
      %v7211 = vpop.f32.mrb[0].mxu0
      %v7212 = vadd.f32 %v7049, %v7211
      %7213 = vdwg.mxu0
      %s7214 = scalar_lea.vmem %s10, 4
      %v7215 = vld [vmem:[%s7214] sm:$0x3]
      %7216 = vrot.lane.b32.xlu0 %v6875, 80
      %v7217 = vpop.permute.xlu0 %7216
      %7218 = vrot.lane.b32.xlu0 %v6876, 80
      %v7219 = vpop.permute.xlu0 %7218
      %7220 = vrot.lane.b32.xlu0 %v6877, 80
      %v7221 = vpop.permute.xlu0 %7220
      %7222 = vrot.lane.b32.xlu0 %v6878, 80
      %v7223 = vpop.permute.xlu0 %7222
      %7224 = vrot.lane.b32.xlu0 %v6879, 80
      %v7225 = vpop.permute.xlu0 %7224
      %v7226 = vsel %vm898, %v7217, %v7219
      %v7227 = vsel %vm898, %v7219, %v7221
      %v7228 = vsel %vm898, %v7221, %v7223
      %v7229 = vsel %vm898, %v7223, %v7225
      %v7235 = vsel %vm2205, %v7215, 0
      %7237 = vmatprep.subr.mxu0 %v7227
      %7238 = vmatpush1.msra.mxu0 %v7226
      %7239 = vmatprep.subr.mxu0 0.0
      %7240 = vmatpush1.msra.mxu0 0.0
      %7241 = vmatprep.subr.mxu0 0.0
      %7242 = vmatpush1.msra.mxu0 0.0
      %7243 = vmatprep.subr.mxu0 0.0
      %7244 = vmatpush1.msra.mxu0 0.0
      %7245 = vmatprep.subr.mxu0 0.0
      %7246 = vmatpush1.msra.mxu0 0.0
      %7247 = vmatprep.subr.mxu0 0.0
      %7248 = vmatpush1.msra.mxu0 0.0
      %7249 = vmatprep.subr.mxu0 0.0
      %7250 = vmatpush1.msra.mxu0 0.0
      %7251 = vmatprep.subr.mxu0 0.0
      %7252 = vmatpush1.msra.mxu0 0.0
      %7253 = vmatprep.subr.mxu0 0.0
      %7254 = vmatpush1.msra.mxu0 0.0
      %7255 = vmatprep.subr.mxu0 0.0
      %7256 = vmatpush1.msra.mxu0 0.0
      %7257 = vmatprep.subr.mxu0 0.0
      %7258 = vmatpush1.msra.mxu0 0.0
      %7259 = vmatprep.subr.mxu0 0.0
      %7260 = vmatpush1.msra.mxu0 0.0
      %7261 = vmatprep.subr.mxu0 0.0
      %7262 = vmatpush1.msra.mxu0 0.0
      %7263 = vmatprep.subr.mxu0 0.0
      %7264 = vmatpush1.msra.mxu0 0.0
      %7265 = vmatprep.subr.mxu0 0.0
      %7266 = vmatpush1.msra.mxu0 0.0
      %7267 = vmatprep.subr.mxu0 0.0
      %7268 = vmatpush1.msra.mxu0 0.0
      %7269 = vmatprep.subr.mxu0 0.0
      %7270 = vmatpush1.msra.mxu0 0.0
      %7271 = vmatprep.subr.mxu0 0.0
      %7272 = vmatpush1.msra.mxu0 0.0
      %7273 = vmatprep.subr.mxu0 0.0
      %7274 = vmatpush1.msra.mxu0 0.0
      %7275 = vmatprep.subr.mxu0 0.0
      %7276 = vmatpush1.msra.mxu0 0.0
      %7277 = vmatprep.subr.mxu0 0.0
      %7278 = vmatpush1.msra.mxu0 0.0
      %7279 = vmatprep.subr.mxu0 0.0
      %7280 = vmatpush1.msra.mxu0 0.0
      %7281 = vmatprep.subr.mxu0 0.0
      %7282 = vmatpush1.msra.mxu0 0.0
      %7283 = vmatprep.subr.mxu0 0.0
      %7284 = vmatpush1.msra.mxu0 0.0
      %7285 = vmatprep.subr.mxu0 0.0
      %7286 = vmatpush1.msra.mxu0 0.0
      %7287 = vmatprep.subr.mxu0 0.0
      %7288 = vmatpush1.msra.mxu0 0.0
      %7289 = vmatprep.subr.mxu0 0.0
      %7290 = vmatpush1.msra.mxu0 0.0
      %7291 = vmatprep.subr.mxu0 0.0
      %7292 = vmatpush1.msra.mxu0 0.0
      %7293 = vmatprep.subr.mxu0 0.0
      %7294 = vmatpush1.msra.mxu0 0.0
      %7295 = vmatprep.subr.mxu0 0.0
      %7296 = vmatpush1.msra.mxu0 0.0
      %7297 = vmatprep.subr.mxu0 0.0
      %7298 = vmatpush1.msra.mxu0 0.0
      %7299 = vmatprep.subr.mxu0 0.0
      %7300 = vmatpush1.msra.mxu0 0.0
      %7301 = vmatprep.mubr.f32.mxu0 0.0
      %7302 = vmatmul.mubr.f32.gmra.mrb[0].mxu0 %v7235
      %v7303 = vpop.f32.mrb[0].mxu0
      %v7304 = vadd.f32 0.0, %v7303
      %v7305 = vpop.f32.mrb[0].mxu0
      %v7306 = vadd.f32 0.0, %v7305
      %7307 = vdwg.mxu0
      %7308 = vmatprep.subr.mxu0 %v7229
      %7309 = vmatpush1.msra.mxu0 %v7228
      %7310 = vmatprep.subr.mxu0 0.0
      %7311 = vmatpush1.msra.mxu0 0.0
      %7312 = vmatprep.subr.mxu0 0.0
      %7313 = vmatpush1.msra.mxu0 0.0
      %7314 = vmatprep.subr.mxu0 0.0
      %7315 = vmatpush1.msra.mxu0 0.0
      %7316 = vmatprep.subr.mxu0 0.0
      %7317 = vmatpush1.msra.mxu0 0.0
      %7318 = vmatprep.subr.mxu0 0.0
      %7319 = vmatpush1.msra.mxu0 0.0
      %7320 = vmatprep.subr.mxu0 0.0
      %7321 = vmatpush1.msra.mxu0 0.0
      %7322 = vmatprep.subr.mxu0 0.0
      %7323 = vmatpush1.msra.mxu0 0.0
      %7324 = vmatprep.subr.mxu0 0.0
      %7325 = vmatpush1.msra.mxu0 0.0
      %7326 = vmatprep.subr.mxu0 0.0
      %7327 = vmatpush1.msra.mxu0 0.0
      %7328 = vmatprep.subr.mxu0 0.0
      %7329 = vmatpush1.msra.mxu0 0.0
      %7330 = vmatprep.subr.mxu0 0.0
      %7331 = vmatpush1.msra.mxu0 0.0
      %7332 = vmatprep.subr.mxu0 0.0
      %7333 = vmatpush1.msra.mxu0 0.0
      %7334 = vmatprep.subr.mxu0 0.0
      %7335 = vmatpush1.msra.mxu0 0.0
      %7336 = vmatprep.subr.mxu0 0.0
      %7337 = vmatpush1.msra.mxu0 0.0
      %7338 = vmatprep.subr.mxu0 0.0
      %7339 = vmatpush1.msra.mxu0 0.0
      %7340 = vmatprep.subr.mxu0 0.0
      %7341 = vmatpush1.msra.mxu0 0.0
      %7342 = vmatprep.subr.mxu0 0.0
      %7343 = vmatpush1.msra.mxu0 0.0
      %7344 = vmatprep.subr.mxu0 0.0
      %7345 = vmatpush1.msra.mxu0 0.0
      %7346 = vmatprep.subr.mxu0 0.0
      %7347 = vmatpush1.msra.mxu0 0.0
      %7348 = vmatprep.subr.mxu0 0.0
      %7349 = vmatpush1.msra.mxu0 0.0
      %7350 = vmatprep.subr.mxu0 0.0
      %7351 = vmatpush1.msra.mxu0 0.0
      %7352 = vmatprep.subr.mxu0 0.0
      %7353 = vmatpush1.msra.mxu0 0.0
      %7354 = vmatprep.subr.mxu0 0.0
      %7355 = vmatpush1.msra.mxu0 0.0
      %7356 = vmatprep.subr.mxu0 0.0
      %7357 = vmatpush1.msra.mxu0 0.0
      %7358 = vmatprep.subr.mxu0 0.0
      %7359 = vmatpush1.msra.mxu0 0.0
      %7360 = vmatprep.subr.mxu0 0.0
      %7361 = vmatpush1.msra.mxu0 0.0
      %7362 = vmatprep.subr.mxu0 0.0
      %7363 = vmatpush1.msra.mxu0 0.0
      %7364 = vmatprep.subr.mxu0 0.0
      %7365 = vmatpush1.msra.mxu0 0.0
      %7366 = vmatprep.subr.mxu0 0.0
      %7367 = vmatpush1.msra.mxu0 0.0
      %7368 = vmatprep.subr.mxu0 0.0
      %7369 = vmatpush1.msra.mxu0 0.0
      %7370 = vmatprep.subr.mxu0 0.0
      %7371 = vmatpush1.msra.mxu0 0.0
      %7372 = vmatprep.mubr.f32.mxu0 0.0
      %7373 = vmatmul.mubr.f32.gmra.mrb[0].mxu0 %v7235
      %v7374 = vpop.f32.mrb[0].mxu0
      %v7375 = vadd.f32 0.0, %v7374
      %v7376 = vpop.f32.mrb[0].mxu0
      %v7377 = vadd.f32 0.0, %v7376
      %7378 = vdwg.mxu0
      %v7379 = vadd.f32 %v7139, %v7304
      %v7380 = vadd.f32 %v7141, %v7306
      %v7381 = vadd.f32 %v7210, %v7375
      %v7382 = vadd.f32 %v7212, %v7377
      %s7383 = scalar_lea.vmem %s10, 6
      %v7384 = vld [vmem:[%s7383] sm:$0x3]
      %7385 = vrot.lane.b32.xlu0 %v6875, 60
      %v7386 = vpop.permute.xlu0 %7385
      %7387 = vrot.lane.b32.xlu0 %v6876, 60
      %v7388 = vpop.permute.xlu0 %7387
      %7389 = vrot.lane.b32.xlu0 %v6877, 60
      %v7390 = vpop.permute.xlu0 %7389
      %7391 = vrot.lane.b32.xlu0 %v6878, 60
      %v7392 = vpop.permute.xlu0 %7391
      %7393 = vrot.lane.b32.xlu0 %v6879, 60
      %v7394 = vpop.permute.xlu0 %7393
      %v7395 = vsel %vm1072, %v7386, %v7388
      %v7396 = vsel %vm1072, %v7388, %v7390
      %v7397 = vsel %vm1072, %v7390, %v7392
      %v7398 = vsel %vm1072, %v7392, %v7394
      %v7404 = vsel %vm2205, %v7384, 0
      %7406 = vmatprep.subr.mxu0 %v7396
      %7407 = vmatpush1.msra.mxu0 %v7395
      %7408 = vmatprep.subr.mxu0 0.0
      %7409 = vmatpush1.msra.mxu0 0.0
      %7410 = vmatprep.subr.mxu0 0.0
      %7411 = vmatpush1.msra.mxu0 0.0
      %7412 = vmatprep.subr.mxu0 0.0
      %7413 = vmatpush1.msra.mxu0 0.0
      %7414 = vmatprep.subr.mxu0 0.0
      %7415 = vmatpush1.msra.mxu0 0.0
      %7416 = vmatprep.subr.mxu0 0.0
      %7417 = vmatpush1.msra.mxu0 0.0
      %7418 = vmatprep.subr.mxu0 0.0
      %7419 = vmatpush1.msra.mxu0 0.0
      %7420 = vmatprep.subr.mxu0 0.0
      %7421 = vmatpush1.msra.mxu0 0.0
      %7422 = vmatprep.subr.mxu0 0.0
      %7423 = vmatpush1.msra.mxu0 0.0
      %7424 = vmatprep.subr.mxu0 0.0
      %7425 = vmatpush1.msra.mxu0 0.0
      %7426 = vmatprep.subr.mxu0 0.0
      %7427 = vmatpush1.msra.mxu0 0.0
      %7428 = vmatprep.subr.mxu0 0.0
      %7429 = vmatpush1.msra.mxu0 0.0
      %7430 = vmatprep.subr.mxu0 0.0
      %7431 = vmatpush1.msra.mxu0 0.0
      %7432 = vmatprep.subr.mxu0 0.0
      %7433 = vmatpush1.msra.mxu0 0.0
      %7434 = vmatprep.subr.mxu0 0.0
      %7435 = vmatpush1.msra.mxu0 0.0
      %7436 = vmatprep.subr.mxu0 0.0
      %7437 = vmatpush1.msra.mxu0 0.0
      %7438 = vmatprep.subr.mxu0 0.0
      %7439 = vmatpush1.msra.mxu0 0.0
      %7440 = vmatprep.subr.mxu0 0.0
      %7441 = vmatpush1.msra.mxu0 0.0
      %7442 = vmatprep.subr.mxu0 0.0
      %7443 = vmatpush1.msra.mxu0 0.0
      %7444 = vmatprep.subr.mxu0 0.0
      %7445 = vmatpush1.msra.mxu0 0.0
      %7446 = vmatprep.subr.mxu0 0.0
      %7447 = vmatpush1.msra.mxu0 0.0
      %7448 = vmatprep.subr.mxu0 0.0
      %7449 = vmatpush1.msra.mxu0 0.0
      %7450 = vmatprep.subr.mxu0 0.0
      %7451 = vmatpush1.msra.mxu0 0.0
      %7452 = vmatprep.subr.mxu0 0.0
      %7453 = vmatpush1.msra.mxu0 0.0
      %7454 = vmatprep.subr.mxu0 0.0
      %7455 = vmatpush1.msra.mxu0 0.0
      %7456 = vmatprep.subr.mxu0 0.0
      %7457 = vmatpush1.msra.mxu0 0.0
      %7458 = vmatprep.subr.mxu0 0.0
      %7459 = vmatpush1.msra.mxu0 0.0
      %7460 = vmatprep.subr.mxu0 0.0
      %7461 = vmatpush1.msra.mxu0 0.0
      %7462 = vmatprep.subr.mxu0 0.0
      %7463 = vmatpush1.msra.mxu0 0.0
      %7464 = vmatprep.subr.mxu0 0.0
      %7465 = vmatpush1.msra.mxu0 0.0
      %7466 = vmatprep.subr.mxu0 0.0
      %7467 = vmatpush1.msra.mxu0 0.0
      %7468 = vmatprep.subr.mxu0 0.0
      %7469 = vmatpush1.msra.mxu0 0.0
      %7470 = vmatprep.mubr.f32.mxu0 0.0
      %7471 = vmatmul.mubr.f32.gmra.mrb[0].mxu0 %v7404
      %v7472 = vpop.f32.mrb[0].mxu0
      %v7473 = vadd.f32 0.0, %v7472
      %v7474 = vpop.f32.mrb[0].mxu0
      %v7475 = vadd.f32 0.0, %v7474
      %7476 = vdwg.mxu0
      %7477 = vmatprep.subr.mxu0 %v7398
      %7478 = vmatpush1.msra.mxu0 %v7397
      %7479 = vmatprep.subr.mxu0 0.0
      %7480 = vmatpush1.msra.mxu0 0.0
      %7481 = vmatprep.subr.mxu0 0.0
      %7482 = vmatpush1.msra.mxu0 0.0
      %7483 = vmatprep.subr.mxu0 0.0
      %7484 = vmatpush1.msra.mxu0 0.0
      %7485 = vmatprep.subr.mxu0 0.0
      %7486 = vmatpush1.msra.mxu0 0.0
      %7487 = vmatprep.subr.mxu0 0.0
      %7488 = vmatpush1.msra.mxu0 0.0
      %7489 = vmatprep.subr.mxu0 0.0
      %7490 = vmatpush1.msra.mxu0 0.0
      %7491 = vmatprep.subr.mxu0 0.0
      %7492 = vmatpush1.msra.mxu0 0.0
      %7493 = vmatprep.subr.mxu0 0.0
      %7494 = vmatpush1.msra.mxu0 0.0
      %7495 = vmatprep.subr.mxu0 0.0
      %7496 = vmatpush1.msra.mxu0 0.0
      %7497 = vmatprep.subr.mxu0 0.0
      %7498 = vmatpush1.msra.mxu0 0.0
      %7499 = vmatprep.subr.mxu0 0.0
      %7500 = vmatpush1.msra.mxu0 0.0
      %7501 = vmatprep.subr.mxu0 0.0
      %7502 = vmatpush1.msra.mxu0 0.0
      %7503 = vmatprep.subr.mxu0 0.0
      %7504 = vmatpush1.msra.mxu0 0.0
      %7505 = vmatprep.subr.mxu0 0.0
      %7506 = vmatpush1.msra.mxu0 0.0
      %7507 = vmatprep.subr.mxu0 0.0
      %7508 = vmatpush1.msra.mxu0 0.0
      %7509 = vmatprep.subr.mxu0 0.0
      %7510 = vmatpush1.msra.mxu0 0.0
      %7511 = vmatprep.subr.mxu0 0.0
      %7512 = vmatpush1.msra.mxu0 0.0
      %7513 = vmatprep.subr.mxu0 0.0
      %7514 = vmatpush1.msra.mxu0 0.0
      %7515 = vmatprep.subr.mxu0 0.0
      %7516 = vmatpush1.msra.mxu0 0.0
      %7517 = vmatprep.subr.mxu0 0.0
      %7518 = vmatpush1.msra.mxu0 0.0
      %7519 = vmatprep.subr.mxu0 0.0
      %7520 = vmatpush1.msra.mxu0 0.0
      %7521 = vmatprep.subr.mxu0 0.0
      %7522 = vmatpush1.msra.mxu0 0.0
      %7523 = vmatprep.subr.mxu0 0.0
      %7524 = vmatpush1.msra.mxu0 0.0
      %7525 = vmatprep.subr.mxu0 0.0
      %7526 = vmatpush1.msra.mxu0 0.0
      %7527 = vmatprep.subr.mxu0 0.0
      %7528 = vmatpush1.msra.mxu0 0.0
      %7529 = vmatprep.subr.mxu0 0.0
      %7530 = vmatpush1.msra.mxu0 0.0
      %7531 = vmatprep.subr.mxu0 0.0
      %7532 = vmatpush1.msra.mxu0 0.0
      %7533 = vmatprep.subr.mxu0 0.0
      %7534 = vmatpush1.msra.mxu0 0.0
      %7535 = vmatprep.subr.mxu0 0.0
      %7536 = vmatpush1.msra.mxu0 0.0
      %7537 = vmatprep.subr.mxu0 0.0
      %7538 = vmatpush1.msra.mxu0 0.0
      %7539 = vmatprep.subr.mxu0 0.0
      %7540 = vmatpush1.msra.mxu0 0.0
      %7541 = vmatprep.mubr.f32.mxu0 0.0
      %7542 = vmatmul.mubr.f32.gmra.mrb[0].mxu0 %v7404
      %v7543 = vpop.f32.mrb[0].mxu0
      %v7544 = vadd.f32 0.0, %v7543
      %v7545 = vpop.f32.mrb[0].mxu0
      %v7546 = vadd.f32 0.0, %v7545
      %7547 = vdwg.mxu0
      %v7548 = vadd.f32 %v7379, %v7473
      %v7549 = vadd.f32 %v7380, %v7475
      %v7550 = vadd.f32 %v7381, %v7544
      %v7551 = vadd.f32 %v7382, %v7546
      %s7552 = scalar_lea.vmem %s10, 8
      %v7553 = vld [vmem:[%s7552] sm:$0x3]
      %7554 = vrot.lane.b32.xlu0 %v6875, 59
      %v7555 = vpop.permute.xlu0 %7554
      %7556 = vrot.lane.b32.xlu0 %v6876, 59
      %v7557 = vpop.permute.xlu0 %7556
      %7558 = vrot.lane.b32.xlu0 %v6877, 59
      %v7559 = vpop.permute.xlu0 %7558
      %7560 = vrot.lane.b32.xlu0 %v6878, 59
      %v7561 = vpop.permute.xlu0 %7560
      %7562 = vrot.lane.b32.xlu0 %v6879, 59
      %v7563 = vpop.permute.xlu0 %7562
      %v7564 = vsel %vm1246, %v7555, %v7557
      %v7565 = vsel %vm1246, %v7557, %v7559
      %v7566 = vsel %vm1246, %v7559, %v7561
      %v7567 = vsel %vm1246, %v7561, %v7563
      %v7573 = vsel %vm2205, %v7553, 0
      %7575 = vmatprep.subr.mxu0 %v7565
      %7576 = vmatpush1.msra.mxu0 %v7564
      %7577 = vmatprep.subr.mxu0 0.0
      %7578 = vmatpush1.msra.mxu0 0.0
      %7579 = vmatprep.subr.mxu0 0.0
      %7580 = vmatpush1.msra.mxu0 0.0
      %7581 = vmatprep.subr.mxu0 0.0
      %7582 = vmatpush1.msra.mxu0 0.0
      %7583 = vmatprep.subr.mxu0 0.0
      %7584 = vmatpush1.msra.mxu0 0.0
      %7585 = vmatprep.subr.mxu0 0.0
      %7586 = vmatpush1.msra.mxu0 0.0
      %7587 = vmatprep.subr.mxu0 0.0
      %7588 = vmatpush1.msra.mxu0 0.0
      %7589 = vmatprep.subr.mxu0 0.0
      %7590 = vmatpush1.msra.mxu0 0.0
      %7591 = vmatprep.subr.mxu0 0.0
      %7592 = vmatpush1.msra.mxu0 0.0
      %7593 = vmatprep.subr.mxu0 0.0
      %7594 = vmatpush1.msra.mxu0 0.0
      %7595 = vmatprep.subr.mxu0 0.0
      %7596 = vmatpush1.msra.mxu0 0.0
      %7597 = vmatprep.subr.mxu0 0.0
      %7598 = vmatpush1.msra.mxu0 0.0
      %7599 = vmatprep.subr.mxu0 0.0
      %7600 = vmatpush1.msra.mxu0 0.0
      %7601 = vmatprep.subr.mxu0 0.0
      %7602 = vmatpush1.msra.mxu0 0.0
      %7603 = vmatprep.subr.mxu0 0.0
      %7604 = vmatpush1.msra.mxu0 0.0
      %7605 = vmatprep.subr.mxu0 0.0
      %7606 = vmatpush1.msra.mxu0 0.0
      %7607 = vmatprep.subr.mxu0 0.0
      %7608 = vmatpush1.msra.mxu0 0.0
      %7609 = vmatprep.subr.mxu0 0.0
      %7610 = vmatpush1.msra.mxu0 0.0
      %7611 = vmatprep.subr.mxu0 0.0
      %7612 = vmatpush1.msra.mxu0 0.0
      %7613 = vmatprep.subr.mxu0 0.0
      %7614 = vmatpush1.msra.mxu0 0.0
      %7615 = vmatprep.subr.mxu0 0.0
      %7616 = vmatpush1.msra.mxu0 0.0
      %7617 = vmatprep.subr.mxu0 0.0
      %7618 = vmatpush1.msra.mxu0 0.0
      %7619 = vmatprep.subr.mxu0 0.0
      %7620 = vmatpush1.msra.mxu0 0.0
      %7621 = vmatprep.subr.mxu0 0.0
      %7622 = vmatpush1.msra.mxu0 0.0
      %7623 = vmatprep.subr.mxu0 0.0
      %7624 = vmatpush1.msra.mxu0 0.0
      %7625 = vmatprep.subr.mxu0 0.0
      %7626 = vmatpush1.msra.mxu0 0.0
      %7627 = vmatprep.subr.mxu0 0.0
      %7628 = vmatpush1.msra.mxu0 0.0
      %7629 = vmatprep.subr.mxu0 0.0
      %7630 = vmatpush1.msra.mxu0 0.0
      %7631 = vmatprep.subr.mxu0 0.0
      %7632 = vmatpush1.msra.mxu0 0.0
      %7633 = vmatprep.subr.mxu0 0.0
      %7634 = vmatpush1.msra.mxu0 0.0
      %7635 = vmatprep.subr.mxu0 0.0
      %7636 = vmatpush1.msra.mxu0 0.0
      %7637 = vmatprep.subr.mxu0 0.0
      %7638 = vmatpush1.msra.mxu0 0.0
      %7639 = vmatprep.mubr.f32.mxu0 0.0
      %7640 = vmatmul.mubr.f32.gmra.mrb[0].mxu0 %v7573
      %v7641 = vpop.f32.mrb[0].mxu0
      %v7642 = vadd.f32 0.0, %v7641
      %v7643 = vpop.f32.mrb[0].mxu0
      %v7644 = vadd.f32 0.0, %v7643
      %7645 = vdwg.mxu0
      %7646 = vmatprep.subr.mxu0 %v7567
      %7647 = vmatpush1.msra.mxu0 %v7566
      %7648 = vmatprep.subr.mxu0 0.0
      %7649 = vmatpush1.msra.mxu0 0.0
      %7650 = vmatprep.subr.mxu0 0.0
      %7651 = vmatpush1.msra.mxu0 0.0
      %7652 = vmatprep.subr.mxu0 0.0
      %7653 = vmatpush1.msra.mxu0 0.0
      %7654 = vmatprep.subr.mxu0 0.0
      %7655 = vmatpush1.msra.mxu0 0.0
      %7656 = vmatprep.subr.mxu0 0.0
      %7657 = vmatpush1.msra.mxu0 0.0
      %7658 = vmatprep.subr.mxu0 0.0
      %7659 = vmatpush1.msra.mxu0 0.0
      %7660 = vmatprep.subr.mxu0 0.0
      %7661 = vmatpush1.msra.mxu0 0.0
      %7662 = vmatprep.subr.mxu0 0.0
      %7663 = vmatpush1.msra.mxu0 0.0
      %7664 = vmatprep.subr.mxu0 0.0
      %7665 = vmatpush1.msra.mxu0 0.0
      %7666 = vmatprep.subr.mxu0 0.0
      %7667 = vmatpush1.msra.mxu0 0.0
      %7668 = vmatprep.subr.mxu0 0.0
      %7669 = vmatpush1.msra.mxu0 0.0
      %7670 = vmatprep.subr.mxu0 0.0
      %7671 = vmatpush1.msra.mxu0 0.0
      %7672 = vmatprep.subr.mxu0 0.0
      %7673 = vmatpush1.msra.mxu0 0.0
      %7674 = vmatprep.subr.mxu0 0.0
      %7675 = vmatpush1.msra.mxu0 0.0
      %7676 = vmatprep.subr.mxu0 0.0
      %7677 = vmatpush1.msra.mxu0 0.0
      %7678 = vmatprep.subr.mxu0 0.0
      %7679 = vmatpush1.msra.mxu0 0.0
      %7680 = vmatprep.subr.mxu0 0.0
      %7681 = vmatpush1.msra.mxu0 0.0
      %7682 = vmatprep.subr.mxu0 0.0
      %7683 = vmatpush1.msra.mxu0 0.0
      %7684 = vmatprep.subr.mxu0 0.0
      %7685 = vmatpush1.msra.mxu0 0.0
      %7686 = vmatprep.subr.mxu0 0.0
      %7687 = vmatpush1.msra.mxu0 0.0
      %7688 = vmatprep.subr.mxu0 0.0
      %7689 = vmatpush1.msra.mxu0 0.0
      %7690 = vmatprep.subr.mxu0 0.0
      %7691 = vmatpush1.msra.mxu0 0.0
      %7692 = vmatprep.subr.mxu0 0.0
      %7693 = vmatpush1.msra.mxu0 0.0
      %7694 = vmatprep.subr.mxu0 0.0
      %7695 = vmatpush1.msra.mxu0 0.0
      %7696 = vmatprep.subr.mxu0 0.0
      %7697 = vmatpush1.msra.mxu0 0.0
      %7698 = vmatprep.subr.mxu0 0.0
      %7699 = vmatpush1.msra.mxu0 0.0
      %7700 = vmatprep.subr.mxu0 0.0
      %7701 = vmatpush1.msra.mxu0 0.0
      %7702 = vmatprep.subr.mxu0 0.0
      %7703 = vmatpush1.msra.mxu0 0.0
      %7704 = vmatprep.subr.mxu0 0.0
      %7705 = vmatpush1.msra.mxu0 0.0
      %7706 = vmatprep.subr.mxu0 0.0
      %7707 = vmatpush1.msra.mxu0 0.0
      %7708 = vmatprep.subr.mxu0 0.0
      %7709 = vmatpush1.msra.mxu0 0.0
      %7710 = vmatprep.mubr.f32.mxu0 0.0
      %7711 = vmatmul.mubr.f32.gmra.mrb[0].mxu0 %v7573
      %v7712 = vpop.f32.mrb[0].mxu0
      %v7713 = vadd.f32 0.0, %v7712
      %v7714 = vpop.f32.mrb[0].mxu0
      %v7715 = vadd.f32 0.0, %v7714
      %7716 = vdwg.mxu0
      %v7717 = vadd.f32 %v7548, %v7642
      %v7718 = vadd.f32 %v7549, %v7644
      %v7719 = vadd.f32 %v7550, %v7713
      %v7720 = vadd.f32 %v7551, %v7715
      %s7721 = scalar_lea.vmem %s10, 10
      %v7722 = vld [vmem:[%s7721] sm:$0x3]
      %7723 = vrot.lane.b32.xlu0 %v6875, 58
      %v7724 = vpop.permute.xlu0 %7723
      %7725 = vrot.lane.b32.xlu0 %v6876, 58
      %v7726 = vpop.permute.xlu0 %7725
      %7727 = vrot.lane.b32.xlu0 %v6877, 58
      %v7728 = vpop.permute.xlu0 %7727
      %7729 = vrot.lane.b32.xlu0 %v6878, 58
      %v7730 = vpop.permute.xlu0 %7729
      %7731 = vrot.lane.b32.xlu0 %v6879, 58
      %v7732 = vpop.permute.xlu0 %7731
      %v7733 = vsel %vm1420, %v7724, %v7726
      %v7734 = vsel %vm1420, %v7726, %v7728
      %v7735 = vsel %vm1420, %v7728, %v7730
      %v7736 = vsel %vm1420, %v7730, %v7732
      %v7742 = vsel %vm2205, %v7722, 0
      %7744 = vmatprep.subr.mxu0 %v7734
      %7745 = vmatpush1.msra.mxu0 %v7733
      %7746 = vmatprep.subr.mxu0 0.0
      %7747 = vmatpush1.msra.mxu0 0.0
      %7748 = vmatprep.subr.mxu0 0.0
      %7749 = vmatpush1.msra.mxu0 0.0
      %7750 = vmatprep.subr.mxu0 0.0
      %7751 = vmatpush1.msra.mxu0 0.0
      %7752 = vmatprep.subr.mxu0 0.0
      %7753 = vmatpush1.msra.mxu0 0.0
      %7754 = vmatprep.subr.mxu0 0.0
      %7755 = vmatpush1.msra.mxu0 0.0
      %7756 = vmatprep.subr.mxu0 0.0
      %7757 = vmatpush1.msra.mxu0 0.0
      %7758 = vmatprep.subr.mxu0 0.0
      %7759 = vmatpush1.msra.mxu0 0.0
      %7760 = vmatprep.subr.mxu0 0.0
      %7761 = vmatpush1.msra.mxu0 0.0
      %7762 = vmatprep.subr.mxu0 0.0
      %7763 = vmatpush1.msra.mxu0 0.0
      %7764 = vmatprep.subr.mxu0 0.0
      %7765 = vmatpush1.msra.mxu0 0.0
      %7766 = vmatprep.subr.mxu0 0.0
      %7767 = vmatpush1.msra.mxu0 0.0
      %7768 = vmatprep.subr.mxu0 0.0
      %7769 = vmatpush1.msra.mxu0 0.0
      %7770 = vmatprep.subr.mxu0 0.0
      %7771 = vmatpush1.msra.mxu0 0.0
      %7772 = vmatprep.subr.mxu0 0.0
      %7773 = vmatpush1.msra.mxu0 0.0
      %7774 = vmatprep.subr.mxu0 0.0
      %7775 = vmatpush1.msra.mxu0 0.0
      %7776 = vmatprep.subr.mxu0 0.0
      %7777 = vmatpush1.msra.mxu0 0.0
      %7778 = vmatprep.subr.mxu0 0.0
      %7779 = vmatpush1.msra.mxu0 0.0
      %7780 = vmatprep.subr.mxu0 0.0
      %7781 = vmatpush1.msra.mxu0 0.0
      %7782 = vmatprep.subr.mxu0 0.0
      %7783 = vmatpush1.msra.mxu0 0.0
      %7784 = vmatprep.subr.mxu0 0.0
      %7785 = vmatpush1.msra.mxu0 0.0
      %7786 = vmatprep.subr.mxu0 0.0
      %7787 = vmatpush1.msra.mxu0 0.0
      %7788 = vmatprep.subr.mxu0 0.0
      %7789 = vmatpush1.msra.mxu0 0.0
      %7790 = vmatprep.subr.mxu0 0.0
      %7791 = vmatpush1.msra.mxu0 0.0
      %7792 = vmatprep.subr.mxu0 0.0
      %7793 = vmatpush1.msra.mxu0 0.0
      %7794 = vmatprep.subr.mxu0 0.0
      %7795 = vmatpush1.msra.mxu0 0.0
      %7796 = vmatprep.subr.mxu0 0.0
      %7797 = vmatpush1.msra.mxu0 0.0
      %7798 = vmatprep.subr.mxu0 0.0
      %7799 = vmatpush1.msra.mxu0 0.0
      %7800 = vmatprep.subr.mxu0 0.0
      %7801 = vmatpush1.msra.mxu0 0.0
      %7802 = vmatprep.subr.mxu0 0.0
      %7803 = vmatpush1.msra.mxu0 0.0
      %7804 = vmatprep.subr.mxu0 0.0
      %7805 = vmatpush1.msra.mxu0 0.0
      %7806 = vmatprep.subr.mxu0 0.0
      %7807 = vmatpush1.msra.mxu0 0.0
      %7808 = vmatprep.mubr.f32.mxu0 0.0
      %7809 = vmatmul.mubr.f32.gmra.mrb[0].mxu0 %v7742
      %v7810 = vpop.f32.mrb[0].mxu0
      %v7811 = vadd.f32 0.0, %v7810
      %v7812 = vpop.f32.mrb[0].mxu0
      %v7813 = vadd.f32 0.0, %v7812
      %7814 = vdwg.mxu0
      %7815 = vmatprep.subr.mxu0 %v7736
      %7816 = vmatpush1.msra.mxu0 %v7735
      %7817 = vmatprep.subr.mxu0 0.0
      %7818 = vmatpush1.msra.mxu0 0.0
      %7819 = vmatprep.subr.mxu0 0.0
      %7820 = vmatpush1.msra.mxu0 0.0
      %7821 = vmatprep.subr.mxu0 0.0
      %7822 = vmatpush1.msra.mxu0 0.0
      %7823 = vmatprep.subr.mxu0 0.0
      %7824 = vmatpush1.msra.mxu0 0.0
      %7825 = vmatprep.subr.mxu0 0.0
      %7826 = vmatpush1.msra.mxu0 0.0
      %7827 = vmatprep.subr.mxu0 0.0
      %7828 = vmatpush1.msra.mxu0 0.0
      %7829 = vmatprep.subr.mxu0 0.0
      %7830 = vmatpush1.msra.mxu0 0.0
      %7831 = vmatprep.subr.mxu0 0.0
      %7832 = vmatpush1.msra.mxu0 0.0
      %7833 = vmatprep.subr.mxu0 0.0
      %7834 = vmatpush1.msra.mxu0 0.0
      %7835 = vmatprep.subr.mxu0 0.0
      %7836 = vmatpush1.msra.mxu0 0.0
      %7837 = vmatprep.subr.mxu0 0.0
      %7838 = vmatpush1.msra.mxu0 0.0
      %7839 = vmatprep.subr.mxu0 0.0
      %7840 = vmatpush1.msra.mxu0 0.0
      %7841 = vmatprep.subr.mxu0 0.0
      %7842 = vmatpush1.msra.mxu0 0.0
      %7843 = vmatprep.subr.mxu0 0.0
      %7844 = vmatpush1.msra.mxu0 0.0
      %7845 = vmatprep.subr.mxu0 0.0
      %7846 = vmatpush1.msra.mxu0 0.0
      %7847 = vmatprep.subr.mxu0 0.0
      %7848 = vmatpush1.msra.mxu0 0.0
      %7849 = vmatprep.subr.mxu0 0.0
      %7850 = vmatpush1.msra.mxu0 0.0
      %7851 = vmatprep.subr.mxu0 0.0
      %7852 = vmatpush1.msra.mxu0 0.0
      %7853 = vmatprep.subr.mxu0 0.0
      %7854 = vmatpush1.msra.mxu0 0.0
      %7855 = vmatprep.subr.mxu0 0.0
      %7856 = vmatpush1.msra.mxu0 0.0
      %7857 = vmatprep.subr.mxu0 0.0
      %7858 = vmatpush1.msra.mxu0 0.0
      %7859 = vmatprep.subr.mxu0 0.0
      %7860 = vmatpush1.msra.mxu0 0.0
      %7861 = vmatprep.subr.mxu0 0.0
      %7862 = vmatpush1.msra.mxu0 0.0
      %7863 = vmatprep.subr.mxu0 0.0
      %7864 = vmatpush1.msra.mxu0 0.0
      %7865 = vmatprep.subr.mxu0 0.0
      %7866 = vmatpush1.msra.mxu0 0.0
      %7867 = vmatprep.subr.mxu0 0.0
      %7868 = vmatpush1.msra.mxu0 0.0
      %7869 = vmatprep.subr.mxu0 0.0
      %7870 = vmatpush1.msra.mxu0 0.0
      %7871 = vmatprep.subr.mxu0 0.0
      %7872 = vmatpush1.msra.mxu0 0.0
      %7873 = vmatprep.subr.mxu0 0.0
      %7874 = vmatpush1.msra.mxu0 0.0
      %7875 = vmatprep.subr.mxu0 0.0
      %7876 = vmatpush1.msra.mxu0 0.0
      %7877 = vmatprep.subr.mxu0 0.0
      %7878 = vmatpush1.msra.mxu0 0.0
      %7879 = vmatprep.mubr.f32.mxu0 0.0
      %7880 = vmatmul.mubr.f32.gmra.mrb[0].mxu0 %v7742
      %v7881 = vpop.f32.mrb[0].mxu0
      %v7882 = vadd.f32 0.0, %v7881
      %v7883 = vpop.f32.mrb[0].mxu0
      %v7884 = vadd.f32 0.0, %v7883
      %7885 = vdwg.mxu0
      %v7886 = vadd.f32 %v7717, %v7811
      %v7887 = vadd.f32 %v7718, %v7813
      %v7888 = vadd.f32 %v7719, %v7882
      %v7889 = vadd.f32 %v7720, %v7884
      %s7890 = scalar_lea.vmem %s10, 12
      %v7891 = vld [vmem:[%s7890] sm:$0x3]
      %7892 = vrot.lane.b32.xlu0 %v6875, 38
      %v7893 = vpop.permute.xlu0 %7892
      %7894 = vrot.lane.b32.xlu0 %v6876, 38
      %v7895 = vpop.permute.xlu0 %7894
      %7896 = vrot.lane.b32.xlu0 %v6877, 38
      %v7897 = vpop.permute.xlu0 %7896
      %7898 = vrot.lane.b32.xlu0 %v6878, 38
      %v7899 = vpop.permute.xlu0 %7898
      %7900 = vrot.lane.b32.xlu0 %v6879, 38
      %v7901 = vpop.permute.xlu0 %7900
      %v7902 = vsel %vm1594, %v7893, %v7895
      %v7903 = vsel %vm1594, %v7895, %v7897
      %v7904 = vsel %vm1594, %v7897, %v7899
      %v7905 = vsel %vm1594, %v7899, %v7901
      %v7911 = vsel %vm2205, %v7891, 0
      %7913 = vmatprep.subr.mxu0 %v7903
      %7914 = vmatpush1.msra.mxu0 %v7902
      %7915 = vmatprep.subr.mxu0 0.0
      %7916 = vmatpush1.msra.mxu0 0.0
      %7917 = vmatprep.subr.mxu0 0.0
      %7918 = vmatpush1.msra.mxu0 0.0
      %7919 = vmatprep.subr.mxu0 0.0
      %7920 = vmatpush1.msra.mxu0 0.0
      %7921 = vmatprep.subr.mxu0 0.0
      %7922 = vmatpush1.msra.mxu0 0.0
      %7923 = vmatprep.subr.mxu0 0.0
      %7924 = vmatpush1.msra.mxu0 0.0
      %7925 = vmatprep.subr.mxu0 0.0
      %7926 = vmatpush1.msra.mxu0 0.0
      %7927 = vmatprep.subr.mxu0 0.0
      %7928 = vmatpush1.msra.mxu0 0.0
      %7929 = vmatprep.subr.mxu0 0.0
      %7930 = vmatpush1.msra.mxu0 0.0
      %7931 = vmatprep.subr.mxu0 0.0
      %7932 = vmatpush1.msra.mxu0 0.0
      %7933 = vmatprep.subr.mxu0 0.0
      %7934 = vmatpush1.msra.mxu0 0.0
      %7935 = vmatprep.subr.mxu0 0.0
      %7936 = vmatpush1.msra.mxu0 0.0
      %7937 = vmatprep.subr.mxu0 0.0
      %7938 = vmatpush1.msra.mxu0 0.0
      %7939 = vmatprep.subr.mxu0 0.0
      %7940 = vmatpush1.msra.mxu0 0.0
      %7941 = vmatprep.subr.mxu0 0.0
      %7942 = vmatpush1.msra.mxu0 0.0
      %7943 = vmatprep.subr.mxu0 0.0
      %7944 = vmatpush1.msra.mxu0 0.0
      %7945 = vmatprep.subr.mxu0 0.0
      %7946 = vmatpush1.msra.mxu0 0.0
      %7947 = vmatprep.subr.mxu0 0.0
      %7948 = vmatpush1.msra.mxu0 0.0
      %7949 = vmatprep.subr.mxu0 0.0
      %7950 = vmatpush1.msra.mxu0 0.0
      %7951 = vmatprep.subr.mxu0 0.0
      %7952 = vmatpush1.msra.mxu0 0.0
      %7953 = vmatprep.subr.mxu0 0.0
      %7954 = vmatpush1.msra.mxu0 0.0
      %7955 = vmatprep.subr.mxu0 0.0
      %7956 = vmatpush1.msra.mxu0 0.0
      %7957 = vmatprep.subr.mxu0 0.0
      %7958 = vmatpush1.msra.mxu0 0.0
      %7959 = vmatprep.subr.mxu0 0.0
      %7960 = vmatpush1.msra.mxu0 0.0
      %7961 = vmatprep.subr.mxu0 0.0
      %7962 = vmatpush1.msra.mxu0 0.0
      %7963 = vmatprep.subr.mxu0 0.0
      %7964 = vmatpush1.msra.mxu0 0.0
      %7965 = vmatprep.subr.mxu0 0.0
      %7966 = vmatpush1.msra.mxu0 0.0
      %7967 = vmatprep.subr.mxu0 0.0
      %7968 = vmatpush1.msra.mxu0 0.0
      %7969 = vmatprep.subr.mxu0 0.0
      %7970 = vmatpush1.msra.mxu0 0.0
      %7971 = vmatprep.subr.mxu0 0.0
      %7972 = vmatpush1.msra.mxu0 0.0
      %7973 = vmatprep.subr.mxu0 0.0
      %7974 = vmatpush1.msra.mxu0 0.0
      %7975 = vmatprep.subr.mxu0 0.0
      %7976 = vmatpush1.msra.mxu0 0.0
      %7977 = vmatprep.mubr.f32.mxu0 0.0
      %7978 = vmatmul.mubr.f32.gmra.mrb[0].mxu0 %v7911
      %v7979 = vpop.f32.mrb[0].mxu0
      %v7980 = vadd.f32 0.0, %v7979
      %v7981 = vpop.f32.mrb[0].mxu0
      %v7982 = vadd.f32 0.0, %v7981
      %7983 = vdwg.mxu0
      %7984 = vmatprep.subr.mxu0 %v7905
      %7985 = vmatpush1.msra.mxu0 %v7904
      %7986 = vmatprep.subr.mxu0 0.0
      %7987 = vmatpush1.msra.mxu0 0.0
      %7988 = vmatprep.subr.mxu0 0.0
      %7989 = vmatpush1.msra.mxu0 0.0
      %7990 = vmatprep.subr.mxu0 0.0
      %7991 = vmatpush1.msra.mxu0 0.0
      %7992 = vmatprep.subr.mxu0 0.0
      %7993 = vmatpush1.msra.mxu0 0.0
      %7994 = vmatprep.subr.mxu0 0.0
      %7995 = vmatpush1.msra.mxu0 0.0
      %7996 = vmatprep.subr.mxu0 0.0
      %7997 = vmatpush1.msra.mxu0 0.0
      %7998 = vmatprep.subr.mxu0 0.0
      %7999 = vmatpush1.msra.mxu0 0.0
      %8000 = vmatprep.subr.mxu0 0.0
      %8001 = vmatpush1.msra.mxu0 0.0
      %8002 = vmatprep.subr.mxu0 0.0
      %8003 = vmatpush1.msra.mxu0 0.0
      %8004 = vmatprep.subr.mxu0 0.0
      %8005 = vmatpush1.msra.mxu0 0.0
      %8006 = vmatprep.subr.mxu0 0.0
      %8007 = vmatpush1.msra.mxu0 0.0
      %8008 = vmatprep.subr.mxu0 0.0
      %8009 = vmatpush1.msra.mxu0 0.0
      %8010 = vmatprep.subr.mxu0 0.0
      %8011 = vmatpush1.msra.mxu0 0.0
      %8012 = vmatprep.subr.mxu0 0.0
      %8013 = vmatpush1.msra.mxu0 0.0
      %8014 = vmatprep.subr.mxu0 0.0
      %8015 = vmatpush1.msra.mxu0 0.0
      %8016 = vmatprep.subr.mxu0 0.0
      %8017 = vmatpush1.msra.mxu0 0.0
      %8018 = vmatprep.subr.mxu0 0.0
      %8019 = vmatpush1.msra.mxu0 0.0
      %8020 = vmatprep.subr.mxu0 0.0
      %8021 = vmatpush1.msra.mxu0 0.0
      %8022 = vmatprep.subr.mxu0 0.0
      %8023 = vmatpush1.msra.mxu0 0.0
      %8024 = vmatprep.subr.mxu0 0.0
      %8025 = vmatpush1.msra.mxu0 0.0
      %8026 = vmatprep.subr.mxu0 0.0
      %8027 = vmatpush1.msra.mxu0 0.0
      %8028 = vmatprep.subr.mxu0 0.0
      %8029 = vmatpush1.msra.mxu0 0.0
      %8030 = vmatprep.subr.mxu0 0.0
      %8031 = vmatpush1.msra.mxu0 0.0
      %8032 = vmatprep.subr.mxu0 0.0
      %8033 = vmatpush1.msra.mxu0 0.0
      %8034 = vmatprep.subr.mxu0 0.0
      %8035 = vmatpush1.msra.mxu0 0.0
      %8036 = vmatprep.subr.mxu0 0.0
      %8037 = vmatpush1.msra.mxu0 0.0
      %8038 = vmatprep.subr.mxu0 0.0
      %8039 = vmatpush1.msra.mxu0 0.0
      %8040 = vmatprep.subr.mxu0 0.0
      %8041 = vmatpush1.msra.mxu0 0.0
      %8042 = vmatprep.subr.mxu0 0.0
      %8043 = vmatpush1.msra.mxu0 0.0
      %8044 = vmatprep.subr.mxu0 0.0
      %8045 = vmatpush1.msra.mxu0 0.0
      %8046 = vmatprep.subr.mxu0 0.0
      %8047 = vmatpush1.msra.mxu0 0.0
      %8048 = vmatprep.mubr.f32.mxu0 0.0
      %8049 = vmatmul.mubr.f32.gmra.mrb[0].mxu0 %v7911
      %v8050 = vpop.f32.mrb[0].mxu0
      %v8051 = vadd.f32 0.0, %v8050
      %v8052 = vpop.f32.mrb[0].mxu0
      %v8053 = vadd.f32 0.0, %v8052
      %8054 = vdwg.mxu0
      %v8055 = vadd.f32 %v7886, %v7980
      %v8056 = vadd.f32 %v7887, %v7982
      %v8057 = vadd.f32 %v7888, %v8051
      %v8058 = vadd.f32 %v7889, %v8053
      %s8059 = scalar_lea.vmem %s10, 14
      %v8060 = vld [vmem:[%s8059] sm:$0x3]
      %8061 = vrot.lane.b32.xlu0 %v6875, 37
      %v8062 = vpop.permute.xlu0 %8061
      %8063 = vrot.lane.b32.xlu0 %v6876, 37
      %v8064 = vpop.permute.xlu0 %8063
      %8065 = vrot.lane.b32.xlu0 %v6877, 37
      %v8066 = vpop.permute.xlu0 %8065
      %8067 = vrot.lane.b32.xlu0 %v6878, 37
      %v8068 = vpop.permute.xlu0 %8067
      %8069 = vrot.lane.b32.xlu0 %v6879, 37
      %v8070 = vpop.permute.xlu0 %8069
      %v8071 = vsel %vm1768, %v8062, %v8064
      %v8072 = vsel %vm1768, %v8064, %v8066
      %v8073 = vsel %vm1768, %v8066, %v8068
      %v8074 = vsel %vm1768, %v8068, %v8070
      %v8080 = vsel %vm2205, %v8060, 0
      %8082 = vmatprep.subr.mxu0 %v8072
      %8083 = vmatpush1.msra.mxu0 %v8071
      %8084 = vmatprep.subr.mxu0 0.0
      %8085 = vmatpush1.msra.mxu0 0.0
      %8086 = vmatprep.subr.mxu0 0.0
      %8087 = vmatpush1.msra.mxu0 0.0
      %8088 = vmatprep.subr.mxu0 0.0
      %8089 = vmatpush1.msra.mxu0 0.0
      %8090 = vmatprep.subr.mxu0 0.0
      %8091 = vmatpush1.msra.mxu0 0.0
      %8092 = vmatprep.subr.mxu0 0.0
      %8093 = vmatpush1.msra.mxu0 0.0
      %8094 = vmatprep.subr.mxu0 0.0
      %8095 = vmatpush1.msra.mxu0 0.0
      %8096 = vmatprep.subr.mxu0 0.0
      %8097 = vmatpush1.msra.mxu0 0.0
      %8098 = vmatprep.subr.mxu0 0.0
      %8099 = vmatpush1.msra.mxu0 0.0
      %8100 = vmatprep.subr.mxu0 0.0
      %8101 = vmatpush1.msra.mxu0 0.0
      %8102 = vmatprep.subr.mxu0 0.0
      %8103 = vmatpush1.msra.mxu0 0.0
      %8104 = vmatprep.subr.mxu0 0.0
      %8105 = vmatpush1.msra.mxu0 0.0
      %8106 = vmatprep.subr.mxu0 0.0
      %8107 = vmatpush1.msra.mxu0 0.0
      %8108 = vmatprep.subr.mxu0 0.0
      %8109 = vmatpush1.msra.mxu0 0.0
      %8110 = vmatprep.subr.mxu0 0.0
      %8111 = vmatpush1.msra.mxu0 0.0
      %8112 = vmatprep.subr.mxu0 0.0
      %8113 = vmatpush1.msra.mxu0 0.0
      %8114 = vmatprep.subr.mxu0 0.0
      %8115 = vmatpush1.msra.mxu0 0.0
      %8116 = vmatprep.subr.mxu0 0.0
      %8117 = vmatpush1.msra.mxu0 0.0
      %8118 = vmatprep.subr.mxu0 0.0
      %8119 = vmatpush1.msra.mxu0 0.0
      %8120 = vmatprep.subr.mxu0 0.0
      %8121 = vmatpush1.msra.mxu0 0.0
      %8122 = vmatprep.subr.mxu0 0.0
      %8123 = vmatpush1.msra.mxu0 0.0
      %8124 = vmatprep.subr.mxu0 0.0
      %8125 = vmatpush1.msra.mxu0 0.0
      %8126 = vmatprep.subr.mxu0 0.0
      %8127 = vmatpush1.msra.mxu0 0.0
      %8128 = vmatprep.subr.mxu0 0.0
      %8129 = vmatpush1.msra.mxu0 0.0
      %8130 = vmatprep.subr.mxu0 0.0
      %8131 = vmatpush1.msra.mxu0 0.0
      %8132 = vmatprep.subr.mxu0 0.0
      %8133 = vmatpush1.msra.mxu0 0.0
      %8134 = vmatprep.subr.mxu0 0.0
      %8135 = vmatpush1.msra.mxu0 0.0
      %8136 = vmatprep.subr.mxu0 0.0
      %8137 = vmatpush1.msra.mxu0 0.0
      %8138 = vmatprep.subr.mxu0 0.0
      %8139 = vmatpush1.msra.mxu0 0.0
      %8140 = vmatprep.subr.mxu0 0.0
      %8141 = vmatpush1.msra.mxu0 0.0
      %8142 = vmatprep.subr.mxu0 0.0
      %8143 = vmatpush1.msra.mxu0 0.0
      %8144 = vmatprep.subr.mxu0 0.0
      %8145 = vmatpush1.msra.mxu0 0.0
      %8146 = vmatprep.mubr.f32.mxu0 0.0
      %8147 = vmatmul.mubr.f32.gmra.mrb[0].mxu0 %v8080
      %v8148 = vpop.f32.mrb[0].mxu0
      %v8149 = vadd.f32 0.0, %v8148
      %v8150 = vpop.f32.mrb[0].mxu0
      %v8151 = vadd.f32 0.0, %v8150
      %8152 = vdwg.mxu0
      %8153 = vmatprep.subr.mxu0 %v8074
      %8154 = vmatpush1.msra.mxu0 %v8073
      %8155 = vmatprep.subr.mxu0 0.0
      %8156 = vmatpush1.msra.mxu0 0.0
      %8157 = vmatprep.subr.mxu0 0.0
      %8158 = vmatpush1.msra.mxu0 0.0
      %8159 = vmatprep.subr.mxu0 0.0
      %8160 = vmatpush1.msra.mxu0 0.0
      %8161 = vmatprep.subr.mxu0 0.0
      %8162 = vmatpush1.msra.mxu0 0.0
      %8163 = vmatprep.subr.mxu0 0.0
      %8164 = vmatpush1.msra.mxu0 0.0
      %8165 = vmatprep.subr.mxu0 0.0
      %8166 = vmatpush1.msra.mxu0 0.0
      %8167 = vmatprep.subr.mxu0 0.0
      %8168 = vmatpush1.msra.mxu0 0.0
      %8169 = vmatprep.subr.mxu0 0.0
      %8170 = vmatpush1.msra.mxu0 0.0
      %8171 = vmatprep.subr.mxu0 0.0
      %8172 = vmatpush1.msra.mxu0 0.0
      %8173 = vmatprep.subr.mxu0 0.0
      %8174 = vmatpush1.msra.mxu0 0.0
      %8175 = vmatprep.subr.mxu0 0.0
      %8176 = vmatpush1.msra.mxu0 0.0
      %8177 = vmatprep.subr.mxu0 0.0
      %8178 = vmatpush1.msra.mxu0 0.0
      %8179 = vmatprep.subr.mxu0 0.0
      %8180 = vmatpush1.msra.mxu0 0.0
      %8181 = vmatprep.subr.mxu0 0.0
      %8182 = vmatpush1.msra.mxu0 0.0
      %8183 = vmatprep.subr.mxu0 0.0
      %8184 = vmatpush1.msra.mxu0 0.0
      %8185 = vmatprep.subr.mxu0 0.0
      %8186 = vmatpush1.msra.mxu0 0.0
      %8187 = vmatprep.subr.mxu0 0.0
      %8188 = vmatpush1.msra.mxu0 0.0
      %8189 = vmatprep.subr.mxu0 0.0
      %8190 = vmatpush1.msra.mxu0 0.0
      %8191 = vmatprep.subr.mxu0 0.0
      %8192 = vmatpush1.msra.mxu0 0.0
      %8193 = vmatprep.subr.mxu0 0.0
      %8194 = vmatpush1.msra.mxu0 0.0
      %8195 = vmatprep.subr.mxu0 0.0
      %8196 = vmatpush1.msra.mxu0 0.0
      %8197 = vmatprep.subr.mxu0 0.0
      %8198 = vmatpush1.msra.mxu0 0.0
      %8199 = vmatprep.subr.mxu0 0.0
      %8200 = vmatpush1.msra.mxu0 0.0
      %8201 = vmatprep.subr.mxu0 0.0
      %8202 = vmatpush1.msra.mxu0 0.0
      %8203 = vmatprep.subr.mxu0 0.0
      %8204 = vmatpush1.msra.mxu0 0.0
      %8205 = vmatprep.subr.mxu0 0.0
      %8206 = vmatpush1.msra.mxu0 0.0
      %8207 = vmatprep.subr.mxu0 0.0
      %8208 = vmatpush1.msra.mxu0 0.0
      %8209 = vmatprep.subr.mxu0 0.0
      %8210 = vmatpush1.msra.mxu0 0.0
      %8211 = vmatprep.subr.mxu0 0.0
      %8212 = vmatpush1.msra.mxu0 0.0
      %8213 = vmatprep.subr.mxu0 0.0
      %8214 = vmatpush1.msra.mxu0 0.0
      %8215 = vmatprep.subr.mxu0 0.0
      %8216 = vmatpush1.msra.mxu0 0.0
      %8217 = vmatprep.mubr.f32.mxu0 0.0
      %8218 = vmatmul.mubr.f32.gmra.mrb[0].mxu0 %v8080
      %v8219 = vpop.f32.mrb[0].mxu0
      %v8220 = vadd.f32 0.0, %v8219
      %v8221 = vpop.f32.mrb[0].mxu0
      %v8222 = vadd.f32 0.0, %v8221
      %8223 = vdwg.mxu0
      %v8224 = vadd.f32 %v8055, %v8149
      %v8225 = vadd.f32 %v8056, %v8151
      %v8226 = vadd.f32 %v8057, %v8220
      %v8227 = vadd.f32 %v8058, %v8222
      %s8228 = scalar_lea.vmem %s10, 16
      %v8229 = vld [vmem:[%s8228] sm:$0x3]
      %8230 = vrot.lane.b32.xlu0 %v6875, 36
      %v8231 = vpop.permute.xlu0 %8230
      %8232 = vrot.lane.b32.xlu0 %v6876, 36
      %v8233 = vpop.permute.xlu0 %8232
      %8234 = vrot.lane.b32.xlu0 %v6877, 36
      %v8235 = vpop.permute.xlu0 %8234
      %8236 = vrot.lane.b32.xlu0 %v6878, 36
      %v8237 = vpop.permute.xlu0 %8236
      %8238 = vrot.lane.b32.xlu0 %v6879, 36
      %v8239 = vpop.permute.xlu0 %8238
      %v8240 = vsel %vm1942, %v8231, %v8233
      %v8241 = vsel %vm1942, %v8233, %v8235
      %v8242 = vsel %vm1942, %v8235, %v8237
      %v8243 = vsel %vm1942, %v8237, %v8239
      %v8249 = vsel %vm2205, %v8229, 0
      %8251 = vmatprep.subr.mxu0 %v8241
      %8252 = vmatpush1.msra.mxu0 %v8240
      %8253 = vmatprep.subr.mxu0 0.0
      %8254 = vmatpush1.msra.mxu0 0.0
      %8255 = vmatprep.subr.mxu0 0.0
      %8256 = vmatpush1.msra.mxu0 0.0
      %8257 = vmatprep.subr.mxu0 0.0
      %8258 = vmatpush1.msra.mxu0 0.0
      %8259 = vmatprep.subr.mxu0 0.0
      %8260 = vmatpush1.msra.mxu0 0.0
      %8261 = vmatprep.subr.mxu0 0.0
      %8262 = vmatpush1.msra.mxu0 0.0
      %8263 = vmatprep.subr.mxu0 0.0
      %8264 = vmatpush1.msra.mxu0 0.0
      %8265 = vmatprep.subr.mxu0 0.0
      %8266 = vmatpush1.msra.mxu0 0.0
      %8267 = vmatprep.subr.mxu0 0.0
      %8268 = vmatpush1.msra.mxu0 0.0
      %8269 = vmatprep.subr.mxu0 0.0
      %8270 = vmatpush1.msra.mxu0 0.0
      %8271 = vmatprep.subr.mxu0 0.0
      %8272 = vmatpush1.msra.mxu0 0.0
      %8273 = vmatprep.subr.mxu0 0.0
      %8274 = vmatpush1.msra.mxu0 0.0
      %8275 = vmatprep.subr.mxu0 0.0
      %8276 = vmatpush1.msra.mxu0 0.0
      %8277 = vmatprep.subr.mxu0 0.0
      %8278 = vmatpush1.msra.mxu0 0.0
      %8279 = vmatprep.subr.mxu0 0.0
      %8280 = vmatpush1.msra.mxu0 0.0
      %8281 = vmatprep.subr.mxu0 0.0
      %8282 = vmatpush1.msra.mxu0 0.0
      %8283 = vmatprep.subr.mxu0 0.0
      %8284 = vmatpush1.msra.mxu0 0.0
      %8285 = vmatprep.subr.mxu0 0.0
      %8286 = vmatpush1.msra.mxu0 0.0
      %8287 = vmatprep.subr.mxu0 0.0
      %8288 = vmatpush1.msra.mxu0 0.0
      %8289 = vmatprep.subr.mxu0 0.0
      %8290 = vmatpush1.msra.mxu0 0.0
      %8291 = vmatprep.subr.mxu0 0.0
      %8292 = vmatpush1.msra.mxu0 0.0
      %8293 = vmatprep.subr.mxu0 0.0
      %8294 = vmatpush1.msra.mxu0 0.0
      %8295 = vmatprep.subr.mxu0 0.0
      %8296 = vmatpush1.msra.mxu0 0.0
      %8297 = vmatprep.subr.mxu0 0.0
      %8298 = vmatpush1.msra.mxu0 0.0
      %8299 = vmatprep.subr.mxu0 0.0
      %8300 = vmatpush1.msra.mxu0 0.0
      %8301 = vmatprep.subr.mxu0 0.0
      %8302 = vmatpush1.msra.mxu0 0.0
      %8303 = vmatprep.subr.mxu0 0.0
      %8304 = vmatpush1.msra.mxu0 0.0
      %8305 = vmatprep.subr.mxu0 0.0
      %8306 = vmatpush1.msra.mxu0 0.0
      %8307 = vmatprep.subr.mxu0 0.0
      %8308 = vmatpush1.msra.mxu0 0.0
      %8309 = vmatprep.subr.mxu0 0.0
      %8310 = vmatpush1.msra.mxu0 0.0
      %8311 = vmatprep.subr.mxu0 0.0
      %8312 = vmatpush1.msra.mxu0 0.0
      %8313 = vmatprep.subr.mxu0 0.0
      %8314 = vmatpush1.msra.mxu0 0.0
      %8315 = vmatprep.mubr.f32.mxu0 0.0
      %8316 = vmatmul.mubr.f32.gmra.mrb[0].mxu0 %v8249
      %v8317 = vpop.f32.mrb[0].mxu0
      %v8318 = vadd.f32 0.0, %v8317
      %v8319 = vpop.f32.mrb[0].mxu0
      %v8320 = vadd.f32 0.0, %v8319
      %8321 = vdwg.mxu0
      %8322 = vmatprep.subr.mxu0 %v8243
      %8323 = vmatpush1.msra.mxu0 %v8242
      %8324 = vmatprep.subr.mxu0 0.0
      %8325 = vmatpush1.msra.mxu0 0.0
      %8326 = vmatprep.subr.mxu0 0.0
      %8327 = vmatpush1.msra.mxu0 0.0
      %8328 = vmatprep.subr.mxu0 0.0
      %8329 = vmatpush1.msra.mxu0 0.0
      %8330 = vmatprep.subr.mxu0 0.0
      %8331 = vmatpush1.msra.mxu0 0.0
      %8332 = vmatprep.subr.mxu0 0.0
      %8333 = vmatpush1.msra.mxu0 0.0
      %8334 = vmatprep.subr.mxu0 0.0
      %8335 = vmatpush1.msra.mxu0 0.0
      %8336 = vmatprep.subr.mxu0 0.0
      %8337 = vmatpush1.msra.mxu0 0.0
      %8338 = vmatprep.subr.mxu0 0.0
      %8339 = vmatpush1.msra.mxu0 0.0
      %8340 = vmatprep.subr.mxu0 0.0
      %8341 = vmatpush1.msra.mxu0 0.0
      %8342 = vmatprep.subr.mxu0 0.0
      %8343 = vmatpush1.msra.mxu0 0.0
      %8344 = vmatprep.subr.mxu0 0.0
      %8345 = vmatpush1.msra.mxu0 0.0
      %8346 = vmatprep.subr.mxu0 0.0
      %8347 = vmatpush1.msra.mxu0 0.0
      %8348 = vmatprep.subr.mxu0 0.0
      %8349 = vmatpush1.msra.mxu0 0.0
      %8350 = vmatprep.subr.mxu0 0.0
      %8351 = vmatpush1.msra.mxu0 0.0
      %8352 = vmatprep.subr.mxu0 0.0
      %8353 = vmatpush1.msra.mxu0 0.0
      %8354 = vmatprep.subr.mxu0 0.0
      %8355 = vmatpush1.msra.mxu0 0.0
      %8356 = vmatprep.subr.mxu0 0.0
      %8357 = vmatpush1.msra.mxu0 0.0
      %8358 = vmatprep.subr.mxu0 0.0
      %8359 = vmatpush1.msra.mxu0 0.0
      %8360 = vmatprep.subr.mxu0 0.0
      %8361 = vmatpush1.msra.mxu0 0.0
      %8362 = vmatprep.subr.mxu0 0.0
      %8363 = vmatpush1.msra.mxu0 0.0
      %8364 = vmatprep.subr.mxu0 0.0
      %8365 = vmatpush1.msra.mxu0 0.0
      %8366 = vmatprep.subr.mxu0 0.0
      %8367 = vmatpush1.msra.mxu0 0.0
      %8368 = vmatprep.subr.mxu0 0.0
      %8369 = vmatpush1.msra.mxu0 0.0
      %8370 = vmatprep.subr.mxu0 0.0
      %8371 = vmatpush1.msra.mxu0 0.0
      %8372 = vmatprep.subr.mxu0 0.0
      %8373 = vmatpush1.msra.mxu0 0.0
      %8374 = vmatprep.subr.mxu0 0.0
      %8375 = vmatpush1.msra.mxu0 0.0
      %8376 = vmatprep.subr.mxu0 0.0
      %8377 = vmatpush1.msra.mxu0 0.0
      %8378 = vmatprep.subr.mxu0 0.0
      %8379 = vmatpush1.msra.mxu0 0.0
      %8380 = vmatprep.subr.mxu0 0.0
      %8381 = vmatpush1.msra.mxu0 0.0
      %8382 = vmatprep.subr.mxu0 0.0
      %8383 = vmatpush1.msra.mxu0 0.0
      %8384 = vmatprep.subr.mxu0 0.0
      %8385 = vmatpush1.msra.mxu0 0.0
      %8386 = vmatprep.mubr.f32.mxu0 0.0
      %8387 = vmatmul.mubr.f32.gmra.mrb[0].mxu0 %v8249
      %v8388 = vpop.f32.mrb[0].mxu0
      %v8389 = vadd.f32 0.0, %v8388
      %v8390 = vpop.f32.mrb[0].mxu0
      %v8391 = vadd.f32 0.0, %v8390
      %8392 = vdwg.mxu0
      %v8393 = vadd.f32 %v8224, %v8318
      %v8394 = vadd.f32 %v8225, %v8320
      %v8395 = vadd.f32 %v8226, %v8389
      %v8396 = vadd.f32 %v8227, %v8391
      %v8397 = vld [vmem:[%s11] sm:$0x3]
      %8399 = vset.pattern.permute.xlu0 0
      %8400 = vperm.xlu0 %8399, %v8397
      %v8401 = vpop.permute.xlu0 %8400
      %v8403 = vadd.f32 %v8393, %v8401
      %v8404 = vadd.f32 %v8394, %v8401
      %v8405 = vadd.f32 %v8395, %v8401
      %v8406 = vadd.f32 %v8396, %v8401
      %v8407 = vmul.f32 %v8403, 0.01
      %v8408 = vmul.f32 %v8404, 0.01
      %v8409 = vmul.f32 %v8405, 0.01
      %v8410 = vmul.f32 %v8406, 0.01
      %v8411 = vmax.f32 %v8403, %v8407
      %v8412 = vmax.f32 %v8404, %v8408
      %v8413 = vmax.f32 %v8405, %v8409
      %v8414 = vmax.f32 %v8406, %v8410
      %v8415 = vmul.f32 %v8411, %v2126
      %v8416 = vmul.f32 %v8412, %v2130
      %v8417 = vmul.f32 %v8413, %v2134
      %v8418 = vmul.f32 %v8414, %v2138
      %v8423 = vadd.f32 %v8415, %v502
      %v8424 = vadd.f32 %v8416, %v510
      %v8425 = vadd.f32 %v8417, %v509
      %v8426 = vadd.f32 %v8418, %v511
      %v8431 = vcombine.low %v8423, %v8424
      %v8432 = vcombine.low %v8425, %v8426
      %v8434 = vunpack.c.l.s4 1983009808
      %v8435 = vunpack.c.0.s8 %v8434
      %v8436 = vlaneseq
      %v8437 = vshrl.u32 %v8436, 7
      %v8438 = vsub.s32 %v8435, %v8437
      %v8439 = vrot.slane %v8431, %v8438
      %v8441 = vunpack.c.l.s4 1983009808
      %v8442 = vunpack.c.0.s8 %v8441
      %v8443 = vlaneseq
      %v8444 = vshrl.u32 %v8443, 7
      %v8445 = vsub.s32 %v8442, %v8444
      %v8446 = vrot.slane %v8432, %v8445
      %v8447 = vcombine.low %v8439, %v8446
      %vm8449 = vcmask 1043458
      %vm8450 = vmor %vm8449, %vm567
      %vm8451 = vcmask 1045508
      %vm8452 = vmor %vm8451, %vm8450
      %vm8453 = vcmask 818182
      %vm8454 = vmor %vm8453, %vm8452
      %8455 = vst.msk [vmem:[%s483] sm:$0xff] %vm8454, %v8447
      %v8456 = vmul.f32 %v8423, %v8423
      %v8457 = vmul.f32 %v8424, %v8424
      %v8458 = vmul.f32 %v8425, %v8425
      %v8459 = vmul.f32 %v8426, %v8426
      %v8460 = vsel %vm567, %v8456, 0.0
      %v8461 = vrot.slane %v8460, 4
      %v8462 = vadd.f32 %v8460, %v8461
      %v8463 = vrot.slane %v8462, 2
      %v8464 = vadd.f32 %v8462, %v8463
      %v8465 = vrot.slane %v8464, 1
      %v8466 = vadd.f32 %v8464, %v8465
      %v8467 = vsel %vm567, %v8457, 0.0
      %v8468 = vrot.slane %v8467, 4
      %v8469 = vadd.f32 %v8467, %v8468
      %v8470 = vrot.slane %v8469, 2
      %v8471 = vadd.f32 %v8469, %v8470
      %v8472 = vrot.slane %v8471, 1
      %v8473 = vadd.f32 %v8471, %v8472
      %v8474 = vsel %vm567, %v8458, 0.0
      %v8475 = vrot.slane %v8474, 4
      %v8476 = vadd.f32 %v8474, %v8475
      %v8477 = vrot.slane %v8476, 2
      %v8478 = vadd.f32 %v8476, %v8477
      %v8479 = vrot.slane %v8478, 1
      %v8480 = vadd.f32 %v8478, %v8479
      %vm8481 = vcmask 812032
      %v8482 = vsel %vm8481, %v8459, 0.0
      %v8483 = vrot.slane %v8482, 4
      %v8484 = vadd.f32 %v8482, %v8483
      %v8485 = vrot.slane %v8484, 2
      %v8486 = vadd.f32 %v8484, %v8485
      %v8487 = vrot.slane %v8486, 1
      %v8488 = vadd.f32 %v8486, %v8487
      %p8489 = scmp.eq.s32.totalorder %s30, 0
      // Predicated region
      $region69: #{_lambda_.1} parent=67 // pred_check
        %p8490 = pneg %p8489
      $region70: #{_lambda_.1} parent=67 // pred_check_branch
        %8492 = sbr.rel (%p8490) target = $region72
      $region71: #{_lambda_.1} parent=67 // pred_region
        %v8497 = vcombine.low %v8466, %v8473
        %v8498 = vcombine.low %v8480, %v8488
        %v8500 = vunpack.c.l.s4 1966171168
        %v8501 = vunpack.c.0.s8 %v8500
        %v8502 = vlaneseq
        %v8503 = vshrl.u32 %v8502, 7
        %v8504 = vsub.s32 %v8501, %v8503
        %v8505 = vrot.slane %v8497, %v8504
        %v8507 = vunpack.c.l.s4 1966171168
        %v8508 = vunpack.c.0.s8 %v8507
        %v8509 = vlaneseq
        %v8510 = vshrl.u32 %v8509, 7
        %v8511 = vsub.s32 %v8508, %v8510
        %v8512 = vrot.slane %v8498, %v8511
        %v8513 = vcombine.low %v8505, %v8512
        %v8515 = vunpack.c.l.s4 1966171168
        %v8516 = vunpack.c.0.s8 %v8515
        %v8517 = vlaneseq
        %v8518 = vshrl.u32 %v8517, 7
        %v8519 = vsub.s32 %v8516, %v8518
        %v8520 = vrot.slane %v8513, %v8519
        %v8522 = vlaneseq
        %vm8523 = vcmp.ge.s32.totalorder %v8522, 0
        %vm8524 = vcmp.lt.s32.totalorder %v8522, 484
        %vm8525 = vmand %vm8523, %vm8524
        %8526 = vst.msk [vmem:[%s487] sm:$0xf] %vm8525, %v8520
      $region72: #{_lambda_.1} parent=67 // pred_fallthru
        _
      %p8527 = scmp.gt.s32.totalorder %s30, 0
      // Predicated region
      $region73: #{_lambda_.1} parent=67 // pred_check
        %p8528 = pneg %p8527
      $region74: #{_lambda_.1} parent=67 // pred_check_branch
        %8530 = sbr.rel (%p8528) target = $region76
      $region75: #{_lambda_.1} parent=67 // pred_region
        %v8531 = vld [vmem:[%s487] sm:$0xf]
        %v8536 = vcombine.low %v8466, %v8473
        %v8537 = vcombine.low %v8480, %v8488
        %v8539 = vunpack.c.l.s4 1966171168
        %v8540 = vunpack.c.0.s8 %v8539
        %v8541 = vlaneseq
        %v8542 = vshrl.u32 %v8541, 7
        %v8543 = vsub.s32 %v8540, %v8542
        %v8544 = vrot.slane %v8536, %v8543
        %v8546 = vunpack.c.l.s4 1966171168
        %v8547 = vunpack.c.0.s8 %v8546
        %v8548 = vlaneseq
        %v8549 = vshrl.u32 %v8548, 7
        %v8550 = vsub.s32 %v8547, %v8549
        %v8551 = vrot.slane %v8537, %v8550
        %v8552 = vcombine.low %v8544, %v8551
        %v8554 = vunpack.c.l.s4 1966171168
        %v8555 = vunpack.c.0.s8 %v8554
        %v8556 = vlaneseq
        %v8557 = vshrl.u32 %v8556, 7
        %v8558 = vsub.s32 %v8555, %v8557
        %v8559 = vrot.slane %v8552, %v8558
        %v8561 = vadd.f32 %v8531, %v8559
        %v8562 = vlaneseq
        %vm8563 = vcmp.ge.s32.totalorder %v8562, 0
        %vm8564 = vcmp.lt.s32.totalorder %v8562, 484
        %vm8565 = vmand %vm8563, %vm8564
        %8566 = vst.msk [vmem:[%s487] sm:$0xf] %vm8565, %v8561
      $region76: #{_lambda_.1} parent=67 // pred_fallthru
        _
      %p8567 = scmp.lt.s32.totalorder %s29, 1
      %s8568 = scalar_select %p8567, %s29, 1
      %p8569 = scmp.lt.s32.totalorder %s30, 3
      %s8570 = scalar_select %p8569, %s30, 3
      %s8571 = smul.addr %s8570, 4
      %s8572 = smul.addr %s8568, 16
      %s8573 = sadd.s32 %s8571, %s8572
      %s8574 = smul.addr %s8573, 2
      %s8575 = scalar_lea.vmem %s12, %s8574
      %p8576 = scmp.lt.s32.totalorder %s29, 1
      %s8577 = scalar_select %p8576, %s29, 1
      %s8578 = smul.addr %s8577, 4
      %s8579 = scalar_lea.vmem %s13, %s8578
      // Predicated region
      $region77: #{_lambda_.1} parent=67 // pred_check
        %p8580 = pneg %p316
      $region78: #{_lambda_.1} parent=67 // pred_check_branch
        %8582 = sbr.rel (%p8580) target = $region80
      $region79: #{_lambda_.1} parent=67 // pred_region
        _
      $region80: #{_lambda_.1} parent=67 // pred_fallthru
        _
      // Predicated region
      $region81: #{_lambda_.1} parent=67 // pred_check
        %p8583 = pneg %p342
      $region82: #{_lambda_.1} parent=67 // pred_check_branch
        %8585 = sbr.rel (%p8583) target = $region84
      $region83: #{_lambda_.1} parent=67 // pred_region
        _
      $region84: #{_lambda_.1} parent=67 // pred_fallthru
        _
    $region68: #{_lambda_.1} parent=5 // pred_fallthru
      _
    %p8586 = scmp.le.s32.totalorder 2, %s20
    // Predicated region
    $region85: #{_lambda_.1} parent=5 // pred_check
      %p8587 = pneg %p8586
    $region86: #{_lambda_.1} parent=5 // pred_check_branch
      %8589 = sbr.rel (%p8587) target = $region88
    $region87: #{_lambda_.1} parent=5 // pred_region
      %s8590 = ssub.s32 %s20, 2
      // Predicated region
      $region89: #{_lambda_.1} parent=87 // pred_check
        %p8591 = pneg %p322
      $region90: #{_lambda_.1} parent=87 // pred_check_branch
        %8593 = sbr.rel (%p8591) target = $region92
      $region91: #{_lambda_.1} parent=87 // pred_region
        %p8594 = scmp.lt.s32.totalorder %s31, 1
        %s8595 = scalar_select %p8594, %s31, 1
        %p8596 = scmp.lt.s32.totalorder %s32, 3
        %s8597 = scalar_select %p8596, %s32, 3
        %s8598 = smul.addr %s8597, 4
        %s8599 = smul.addr %s8595, 16
        %s8600 = sadd.s32 %s8598, %s8599
        %s8601 = smul.addr %s8600, 2
        %s8602 = scalar_lea.vmem %s12, %s8601
      $region92: #{_lambda_.1} parent=87 // pred_fallthru
        _
      // Predicated region
      $region93: #{_lambda_.1} parent=87 // pred_check
        %p8603 = pneg %p348
      $region94: #{_lambda_.1} parent=87 // pred_check_branch
        %8605 = sbr.rel (%p8603) target = $region96
      $region95: #{_lambda_.1} parent=87 // pred_region
        %p8606 = scmp.lt.s32.totalorder %s31, 1
        %s8607 = scalar_select %p8606, %s31, 1
        %s8608 = smul.addr %s8607, 4
        %s8609 = scalar_lea.vmem %s13, %s8608
      $region96: #{_lambda_.1} parent=87 // pred_fallthru
        _
    $region88: #{_lambda_.1} parent=5 // pred_fallthru
      _
  $region6: #{_lambda_.1} parent=0 // loop_footer
    %s24 = sadd.s32 1, %s20
  $region7: #{_lambda_.1} parent=0 // loop_footer_branch
    %19 = sbr.rel target = $region3
  $region8: #{_lambda_.1} parent=0 // loop_exit
    _

</llo_original>
